<compile_context>
chip_gen: v7x
topology: tpu7x:2x2x1
jax: 0.10.0
libtpu: 0.0.40
codegen_flags: <defaults>
</compile_context>

<pallas_src>
import functools

import jax
import jax.numpy as jnp
from jax.experimental import pallas as pl
from jax.experimental.pallas import tpu as pltpu


# ----------------------------- Pallas kernel -------------------------------- #
def _decon_kernel(x_ref,                       # (num_z, rr)      padded imstack (real)
                  psf_r_ref, psf_i_ref,        # (B, num_z, rr)   PSF_fft
                  psfr_r_ref, psfr_i_ref,      # (B, num_z, rr)   PSFR_fft
                  ht_ref,                      # (num_z, NNp)     |HT| (lane-padded)
                  im_ref,                      # (num_z, NNp)     original imstack (lane-padded)
                  wf_ref,                      # (rr, 2*rr)       [Re W | Im W], W = fft2 operator
                  ct_ref,                      # (rr, 2*NNp)      [ Re Vc | Im Vc]   (ifft2+crop)
                  cb_ref,                      # (rr, 2*NNp)      [-Im Vc | Re Vc]
                  out_ref):                    # (num_z, NNp)
    rr = x_ref.shape[1]
    nnp = out_ref.shape[1]
    B = psf_r_ref.shape[0]

    # NOTE(precision): single-pass bf16 (Precision.DEFAULT) was evaluated per the review but
    # rejected: the 1/|HTH| factor amplifies matmul rounding error at pixels where |HTH|~0 and
    # breaks the 5e-2 validation against the f32 FFT reference. With the matmul count cut from
    # ~50 small launches to 3 fused ones, precision passes are no longer the dominant cost.
    dot = functools.partial(jnp.dot, preferred_element_type=jnp.float32,
                            precision=jax.lax.Precision.HIGHEST)

    # imstack_fft = fft2(pad(imstack)) : one fused real->complex DFT matmul (M=num_z).
    xf = dot(x_ref[...], wf_ref[...])                       # (num_z, 2*rr) = [Re | Im]
    xf_r, xf_i = xf[:, :rr], xf[:, rr:]

    # fft2(ifft2(X)) == X, so  H_fft[b] = sum_z imstack_fft[z] * PSF_fft[b, z]  — the reference's
    # per-view ifft2->fft2 round trip collapses to a VPU complex-multiply + cross-sublane reduce.
    # G[z] = sum_b H_fft[b] * PSFR_fft[b, z] is accumulated element-wise so only ONE crop-fused
    # inverse-DFT matmul is needed after the loop.
    g_r = jnp.zeros_like(xf_r)
    g_i = jnp.zeros_like(xf_i)
    for b in range(B):                                      # static unroll over the 4 views
        pr, pi = psf_r_ref[b], psf_i_ref[b]                 # (num_z, rr)
        hf_r = jnp.sum(pr * xf_r - pi * xf_i, axis=0, keepdims=True)   # (1, rr)
        hf_i = jnp.sum(pr * xf_i + pi * xf_r, axis=0, keepdims=True)
        qr, qi = psfr_r_ref[b], psfr_i_ref[b]               # (num_z, rr)
        g_r = g_r + (qr * hf_r - qi * hf_i)                 # broadcast (1, rr) over num_z
        g_i = g_i + (qr * hf_i + qi * hf_r)

    # HTH[2rPSF:, 2rPSF:] = ifft2(G) cropped: two fused matmuls -> [Re HTH | Im HTH] (lane-padded).
    z = dot(g_r, ct_ref[...]) + dot(g_i, cb_ref[...])       # (num_z, 2*NNp)
    z_r, z_i = z[:, :nnp], z[:, nnp:]

    # out = HT_abs / |HTH| * imstack, with 1/|.| as an EUP rsqrt. The 1e-30 floor only affects
    # the zero-padded lanes (keeps them at 0 instead of NaN); real lanes are unchanged.
    hth2 = jnp.maximum(z_r * z_r + z_i * z_i, 1e-30)
    out_ref[...] = ht_ref[...] * im_ref[...] * jax.lax.rsqrt(hth2)


# ------------------------------ JAX glue ------------------------------------ #
def _build_operators(r, rPSF, NN, NNp):
    """Dense DFT operators acting on row-major-flattened (r, r) images (right-multiply).

    Returns
      wf    : (r*r, 2*r*r)  [Re W | Im W],  W = kron(F, F)  (fft2)
      c_top : (r*r, 2*NNp)  [ Re Vc | Im Vc]
      c_bot : (r*r, 2*NNp)  [-Im Vc | Re Vc]
    where Vc = kron(Finv, Finv)[:, crop_cols] zero-padded on the lane axis to NNp columns, so
    that  g_r @ c_top + g_i @ c_bot == [Re | Im] of ifft2(G)[2*rPSF:, 2*rPSF:].
    """
    f32 = jnp.float32
    k = jnp.arange(r)
    F = jnp.exp(-2j * jnp.pi * jnp.outer(k, k).astype(f32) / r)   # symmetric DFT matrix
    Finv = jnp.conj(F) / r
    W = jnp.kron(F, F)                                            # fft2 on flattened vectors
    V = jnp.kron(Finv, Finv)                                      # ifft2
    sel = (jnp.arange(2 * rPSF, r)[:, None] * r
           + jnp.arange(2 * rPSF, r)[None, :]).reshape(-1)
    Vc = V[:, sel]                                                # ifft2 fused with the crop
    lane_pad = ((0, 0), (0, NNp - NN))
    cr = jnp.pad(jnp.real(Vc).astype(f32), lane_pad)
    ci = jnp.pad(jnp.imag(Vc).astype(f32), lane_pad)
    wf = jnp.concatenate([jnp.real(W), jnp.imag(W)], axis=1).astype(f32)
    c_top = jnp.concatenate([cr, ci], axis=1)
    c_bot = jnp.concatenate([-ci, cr], axis=1)
    return wf, c_top, c_bot


def make_decon_params(img, PSF, PSFR, rPSF, r, num_z):
    """Equivalent of DeconNet.__init__ (parameter setup, plain JAX)."""
    PSF_fft = jnp.fft.fftn(PSF, s=(r, r), axes=(-2, -1))
    PSFR_fft = jnp.fft.fftn(PSFR, s=(r, r), axes=(-2, -1))
    img_fft = jnp.fft.fftn(img, s=(r, r), axes=(-2, -1))              # (4, 1, r, r)
    img_fft = jnp.broadcast_to(img_fft, (img.shape[0], num_z, r, r))
    HT = jnp.sum(jnp.fft.ifftn(img_fft * PSFR_fft, axes=(-2, -1)), axis=0, keepdims=True)
    HT_abs = jnp.abs(HT[:, :, rPSF:-rPSF, rPSF:-rPSF])                # (1, num_z, N, N)
    return PSF_fft, PSFR_fft, HT_abs


def decon_forward_pallas(imstack, PSF_fft, PSFR_fft, HT_abs, rPSF, r, num_z):
    """DeconNet.forward. imstack: (1, num_z, N, N) float32."""
    B = PSF_fft.shape[0]                       # 4 expanded views
    N = imstack.shape[-1]
    NN, rr = N * N, r * r
    NNp = ((NN + 127) // 128) * 128            # lane-pad 144 -> 256: dense, unmasked stores

    wf, c_top, c_bot = _build_operators(r, rPSF, NN, NNp)

    f32 = jnp.float32
    x = imstack[0].astype(f32)                                             # (num_z, N, N)
    x_pad = jnp.pad(x, ((0, 0), (0, r - N), (0, r - N))).reshape(num_z, rr)
    lane_pad = ((0, 0), (0, NNp - NN))
    im_p = jnp.pad(x.reshape(num_z, NN), lane_pad)
    ht_p = jnp.pad(HT_abs[0].reshape(num_z, NN).astype(f32), lane_pad)

    psf_r = jnp.real(PSF_fft).reshape(B, num_z, rr).astype(f32)
    psf_i = jnp.imag(PSF_fft).reshape(B, num_z, rr).astype(f32)
    psfr_r = jnp.real(PSFR_fft).reshape(B, num_z, rr).astype(f32)
    psfr_i = jnp.imag(PSFR_fft).reshape(B, num_z, rr).astype(f32)

    args = (x_pad, psf_r, psf_i, psfr_r, psfr_i, ht_p, im_p, wf, c_top, c_bot)
    vmem = pl.BlockSpec(memory_space=pltpu.MemorySpace.VMEM)

    # Single grid-less program: everything (operators included, ~1.7 MiB f32) fits in VMEM at
    # this size, and keeping all num_z rows in one program keeps the matmul M dimension at
    # num_z instead of 1.
    # TODO(synk): for large r the (r*r, 2*r*r) DFT operators grow as r^4; that regime needs a
    #             BlockSpec grid over operator tiles (+ vmem_limit_bytes) and a "parallel"
    #             grid axis so v7x's second TensorCore can be used.
    out_p = pl.pallas_call(
        _decon_kernel,
        out_shape=jax.ShapeDtypeStruct((num_z, NNp), jnp.float32),
        in_specs=[vmem] * len(args),
        out_specs=vmem,
    )(*args)
    return out_p[:, :NN].reshape(1, num_z, N, N)


def decon_forward_ref(imstack, PSF_fft, PSFR_fft, HT_abs, rPSF, r, num_z):
    """Pure-JAX reference mirroring the PyTorch forward (for validation)."""
    imstack_fft = jnp.fft.fftn(imstack, s=(r, r), axes=(-2, -1))
    imstack_fft = jnp.broadcast_to(imstack_fft, (4, num_z, r, r))
    H = jnp.sum(jnp.fft.ifftn(imstack_fft * PSF_fft, axes=(-2, -1)), axis=1, keepdims=True)
    H_fft = jnp.fft.fftn(H, axes=(-2, -1))
    H_fft = jnp.broadcast_to(H_fft, (4, num_z, r, r))
    HTH = jnp.sum(jnp.fft.ifftn(H_fft * PSFR_fft, axes=(-2, -1)), axis=0, keepdims=True)
    return HT_abs / jnp.abs(HTH[:, :, 2 * rPSF:, 2 * rPSF:]) * imstack


# --------------------------------- main -------------------------------------- #
if __name__ == "__main__":
    num_z, rPSF, N = 4, 2, 12
    r = N + 2 * rPSF                          # 16 (FFT size)
    kp = 2 * rPSF + 1                         # 5  (PSF spatial size)

    key = jax.random.PRNGKey(0)
    k1, k2, k3, k4 = jax.random.split(key, 4)
    PSF = jax.random.normal(k1, (4, num_z, kp, kp), jnp.float32)
    PSFR = jax.random.normal(k2, (4, num_z, kp, kp), jnp.float32)
    img = jax.random.normal(k3, (4, 1, N, N), jnp.float32)
    imstack = jax.random.normal(k4, (1, num_z, N, N), jnp.float32)

    PSF_fft, PSFR_fft, HT_abs = make_decon_params(img, PSF, PSFR, rPSF, r, num_z)

    out = decon_forward_pallas(imstack, PSF_fft, PSFR_fft, HT_abs, rPSF, r, num_z)
    out = jax.block_until_ready(out)

    ref = decon_forward_ref(imstack, PSF_fft, PSFR_fft, HT_abs, rPSF, r, num_z)
    rel_err = float(jnp.max(jnp.abs(out - ref)) / (jnp.max(jnp.abs(ref)) + 1e-6))

    assert out.shape == (1, num_z, N, N)
    assert bool(jnp.isfinite(out).all())
    assert rel_err < 5e-2, f"relative error too large: {rel_err}"
    print("KERNEL_OK")
</pallas_src>

<mosaic_0001>
module attributes {stable_mosaic.version = 11 : i64} {
  func.func @_decon_kernel(%arg0: memref<4x256xf32, #tpu.memory_space<vmem>>, %arg1: memref<4x4x256xf32, #tpu.memory_space<vmem>>, %arg2: memref<4x4x256xf32, #tpu.memory_space<vmem>>, %arg3: memref<4x4x256xf32, #tpu.memory_space<vmem>>, %arg4: memref<4x4x256xf32, #tpu.memory_space<vmem>>, %arg5: memref<4x256xf32, #tpu.memory_space<vmem>>, %arg6: memref<4x256xf32, #tpu.memory_space<vmem>>, %arg7: memref<256x512xf32, #tpu.memory_space<vmem>>, %arg8: memref<256x512xf32, #tpu.memory_space<vmem>>, %arg9: memref<256x512xf32, #tpu.memory_space<vmem>>, %arg10: memref<4x256xf32, #tpu.memory_space<vmem>>) attributes {dimension_semantics = [], scalar_prefetch = 0 : i64, scratch_operands = 0 : i64, tpu.core_type = #tpu.core_type<tc>} {
    %c0 = arith.constant 0 : index
    %c0_0 = arith.constant 0 : index
    %0 = vector.load %arg0[%c0, %c0_0] : memref<4x256xf32, #tpu.memory_space<vmem>>, vector<4x256xf32>
    %c0_1 = arith.constant 0 : index
    %c0_2 = arith.constant 0 : index
    %1 = vector.load %arg7[%c0_1, %c0_2] : memref<256x512xf32, #tpu.memory_space<vmem>>, vector<256x512xf32>
    %cst = arith.constant dense<0.000000e+00> : vector<4x512xf32>
    %2 = tpu.matmul %0, %1, %cst {dimension_numbers = #tpu.dot_dimension_numbers<[1], [0], [0], [1], [0, 0, 1, 1], [], []>, precision = #tpu.contract_precision<fp32>} : vector<4x256xf32>, vector<256x512xf32>, vector<4x512xf32> -> vector<4x512xf32>
    %3 = vector.extract_strided_slice %2 {offsets = [0, 0], sizes = [4, 256], strides = [1, 1]} : vector<4x512xf32> to vector<4x256xf32>
    %4 = vector.extract_strided_slice %2 {offsets = [0, 256], sizes = [4, 256], strides = [1, 1]} : vector<4x512xf32> to vector<4x256xf32>
    %cst_3 = arith.constant 0.000000e+00 : f32
    %5 = vector.broadcast %cst_3 : f32 to vector<4x256xf32>
    %cst_4 = arith.constant 0.000000e+00 : f32
    %6 = vector.broadcast %cst_4 : f32 to vector<4x256xf32>
    %c0_5 = arith.constant 0 : index
    %c0_6 = arith.constant 0 : index
    %c0_7 = arith.constant 0 : index
    %7 = vector.load %arg1[%c0_5, %c0_6, %c0_7] : memref<4x4x256xf32, #tpu.memory_space<vmem>>, vector<1x4x256xf32>
    %8 = vector.shape_cast %7 : vector<1x4x256xf32> to vector<4x256xf32>
    %c0_8 = arith.constant 0 : index
    %c0_9 = arith.constant 0 : index
    %c0_10 = arith.constant 0 : index
    %9 = vector.load %arg2[%c0_8, %c0_9, %c0_10] : memref<4x4x256xf32, #tpu.memory_space<vmem>>, vector<1x4x256xf32>
    %10 = vector.shape_cast %9 : vector<1x4x256xf32> to vector<4x256xf32>
    %11 = arith.mulf %8, %3 : vector<4x256xf32>
    %12 = arith.mulf %10, %4 : vector<4x256xf32>
    %13 = arith.subf %11, %12 : vector<4x256xf32>
    %cst_11 = arith.constant dense<0.000000e+00> : vector<256xf32>
    %14 = vector.multi_reduction <add>, %13, %cst_11 [0] : vector<4x256xf32> to vector<256xf32>
    %15 = vector.shape_cast %14 : vector<256xf32> to vector<1x256xf32>
    %16 = arith.mulf %8, %4 : vector<4x256xf32>
    %17 = arith.mulf %10, %3 : vector<4x256xf32>
    %18 = arith.addf %16, %17 : vector<4x256xf32>
    %cst_12 = arith.constant dense<0.000000e+00> : vector<256xf32>
    %19 = vector.multi_reduction <add>, %18, %cst_12 [0] : vector<4x256xf32> to vector<256xf32>
    %20 = vector.shape_cast %19 : vector<256xf32> to vector<1x256xf32>
    %c0_13 = arith.constant 0 : index
    %c0_14 = arith.constant 0 : index
    %c0_15 = arith.constant 0 : index
    %21 = vector.load %arg3[%c0_13, %c0_14, %c0_15] : memref<4x4x256xf32, #tpu.memory_space<vmem>>, vector<1x4x256xf32>
    %22 = vector.shape_cast %21 : vector<1x4x256xf32> to vector<4x256xf32>
    %c0_16 = arith.constant 0 : index
    %c0_17 = arith.constant 0 : index
    %c0_18 = arith.constant 0 : index
    %23 = vector.load %arg4[%c0_16, %c0_17, %c0_18] : memref<4x4x256xf32, #tpu.memory_space<vmem>>, vector<1x4x256xf32>
    %24 = vector.shape_cast %23 : vector<1x4x256xf32> to vector<4x256xf32>
    %25 = vector.broadcast %15 : vector<1x256xf32> to vector<4x256xf32>
    %26 = arith.mulf %22, %25 : vector<4x256xf32>
    %27 = vector.broadcast %20 : vector<1x256xf32> to vector<4x256xf32>
    %28 = arith.mulf %24, %27 : vector<4x256xf32>
    %29 = arith.subf %26, %28 : vector<4x256xf32>
    %30 = arith.addf %5, %29 : vector<4x256xf32>
    %31 = vector.broadcast %20 : vector<1x256xf32> to vector<4x256xf32>
    %32 = arith.mulf %22, %31 : vector<4x256xf32>
    %33 = vector.broadcast %15 : vector<1x256xf32> to vector<4x256xf32>
    %34 = arith.mulf %24, %33 : vector<4x256xf32>
    %35 = arith.addf %32, %34 : vector<4x256xf32>
    %36 = arith.addf %6, %35 : vector<4x256xf32>
    %c1 = arith.constant 1 : index
    %c0_19 = arith.constant 0 : index
    %c0_20 = arith.constant 0 : index
    %37 = vector.load %arg1[%c1, %c0_19, %c0_20] : memref<4x4x256xf32, #tpu.memory_space<vmem>>, vector<1x4x256xf32>
    %38 = vector.shape_cast %37 : vector<1x4x256xf32> to vector<4x256xf32>
    %c1_21 = arith.constant 1 : index
    %c0_22 = arith.constant 0 : index
    %c0_23 = arith.constant 0 : index
    %39 = vector.load %arg2[%c1_21, %c0_22, %c0_23] : memref<4x4x256xf32, #tpu.memory_space<vmem>>, vector<1x4x256xf32>
    %40 = vector.shape_cast %39 : vector<1x4x256xf32> to vector<4x256xf32>
    %41 = arith.mulf %38, %3 : vector<4x256xf32>
    %42 = arith.mulf %40, %4 : vector<4x256xf32>
    %43 = arith.subf %41, %42 : vector<4x256xf32>
    %cst_24 = arith.constant dense<0.000000e+00> : vector<256xf32>
    %44 = vector.multi_reduction <add>, %43, %cst_24 [0] : vector<4x256xf32> to vector<256xf32>
    %45 = vector.shape_cast %44 : vector<256xf32> to vector<1x256xf32>
    %46 = arith.mulf %38, %4 : vector<4x256xf32>
    %47 = arith.mulf %40, %3 : vector<4x256xf32>
    %48 = arith.addf %46, %47 : vector<4x256xf32>
    %cst_25 = arith.constant dense<0.000000e+00> : vector<256xf32>
    %49 = vector.multi_reduction <add>, %48, %cst_25 [0] : vector<4x256xf32> to vector<256xf32>
    %50 = vector.shape_cast %49 : vector<256xf32> to vector<1x256xf32>
    %c1_26 = arith.constant 1 : index
    %c0_27 = arith.constant 0 : index
    %c0_28 = arith.constant 0 : index
    %51 = vector.load %arg3[%c1_26, %c0_27, %c0_28] : memref<4x4x256xf32, #tpu.memory_space<vmem>>, vector<1x4x256xf32>
    %52 = vector.shape_cast %51 : vector<1x4x256xf32> to vector<4x256xf32>
    %c1_29 = arith.constant 1 : index
    %c0_30 = arith.constant 0 : index
    %c0_31 = arith.constant 0 : index
    %53 = vector.load %arg4[%c1_29, %c0_30, %c0_31] : memref<4x4x256xf32, #tpu.memory_space<vmem>>, vector<1x4x256xf32>
    %54 = vector.shape_cast %53 : vector<1x4x256xf32> to vector<4x256xf32>
    %55 = vector.broadcast %45 : vector<1x256xf32> to vector<4x256xf32>
    %56 = arith.mulf %52, %55 : vector<4x256xf32>
    %57 = vector.broadcast %50 : vector<1x256xf32> to vector<4x256xf32>
    %58 = arith.mulf %54, %57 : vector<4x256xf32>
    %59 = arith.subf %56, %58 : vector<4x256xf32>
    %60 = arith.addf %30, %59 : vector<4x256xf32>
    %61 = vector.broadcast %50 : vector<1x256xf32> to vector<4x256xf32>
    %62 = arith.mulf %52, %61 : vector<4x256xf32>
    %63 = vector.broadcast %45 : vector<1x256xf32> to vector<4x256xf32>
    %64 = arith.mulf %54, %63 : vector<4x256xf32>
    %65 = arith.addf %62, %64 : vector<4x256xf32>
    %66 = arith.addf %36, %65 : vector<4x256xf32>
    %c2 = arith.constant 2 : index
    %c0_32 = arith.constant 0 : index
    %c0_33 = arith.constant 0 : index
    %67 = vector.load %arg1[%c2, %c0_32, %c0_33] : memref<4x4x256xf32, #tpu.memory_space<vmem>>, vector<1x4x256xf32>
    %68 = vector.shape_cast %67 : vector<1x4x256xf32> to vector<4x256xf32>
    %c2_34 = arith.constant 2 : index
    %c0_35 = arith.constant 0 : index
    %c0_36 = arith.constant 0 : index
    %69 = vector.load %arg2[%c2_34, %c0_35, %c0_36] : memref<4x4x256xf32, #tpu.memory_space<vmem>>, vector<1x4x256xf32>
    %70 = vector.shape_cast %69 : vector<1x4x256xf32> to vector<4x256xf32>
    %71 = arith.mulf %68, %3 : vector<4x256xf32>
    %72 = arith.mulf %70, %4 : vector<4x256xf32>
    %73 = arith.subf %71, %72 : vector<4x256xf32>
    %cst_37 = arith.constant dense<0.000000e+00> : vector<256xf32>
    %74 = vector.multi_reduction <add>, %73, %cst_37 [0] : vector<4x256xf32> to vector<256xf32>
    %75 = vector.shape_cast %74 : vector<256xf32> to vector<1x256xf32>
    %76 = arith.mulf %68, %4 : vector<4x256xf32>
    %77 = arith.mulf %70, %3 : vector<4x256xf32>
    %78 = arith.addf %76, %77 : vector<4x256xf32>
    %cst_38 = arith.constant dense<0.000000e+00> : vector<256xf32>
    %79 = vector.multi_reduction <add>, %78, %cst_38 [0] : vector<4x256xf32> to vector<256xf32>
    %80 = vector.shape_cast %79 : vector<256xf32> to vector<1x256xf32>
    %c2_39 = arith.constant 2 : index
    %c0_40 = arith.constant 0 : index
    %c0_41 = arith.constant 0 : index
    %81 = vector.load %arg3[%c2_39, %c0_40, %c0_41] : memref<4x4x256xf32, #tpu.memory_space<vmem>>, vector<1x4x256xf32>
    %82 = vector.shape_cast %81 : vector<1x4x256xf32> to vector<4x256xf32>
    %c2_42 = arith.constant 2 : index
    %c0_43 = arith.constant 0 : index
    %c0_44 = arith.constant 0 : index
    %83 = vector.load %arg4[%c2_42, %c0_43, %c0_44] : memref<4x4x256xf32, #tpu.memory_space<vmem>>, vector<1x4x256xf32>
    %84 = vector.shape_cast %83 : vector<1x4x256xf32> to vector<4x256xf32>
    %85 = vector.broadcast %75 : vector<1x256xf32> to vector<4x256xf32>
    %86 = arith.mulf %82, %85 : vector<4x256xf32>
    %87 = vector.broadcast %80 : vector<1x256xf32> to vector<4x256xf32>
    %88 = arith.mulf %84, %87 : vector<4x256xf32>
    %89 = arith.subf %86, %88 : vector<4x256xf32>
    %90 = arith.addf %60, %89 : vector<4x256xf32>
    %91 = vector.broadcast %80 : vector<1x256xf32> to vector<4x256xf32>
    %92 = arith.mulf %82, %91 : vector<4x256xf32>
    %93 = vector.broadcast %75 : vector<1x256xf32> to vector<4x256xf32>
    %94 = arith.mulf %84, %93 : vector<4x256xf32>
    %95 = arith.addf %92, %94 : vector<4x256xf32>
    %96 = arith.addf %66, %95 : vector<4x256xf32>
    %c3 = arith.constant 3 : index
    %c0_45 = arith.constant 0 : index
    %c0_46 = arith.constant 0 : index
    %97 = vector.load %arg1[%c3, %c0_45, %c0_46] : memref<4x4x256xf32, #tpu.memory_space<vmem>>, vector<1x4x256xf32>
    %98 = vector.shape_cast %97 : vector<1x4x256xf32> to vector<4x256xf32>
    %c3_47 = arith.constant 3 : index
    %c0_48 = arith.constant 0 : index
    %c0_49 = arith.constant 0 : index
    %99 = vector.load %arg2[%c3_47, %c0_48, %c0_49] : memref<4x4x256xf32, #tpu.memory_space<vmem>>, vector<1x4x256xf32>
    %100 = vector.shape_cast %99 : vector<1x4x256xf32> to vector<4x256xf32>
    %101 = arith.mulf %98, %3 : vector<4x256xf32>
    %102 = arith.mulf %100, %4 : vector<4x256xf32>
    %103 = arith.subf %101, %102 : vector<4x256xf32>
    %cst_50 = arith.constant dense<0.000000e+00> : vector<256xf32>
    %104 = vector.multi_reduction <add>, %103, %cst_50 [0] : vector<4x256xf32> to vector<256xf32>
    %105 = vector.shape_cast %104 : vector<256xf32> to vector<1x256xf32>
    %106 = arith.mulf %98, %4 : vector<4x256xf32>
    %107 = arith.mulf %100, %3 : vector<4x256xf32>
    %108 = arith.addf %106, %107 : vector<4x256xf32>
    %cst_51 = arith.constant dense<0.000000e+00> : vector<256xf32>
    %109 = vector.multi_reduction <add>, %108, %cst_51 [0] : vector<4x256xf32> to vector<256xf32>
    %110 = vector.shape_cast %109 : vector<256xf32> to vector<1x256xf32>
    %c3_52 = arith.constant 3 : index
    %c0_53 = arith.constant 0 : index
    %c0_54 = arith.constant 0 : index
    %111 = vector.load %arg3[%c3_52, %c0_53, %c0_54] : memref<4x4x256xf32, #tpu.memory_space<vmem>>, vector<1x4x256xf32>
    %112 = vector.shape_cast %111 : vector<1x4x256xf32> to vector<4x256xf32>
    %c3_55 = arith.constant 3 : index
    %c0_56 = arith.constant 0 : index
    %c0_57 = arith.constant 0 : index
    %113 = vector.load %arg4[%c3_55, %c0_56, %c0_57] : memref<4x4x256xf32, #tpu.memory_space<vmem>>, vector<1x4x256xf32>
    %114 = vector.shape_cast %113 : vector<1x4x256xf32> to vector<4x256xf32>
    %115 = vector.broadcast %105 : vector<1x256xf32> to vector<4x256xf32>
    %116 = arith.mulf %112, %115 : vector<4x256xf32>
    %117 = vector.broadcast %110 : vector<1x256xf32> to vector<4x256xf32>
    %118 = arith.mulf %114, %117 : vector<4x256xf32>
    %119 = arith.subf %116, %118 : vector<4x256xf32>
    %120 = arith.addf %90, %119 : vector<4x256xf32>
    %121 = vector.broadcast %110 : vector<1x256xf32> to vector<4x256xf32>
    %122 = arith.mulf %112, %121 : vector<4x256xf32>
    %123 = vector.broadcast %105 : vector<1x256xf32> to vector<4x256xf32>
    %124 = arith.mulf %114, %123 : vector<4x256xf32>
    %125 = arith.addf %122, %124 : vector<4x256xf32>
    %126 = arith.addf %96, %125 : vector<4x256xf32>
    %c0_58 = arith.constant 0 : index
    %c0_59 = arith.constant 0 : index
    %127 = vector.load %arg8[%c0_58, %c0_59] : memref<256x512xf32, #tpu.memory_space<vmem>>, vector<256x512xf32>
    %cst_60 = arith.constant dense<0.000000e+00> : vector<4x512xf32>
    %128 = tpu.matmul %120, %127, %cst_60 {dimension_numbers = #tpu.dot_dimension_numbers<[1], [0], [0], [1], [0, 0, 1, 1], [], []>, precision = #tpu.contract_precision<fp32>} : vector<4x256xf32>, vector<256x512xf32>, vector<4x512xf32> -> vector<4x512xf32>
    %c0_61 = arith.constant 0 : index
    %c0_62 = arith.constant 0 : index
    %129 = vector.load %arg9[%c0_61, %c0_62] : memref<256x512xf32, #tpu.memory_space<vmem>>, vector<256x512xf32>
    %cst_63 = arith.constant dense<0.000000e+00> : vector<4x512xf32>
    %130 = tpu.matmul %126, %129, %cst_63 {dimension_numbers = #tpu.dot_dimension_numbers<[1], [0], [0], [1], [0, 0, 1, 1], [], []>, precision = #tpu.contract_precision<fp32>} : vector<4x256xf32>, vector<256x512xf32>, vector<4x512xf32> -> vector<4x512xf32>
    %131 = arith.addf %128, %130 : vector<4x512xf32>
    %132 = vector.extract_strided_slice %131 {offsets = [0, 0], sizes = [4, 256], strides = [1, 1]} : vector<4x512xf32> to vector<4x256xf32>
    %133 = vector.extract_strided_slice %131 {offsets = [0, 256], sizes = [4, 256], strides = [1, 1]} : vector<4x512xf32> to vector<4x256xf32>
    %134 = arith.mulf %132, %132 : vector<4x256xf32>
    %135 = arith.mulf %133, %133 : vector<4x256xf32>
    %136 = arith.addf %134, %135 : vector<4x256xf32>
    %cst_64 = arith.constant 1.000000e-30 : f32
    %137 = vector.broadcast %cst_64 : f32 to vector<4x256xf32>
    %138 = arith.maximumf %136, %137 : vector<4x256xf32>
    %c0_65 = arith.constant 0 : index
    %c0_66 = arith.constant 0 : index
    %139 = vector.load %arg5[%c0_65, %c0_66] : memref<4x256xf32, #tpu.memory_space<vmem>>, vector<4x256xf32>
    %c0_67 = arith.constant 0 : index
    %c0_68 = arith.constant 0 : index
    %140 = vector.load %arg6[%c0_67, %c0_68] : memref<4x256xf32, #tpu.memory_space<vmem>>, vector<4x256xf32>
    %141 = arith.mulf %139, %140 : vector<4x256xf32>
    %142 = math.rsqrt %138 : vector<4x256xf32>
    %143 = arith.mulf %141, %142 : vector<4x256xf32>
    %c0_69 = arith.constant 0 : index
    %c0_70 = arith.constant 0 : index
    %144 = vector.load %arg10[%c0_69, %c0_70] : memref<4x256xf32, #tpu.memory_space<vmem>>, vector<4x256xf32>
    tpu.vector_store %arg10[%c0_69, %c0_70], %143 {strides = array<i32>} : memref<4x256xf32, #tpu.memory_space<vmem>>, vector<4x256xf32>,
    return
  }
}

</mosaic_0001>

<llo_original>
// kernel: tpu_custom_call.1
$region0: #{tpu_custom_call.1}
  #allocation0 [shape = 'u32[]', space=smem, size = 0x4, offset = 0x4, fixed_abs, tag = 'smem constant byte address 0x4 - core index']
  #allocation1 [shape = 'u32[144,128]{1,0:T(1,128)}', space=vmem, size = 0x12000, scoped, tag = 'internal scratch']
  %s0 = inlined_call_operand.hbm [shape: f32[4,256], index: 0, kind: input, shape index: {}]
  %s1 = inlined_call_operand.hbm [shape: f32[4,4,256], index: 1, kind: input, shape index: {}]
  %s2 = inlined_call_operand.hbm [shape: f32[4,4,256], index: 2, kind: input, shape index: {}]
  %s3 = inlined_call_operand.hbm [shape: f32[4,4,256], index: 3, kind: input, shape index: {}]
  %s4 = inlined_call_operand.hbm [shape: f32[4,4,256], index: 4, kind: input, shape index: {}]
  %s5 = inlined_call_operand.vmem [shape: f32[4,256], index: 5, kind: input, shape index: {}]
  %s6 = inlined_call_operand.vmem [shape: f32[4,256], index: 6, kind: input, shape index: {}]
  %s7 = inlined_call_operand.hbm [shape: f32[256,512], index: 7, kind: input, shape index: {}]
  %s8 = inlined_call_operand.hbm [shape: f32[256,512], index: 8, kind: input, shape index: {}]
  %s9 = inlined_call_operand.hbm [shape: f32[256,512], index: 9, kind: input, shape index: {}]
  %s10 = inlined_call_operand.hbm [shape: f32[4,256], index: 10, kind: output, shape index: {}]
  %s11 = sld [smem:[#allocation0]]
  $region82: #{tpu_custom_call.1} parent=0
    _
  %s13 = ssub.s32 1, %s11
  %s14 = scalar_select 0, %s13, %s11
  $region1: #{tpu_custom_call.1} parent=0
    #allocation2 [shape = 'u8[4096]{0}', space=vmem, size = 0x1000, scoped, tag = 'input window, operand 0, single buffered']
    #allocation3 [shape = 's32[1]{0}', space=sflag, size = 0x4, scoped, tag = 'scoped memory for tpu_custom_call.1']
    #allocation4 [shape = 's32[1]{0}', space=sflag, size = 0x4, scoped, tag = 'scoped memory for tpu_custom_call.1']
    #allocation5 [shape = 'u8[16384]{0}', space=vmem, size = 0x4000, scoped, tag = 'input window, operand 1, single buffered']
    #allocation6 [shape = 's32[1]{0}', space=sflag, size = 0x4, scoped, tag = 'scoped memory for tpu_custom_call.1']
    #allocation7 [shape = 'u8[16384]{0}', space=vmem, size = 0x4000, scoped, tag = 'input window, operand 2, single buffered']
    #allocation8 [shape = 'u8[16384]{0}', space=vmem, size = 0x4000, scoped, tag = 'input window, operand 3, single buffered']
    #allocation9 [shape = 's32[1]{0}', space=sflag, size = 0x4, scoped, tag = 'scoped memory for tpu_custom_call.1']
    #allocation10 [shape = 'u8[16384]{0}', space=vmem, size = 0x4000, scoped, tag = 'input window, operand 4, single buffered']
    #allocation11 [shape = 'u8[524288]{0}', space=vmem, size = 0x80000, scoped, tag = 'input window, operand 7, single buffered']
    #allocation12 [shape = 's32[1]{0}', space=sflag, size = 0x4, scoped, tag = 'scoped memory for tpu_custom_call.1']
    #allocation13 [shape = 'u8[524288]{0}', space=vmem, size = 0x80000, scoped, tag = 'input window, operand 8, single buffered']
    #allocation14 [shape = 'u8[524288]{0}', space=vmem, size = 0x80000, scoped, tag = 'input window, operand 9, single buffered']
    #allocation15 [shape = 's32[1]{0}', space=sflag, size = 0x4, scoped, tag = 'scoped memory for tpu_custom_call.1']
    #allocation16 [shape = 'u8[4096]{0}', space=vmem, size = 0x1000, scoped, tag = 'output window, operand 0, single buffered']
    %15 = vsyncpa [#allocation3], 0
    %16 = vsyncpa [#allocation6], 0
    %17 = vsyncpa [#allocation9], 0
    %18 = vsyncpa [#allocation12], 0
    %19 = vsyncpa [#allocation15], 0
    %20 = vsyncpa [#allocation4], 0
    // Predicated region
    $region2: #{tpu_custom_call.1} parent=1 // pred_check
      _
    $region3: #{tpu_custom_call.1} parent=1 // pred_check_branch
      %22 = sbr.rel (0) target = $region5
    $region4: #{tpu_custom_call.1} parent=1 // pred_region
      %s24 = ssub.s32 128, 128
      %25 = vsyncadd [#allocation3], %s24
      %s27 = sshll.u32 [#allocation2], 4
      %s28 = int_to_ptr.vmem [resolvable:$true] %s27
      %30 = dma.hbm_to_vmem [thread:$0]  %s0, 128, %s28, [#allocation3]
    $region5: #{tpu_custom_call.1} parent=1 // pred_fallthru
      _
    // Predicated region
    $region6: #{tpu_custom_call.1} parent=1 // pred_check
      _
    $region7: #{tpu_custom_call.1} parent=1 // pred_check_branch
      %32 = sbr.rel (0) target = $region9
    $region8: #{tpu_custom_call.1} parent=1 // pred_region
      %s34 = ssub.s32 512, 512
      %35 = vsyncadd [#allocation6], %s34
      %s36 = sshll.u32 [#allocation5], 4
      %s37 = int_to_ptr.vmem [resolvable:$true] %s36
      %42 = dma.hbm_to_vmem [thread:$0]  %s1, 512, %s37, [#allocation6], 128, 128, 8
    $region9: #{tpu_custom_call.1} parent=1 // pred_fallthru
      _
    // Predicated region
    $region10: #{tpu_custom_call.1} parent=1 // pred_check
      _
    $region11: #{tpu_custom_call.1} parent=1 // pred_check_branch
      %44 = sbr.rel (0) target = $region13
    $region12: #{tpu_custom_call.1} parent=1 // pred_region
      %s46 = ssub.s32 512, 512
      %47 = vsyncadd [#allocation6], %s46
      %s48 = sshll.u32 [#allocation7], 4
      %s49 = int_to_ptr.vmem [resolvable:$true] %s48
      %54 = dma.hbm_to_vmem [thread:$0]  %s2, 512, %s49, [#allocation6], 128, 128, 8
    $region13: #{tpu_custom_call.1} parent=1 // pred_fallthru
      _
    // Predicated region
    $region14: #{tpu_custom_call.1} parent=1 // pred_check
      _
    $region15: #{tpu_custom_call.1} parent=1 // pred_check_branch
      %56 = sbr.rel (0) target = $region17
    $region16: #{tpu_custom_call.1} parent=1 // pred_region
      %s58 = ssub.s32 512, 512
      %59 = vsyncadd [#allocation9], %s58
      %s60 = sshll.u32 [#allocation8], 4
      %s61 = int_to_ptr.vmem [resolvable:$true] %s60
      %66 = dma.hbm_to_vmem [thread:$0]  %s3, 512, %s61, [#allocation9], 128, 128, 8
    $region17: #{tpu_custom_call.1} parent=1 // pred_fallthru
      _
    // Predicated region
    $region18: #{tpu_custom_call.1} parent=1 // pred_check
      _
    $region19: #{tpu_custom_call.1} parent=1 // pred_check_branch
      %68 = sbr.rel (0) target = $region21
    $region20: #{tpu_custom_call.1} parent=1 // pred_region
      %s70 = ssub.s32 512, 512
      %71 = vsyncadd [#allocation9], %s70
      %s72 = sshll.u32 [#allocation10], 4
      %s73 = int_to_ptr.vmem [resolvable:$true] %s72
      %78 = dma.hbm_to_vmem [thread:$0]  %s4, 512, %s73, [#allocation9], 128, 128, 8
    $region21: #{tpu_custom_call.1} parent=1 // pred_fallthru
      _
    // Predicated region
    $region22: #{tpu_custom_call.1} parent=1 // pred_check
      _
    $region23: #{tpu_custom_call.1} parent=1 // pred_check_branch
      %80 = sbr.rel (0) target = $region25
    $region24: #{tpu_custom_call.1} parent=1 // pred_region
      _
    $region25: #{tpu_custom_call.1} parent=1 // pred_fallthru
      _
    // Predicated region
    $region26: #{tpu_custom_call.1} parent=1 // pred_check
      _
    $region27: #{tpu_custom_call.1} parent=1 // pred_check_branch
      %82 = sbr.rel (0) target = $region29
    $region28: #{tpu_custom_call.1} parent=1 // pred_region
      _
    $region29: #{tpu_custom_call.1} parent=1 // pred_fallthru
      _
    // Predicated region
    $region30: #{tpu_custom_call.1} parent=1 // pred_check
      _
    $region31: #{tpu_custom_call.1} parent=1 // pred_check_branch
      %84 = sbr.rel (0) target = $region33
    $region32: #{tpu_custom_call.1} parent=1 // pred_region
      %s86 = ssub.s32 16384, 16384
      %87 = vsyncadd [#allocation12], %s86
      %s88 = sshll.u32 [#allocation11], 4
      %s89 = int_to_ptr.vmem [resolvable:$true] %s88
      %94 = dma.hbm_to_vmem [thread:$0]  %s7, 16384, %s89, [#allocation12], 512, 512, 32
    $region33: #{tpu_custom_call.1} parent=1 // pred_fallthru
      _
    // Predicated region
    $region34: #{tpu_custom_call.1} parent=1 // pred_check
      _
    $region35: #{tpu_custom_call.1} parent=1 // pred_check_branch
      %96 = sbr.rel (0) target = $region37
    $region36: #{tpu_custom_call.1} parent=1 // pred_region
      %s98 = ssub.s32 16384, 16384
      %99 = vsyncadd [#allocation12], %s98
      %s100 = sshll.u32 [#allocation13], 4
      %s101 = int_to_ptr.vmem [resolvable:$true] %s100
      %106 = dma.hbm_to_vmem [thread:$0]  %s8, 16384, %s101, [#allocation12], 512, 512, 32
    $region37: #{tpu_custom_call.1} parent=1 // pred_fallthru
      _
    // Predicated region
    $region38: #{tpu_custom_call.1} parent=1 // pred_check
      _
    $region39: #{tpu_custom_call.1} parent=1 // pred_check_branch
      %108 = sbr.rel (0) target = $region41
    $region40: #{tpu_custom_call.1} parent=1 // pred_region
      %s110 = ssub.s32 16384, 16384
      %111 = vsyncadd [#allocation15], %s110
      %s112 = sshll.u32 [#allocation14], 4
      %s113 = int_to_ptr.vmem [resolvable:$true] %s112
      %118 = dma.hbm_to_vmem [thread:$0]  %s9, 16384, %s113, [#allocation15], 512, 512, 32
    $region41: #{tpu_custom_call.1} parent=1 // pred_fallthru
      _
    // Predicated region
    $region42: #{tpu_custom_call.1} parent=1 // pred_check
      _
    $region43: #{tpu_custom_call.1} parent=1 // pred_check_branch
      %120 = sbr.rel (0) target = $region45
    $region44: #{tpu_custom_call.1} parent=1 // pred_region
      %121 = dma.done [#allocation3], 128
    $region45: #{tpu_custom_call.1} parent=1 // pred_fallthru
      _
    // Predicated region
    $region46: #{tpu_custom_call.1} parent=1 // pred_check
      _
    $region47: #{tpu_custom_call.1} parent=1 // pred_check_branch
      %123 = sbr.rel (0) target = $region49
    $region48: #{tpu_custom_call.1} parent=1 // pred_region
      %124 = dma.done [#allocation6], 512
    $region49: #{tpu_custom_call.1} parent=1 // pred_fallthru
      _
    // Predicated region
    $region50: #{tpu_custom_call.1} parent=1 // pred_check
      _
    $region51: #{tpu_custom_call.1} parent=1 // pred_check_branch
      %126 = sbr.rel (0) target = $region53
    $region52: #{tpu_custom_call.1} parent=1 // pred_region
      %127 = dma.done [#allocation6], 512
    $region53: #{tpu_custom_call.1} parent=1 // pred_fallthru
      _
    // Predicated region
    $region54: #{tpu_custom_call.1} parent=1 // pred_check
      _
    $region55: #{tpu_custom_call.1} parent=1 // pred_check_branch
      %129 = sbr.rel (0) target = $region57
    $region56: #{tpu_custom_call.1} parent=1 // pred_region
      %130 = dma.done [#allocation9], 512
    $region57: #{tpu_custom_call.1} parent=1 // pred_fallthru
      _
    // Predicated region
    $region58: #{tpu_custom_call.1} parent=1 // pred_check
      _
    $region59: #{tpu_custom_call.1} parent=1 // pred_check_branch
      %132 = sbr.rel (0) target = $region61
    $region60: #{tpu_custom_call.1} parent=1 // pred_region
      %133 = dma.done [#allocation9], 512
    $region61: #{tpu_custom_call.1} parent=1 // pred_fallthru
      _
    // Predicated region
    $region62: #{tpu_custom_call.1} parent=1 // pred_check
      _
    $region63: #{tpu_custom_call.1} parent=1 // pred_check_branch
      %135 = sbr.rel (0) target = $region65
    $region64: #{tpu_custom_call.1} parent=1 // pred_region
      %136 = dma.done [#allocation12], 16384
    $region65: #{tpu_custom_call.1} parent=1 // pred_fallthru
      _
    // Predicated region
    $region66: #{tpu_custom_call.1} parent=1 // pred_check
      _
    $region67: #{tpu_custom_call.1} parent=1 // pred_check_branch
      %138 = sbr.rel (0) target = $region69
    $region68: #{tpu_custom_call.1} parent=1 // pred_region
      %139 = dma.done [#allocation12], 16384
    $region69: #{tpu_custom_call.1} parent=1 // pred_fallthru
      _
    // Predicated region
    $region70: #{tpu_custom_call.1} parent=1 // pred_check
      _
    $region71: #{tpu_custom_call.1} parent=1 // pred_check_branch
      %141 = sbr.rel (0) target = $region73
    $region72: #{tpu_custom_call.1} parent=1 // pred_region
      %142 = dma.done [#allocation15], 16384
    $region73: #{tpu_custom_call.1} parent=1 // pred_fallthru
      _
    %v143 = vld [vmem:[#allocation2] sm:$0xff]
    %v144 = vld [vmem:[#allocation11] sm:$0xff]
    %v145 = vld [vmem:[#allocation11 + $0x8] sm:$0xff]
    %v146 = vld [vmem:[#allocation11 + $0x10] sm:$0xff]
    %v147 = vld [vmem:[#allocation11 + $0x18] sm:$0xff]
    %v148 = vld [vmem:[#allocation11 + $0x20] sm:$0xff]
    %v149 = vld [vmem:[#allocation11 + $0x28] sm:$0xff]
    %v150 = vld [vmem:[#allocation11 + $0x30] sm:$0xff]
    %v151 = vld [vmem:[#allocation11 + $0x38] sm:$0xff]
    %v152 = vld [vmem:[#allocation11 + $0x40] sm:$0xff]
    %v153 = vld [vmem:[#allocation11 + $0x48] sm:$0xff]
    %v154 = vld [vmem:[#allocation11 + $0x50] sm:$0xff]
    %v155 = vld [vmem:[#allocation11 + $0x58] sm:$0xff]
    %v156 = vld [vmem:[#allocation11 + $0x60] sm:$0xff]
    %v157 = vld [vmem:[#allocation11 + $0x68] sm:$0xff]
    %v158 = vld [vmem:[#allocation11 + $0x70] sm:$0xff]
    %v159 = vld [vmem:[#allocation11 + $0x78] sm:$0xff]
    %v160 = vld [vmem:[#allocation11 + $0x80] sm:$0xff]
    %v161 = vld [vmem:[#allocation11 + $0x88] sm:$0xff]
    %v162 = vld [vmem:[#allocation11 + $0x90] sm:$0xff]
    %v163 = vld [vmem:[#allocation11 + $0x98] sm:$0xff]
    %v164 = vld [vmem:[#allocation11 + $0xa0] sm:$0xff]
    %v165 = vld [vmem:[#allocation11 + $0xa8] sm:$0xff]
    %v166 = vld [vmem:[#allocation11 + $0xb0] sm:$0xff]
    %v167 = vld [vmem:[#allocation11 + $0xb8] sm:$0xff]
    %v168 = vld [vmem:[#allocation11 + $0xc0] sm:$0xff]
    %v169 = vld [vmem:[#allocation11 + $0xc8] sm:$0xff]
    %v170 = vld [vmem:[#allocation11 + $0xd0] sm:$0xff]
    %v171 = vld [vmem:[#allocation11 + $0xd8] sm:$0xff]
    %v172 = vld [vmem:[#allocation11 + $0xe0] sm:$0xff]
    %v173 = vld [vmem:[#allocation11 + $0xe8] sm:$0xff]
    %v174 = vld [vmem:[#allocation11 + $0xf0] sm:$0xff]
    %v175 = vld [vmem:[#allocation11 + $0xf8] sm:$0xff]
    %v176 = vld [vmem:[#allocation11 + $0x100] sm:$0xff]
    %v177 = vld [vmem:[#allocation11 + $0x108] sm:$0xff]
    %v178 = vld [vmem:[#allocation11 + $0x110] sm:$0xff]
    %v179 = vld [vmem:[#allocation11 + $0x118] sm:$0xff]
    %v180 = vld [vmem:[#allocation11 + $0x120] sm:$0xff]
    %v181 = vld [vmem:[#allocation11 + $0x128] sm:$0xff]
    %v182 = vld [vmem:[#allocation11 + $0x130] sm:$0xff]
    %v183 = vld [vmem:[#allocation11 + $0x138] sm:$0xff]
    %v184 = vld [vmem:[#allocation11 + $0x140] sm:$0xff]
    %v185 = vld [vmem:[#allocation11 + $0x148] sm:$0xff]
    %v186 = vld [vmem:[#allocation11 + $0x150] sm:$0xff]
    %v187 = vld [vmem:[#allocation11 + $0x158] sm:$0xff]
    %v188 = vld [vmem:[#allocation11 + $0x160] sm:$0xff]
    %v189 = vld [vmem:[#allocation11 + $0x168] sm:$0xff]
    %v190 = vld [vmem:[#allocation11 + $0x170] sm:$0xff]
    %v191 = vld [vmem:[#allocation11 + $0x178] sm:$0xff]
    %v192 = vld [vmem:[#allocation11 + $0x180] sm:$0xff]
    %v193 = vld [vmem:[#allocation11 + $0x188] sm:$0xff]
    %v194 = vld [vmem:[#allocation11 + $0x190] sm:$0xff]
    %v195 = vld [vmem:[#allocation11 + $0x198] sm:$0xff]
    %v196 = vld [vmem:[#allocation11 + $0x1a0] sm:$0xff]
    %v197 = vld [vmem:[#allocation11 + $0x1a8] sm:$0xff]
    %v198 = vld [vmem:[#allocation11 + $0x1b0] sm:$0xff]
    %v199 = vld [vmem:[#allocation11 + $0x1b8] sm:$0xff]
    %v200 = vld [vmem:[#allocation11 + $0x1c0] sm:$0xff]
    %v201 = vld [vmem:[#allocation11 + $0x1c8] sm:$0xff]
    %v202 = vld [vmem:[#allocation11 + $0x1d0] sm:$0xff]
    %v203 = vld [vmem:[#allocation11 + $0x1d8] sm:$0xff]
    %v204 = vld [vmem:[#allocation11 + $0x1e0] sm:$0xff]
    %v205 = vld [vmem:[#allocation11 + $0x1e8] sm:$0xff]
    %v206 = vld [vmem:[#allocation11 + $0x1f0] sm:$0xff]
    %v207 = vld [vmem:[#allocation11 + $0x1f8] sm:$0xff]
    %v208 = vld [vmem:[#allocation11 + $0x200] sm:$0xff]
    %v209 = vld [vmem:[#allocation11 + $0x208] sm:$0xff]
    %v210 = vld [vmem:[#allocation11 + $0x210] sm:$0xff]
    %v211 = vld [vmem:[#allocation11 + $0x218] sm:$0xff]
    %v212 = vld [vmem:[#allocation11 + $0x220] sm:$0xff]
    %v213 = vld [vmem:[#allocation11 + $0x228] sm:$0xff]
    %v214 = vld [vmem:[#allocation11 + $0x230] sm:$0xff]
    %v215 = vld [vmem:[#allocation11 + $0x238] sm:$0xff]
    %v216 = vld [vmem:[#allocation11 + $0x240] sm:$0xff]
    %v217 = vld [vmem:[#allocation11 + $0x248] sm:$0xff]
    %v218 = vld [vmem:[#allocation11 + $0x250] sm:$0xff]
    %v219 = vld [vmem:[#allocation11 + $0x258] sm:$0xff]
    %v220 = vld [vmem:[#allocation11 + $0x260] sm:$0xff]
    %v221 = vld [vmem:[#allocation11 + $0x268] sm:$0xff]
    %v222 = vld [vmem:[#allocation11 + $0x270] sm:$0xff]
    %v223 = vld [vmem:[#allocation11 + $0x278] sm:$0xff]
    %v224 = vld [vmem:[#allocation11 + $0x280] sm:$0xff]
    %v225 = vld [vmem:[#allocation11 + $0x288] sm:$0xff]
    %v226 = vld [vmem:[#allocation11 + $0x290] sm:$0xff]
    %v227 = vld [vmem:[#allocation11 + $0x298] sm:$0xff]
    %v228 = vld [vmem:[#allocation11 + $0x2a0] sm:$0xff]
    %v229 = vld [vmem:[#allocation11 + $0x2a8] sm:$0xff]
    %v230 = vld [vmem:[#allocation11 + $0x2b0] sm:$0xff]
    %v231 = vld [vmem:[#allocation11 + $0x2b8] sm:$0xff]
    %v232 = vld [vmem:[#allocation11 + $0x2c0] sm:$0xff]
    %v233 = vld [vmem:[#allocation11 + $0x2c8] sm:$0xff]
    %v234 = vld [vmem:[#allocation11 + $0x2d0] sm:$0xff]
    %v235 = vld [vmem:[#allocation11 + $0x2d8] sm:$0xff]
    %v236 = vld [vmem:[#allocation11 + $0x2e0] sm:$0xff]
    %v237 = vld [vmem:[#allocation11 + $0x2e8] sm:$0xff]
    %v238 = vld [vmem:[#allocation11 + $0x2f0] sm:$0xff]
    %v239 = vld [vmem:[#allocation11 + $0x2f8] sm:$0xff]
    %v240 = vld [vmem:[#allocation11 + $0x300] sm:$0xff]
    %v241 = vld [vmem:[#allocation11 + $0x308] sm:$0xff]
    %v242 = vld [vmem:[#allocation11 + $0x310] sm:$0xff]
    %v243 = vld [vmem:[#allocation11 + $0x318] sm:$0xff]
    %v244 = vld [vmem:[#allocation11 + $0x320] sm:$0xff]
    %v245 = vld [vmem:[#allocation11 + $0x328] sm:$0xff]
    %v246 = vld [vmem:[#allocation11 + $0x330] sm:$0xff]
    %v247 = vld [vmem:[#allocation11 + $0x338] sm:$0xff]
    %v248 = vld [vmem:[#allocation11 + $0x340] sm:$0xff]
    %v249 = vld [vmem:[#allocation11 + $0x348] sm:$0xff]
    %v250 = vld [vmem:[#allocation11 + $0x350] sm:$0xff]
    %v251 = vld [vmem:[#allocation11 + $0x358] sm:$0xff]
    %v252 = vld [vmem:[#allocation11 + $0x360] sm:$0xff]
    %v253 = vld [vmem:[#allocation11 + $0x368] sm:$0xff]
    %v254 = vld [vmem:[#allocation11 + $0x370] sm:$0xff]
    %v255 = vld [vmem:[#allocation11 + $0x378] sm:$0xff]
    %v256 = vld [vmem:[#allocation11 + $0x380] sm:$0xff]
    %v257 = vld [vmem:[#allocation11 + $0x388] sm:$0xff]
    %v258 = vld [vmem:[#allocation11 + $0x390] sm:$0xff]
    %v259 = vld [vmem:[#allocation11 + $0x398] sm:$0xff]
    %v260 = vld [vmem:[#allocation11 + $0x3a0] sm:$0xff]
    %v261 = vld [vmem:[#allocation11 + $0x3a8] sm:$0xff]
    %v262 = vld [vmem:[#allocation11 + $0x3b0] sm:$0xff]
    %v263 = vld [vmem:[#allocation11 + $0x3b8] sm:$0xff]
    %v264 = vld [vmem:[#allocation11 + $0x3c0] sm:$0xff]
    %v265 = vld [vmem:[#allocation11 + $0x3c8] sm:$0xff]
    %v266 = vld [vmem:[#allocation11 + $0x3d0] sm:$0xff]
    %v267 = vld [vmem:[#allocation11 + $0x3d8] sm:$0xff]
    %v268 = vld [vmem:[#allocation11 + $0x3e0] sm:$0xff]
    %v269 = vld [vmem:[#allocation11 + $0x3e8] sm:$0xff]
    %v270 = vld [vmem:[#allocation11 + $0x3f0] sm:$0xff]
    %v271 = vld [vmem:[#allocation11 + $0x3f8] sm:$0xff]
    %v273 = vcombine.high %v143, %v143
    %v275 = vand.u32 %v145, 4294901760
    %276 = vmatprep.subr.mxu0 %v275
    %v277 = vand.u32 %v144, 4294901760
    %278 = vmatpush1.msra.mxu0 %v277
    %v279 = vand.u32 %v149, 4294901760
    %280 = vmatprep.subr.mxu0 %v279
    %v281 = vand.u32 %v148, 4294901760
    %282 = vmatpush1.msra.mxu0 %v281
    %v283 = vand.u32 %v153, 4294901760
    %284 = vmatprep.subr.mxu0 %v283
    %v285 = vand.u32 %v152, 4294901760
    %286 = vmatpush1.msra.mxu0 %v285
    %v287 = vand.u32 %v157, 4294901760
    %288 = vmatprep.subr.mxu0 %v287
    %v289 = vand.u32 %v156, 4294901760
    %290 = vmatpush1.msra.mxu0 %v289
    %v291 = vand.u32 %v161, 4294901760
    %292 = vmatprep.subr.mxu0 %v291
    %v293 = vand.u32 %v160, 4294901760
    %294 = vmatpush1.msra.mxu0 %v293
    %v295 = vand.u32 %v165, 4294901760
    %296 = vmatprep.subr.mxu0 %v295
    %v297 = vand.u32 %v164, 4294901760
    %298 = vmatpush1.msra.mxu0 %v297
    %v299 = vand.u32 %v169, 4294901760
    %300 = vmatprep.subr.mxu0 %v299
    %v301 = vand.u32 %v168, 4294901760
    %302 = vmatpush1.msra.mxu0 %v301
    %v303 = vand.u32 %v173, 4294901760
    %304 = vmatprep.subr.mxu0 %v303
    %v305 = vand.u32 %v172, 4294901760
    %306 = vmatpush1.msra.mxu0 %v305
    %v307 = vand.u32 %v177, 4294901760
    %308 = vmatprep.subr.mxu0 %v307
    %v309 = vand.u32 %v176, 4294901760
    %310 = vmatpush1.msra.mxu0 %v309
    %v311 = vand.u32 %v181, 4294901760
    %312 = vmatprep.subr.mxu0 %v311
    %v313 = vand.u32 %v180, 4294901760
    %314 = vmatpush1.msra.mxu0 %v313
    %v315 = vand.u32 %v185, 4294901760
    %316 = vmatprep.subr.mxu0 %v315
    %v317 = vand.u32 %v184, 4294901760
    %318 = vmatpush1.msra.mxu0 %v317
    %v319 = vand.u32 %v189, 4294901760
    %320 = vmatprep.subr.mxu0 %v319
    %v321 = vand.u32 %v188, 4294901760
    %322 = vmatpush1.msra.mxu0 %v321
    %v323 = vand.u32 %v193, 4294901760
    %324 = vmatprep.subr.mxu0 %v323
    %v325 = vand.u32 %v192, 4294901760
    %326 = vmatpush1.msra.mxu0 %v325
    %v327 = vand.u32 %v197, 4294901760
    %328 = vmatprep.subr.mxu0 %v327
    %v329 = vand.u32 %v196, 4294901760
    %330 = vmatpush1.msra.mxu0 %v329
    %v331 = vand.u32 %v201, 4294901760
    %332 = vmatprep.subr.mxu0 %v331
    %v333 = vand.u32 %v200, 4294901760
    %334 = vmatpush1.msra.mxu0 %v333
    %v335 = vand.u32 %v205, 4294901760
    %336 = vmatprep.subr.mxu0 %v335
    %v337 = vand.u32 %v204, 4294901760
    %338 = vmatpush1.msra.mxu0 %v337
    %v339 = vand.u32 %v209, 4294901760
    %340 = vmatprep.subr.mxu0 %v339
    %v341 = vand.u32 %v208, 4294901760
    %342 = vmatpush1.msra.mxu0 %v341
    %v343 = vand.u32 %v213, 4294901760
    %344 = vmatprep.subr.mxu0 %v343
    %v345 = vand.u32 %v212, 4294901760
    %346 = vmatpush1.msra.mxu0 %v345
    %v347 = vand.u32 %v217, 4294901760
    %348 = vmatprep.subr.mxu0 %v347
    %v349 = vand.u32 %v216, 4294901760
    %350 = vmatpush1.msra.mxu0 %v349
    %v351 = vand.u32 %v221, 4294901760
    %352 = vmatprep.subr.mxu0 %v351
    %v353 = vand.u32 %v220, 4294901760
    %354 = vmatpush1.msra.mxu0 %v353
    %v355 = vand.u32 %v225, 4294901760
    %356 = vmatprep.subr.mxu0 %v355
    %v357 = vand.u32 %v224, 4294901760
    %358 = vmatpush1.msra.mxu0 %v357
    %v359 = vand.u32 %v229, 4294901760
    %360 = vmatprep.subr.mxu0 %v359
    %v361 = vand.u32 %v228, 4294901760
    %362 = vmatpush1.msra.mxu0 %v361
    %v363 = vand.u32 %v233, 4294901760
    %364 = vmatprep.subr.mxu0 %v363
    %v365 = vand.u32 %v232, 4294901760
    %366 = vmatpush1.msra.mxu0 %v365
    %v367 = vand.u32 %v237, 4294901760
    %368 = vmatprep.subr.mxu0 %v367
    %v369 = vand.u32 %v236, 4294901760
    %370 = vmatpush1.msra.mxu0 %v369
    %v371 = vand.u32 %v241, 4294901760
    %372 = vmatprep.subr.mxu0 %v371
    %v373 = vand.u32 %v240, 4294901760
    %374 = vmatpush1.msra.mxu0 %v373
    %v375 = vand.u32 %v245, 4294901760
    %376 = vmatprep.subr.mxu0 %v375
    %v377 = vand.u32 %v244, 4294901760
    %378 = vmatpush1.msra.mxu0 %v377
    %v379 = vand.u32 %v249, 4294901760
    %380 = vmatprep.subr.mxu0 %v379
    %v381 = vand.u32 %v248, 4294901760
    %382 = vmatpush1.msra.mxu0 %v381
    %v383 = vand.u32 %v253, 4294901760
    %384 = vmatprep.subr.mxu0 %v383
    %v385 = vand.u32 %v252, 4294901760
    %386 = vmatpush1.msra.mxu0 %v385
    %v387 = vand.u32 %v257, 4294901760
    %388 = vmatprep.subr.mxu0 %v387
    %v389 = vand.u32 %v256, 4294901760
    %390 = vmatpush1.msra.mxu0 %v389
    %v391 = vand.u32 %v261, 4294901760
    %392 = vmatprep.subr.mxu0 %v391
    %v393 = vand.u32 %v260, 4294901760
    %394 = vmatpush1.msra.mxu0 %v393
    %v395 = vand.u32 %v265, 4294901760
    %396 = vmatprep.subr.mxu0 %v395
    %v397 = vand.u32 %v264, 4294901760
    %398 = vmatpush1.msra.mxu0 %v397
    %v399 = vand.u32 %v269, 4294901760
    %400 = vmatprep.subr.mxu0 %v399
    %v401 = vand.u32 %v268, 4294901760
    %402 = vmatpush1.msra.mxu0 %v401
    %v403 = vand.u32 %v273, 4294901760
    %v404 = vsub.f32 %v273, %v403
    %v405 = vand.u32 %v404, 4294901760
    %v406 = vsub.f32 %v404, %v405
    %v407 = vand.u32 %v406, 4294901760
    %408 = vmatprep.mubr.f32.mxu0 %v407
    %v409 = vand.u32 %v143, 4294901760
    %v410 = vsub.f32 %v143, %v409
    %v411 = vand.u32 %v410, 4294901760
    %v412 = vsub.f32 %v410, %v411
    %v413 = vand.u32 %v412, 4294901760
    %414 = vmatmul.mubr.f32.gmra.mrb[0].mxu0 %v413
    %v415 = vpop.f32.mrb[0].mxu0
    %v416 = vadd.f32 0.0, %v415
    %v417 = vpop.f32.mrb[0].mxu0
    %v418 = vadd.f32 0.0, %v417
    %419 = vdwg.mxu0
    %v420 = vand.u32 %v145, 4294901760
    %v421 = vsub.f32 %v145, %v420
    %v422 = vand.u32 %v421, 4294901760
    %v423 = vsub.f32 %v421, %v422
    %v424 = vand.u32 %v423, 4294901760
    %425 = vmatprep.subr.mxu0 %v424
    %v426 = vand.u32 %v144, 4294901760
    %v427 = vsub.f32 %v144, %v426
    %v428 = vand.u32 %v427, 4294901760
    %v429 = vsub.f32 %v427, %v428
    %v430 = vand.u32 %v429, 4294901760
    %431 = vmatpush1.msra.mxu0 %v430
    %v432 = vand.u32 %v149, 4294901760
    %v433 = vsub.f32 %v149, %v432
    %v434 = vand.u32 %v433, 4294901760
    %v435 = vsub.f32 %v433, %v434
    %v436 = vand.u32 %v435, 4294901760
    %437 = vmatprep.subr.mxu0 %v436
    %v438 = vand.u32 %v148, 4294901760
    %v439 = vsub.f32 %v148, %v438
    %v440 = vand.u32 %v439, 4294901760
    %v441 = vsub.f32 %v439, %v440
    %v442 = vand.u32 %v441, 4294901760
    %443 = vmatpush1.msra.mxu0 %v442
    %v444 = vand.u32 %v153, 4294901760
    %v445 = vsub.f32 %v153, %v444
    %v446 = vand.u32 %v445, 4294901760
    %v447 = vsub.f32 %v445, %v446
    %v448 = vand.u32 %v447, 4294901760
    %449 = vmatprep.subr.mxu0 %v448
    %v450 = vand.u32 %v152, 4294901760
    %v451 = vsub.f32 %v152, %v450
    %v452 = vand.u32 %v451, 4294901760
    %v453 = vsub.f32 %v451, %v452
    %v454 = vand.u32 %v453, 4294901760
    %455 = vmatpush1.msra.mxu0 %v454
    %v456 = vand.u32 %v157, 4294901760
    %v457 = vsub.f32 %v157, %v456
    %v458 = vand.u32 %v457, 4294901760
    %v459 = vsub.f32 %v457, %v458
    %v460 = vand.u32 %v459, 4294901760
    %461 = vmatprep.subr.mxu0 %v460
    %v462 = vand.u32 %v156, 4294901760
    %v463 = vsub.f32 %v156, %v462
    %v464 = vand.u32 %v463, 4294901760
    %v465 = vsub.f32 %v463, %v464
    %v466 = vand.u32 %v465, 4294901760
    %467 = vmatpush1.msra.mxu0 %v466
    %v468 = vand.u32 %v161, 4294901760
    %v469 = vsub.f32 %v161, %v468
    %v470 = vand.u32 %v469, 4294901760
    %v471 = vsub.f32 %v469, %v470
    %v472 = vand.u32 %v471, 4294901760
    %473 = vmatprep.subr.mxu0 %v472
    %v474 = vand.u32 %v160, 4294901760
    %v475 = vsub.f32 %v160, %v474
    %v476 = vand.u32 %v475, 4294901760
    %v477 = vsub.f32 %v475, %v476
    %v478 = vand.u32 %v477, 4294901760
    %479 = vmatpush1.msra.mxu0 %v478
    %v480 = vand.u32 %v165, 4294901760
    %v481 = vsub.f32 %v165, %v480
    %v482 = vand.u32 %v481, 4294901760
    %v483 = vsub.f32 %v481, %v482
    %v484 = vand.u32 %v483, 4294901760
    %485 = vmatprep.subr.mxu0 %v484
    %v486 = vand.u32 %v164, 4294901760
    %v487 = vsub.f32 %v164, %v486
    %v488 = vand.u32 %v487, 4294901760
    %v489 = vsub.f32 %v487, %v488
    %v490 = vand.u32 %v489, 4294901760
    %491 = vmatpush1.msra.mxu0 %v490
    %v492 = vand.u32 %v169, 4294901760
    %v493 = vsub.f32 %v169, %v492
    %v494 = vand.u32 %v493, 4294901760
    %v495 = vsub.f32 %v493, %v494
    %v496 = vand.u32 %v495, 4294901760
    %497 = vmatprep.subr.mxu0 %v496
    %v498 = vand.u32 %v168, 4294901760
    %v499 = vsub.f32 %v168, %v498
    %v500 = vand.u32 %v499, 4294901760
    %v501 = vsub.f32 %v499, %v500
    %v502 = vand.u32 %v501, 4294901760
    %503 = vmatpush1.msra.mxu0 %v502
    %v504 = vand.u32 %v173, 4294901760
    %v505 = vsub.f32 %v173, %v504
    %v506 = vand.u32 %v505, 4294901760
    %v507 = vsub.f32 %v505, %v506
    %v508 = vand.u32 %v507, 4294901760
    %509 = vmatprep.subr.mxu0 %v508
    %v510 = vand.u32 %v172, 4294901760
    %v511 = vsub.f32 %v172, %v510
    %v512 = vand.u32 %v511, 4294901760
    %v513 = vsub.f32 %v511, %v512
    %v514 = vand.u32 %v513, 4294901760
    %515 = vmatpush1.msra.mxu0 %v514
    %v516 = vand.u32 %v177, 4294901760
    %v517 = vsub.f32 %v177, %v516
    %v518 = vand.u32 %v517, 4294901760
    %v519 = vsub.f32 %v517, %v518
    %v520 = vand.u32 %v519, 4294901760
    %521 = vmatprep.subr.mxu0 %v520
    %v522 = vand.u32 %v176, 4294901760
    %v523 = vsub.f32 %v176, %v522
    %v524 = vand.u32 %v523, 4294901760
    %v525 = vsub.f32 %v523, %v524
    %v526 = vand.u32 %v525, 4294901760
    %527 = vmatpush1.msra.mxu0 %v526
    %v528 = vand.u32 %v181, 4294901760
    %v529 = vsub.f32 %v181, %v528
    %v530 = vand.u32 %v529, 4294901760
    %v531 = vsub.f32 %v529, %v530
    %v532 = vand.u32 %v531, 4294901760
    %533 = vmatprep.subr.mxu0 %v532
    %v534 = vand.u32 %v180, 4294901760
    %v535 = vsub.f32 %v180, %v534
    %v536 = vand.u32 %v535, 4294901760
    %v537 = vsub.f32 %v535, %v536
    %v538 = vand.u32 %v537, 4294901760
    %539 = vmatpush1.msra.mxu0 %v538
    %v540 = vand.u32 %v185, 4294901760
    %v541 = vsub.f32 %v185, %v540
    %v542 = vand.u32 %v541, 4294901760
    %v543 = vsub.f32 %v541, %v542
    %v544 = vand.u32 %v543, 4294901760
    %545 = vmatprep.subr.mxu0 %v544
    %v546 = vand.u32 %v184, 4294901760
    %v547 = vsub.f32 %v184, %v546
    %v548 = vand.u32 %v547, 4294901760
    %v549 = vsub.f32 %v547, %v548
    %v550 = vand.u32 %v549, 4294901760
    %551 = vmatpush1.msra.mxu0 %v550
    %v552 = vand.u32 %v189, 4294901760
    %v553 = vsub.f32 %v189, %v552
    %v554 = vand.u32 %v553, 4294901760
    %v555 = vsub.f32 %v553, %v554
    %v556 = vand.u32 %v555, 4294901760
    %557 = vmatprep.subr.mxu0 %v556
    %v558 = vand.u32 %v188, 4294901760
    %v559 = vsub.f32 %v188, %v558
    %v560 = vand.u32 %v559, 4294901760
    %v561 = vsub.f32 %v559, %v560
    %v562 = vand.u32 %v561, 4294901760
    %563 = vmatpush1.msra.mxu0 %v562
    %v564 = vand.u32 %v193, 4294901760
    %v565 = vsub.f32 %v193, %v564
    %v566 = vand.u32 %v565, 4294901760
    %v567 = vsub.f32 %v565, %v566
    %v568 = vand.u32 %v567, 4294901760
    %569 = vmatprep.subr.mxu0 %v568
    %v570 = vand.u32 %v192, 4294901760
    %v571 = vsub.f32 %v192, %v570
    %v572 = vand.u32 %v571, 4294901760
    %v573 = vsub.f32 %v571, %v572
    %v574 = vand.u32 %v573, 4294901760
    %575 = vmatpush1.msra.mxu0 %v574
    %v576 = vand.u32 %v197, 4294901760
    %v577 = vsub.f32 %v197, %v576
    %v578 = vand.u32 %v577, 4294901760
    %v579 = vsub.f32 %v577, %v578
    %v580 = vand.u32 %v579, 4294901760
    %581 = vmatprep.subr.mxu0 %v580
    %v582 = vand.u32 %v196, 4294901760
    %v583 = vsub.f32 %v196, %v582
    %v584 = vand.u32 %v583, 4294901760
    %v585 = vsub.f32 %v583, %v584
    %v586 = vand.u32 %v585, 4294901760
    %587 = vmatpush1.msra.mxu0 %v586
    %v588 = vand.u32 %v201, 4294901760
    %v589 = vsub.f32 %v201, %v588
    %v590 = vand.u32 %v589, 4294901760
    %v591 = vsub.f32 %v589, %v590
    %v592 = vand.u32 %v591, 4294901760
    %593 = vmatprep.subr.mxu0 %v592
    %v594 = vand.u32 %v200, 4294901760
    %v595 = vsub.f32 %v200, %v594
    %v596 = vand.u32 %v595, 4294901760
    %v597 = vsub.f32 %v595, %v596
    %v598 = vand.u32 %v597, 4294901760
    %599 = vmatpush1.msra.mxu0 %v598
    %v600 = vand.u32 %v205, 4294901760
    %v601 = vsub.f32 %v205, %v600
    %v602 = vand.u32 %v601, 4294901760
    %v603 = vsub.f32 %v601, %v602
    %v604 = vand.u32 %v603, 4294901760
    %605 = vmatprep.subr.mxu0 %v604
    %v606 = vand.u32 %v204, 4294901760
    %v607 = vsub.f32 %v204, %v606
    %v608 = vand.u32 %v607, 4294901760
    %v609 = vsub.f32 %v607, %v608
    %v610 = vand.u32 %v609, 4294901760
    %611 = vmatpush1.msra.mxu0 %v610
    %v612 = vand.u32 %v209, 4294901760
    %v613 = vsub.f32 %v209, %v612
    %v614 = vand.u32 %v613, 4294901760
    %v615 = vsub.f32 %v613, %v614
    %v616 = vand.u32 %v615, 4294901760
    %617 = vmatprep.subr.mxu0 %v616
    %v618 = vand.u32 %v208, 4294901760
    %v619 = vsub.f32 %v208, %v618
    %v620 = vand.u32 %v619, 4294901760
    %v621 = vsub.f32 %v619, %v620
    %v622 = vand.u32 %v621, 4294901760
    %623 = vmatpush1.msra.mxu0 %v622
    %v624 = vand.u32 %v213, 4294901760
    %v625 = vsub.f32 %v213, %v624
    %v626 = vand.u32 %v625, 4294901760
    %v627 = vsub.f32 %v625, %v626
    %v628 = vand.u32 %v627, 4294901760
    %629 = vmatprep.subr.mxu0 %v628
    %v630 = vand.u32 %v212, 4294901760
    %v631 = vsub.f32 %v212, %v630
    %v632 = vand.u32 %v631, 4294901760
    %v633 = vsub.f32 %v631, %v632
    %v634 = vand.u32 %v633, 4294901760
    %635 = vmatpush1.msra.mxu0 %v634
    %v636 = vand.u32 %v217, 4294901760
    %v637 = vsub.f32 %v217, %v636
    %v638 = vand.u32 %v637, 4294901760
    %v639 = vsub.f32 %v637, %v638
    %v640 = vand.u32 %v639, 4294901760
    %641 = vmatprep.subr.mxu0 %v640
    %v642 = vand.u32 %v216, 4294901760
    %v643 = vsub.f32 %v216, %v642
    %v644 = vand.u32 %v643, 4294901760
    %v645 = vsub.f32 %v643, %v644
    %v646 = vand.u32 %v645, 4294901760
    %647 = vmatpush1.msra.mxu0 %v646
    %v648 = vand.u32 %v221, 4294901760
    %v649 = vsub.f32 %v221, %v648
    %v650 = vand.u32 %v649, 4294901760
    %v651 = vsub.f32 %v649, %v650
    %v652 = vand.u32 %v651, 4294901760
    %653 = vmatprep.subr.mxu0 %v652
    %v654 = vand.u32 %v220, 4294901760
    %v655 = vsub.f32 %v220, %v654
    %v656 = vand.u32 %v655, 4294901760
    %v657 = vsub.f32 %v655, %v656
    %v658 = vand.u32 %v657, 4294901760
    %659 = vmatpush1.msra.mxu0 %v658
    %v660 = vand.u32 %v225, 4294901760
    %v661 = vsub.f32 %v225, %v660
    %v662 = vand.u32 %v661, 4294901760
    %v663 = vsub.f32 %v661, %v662
    %v664 = vand.u32 %v663, 4294901760
    %665 = vmatprep.subr.mxu0 %v664
    %v666 = vand.u32 %v224, 4294901760
    %v667 = vsub.f32 %v224, %v666
    %v668 = vand.u32 %v667, 4294901760
    %v669 = vsub.f32 %v667, %v668
    %v670 = vand.u32 %v669, 4294901760
    %671 = vmatpush1.msra.mxu0 %v670
    %v672 = vand.u32 %v229, 4294901760
    %v673 = vsub.f32 %v229, %v672
    %v674 = vand.u32 %v673, 4294901760
    %v675 = vsub.f32 %v673, %v674
    %v676 = vand.u32 %v675, 4294901760
    %677 = vmatprep.subr.mxu0 %v676
    %v678 = vand.u32 %v228, 4294901760
    %v679 = vsub.f32 %v228, %v678
    %v680 = vand.u32 %v679, 4294901760
    %v681 = vsub.f32 %v679, %v680
    %v682 = vand.u32 %v681, 4294901760
    %683 = vmatpush1.msra.mxu0 %v682
    %v684 = vand.u32 %v233, 4294901760
    %v685 = vsub.f32 %v233, %v684
    %v686 = vand.u32 %v685, 4294901760
    %v687 = vsub.f32 %v685, %v686
    %v688 = vand.u32 %v687, 4294901760
    %689 = vmatprep.subr.mxu0 %v688
    %v690 = vand.u32 %v232, 4294901760
    %v691 = vsub.f32 %v232, %v690
    %v692 = vand.u32 %v691, 4294901760
    %v693 = vsub.f32 %v691, %v692
    %v694 = vand.u32 %v693, 4294901760
    %695 = vmatpush1.msra.mxu0 %v694
    %v696 = vand.u32 %v237, 4294901760
    %v697 = vsub.f32 %v237, %v696
    %v698 = vand.u32 %v697, 4294901760
    %v699 = vsub.f32 %v697, %v698
    %v700 = vand.u32 %v699, 4294901760
    %701 = vmatprep.subr.mxu0 %v700
    %v702 = vand.u32 %v236, 4294901760
    %v703 = vsub.f32 %v236, %v702
    %v704 = vand.u32 %v703, 4294901760
    %v705 = vsub.f32 %v703, %v704
    %v706 = vand.u32 %v705, 4294901760
    %707 = vmatpush1.msra.mxu0 %v706
    %v708 = vand.u32 %v241, 4294901760
    %v709 = vsub.f32 %v241, %v708
    %v710 = vand.u32 %v709, 4294901760
    %v711 = vsub.f32 %v709, %v710
    %v712 = vand.u32 %v711, 4294901760
    %713 = vmatprep.subr.mxu0 %v712
    %v714 = vand.u32 %v240, 4294901760
    %v715 = vsub.f32 %v240, %v714
    %v716 = vand.u32 %v715, 4294901760
    %v717 = vsub.f32 %v715, %v716
    %v718 = vand.u32 %v717, 4294901760
    %719 = vmatpush1.msra.mxu0 %v718
    %v720 = vand.u32 %v245, 4294901760
    %v721 = vsub.f32 %v245, %v720
    %v722 = vand.u32 %v721, 4294901760
    %v723 = vsub.f32 %v721, %v722
    %v724 = vand.u32 %v723, 4294901760
    %725 = vmatprep.subr.mxu0 %v724
    %v726 = vand.u32 %v244, 4294901760
    %v727 = vsub.f32 %v244, %v726
    %v728 = vand.u32 %v727, 4294901760
    %v729 = vsub.f32 %v727, %v728
    %v730 = vand.u32 %v729, 4294901760
    %731 = vmatpush1.msra.mxu0 %v730
    %v732 = vand.u32 %v249, 4294901760
    %v733 = vsub.f32 %v249, %v732
    %v734 = vand.u32 %v733, 4294901760
    %v735 = vsub.f32 %v733, %v734
    %v736 = vand.u32 %v735, 4294901760
    %737 = vmatprep.subr.mxu0 %v736
    %v738 = vand.u32 %v248, 4294901760
    %v739 = vsub.f32 %v248, %v738
    %v740 = vand.u32 %v739, 4294901760
    %v741 = vsub.f32 %v739, %v740
    %v742 = vand.u32 %v741, 4294901760
    %743 = vmatpush1.msra.mxu0 %v742
    %v744 = vand.u32 %v253, 4294901760
    %v745 = vsub.f32 %v253, %v744
    %v746 = vand.u32 %v745, 4294901760
    %v747 = vsub.f32 %v745, %v746
    %v748 = vand.u32 %v747, 4294901760
    %749 = vmatprep.subr.mxu0 %v748
    %v750 = vand.u32 %v252, 4294901760
    %v751 = vsub.f32 %v252, %v750
    %v752 = vand.u32 %v751, 4294901760
    %v753 = vsub.f32 %v751, %v752
    %v754 = vand.u32 %v753, 4294901760
    %755 = vmatpush1.msra.mxu0 %v754
    %v756 = vand.u32 %v257, 4294901760
    %v757 = vsub.f32 %v257, %v756
    %v758 = vand.u32 %v757, 4294901760
    %v759 = vsub.f32 %v757, %v758
    %v760 = vand.u32 %v759, 4294901760
    %761 = vmatprep.subr.mxu0 %v760
    %v762 = vand.u32 %v256, 4294901760
    %v763 = vsub.f32 %v256, %v762
    %v764 = vand.u32 %v763, 4294901760
    %v765 = vsub.f32 %v763, %v764
    %v766 = vand.u32 %v765, 4294901760
    %767 = vmatpush1.msra.mxu0 %v766
    %v768 = vand.u32 %v261, 4294901760
    %v769 = vsub.f32 %v261, %v768
    %v770 = vand.u32 %v769, 4294901760
    %v771 = vsub.f32 %v769, %v770
    %v772 = vand.u32 %v771, 4294901760
    %773 = vmatprep.subr.mxu0 %v772
    %v774 = vand.u32 %v260, 4294901760
    %v775 = vsub.f32 %v260, %v774
    %v776 = vand.u32 %v775, 4294901760
    %v777 = vsub.f32 %v775, %v776
    %v778 = vand.u32 %v777, 4294901760
    %779 = vmatpush1.msra.mxu0 %v778
    %v780 = vand.u32 %v265, 4294901760
    %v781 = vsub.f32 %v265, %v780
    %v782 = vand.u32 %v781, 4294901760
    %v783 = vsub.f32 %v781, %v782
    %v784 = vand.u32 %v783, 4294901760
    %785 = vmatprep.subr.mxu0 %v784
    %v786 = vand.u32 %v264, 4294901760
    %v787 = vsub.f32 %v264, %v786
    %v788 = vand.u32 %v787, 4294901760
    %v789 = vsub.f32 %v787, %v788
    %v790 = vand.u32 %v789, 4294901760
    %791 = vmatpush1.msra.mxu0 %v790
    %v792 = vand.u32 %v269, 4294901760
    %v793 = vsub.f32 %v269, %v792
    %v794 = vand.u32 %v793, 4294901760
    %v795 = vsub.f32 %v793, %v794
    %v796 = vand.u32 %v795, 4294901760
    %797 = vmatprep.subr.mxu0 %v796
    %v798 = vand.u32 %v268, 4294901760
    %v799 = vsub.f32 %v268, %v798
    %v800 = vand.u32 %v799, 4294901760
    %v801 = vsub.f32 %v799, %v800
    %v802 = vand.u32 %v801, 4294901760
    %803 = vmatpush1.msra.mxu0 %v802
    %v804 = vand.u32 %v273, 4294901760
    %805 = vmatprep.mubr.f32.mxu0 %v804
    %v806 = vand.u32 %v143, 4294901760
    %807 = vmatmul.mubr.f32.gmra.mrb[0].mxu0 %v806
    %v808 = vpop.f32.mrb[0].mxu0
    %v809 = vadd.f32 %v416, %v808
    %v810 = vpop.f32.mrb[0].mxu0
    %v811 = vadd.f32 %v418, %v810
    %812 = vdwg.mxu0
    %v813 = vand.u32 %v145, 4294901760
    %v814 = vsub.f32 %v145, %v813
    %815 = vmatprep.subr.mxu0 %v814
    %v816 = vand.u32 %v144, 4294901760
    %v817 = vsub.f32 %v144, %v816
    %818 = vmatpush1.msra.mxu0 %v817
    %v819 = vand.u32 %v149, 4294901760
    %v820 = vsub.f32 %v149, %v819
    %821 = vmatprep.subr.mxu0 %v820
    %v822 = vand.u32 %v148, 4294901760
    %v823 = vsub.f32 %v148, %v822
    %824 = vmatpush1.msra.mxu0 %v823
    %v825 = vand.u32 %v153, 4294901760
    %v826 = vsub.f32 %v153, %v825
    %827 = vmatprep.subr.mxu0 %v826
    %v828 = vand.u32 %v152, 4294901760
    %v829 = vsub.f32 %v152, %v828
    %830 = vmatpush1.msra.mxu0 %v829
    %v831 = vand.u32 %v157, 4294901760
    %v832 = vsub.f32 %v157, %v831
    %833 = vmatprep.subr.mxu0 %v832
    %v834 = vand.u32 %v156, 4294901760
    %v835 = vsub.f32 %v156, %v834
    %836 = vmatpush1.msra.mxu0 %v835
    %v837 = vand.u32 %v161, 4294901760
    %v838 = vsub.f32 %v161, %v837
    %839 = vmatprep.subr.mxu0 %v838
    %v840 = vand.u32 %v160, 4294901760
    %v841 = vsub.f32 %v160, %v840
    %842 = vmatpush1.msra.mxu0 %v841
    %v843 = vand.u32 %v165, 4294901760
    %v844 = vsub.f32 %v165, %v843
    %845 = vmatprep.subr.mxu0 %v844
    %v846 = vand.u32 %v164, 4294901760
    %v847 = vsub.f32 %v164, %v846
    %848 = vmatpush1.msra.mxu0 %v847
    %v849 = vand.u32 %v169, 4294901760
    %v850 = vsub.f32 %v169, %v849
    %851 = vmatprep.subr.mxu0 %v850
    %v852 = vand.u32 %v168, 4294901760
    %v853 = vsub.f32 %v168, %v852
    %854 = vmatpush1.msra.mxu0 %v853
    %v855 = vand.u32 %v173, 4294901760
    %v856 = vsub.f32 %v173, %v855
    %857 = vmatprep.subr.mxu0 %v856
    %v858 = vand.u32 %v172, 4294901760
    %v859 = vsub.f32 %v172, %v858
    %860 = vmatpush1.msra.mxu0 %v859
    %v861 = vand.u32 %v177, 4294901760
    %v862 = vsub.f32 %v177, %v861
    %863 = vmatprep.subr.mxu0 %v862
    %v864 = vand.u32 %v176, 4294901760
    %v865 = vsub.f32 %v176, %v864
    %866 = vmatpush1.msra.mxu0 %v865
    %v867 = vand.u32 %v181, 4294901760
    %v868 = vsub.f32 %v181, %v867
    %869 = vmatprep.subr.mxu0 %v868
    %v870 = vand.u32 %v180, 4294901760
    %v871 = vsub.f32 %v180, %v870
    %872 = vmatpush1.msra.mxu0 %v871
    %v873 = vand.u32 %v185, 4294901760
    %v874 = vsub.f32 %v185, %v873
    %875 = vmatprep.subr.mxu0 %v874
    %v876 = vand.u32 %v184, 4294901760
    %v877 = vsub.f32 %v184, %v876
    %878 = vmatpush1.msra.mxu0 %v877
    %v879 = vand.u32 %v189, 4294901760
    %v880 = vsub.f32 %v189, %v879
    %881 = vmatprep.subr.mxu0 %v880
    %v882 = vand.u32 %v188, 4294901760
    %v883 = vsub.f32 %v188, %v882
    %884 = vmatpush1.msra.mxu0 %v883
    %v885 = vand.u32 %v193, 4294901760
    %v886 = vsub.f32 %v193, %v885
    %887 = vmatprep.subr.mxu0 %v886
    %v888 = vand.u32 %v192, 4294901760
    %v889 = vsub.f32 %v192, %v888
    %890 = vmatpush1.msra.mxu0 %v889
    %v891 = vand.u32 %v197, 4294901760
    %v892 = vsub.f32 %v197, %v891
    %893 = vmatprep.subr.mxu0 %v892
    %v894 = vand.u32 %v196, 4294901760
    %v895 = vsub.f32 %v196, %v894
    %896 = vmatpush1.msra.mxu0 %v895
    %v897 = vand.u32 %v201, 4294901760
    %v898 = vsub.f32 %v201, %v897
    %899 = vmatprep.subr.mxu0 %v898
    %v900 = vand.u32 %v200, 4294901760
    %v901 = vsub.f32 %v200, %v900
    %902 = vmatpush1.msra.mxu0 %v901
    %v903 = vand.u32 %v205, 4294901760
    %v904 = vsub.f32 %v205, %v903
    %905 = vmatprep.subr.mxu0 %v904
    %v906 = vand.u32 %v204, 4294901760
    %v907 = vsub.f32 %v204, %v906
    %908 = vmatpush1.msra.mxu0 %v907
    %v909 = vand.u32 %v209, 4294901760
    %v910 = vsub.f32 %v209, %v909
    %911 = vmatprep.subr.mxu0 %v910
    %v912 = vand.u32 %v208, 4294901760
    %v913 = vsub.f32 %v208, %v912
    %914 = vmatpush1.msra.mxu0 %v913
    %v915 = vand.u32 %v213, 4294901760
    %v916 = vsub.f32 %v213, %v915
    %917 = vmatprep.subr.mxu0 %v916
    %v918 = vand.u32 %v212, 4294901760
    %v919 = vsub.f32 %v212, %v918
    %920 = vmatpush1.msra.mxu0 %v919
    %v921 = vand.u32 %v217, 4294901760
    %v922 = vsub.f32 %v217, %v921
    %923 = vmatprep.subr.mxu0 %v922
    %v924 = vand.u32 %v216, 4294901760
    %v925 = vsub.f32 %v216, %v924
    %926 = vmatpush1.msra.mxu0 %v925
    %v927 = vand.u32 %v221, 4294901760
    %v928 = vsub.f32 %v221, %v927
    %929 = vmatprep.subr.mxu0 %v928
    %v930 = vand.u32 %v220, 4294901760
    %v931 = vsub.f32 %v220, %v930
    %932 = vmatpush1.msra.mxu0 %v931
    %v933 = vand.u32 %v225, 4294901760
    %v934 = vsub.f32 %v225, %v933
    %935 = vmatprep.subr.mxu0 %v934
    %v936 = vand.u32 %v224, 4294901760
    %v937 = vsub.f32 %v224, %v936
    %938 = vmatpush1.msra.mxu0 %v937
    %v939 = vand.u32 %v229, 4294901760
    %v940 = vsub.f32 %v229, %v939
    %941 = vmatprep.subr.mxu0 %v940
    %v942 = vand.u32 %v228, 4294901760
    %v943 = vsub.f32 %v228, %v942
    %944 = vmatpush1.msra.mxu0 %v943
    %v945 = vand.u32 %v233, 4294901760
    %v946 = vsub.f32 %v233, %v945
    %947 = vmatprep.subr.mxu0 %v946
    %v948 = vand.u32 %v232, 4294901760
    %v949 = vsub.f32 %v232, %v948
    %950 = vmatpush1.msra.mxu0 %v949
    %v951 = vand.u32 %v237, 4294901760
    %v952 = vsub.f32 %v237, %v951
    %953 = vmatprep.subr.mxu0 %v952
    %v954 = vand.u32 %v236, 4294901760
    %v955 = vsub.f32 %v236, %v954
    %956 = vmatpush1.msra.mxu0 %v955
    %v957 = vand.u32 %v241, 4294901760
    %v958 = vsub.f32 %v241, %v957
    %959 = vmatprep.subr.mxu0 %v958
    %v960 = vand.u32 %v240, 4294901760
    %v961 = vsub.f32 %v240, %v960
    %962 = vmatpush1.msra.mxu0 %v961
    %v963 = vand.u32 %v245, 4294901760
    %v964 = vsub.f32 %v245, %v963
    %965 = vmatprep.subr.mxu0 %v964
    %v966 = vand.u32 %v244, 4294901760
    %v967 = vsub.f32 %v244, %v966
    %968 = vmatpush1.msra.mxu0 %v967
    %v969 = vand.u32 %v249, 4294901760
    %v970 = vsub.f32 %v249, %v969
    %971 = vmatprep.subr.mxu0 %v970
    %v972 = vand.u32 %v248, 4294901760
    %v973 = vsub.f32 %v248, %v972
    %974 = vmatpush1.msra.mxu0 %v973
    %v975 = vand.u32 %v253, 4294901760
    %v976 = vsub.f32 %v253, %v975
    %977 = vmatprep.subr.mxu0 %v976
    %v978 = vand.u32 %v252, 4294901760
    %v979 = vsub.f32 %v252, %v978
    %980 = vmatpush1.msra.mxu0 %v979
    %v981 = vand.u32 %v257, 4294901760
    %v982 = vsub.f32 %v257, %v981
    %983 = vmatprep.subr.mxu0 %v982
    %v984 = vand.u32 %v256, 4294901760
    %v985 = vsub.f32 %v256, %v984
    %986 = vmatpush1.msra.mxu0 %v985
    %v987 = vand.u32 %v261, 4294901760
    %v988 = vsub.f32 %v261, %v987
    %989 = vmatprep.subr.mxu0 %v988
    %v990 = vand.u32 %v260, 4294901760
    %v991 = vsub.f32 %v260, %v990
    %992 = vmatpush1.msra.mxu0 %v991
    %v993 = vand.u32 %v265, 4294901760
    %v994 = vsub.f32 %v265, %v993
    %995 = vmatprep.subr.mxu0 %v994
    %v996 = vand.u32 %v264, 4294901760
    %v997 = vsub.f32 %v264, %v996
    %998 = vmatpush1.msra.mxu0 %v997
    %v999 = vand.u32 %v269, 4294901760
    %v1000 = vsub.f32 %v269, %v999
    %1001 = vmatprep.subr.mxu0 %v1000
    %v1002 = vand.u32 %v268, 4294901760
    %v1003 = vsub.f32 %v268, %v1002
    %1004 = vmatpush1.msra.mxu0 %v1003
    %v1005 = vand.u32 %v273, 4294901760
    %v1006 = vsub.f32 %v273, %v1005
    %1007 = vmatprep.mubr.f32.mxu0 %v1006
    %v1008 = vand.u32 %v143, 4294901760
    %v1009 = vsub.f32 %v143, %v1008
    %1010 = vmatmul.mubr.f32.gmra.mrb[0].mxu0 %v1009
    %v1011 = vpop.f32.mrb[0].mxu0
    %v1012 = vadd.f32 %v809, %v1011
    %v1013 = vpop.f32.mrb[0].mxu0
    %v1014 = vadd.f32 %v811, %v1013
    %1015 = vdwg.mxu0
    %v1016 = vand.u32 %v145, 4294901760
    %1017 = vmatprep.subr.mxu0 %v1016
    %v1018 = vand.u32 %v144, 4294901760
    %1019 = vmatpush1.msra.mxu0 %v1018
    %v1020 = vand.u32 %v149, 4294901760
    %1021 = vmatprep.subr.mxu0 %v1020
    %v1022 = vand.u32 %v148, 4294901760
    %1023 = vmatpush1.msra.mxu0 %v1022
    %v1024 = vand.u32 %v153, 4294901760
    %1025 = vmatprep.subr.mxu0 %v1024
    %v1026 = vand.u32 %v152, 4294901760
    %1027 = vmatpush1.msra.mxu0 %v1026
    %v1028 = vand.u32 %v157, 4294901760
    %1029 = vmatprep.subr.mxu0 %v1028
    %v1030 = vand.u32 %v156, 4294901760
    %1031 = vmatpush1.msra.mxu0 %v1030
    %v1032 = vand.u32 %v161, 4294901760
    %1033 = vmatprep.subr.mxu0 %v1032
    %v1034 = vand.u32 %v160, 4294901760
    %1035 = vmatpush1.msra.mxu0 %v1034
    %v1036 = vand.u32 %v165, 4294901760
    %1037 = vmatprep.subr.mxu0 %v1036
    %v1038 = vand.u32 %v164, 4294901760
    %1039 = vmatpush1.msra.mxu0 %v1038
    %v1040 = vand.u32 %v169, 4294901760
    %1041 = vmatprep.subr.mxu0 %v1040
    %v1042 = vand.u32 %v168, 4294901760
    %1043 = vmatpush1.msra.mxu0 %v1042
    %v1044 = vand.u32 %v173, 4294901760
    %1045 = vmatprep.subr.mxu0 %v1044
    %v1046 = vand.u32 %v172, 4294901760
    %1047 = vmatpush1.msra.mxu0 %v1046
    %v1048 = vand.u32 %v177, 4294901760
    %1049 = vmatprep.subr.mxu0 %v1048
    %v1050 = vand.u32 %v176, 4294901760
    %1051 = vmatpush1.msra.mxu0 %v1050
    %v1052 = vand.u32 %v181, 4294901760
    %1053 = vmatprep.subr.mxu0 %v1052
    %v1054 = vand.u32 %v180, 4294901760
    %1055 = vmatpush1.msra.mxu0 %v1054
    %v1056 = vand.u32 %v185, 4294901760
    %1057 = vmatprep.subr.mxu0 %v1056
    %v1058 = vand.u32 %v184, 4294901760
    %1059 = vmatpush1.msra.mxu0 %v1058
    %v1060 = vand.u32 %v189, 4294901760
    %1061 = vmatprep.subr.mxu0 %v1060
    %v1062 = vand.u32 %v188, 4294901760
    %1063 = vmatpush1.msra.mxu0 %v1062
    %v1064 = vand.u32 %v193, 4294901760
    %1065 = vmatprep.subr.mxu0 %v1064
    %v1066 = vand.u32 %v192, 4294901760
    %1067 = vmatpush1.msra.mxu0 %v1066
    %v1068 = vand.u32 %v197, 4294901760
    %1069 = vmatprep.subr.mxu0 %v1068
    %v1070 = vand.u32 %v196, 4294901760
    %1071 = vmatpush1.msra.mxu0 %v1070
    %v1072 = vand.u32 %v201, 4294901760
    %1073 = vmatprep.subr.mxu0 %v1072
    %v1074 = vand.u32 %v200, 4294901760
    %1075 = vmatpush1.msra.mxu0 %v1074
    %v1076 = vand.u32 %v205, 4294901760
    %1077 = vmatprep.subr.mxu0 %v1076
    %v1078 = vand.u32 %v204, 4294901760
    %1079 = vmatpush1.msra.mxu0 %v1078
    %v1080 = vand.u32 %v209, 4294901760
    %1081 = vmatprep.subr.mxu0 %v1080
    %v1082 = vand.u32 %v208, 4294901760
    %1083 = vmatpush1.msra.mxu0 %v1082
    %v1084 = vand.u32 %v213, 4294901760
    %1085 = vmatprep.subr.mxu0 %v1084
    %v1086 = vand.u32 %v212, 4294901760
    %1087 = vmatpush1.msra.mxu0 %v1086
    %v1088 = vand.u32 %v217, 4294901760
    %1089 = vmatprep.subr.mxu0 %v1088
    %v1090 = vand.u32 %v216, 4294901760
    %1091 = vmatpush1.msra.mxu0 %v1090
    %v1092 = vand.u32 %v221, 4294901760
    %1093 = vmatprep.subr.mxu0 %v1092
    %v1094 = vand.u32 %v220, 4294901760
    %1095 = vmatpush1.msra.mxu0 %v1094
    %v1096 = vand.u32 %v225, 4294901760
    %1097 = vmatprep.subr.mxu0 %v1096
    %v1098 = vand.u32 %v224, 4294901760
    %1099 = vmatpush1.msra.mxu0 %v1098
    %v1100 = vand.u32 %v229, 4294901760
    %1101 = vmatprep.subr.mxu0 %v1100
    %v1102 = vand.u32 %v228, 4294901760
    %1103 = vmatpush1.msra.mxu0 %v1102
    %v1104 = vand.u32 %v233, 4294901760
    %1105 = vmatprep.subr.mxu0 %v1104
    %v1106 = vand.u32 %v232, 4294901760
    %1107 = vmatpush1.msra.mxu0 %v1106
    %v1108 = vand.u32 %v237, 4294901760
    %1109 = vmatprep.subr.mxu0 %v1108
    %v1110 = vand.u32 %v236, 4294901760
    %1111 = vmatpush1.msra.mxu0 %v1110
    %v1112 = vand.u32 %v241, 4294901760
    %1113 = vmatprep.subr.mxu0 %v1112
    %v1114 = vand.u32 %v240, 4294901760
    %1115 = vmatpush1.msra.mxu0 %v1114
    %v1116 = vand.u32 %v245, 4294901760
    %1117 = vmatprep.subr.mxu0 %v1116
    %v1118 = vand.u32 %v244, 4294901760
    %1119 = vmatpush1.msra.mxu0 %v1118
    %v1120 = vand.u32 %v249, 4294901760
    %1121 = vmatprep.subr.mxu0 %v1120
    %v1122 = vand.u32 %v248, 4294901760
    %1123 = vmatpush1.msra.mxu0 %v1122
    %v1124 = vand.u32 %v253, 4294901760
    %1125 = vmatprep.subr.mxu0 %v1124
    %v1126 = vand.u32 %v252, 4294901760
    %1127 = vmatpush1.msra.mxu0 %v1126
    %v1128 = vand.u32 %v257, 4294901760
    %1129 = vmatprep.subr.mxu0 %v1128
    %v1130 = vand.u32 %v256, 4294901760
    %1131 = vmatpush1.msra.mxu0 %v1130
    %v1132 = vand.u32 %v261, 4294901760
    %1133 = vmatprep.subr.mxu0 %v1132
    %v1134 = vand.u32 %v260, 4294901760
    %1135 = vmatpush1.msra.mxu0 %v1134
    %v1136 = vand.u32 %v265, 4294901760
    %1137 = vmatprep.subr.mxu0 %v1136
    %v1138 = vand.u32 %v264, 4294901760
    %1139 = vmatpush1.msra.mxu0 %v1138
    %v1140 = vand.u32 %v269, 4294901760
    %1141 = vmatprep.subr.mxu0 %v1140
    %v1142 = vand.u32 %v268, 4294901760
    %1143 = vmatpush1.msra.mxu0 %v1142
    %v1144 = vand.u32 %v273, 4294901760
    %v1145 = vsub.f32 %v273, %v1144
    %v1146 = vand.u32 %v1145, 4294901760
    %1147 = vmatprep.mubr.f32.mxu0 %v1146
    %v1148 = vand.u32 %v143, 4294901760
    %v1149 = vsub.f32 %v143, %v1148
    %v1150 = vand.u32 %v1149, 4294901760
    %1151 = vmatmul.mubr.f32.gmra.mrb[0].mxu0 %v1150
    %v1152 = vpop.f32.mrb[0].mxu0
    %v1153 = vadd.f32 %v1012, %v1152
    %v1154 = vpop.f32.mrb[0].mxu0
    %v1155 = vadd.f32 %v1014, %v1154
    %1156 = vdwg.mxu0
    %v1157 = vand.u32 %v145, 4294901760
    %v1158 = vsub.f32 %v145, %v1157
    %v1159 = vand.u32 %v1158, 4294901760
    %1160 = vmatprep.subr.mxu0 %v1159
    %v1161 = vand.u32 %v144, 4294901760
    %v1162 = vsub.f32 %v144, %v1161
    %v1163 = vand.u32 %v1162, 4294901760
    %1164 = vmatpush1.msra.mxu0 %v1163
    %v1165 = vand.u32 %v149, 4294901760
    %v1166 = vsub.f32 %v149, %v1165
    %v1167 = vand.u32 %v1166, 4294901760
    %1168 = vmatprep.subr.mxu0 %v1167
    %v1169 = vand.u32 %v148, 4294901760
    %v1170 = vsub.f32 %v148, %v1169
    %v1171 = vand.u32 %v1170, 4294901760
    %1172 = vmatpush1.msra.mxu0 %v1171
    %v1173 = vand.u32 %v153, 4294901760
    %v1174 = vsub.f32 %v153, %v1173
    %v1175 = vand.u32 %v1174, 4294901760
    %1176 = vmatprep.subr.mxu0 %v1175
    %v1177 = vand.u32 %v152, 4294901760
    %v1178 = vsub.f32 %v152, %v1177
    %v1179 = vand.u32 %v1178, 4294901760
    %1180 = vmatpush1.msra.mxu0 %v1179
    %v1181 = vand.u32 %v157, 4294901760
    %v1182 = vsub.f32 %v157, %v1181
    %v1183 = vand.u32 %v1182, 4294901760
    %1184 = vmatprep.subr.mxu0 %v1183
    %v1185 = vand.u32 %v156, 4294901760
    %v1186 = vsub.f32 %v156, %v1185
    %v1187 = vand.u32 %v1186, 4294901760
    %1188 = vmatpush1.msra.mxu0 %v1187
    %v1189 = vand.u32 %v161, 4294901760
    %v1190 = vsub.f32 %v161, %v1189
    %v1191 = vand.u32 %v1190, 4294901760
    %1192 = vmatprep.subr.mxu0 %v1191
    %v1193 = vand.u32 %v160, 4294901760
    %v1194 = vsub.f32 %v160, %v1193
    %v1195 = vand.u32 %v1194, 4294901760
    %1196 = vmatpush1.msra.mxu0 %v1195
    %v1197 = vand.u32 %v165, 4294901760
    %v1198 = vsub.f32 %v165, %v1197
    %v1199 = vand.u32 %v1198, 4294901760
    %1200 = vmatprep.subr.mxu0 %v1199
    %v1201 = vand.u32 %v164, 4294901760
    %v1202 = vsub.f32 %v164, %v1201
    %v1203 = vand.u32 %v1202, 4294901760
    %1204 = vmatpush1.msra.mxu0 %v1203
    %v1205 = vand.u32 %v169, 4294901760
    %v1206 = vsub.f32 %v169, %v1205
    %v1207 = vand.u32 %v1206, 4294901760
    %1208 = vmatprep.subr.mxu0 %v1207
    %v1209 = vand.u32 %v168, 4294901760
    %v1210 = vsub.f32 %v168, %v1209
    %v1211 = vand.u32 %v1210, 4294901760
    %1212 = vmatpush1.msra.mxu0 %v1211
    %v1213 = vand.u32 %v173, 4294901760
    %v1214 = vsub.f32 %v173, %v1213
    %v1215 = vand.u32 %v1214, 4294901760
    %1216 = vmatprep.subr.mxu0 %v1215
    %v1217 = vand.u32 %v172, 4294901760
    %v1218 = vsub.f32 %v172, %v1217
    %v1219 = vand.u32 %v1218, 4294901760
    %1220 = vmatpush1.msra.mxu0 %v1219
    %v1221 = vand.u32 %v177, 4294901760
    %v1222 = vsub.f32 %v177, %v1221
    %v1223 = vand.u32 %v1222, 4294901760
    %1224 = vmatprep.subr.mxu0 %v1223
    %v1225 = vand.u32 %v176, 4294901760
    %v1226 = vsub.f32 %v176, %v1225
    %v1227 = vand.u32 %v1226, 4294901760
    %1228 = vmatpush1.msra.mxu0 %v1227
    %v1229 = vand.u32 %v181, 4294901760
    %v1230 = vsub.f32 %v181, %v1229
    %v1231 = vand.u32 %v1230, 4294901760
    %1232 = vmatprep.subr.mxu0 %v1231
    %v1233 = vand.u32 %v180, 4294901760
    %v1234 = vsub.f32 %v180, %v1233
    %v1235 = vand.u32 %v1234, 4294901760
    %1236 = vmatpush1.msra.mxu0 %v1235
    %v1237 = vand.u32 %v185, 4294901760
    %v1238 = vsub.f32 %v185, %v1237
    %v1239 = vand.u32 %v1238, 4294901760
    %1240 = vmatprep.subr.mxu0 %v1239
    %v1241 = vand.u32 %v184, 4294901760
    %v1242 = vsub.f32 %v184, %v1241
    %v1243 = vand.u32 %v1242, 4294901760
    %1244 = vmatpush1.msra.mxu0 %v1243
    %v1245 = vand.u32 %v189, 4294901760
    %v1246 = vsub.f32 %v189, %v1245
    %v1247 = vand.u32 %v1246, 4294901760
    %1248 = vmatprep.subr.mxu0 %v1247
    %v1249 = vand.u32 %v188, 4294901760
    %v1250 = vsub.f32 %v188, %v1249
    %v1251 = vand.u32 %v1250, 4294901760
    %1252 = vmatpush1.msra.mxu0 %v1251
    %v1253 = vand.u32 %v193, 4294901760
    %v1254 = vsub.f32 %v193, %v1253
    %v1255 = vand.u32 %v1254, 4294901760
    %1256 = vmatprep.subr.mxu0 %v1255
    %v1257 = vand.u32 %v192, 4294901760
    %v1258 = vsub.f32 %v192, %v1257
    %v1259 = vand.u32 %v1258, 4294901760
    %1260 = vmatpush1.msra.mxu0 %v1259
    %v1261 = vand.u32 %v197, 4294901760
    %v1262 = vsub.f32 %v197, %v1261
    %v1263 = vand.u32 %v1262, 4294901760
    %1264 = vmatprep.subr.mxu0 %v1263
    %v1265 = vand.u32 %v196, 4294901760
    %v1266 = vsub.f32 %v196, %v1265
    %v1267 = vand.u32 %v1266, 4294901760
    %1268 = vmatpush1.msra.mxu0 %v1267
    %v1269 = vand.u32 %v201, 4294901760
    %v1270 = vsub.f32 %v201, %v1269
    %v1271 = vand.u32 %v1270, 4294901760
    %1272 = vmatprep.subr.mxu0 %v1271
    %v1273 = vand.u32 %v200, 4294901760
    %v1274 = vsub.f32 %v200, %v1273
    %v1275 = vand.u32 %v1274, 4294901760
    %1276 = vmatpush1.msra.mxu0 %v1275
    %v1277 = vand.u32 %v205, 4294901760
    %v1278 = vsub.f32 %v205, %v1277
    %v1279 = vand.u32 %v1278, 4294901760
    %1280 = vmatprep.subr.mxu0 %v1279
    %v1281 = vand.u32 %v204, 4294901760
    %v1282 = vsub.f32 %v204, %v1281
    %v1283 = vand.u32 %v1282, 4294901760
    %1284 = vmatpush1.msra.mxu0 %v1283
    %v1285 = vand.u32 %v209, 4294901760
    %v1286 = vsub.f32 %v209, %v1285
    %v1287 = vand.u32 %v1286, 4294901760
    %1288 = vmatprep.subr.mxu0 %v1287
    %v1289 = vand.u32 %v208, 4294901760
    %v1290 = vsub.f32 %v208, %v1289
    %v1291 = vand.u32 %v1290, 4294901760
    %1292 = vmatpush1.msra.mxu0 %v1291
    %v1293 = vand.u32 %v213, 4294901760
    %v1294 = vsub.f32 %v213, %v1293
    %v1295 = vand.u32 %v1294, 4294901760
    %1296 = vmatprep.subr.mxu0 %v1295
    %v1297 = vand.u32 %v212, 4294901760
    %v1298 = vsub.f32 %v212, %v1297
    %v1299 = vand.u32 %v1298, 4294901760
    %1300 = vmatpush1.msra.mxu0 %v1299
    %v1301 = vand.u32 %v217, 4294901760
    %v1302 = vsub.f32 %v217, %v1301
    %v1303 = vand.u32 %v1302, 4294901760
    %1304 = vmatprep.subr.mxu0 %v1303
    %v1305 = vand.u32 %v216, 4294901760
    %v1306 = vsub.f32 %v216, %v1305
    %v1307 = vand.u32 %v1306, 4294901760
    %1308 = vmatpush1.msra.mxu0 %v1307
    %v1309 = vand.u32 %v221, 4294901760
    %v1310 = vsub.f32 %v221, %v1309
    %v1311 = vand.u32 %v1310, 4294901760
    %1312 = vmatprep.subr.mxu0 %v1311
    %v1313 = vand.u32 %v220, 4294901760
    %v1314 = vsub.f32 %v220, %v1313
    %v1315 = vand.u32 %v1314, 4294901760
    %1316 = vmatpush1.msra.mxu0 %v1315
    %v1317 = vand.u32 %v225, 4294901760
    %v1318 = vsub.f32 %v225, %v1317
    %v1319 = vand.u32 %v1318, 4294901760
    %1320 = vmatprep.subr.mxu0 %v1319
    %v1321 = vand.u32 %v224, 4294901760
    %v1322 = vsub.f32 %v224, %v1321
    %v1323 = vand.u32 %v1322, 4294901760
    %1324 = vmatpush1.msra.mxu0 %v1323
    %v1325 = vand.u32 %v229, 4294901760
    %v1326 = vsub.f32 %v229, %v1325
    %v1327 = vand.u32 %v1326, 4294901760
    %1328 = vmatprep.subr.mxu0 %v1327
    %v1329 = vand.u32 %v228, 4294901760
    %v1330 = vsub.f32 %v228, %v1329
    %v1331 = vand.u32 %v1330, 4294901760
    %1332 = vmatpush1.msra.mxu0 %v1331
    %v1333 = vand.u32 %v233, 4294901760
    %v1334 = vsub.f32 %v233, %v1333
    %v1335 = vand.u32 %v1334, 4294901760
    %1336 = vmatprep.subr.mxu0 %v1335
    %v1337 = vand.u32 %v232, 4294901760
    %v1338 = vsub.f32 %v232, %v1337
    %v1339 = vand.u32 %v1338, 4294901760
    %1340 = vmatpush1.msra.mxu0 %v1339
    %v1341 = vand.u32 %v237, 4294901760
    %v1342 = vsub.f32 %v237, %v1341
    %v1343 = vand.u32 %v1342, 4294901760
    %1344 = vmatprep.subr.mxu0 %v1343
    %v1345 = vand.u32 %v236, 4294901760
    %v1346 = vsub.f32 %v236, %v1345
    %v1347 = vand.u32 %v1346, 4294901760
    %1348 = vmatpush1.msra.mxu0 %v1347
    %v1349 = vand.u32 %v241, 4294901760
    %v1350 = vsub.f32 %v241, %v1349
    %v1351 = vand.u32 %v1350, 4294901760
    %1352 = vmatprep.subr.mxu0 %v1351
    %v1353 = vand.u32 %v240, 4294901760
    %v1354 = vsub.f32 %v240, %v1353
    %v1355 = vand.u32 %v1354, 4294901760
    %1356 = vmatpush1.msra.mxu0 %v1355
    %v1357 = vand.u32 %v245, 4294901760
    %v1358 = vsub.f32 %v245, %v1357
    %v1359 = vand.u32 %v1358, 4294901760
    %1360 = vmatprep.subr.mxu0 %v1359
    %v1361 = vand.u32 %v244, 4294901760
    %v1362 = vsub.f32 %v244, %v1361
    %v1363 = vand.u32 %v1362, 4294901760
    %1364 = vmatpush1.msra.mxu0 %v1363
    %v1365 = vand.u32 %v249, 4294901760
    %v1366 = vsub.f32 %v249, %v1365
    %v1367 = vand.u32 %v1366, 4294901760
    %1368 = vmatprep.subr.mxu0 %v1367
    %v1369 = vand.u32 %v248, 4294901760
    %v1370 = vsub.f32 %v248, %v1369
    %v1371 = vand.u32 %v1370, 4294901760
    %1372 = vmatpush1.msra.mxu0 %v1371
    %v1373 = vand.u32 %v253, 4294901760
    %v1374 = vsub.f32 %v253, %v1373
    %v1375 = vand.u32 %v1374, 4294901760
    %1376 = vmatprep.subr.mxu0 %v1375
    %v1377 = vand.u32 %v252, 4294901760
    %v1378 = vsub.f32 %v252, %v1377
    %v1379 = vand.u32 %v1378, 4294901760
    %1380 = vmatpush1.msra.mxu0 %v1379
    %v1381 = vand.u32 %v257, 4294901760
    %v1382 = vsub.f32 %v257, %v1381
    %v1383 = vand.u32 %v1382, 4294901760
    %1384 = vmatprep.subr.mxu0 %v1383
    %v1385 = vand.u32 %v256, 4294901760
    %v1386 = vsub.f32 %v256, %v1385
    %v1387 = vand.u32 %v1386, 4294901760
    %1388 = vmatpush1.msra.mxu0 %v1387
    %v1389 = vand.u32 %v261, 4294901760
    %v1390 = vsub.f32 %v261, %v1389
    %v1391 = vand.u32 %v1390, 4294901760
    %1392 = vmatprep.subr.mxu0 %v1391
    %v1393 = vand.u32 %v260, 4294901760
    %v1394 = vsub.f32 %v260, %v1393
    %v1395 = vand.u32 %v1394, 4294901760
    %1396 = vmatpush1.msra.mxu0 %v1395
    %v1397 = vand.u32 %v265, 4294901760
    %v1398 = vsub.f32 %v265, %v1397
    %v1399 = vand.u32 %v1398, 4294901760
    %1400 = vmatprep.subr.mxu0 %v1399
    %v1401 = vand.u32 %v264, 4294901760
    %v1402 = vsub.f32 %v264, %v1401
    %v1403 = vand.u32 %v1402, 4294901760
    %1404 = vmatpush1.msra.mxu0 %v1403
    %v1405 = vand.u32 %v269, 4294901760
    %v1406 = vsub.f32 %v269, %v1405
    %v1407 = vand.u32 %v1406, 4294901760
    %1408 = vmatprep.subr.mxu0 %v1407
    %v1409 = vand.u32 %v268, 4294901760
    %v1410 = vsub.f32 %v268, %v1409
    %v1411 = vand.u32 %v1410, 4294901760
    %1412 = vmatpush1.msra.mxu0 %v1411
    %v1413 = vand.u32 %v273, 4294901760
    %1414 = vmatprep.mubr.f32.mxu0 %v1413
    %v1415 = vand.u32 %v143, 4294901760
    %1416 = vmatmul.mubr.f32.gmra.mrb[0].mxu0 %v1415
    %v1417 = vpop.f32.mrb[0].mxu0
    %v1418 = vadd.f32 %v1153, %v1417
    %v1419 = vpop.f32.mrb[0].mxu0
    %v1420 = vadd.f32 %v1155, %v1419
    %1421 = vdwg.mxu0
    %v1422 = vand.u32 %v145, 4294901760
    %1423 = vmatprep.subr.mxu0 %v1422
    %v1424 = vand.u32 %v144, 4294901760
    %1425 = vmatpush1.msra.mxu0 %v1424
    %v1426 = vand.u32 %v149, 4294901760
    %1427 = vmatprep.subr.mxu0 %v1426
    %v1428 = vand.u32 %v148, 4294901760
    %1429 = vmatpush1.msra.mxu0 %v1428
    %v1430 = vand.u32 %v153, 4294901760
    %1431 = vmatprep.subr.mxu0 %v1430
    %v1432 = vand.u32 %v152, 4294901760
    %1433 = vmatpush1.msra.mxu0 %v1432
    %v1434 = vand.u32 %v157, 4294901760
    %1435 = vmatprep.subr.mxu0 %v1434
    %v1436 = vand.u32 %v156, 4294901760
    %1437 = vmatpush1.msra.mxu0 %v1436
    %v1438 = vand.u32 %v161, 4294901760
    %1439 = vmatprep.subr.mxu0 %v1438
    %v1440 = vand.u32 %v160, 4294901760
    %1441 = vmatpush1.msra.mxu0 %v1440
    %v1442 = vand.u32 %v165, 4294901760
    %1443 = vmatprep.subr.mxu0 %v1442
    %v1444 = vand.u32 %v164, 4294901760
    %1445 = vmatpush1.msra.mxu0 %v1444
    %v1446 = vand.u32 %v169, 4294901760
    %1447 = vmatprep.subr.mxu0 %v1446
    %v1448 = vand.u32 %v168, 4294901760
    %1449 = vmatpush1.msra.mxu0 %v1448
    %v1450 = vand.u32 %v173, 4294901760
    %1451 = vmatprep.subr.mxu0 %v1450
    %v1452 = vand.u32 %v172, 4294901760
    %1453 = vmatpush1.msra.mxu0 %v1452
    %v1454 = vand.u32 %v177, 4294901760
    %1455 = vmatprep.subr.mxu0 %v1454
    %v1456 = vand.u32 %v176, 4294901760
    %1457 = vmatpush1.msra.mxu0 %v1456
    %v1458 = vand.u32 %v181, 4294901760
    %1459 = vmatprep.subr.mxu0 %v1458
    %v1460 = vand.u32 %v180, 4294901760
    %1461 = vmatpush1.msra.mxu0 %v1460
    %v1462 = vand.u32 %v185, 4294901760
    %1463 = vmatprep.subr.mxu0 %v1462
    %v1464 = vand.u32 %v184, 4294901760
    %1465 = vmatpush1.msra.mxu0 %v1464
    %v1466 = vand.u32 %v189, 4294901760
    %1467 = vmatprep.subr.mxu0 %v1466
    %v1468 = vand.u32 %v188, 4294901760
    %1469 = vmatpush1.msra.mxu0 %v1468
    %v1470 = vand.u32 %v193, 4294901760
    %1471 = vmatprep.subr.mxu0 %v1470
    %v1472 = vand.u32 %v192, 4294901760
    %1473 = vmatpush1.msra.mxu0 %v1472
    %v1474 = vand.u32 %v197, 4294901760
    %1475 = vmatprep.subr.mxu0 %v1474
    %v1476 = vand.u32 %v196, 4294901760
    %1477 = vmatpush1.msra.mxu0 %v1476
    %v1478 = vand.u32 %v201, 4294901760
    %1479 = vmatprep.subr.mxu0 %v1478
    %v1480 = vand.u32 %v200, 4294901760
    %1481 = vmatpush1.msra.mxu0 %v1480
    %v1482 = vand.u32 %v205, 4294901760
    %1483 = vmatprep.subr.mxu0 %v1482
    %v1484 = vand.u32 %v204, 4294901760
    %1485 = vmatpush1.msra.mxu0 %v1484
    %v1486 = vand.u32 %v209, 4294901760
    %1487 = vmatprep.subr.mxu0 %v1486
    %v1488 = vand.u32 %v208, 4294901760
    %1489 = vmatpush1.msra.mxu0 %v1488
    %v1490 = vand.u32 %v213, 4294901760
    %1491 = vmatprep.subr.mxu0 %v1490
    %v1492 = vand.u32 %v212, 4294901760
    %1493 = vmatpush1.msra.mxu0 %v1492
    %v1494 = vand.u32 %v217, 4294901760
    %1495 = vmatprep.subr.mxu0 %v1494
    %v1496 = vand.u32 %v216, 4294901760
    %1497 = vmatpush1.msra.mxu0 %v1496
    %v1498 = vand.u32 %v221, 4294901760
    %1499 = vmatprep.subr.mxu0 %v1498
    %v1500 = vand.u32 %v220, 4294901760
    %1501 = vmatpush1.msra.mxu0 %v1500
    %v1502 = vand.u32 %v225, 4294901760
    %1503 = vmatprep.subr.mxu0 %v1502
    %v1504 = vand.u32 %v224, 4294901760
    %1505 = vmatpush1.msra.mxu0 %v1504
    %v1506 = vand.u32 %v229, 4294901760
    %1507 = vmatprep.subr.mxu0 %v1506
    %v1508 = vand.u32 %v228, 4294901760
    %1509 = vmatpush1.msra.mxu0 %v1508
    %v1510 = vand.u32 %v233, 4294901760
    %1511 = vmatprep.subr.mxu0 %v1510
    %v1512 = vand.u32 %v232, 4294901760
    %1513 = vmatpush1.msra.mxu0 %v1512
    %v1514 = vand.u32 %v237, 4294901760
    %1515 = vmatprep.subr.mxu0 %v1514
    %v1516 = vand.u32 %v236, 4294901760
    %1517 = vmatpush1.msra.mxu0 %v1516
    %v1518 = vand.u32 %v241, 4294901760
    %1519 = vmatprep.subr.mxu0 %v1518
    %v1520 = vand.u32 %v240, 4294901760
    %1521 = vmatpush1.msra.mxu0 %v1520
    %v1522 = vand.u32 %v245, 4294901760
    %1523 = vmatprep.subr.mxu0 %v1522
    %v1524 = vand.u32 %v244, 4294901760
    %1525 = vmatpush1.msra.mxu0 %v1524
    %v1526 = vand.u32 %v249, 4294901760
    %1527 = vmatprep.subr.mxu0 %v1526
    %v1528 = vand.u32 %v248, 4294901760
    %1529 = vmatpush1.msra.mxu0 %v1528
    %v1530 = vand.u32 %v253, 4294901760
    %1531 = vmatprep.subr.mxu0 %v1530
    %v1532 = vand.u32 %v252, 4294901760
    %1533 = vmatpush1.msra.mxu0 %v1532
    %v1534 = vand.u32 %v257, 4294901760
    %1535 = vmatprep.subr.mxu0 %v1534
    %v1536 = vand.u32 %v256, 4294901760
    %1537 = vmatpush1.msra.mxu0 %v1536
    %v1538 = vand.u32 %v261, 4294901760
    %1539 = vmatprep.subr.mxu0 %v1538
    %v1540 = vand.u32 %v260, 4294901760
    %1541 = vmatpush1.msra.mxu0 %v1540
    %v1542 = vand.u32 %v265, 4294901760
    %1543 = vmatprep.subr.mxu0 %v1542
    %v1544 = vand.u32 %v264, 4294901760
    %1545 = vmatpush1.msra.mxu0 %v1544
    %v1546 = vand.u32 %v269, 4294901760
    %1547 = vmatprep.subr.mxu0 %v1546
    %v1548 = vand.u32 %v268, 4294901760
    %1549 = vmatpush1.msra.mxu0 %v1548
    %v1550 = vand.u32 %v273, 4294901760
    %1551 = vmatprep.mubr.f32.mxu0 %v1550
    %v1552 = vand.u32 %v143, 4294901760
    %1553 = vmatmul.mubr.f32.gmra.mrb[0].mxu0 %v1552
    %v1554 = vpop.f32.mrb[0].mxu0
    %v1555 = vadd.f32 %v1418, %v1554
    %v1556 = vpop.f32.mrb[0].mxu0
    %v1557 = vadd.f32 %v1420, %v1556
    %1558 = vdwg.mxu0
    %v1559 = vand.u32 %v147, 4294901760
    %1560 = vmatprep.subr.mxu0 %v1559
    %v1561 = vand.u32 %v146, 4294901760
    %1562 = vmatpush1.msra.mxu0 %v1561
    %v1563 = vand.u32 %v151, 4294901760
    %1564 = vmatprep.subr.mxu0 %v1563
    %v1565 = vand.u32 %v150, 4294901760
    %1566 = vmatpush1.msra.mxu0 %v1565
    %v1567 = vand.u32 %v155, 4294901760
    %1568 = vmatprep.subr.mxu0 %v1567
    %v1569 = vand.u32 %v154, 4294901760
    %1570 = vmatpush1.msra.mxu0 %v1569
    %v1571 = vand.u32 %v159, 4294901760
    %1572 = vmatprep.subr.mxu0 %v1571
    %v1573 = vand.u32 %v158, 4294901760
    %1574 = vmatpush1.msra.mxu0 %v1573
    %v1575 = vand.u32 %v163, 4294901760
    %1576 = vmatprep.subr.mxu0 %v1575
    %v1577 = vand.u32 %v162, 4294901760
    %1578 = vmatpush1.msra.mxu0 %v1577
    %v1579 = vand.u32 %v167, 4294901760
    %1580 = vmatprep.subr.mxu0 %v1579
    %v1581 = vand.u32 %v166, 4294901760
    %1582 = vmatpush1.msra.mxu0 %v1581
    %v1583 = vand.u32 %v171, 4294901760
    %1584 = vmatprep.subr.mxu0 %v1583
    %v1585 = vand.u32 %v170, 4294901760
    %1586 = vmatpush1.msra.mxu0 %v1585
    %v1587 = vand.u32 %v175, 4294901760
    %1588 = vmatprep.subr.mxu0 %v1587
    %v1589 = vand.u32 %v174, 4294901760
    %1590 = vmatpush1.msra.mxu0 %v1589
    %v1591 = vand.u32 %v179, 4294901760
    %1592 = vmatprep.subr.mxu0 %v1591
    %v1593 = vand.u32 %v178, 4294901760
    %1594 = vmatpush1.msra.mxu0 %v1593
    %v1595 = vand.u32 %v183, 4294901760
    %1596 = vmatprep.subr.mxu0 %v1595
    %v1597 = vand.u32 %v182, 4294901760
    %1598 = vmatpush1.msra.mxu0 %v1597
    %v1599 = vand.u32 %v187, 4294901760
    %1600 = vmatprep.subr.mxu0 %v1599
    %v1601 = vand.u32 %v186, 4294901760
    %1602 = vmatpush1.msra.mxu0 %v1601
    %v1603 = vand.u32 %v191, 4294901760
    %1604 = vmatprep.subr.mxu0 %v1603
    %v1605 = vand.u32 %v190, 4294901760
    %1606 = vmatpush1.msra.mxu0 %v1605
    %v1607 = vand.u32 %v195, 4294901760
    %1608 = vmatprep.subr.mxu0 %v1607
    %v1609 = vand.u32 %v194, 4294901760
    %1610 = vmatpush1.msra.mxu0 %v1609
    %v1611 = vand.u32 %v199, 4294901760
    %1612 = vmatprep.subr.mxu0 %v1611
    %v1613 = vand.u32 %v198, 4294901760
    %1614 = vmatpush1.msra.mxu0 %v1613
    %v1615 = vand.u32 %v203, 4294901760
    %1616 = vmatprep.subr.mxu0 %v1615
    %v1617 = vand.u32 %v202, 4294901760
    %1618 = vmatpush1.msra.mxu0 %v1617
    %v1619 = vand.u32 %v207, 4294901760
    %1620 = vmatprep.subr.mxu0 %v1619
    %v1621 = vand.u32 %v206, 4294901760
    %1622 = vmatpush1.msra.mxu0 %v1621
    %v1623 = vand.u32 %v211, 4294901760
    %1624 = vmatprep.subr.mxu0 %v1623
    %v1625 = vand.u32 %v210, 4294901760
    %1626 = vmatpush1.msra.mxu0 %v1625
    %v1627 = vand.u32 %v215, 4294901760
    %1628 = vmatprep.subr.mxu0 %v1627
    %v1629 = vand.u32 %v214, 4294901760
    %1630 = vmatpush1.msra.mxu0 %v1629
    %v1631 = vand.u32 %v219, 4294901760
    %1632 = vmatprep.subr.mxu0 %v1631
    %v1633 = vand.u32 %v218, 4294901760
    %1634 = vmatpush1.msra.mxu0 %v1633
    %v1635 = vand.u32 %v223, 4294901760
    %1636 = vmatprep.subr.mxu0 %v1635
    %v1637 = vand.u32 %v222, 4294901760
    %1638 = vmatpush1.msra.mxu0 %v1637
    %v1639 = vand.u32 %v227, 4294901760
    %1640 = vmatprep.subr.mxu0 %v1639
    %v1641 = vand.u32 %v226, 4294901760
    %1642 = vmatpush1.msra.mxu0 %v1641
    %v1643 = vand.u32 %v231, 4294901760
    %1644 = vmatprep.subr.mxu0 %v1643
    %v1645 = vand.u32 %v230, 4294901760
    %1646 = vmatpush1.msra.mxu0 %v1645
    %v1647 = vand.u32 %v235, 4294901760
    %1648 = vmatprep.subr.mxu0 %v1647
    %v1649 = vand.u32 %v234, 4294901760
    %1650 = vmatpush1.msra.mxu0 %v1649
    %v1651 = vand.u32 %v239, 4294901760
    %1652 = vmatprep.subr.mxu0 %v1651
    %v1653 = vand.u32 %v238, 4294901760
    %1654 = vmatpush1.msra.mxu0 %v1653
    %v1655 = vand.u32 %v243, 4294901760
    %1656 = vmatprep.subr.mxu0 %v1655
    %v1657 = vand.u32 %v242, 4294901760
    %1658 = vmatpush1.msra.mxu0 %v1657
    %v1659 = vand.u32 %v247, 4294901760
    %1660 = vmatprep.subr.mxu0 %v1659
    %v1661 = vand.u32 %v246, 4294901760
    %1662 = vmatpush1.msra.mxu0 %v1661
    %v1663 = vand.u32 %v251, 4294901760
    %1664 = vmatprep.subr.mxu0 %v1663
    %v1665 = vand.u32 %v250, 4294901760
    %1666 = vmatpush1.msra.mxu0 %v1665
    %v1667 = vand.u32 %v255, 4294901760
    %1668 = vmatprep.subr.mxu0 %v1667
    %v1669 = vand.u32 %v254, 4294901760
    %1670 = vmatpush1.msra.mxu0 %v1669
    %v1671 = vand.u32 %v259, 4294901760
    %1672 = vmatprep.subr.mxu0 %v1671
    %v1673 = vand.u32 %v258, 4294901760
    %1674 = vmatpush1.msra.mxu0 %v1673
    %v1675 = vand.u32 %v263, 4294901760
    %1676 = vmatprep.subr.mxu0 %v1675
    %v1677 = vand.u32 %v262, 4294901760
    %1678 = vmatpush1.msra.mxu0 %v1677
    %v1679 = vand.u32 %v267, 4294901760
    %1680 = vmatprep.subr.mxu0 %v1679
    %v1681 = vand.u32 %v266, 4294901760
    %1682 = vmatpush1.msra.mxu0 %v1681
    %v1683 = vand.u32 %v271, 4294901760
    %1684 = vmatprep.subr.mxu0 %v1683
    %v1685 = vand.u32 %v270, 4294901760
    %1686 = vmatpush1.msra.mxu0 %v1685
    %v1687 = vand.u32 %v273, 4294901760
    %v1688 = vsub.f32 %v273, %v1687
    %v1689 = vand.u32 %v1688, 4294901760
    %v1690 = vsub.f32 %v1688, %v1689
    %v1691 = vand.u32 %v1690, 4294901760
    %1692 = vmatprep.mubr.f32.mxu0 %v1691
    %v1693 = vand.u32 %v143, 4294901760
    %v1694 = vsub.f32 %v143, %v1693
    %v1695 = vand.u32 %v1694, 4294901760
    %v1696 = vsub.f32 %v1694, %v1695
    %v1697 = vand.u32 %v1696, 4294901760
    %1698 = vmatmul.mubr.f32.gmra.mrb[0].mxu0 %v1697
    %v1699 = vpop.f32.mrb[0].mxu0
    %v1700 = vadd.f32 0.0, %v1699
    %v1701 = vpop.f32.mrb[0].mxu0
    %v1702 = vadd.f32 0.0, %v1701
    %1703 = vdwg.mxu0
    %v1704 = vand.u32 %v147, 4294901760
    %v1705 = vsub.f32 %v147, %v1704
    %v1706 = vand.u32 %v1705, 4294901760
    %v1707 = vsub.f32 %v1705, %v1706
    %v1708 = vand.u32 %v1707, 4294901760
    %1709 = vmatprep.subr.mxu0 %v1708
    %v1710 = vand.u32 %v146, 4294901760
    %v1711 = vsub.f32 %v146, %v1710
    %v1712 = vand.u32 %v1711, 4294901760
    %v1713 = vsub.f32 %v1711, %v1712
    %v1714 = vand.u32 %v1713, 4294901760
    %1715 = vmatpush1.msra.mxu0 %v1714
    %v1716 = vand.u32 %v151, 4294901760
    %v1717 = vsub.f32 %v151, %v1716
    %v1718 = vand.u32 %v1717, 4294901760
    %v1719 = vsub.f32 %v1717, %v1718
    %v1720 = vand.u32 %v1719, 4294901760
    %1721 = vmatprep.subr.mxu0 %v1720
    %v1722 = vand.u32 %v150, 4294901760
    %v1723 = vsub.f32 %v150, %v1722
    %v1724 = vand.u32 %v1723, 4294901760
    %v1725 = vsub.f32 %v1723, %v1724
    %v1726 = vand.u32 %v1725, 4294901760
    %1727 = vmatpush1.msra.mxu0 %v1726
    %v1728 = vand.u32 %v155, 4294901760
    %v1729 = vsub.f32 %v155, %v1728
    %v1730 = vand.u32 %v1729, 4294901760
    %v1731 = vsub.f32 %v1729, %v1730
    %v1732 = vand.u32 %v1731, 4294901760
    %1733 = vmatprep.subr.mxu0 %v1732
    %v1734 = vand.u32 %v154, 4294901760
    %v1735 = vsub.f32 %v154, %v1734
    %v1736 = vand.u32 %v1735, 4294901760
    %v1737 = vsub.f32 %v1735, %v1736
    %v1738 = vand.u32 %v1737, 4294901760
    %1739 = vmatpush1.msra.mxu0 %v1738
    %v1740 = vand.u32 %v159, 4294901760
    %v1741 = vsub.f32 %v159, %v1740
    %v1742 = vand.u32 %v1741, 4294901760
    %v1743 = vsub.f32 %v1741, %v1742
    %v1744 = vand.u32 %v1743, 4294901760
    %1745 = vmatprep.subr.mxu0 %v1744
    %v1746 = vand.u32 %v158, 4294901760
    %v1747 = vsub.f32 %v158, %v1746
    %v1748 = vand.u32 %v1747, 4294901760
    %v1749 = vsub.f32 %v1747, %v1748
    %v1750 = vand.u32 %v1749, 4294901760
    %1751 = vmatpush1.msra.mxu0 %v1750
    %v1752 = vand.u32 %v163, 4294901760
    %v1753 = vsub.f32 %v163, %v1752
    %v1754 = vand.u32 %v1753, 4294901760
    %v1755 = vsub.f32 %v1753, %v1754
    %v1756 = vand.u32 %v1755, 4294901760
    %1757 = vmatprep.subr.mxu0 %v1756
    %v1758 = vand.u32 %v162, 4294901760
    %v1759 = vsub.f32 %v162, %v1758
    %v1760 = vand.u32 %v1759, 4294901760
    %v1761 = vsub.f32 %v1759, %v1760
    %v1762 = vand.u32 %v1761, 4294901760
    %1763 = vmatpush1.msra.mxu0 %v1762
    %v1764 = vand.u32 %v167, 4294901760
    %v1765 = vsub.f32 %v167, %v1764
    %v1766 = vand.u32 %v1765, 4294901760
    %v1767 = vsub.f32 %v1765, %v1766
    %v1768 = vand.u32 %v1767, 4294901760
    %1769 = vmatprep.subr.mxu0 %v1768
    %v1770 = vand.u32 %v166, 4294901760
    %v1771 = vsub.f32 %v166, %v1770
    %v1772 = vand.u32 %v1771, 4294901760
    %v1773 = vsub.f32 %v1771, %v1772
    %v1774 = vand.u32 %v1773, 4294901760
    %1775 = vmatpush1.msra.mxu0 %v1774
    %v1776 = vand.u32 %v171, 4294901760
    %v1777 = vsub.f32 %v171, %v1776
    %v1778 = vand.u32 %v1777, 4294901760
    %v1779 = vsub.f32 %v1777, %v1778
    %v1780 = vand.u32 %v1779, 4294901760
    %1781 = vmatprep.subr.mxu0 %v1780
    %v1782 = vand.u32 %v170, 4294901760
    %v1783 = vsub.f32 %v170, %v1782
    %v1784 = vand.u32 %v1783, 4294901760
    %v1785 = vsub.f32 %v1783, %v1784
    %v1786 = vand.u32 %v1785, 4294901760
    %1787 = vmatpush1.msra.mxu0 %v1786
    %v1788 = vand.u32 %v175, 4294901760
    %v1789 = vsub.f32 %v175, %v1788
    %v1790 = vand.u32 %v1789, 4294901760
    %v1791 = vsub.f32 %v1789, %v1790
    %v1792 = vand.u32 %v1791, 4294901760
    %1793 = vmatprep.subr.mxu0 %v1792
    %v1794 = vand.u32 %v174, 4294901760
    %v1795 = vsub.f32 %v174, %v1794
    %v1796 = vand.u32 %v1795, 4294901760
    %v1797 = vsub.f32 %v1795, %v1796
    %v1798 = vand.u32 %v1797, 4294901760
    %1799 = vmatpush1.msra.mxu0 %v1798
    %v1800 = vand.u32 %v179, 4294901760
    %v1801 = vsub.f32 %v179, %v1800
    %v1802 = vand.u32 %v1801, 4294901760
    %v1803 = vsub.f32 %v1801, %v1802
    %v1804 = vand.u32 %v1803, 4294901760
    %1805 = vmatprep.subr.mxu0 %v1804
    %v1806 = vand.u32 %v178, 4294901760
    %v1807 = vsub.f32 %v178, %v1806
    %v1808 = vand.u32 %v1807, 4294901760
    %v1809 = vsub.f32 %v1807, %v1808
    %v1810 = vand.u32 %v1809, 4294901760
    %1811 = vmatpush1.msra.mxu0 %v1810
    %v1812 = vand.u32 %v183, 4294901760
    %v1813 = vsub.f32 %v183, %v1812
    %v1814 = vand.u32 %v1813, 4294901760
    %v1815 = vsub.f32 %v1813, %v1814
    %v1816 = vand.u32 %v1815, 4294901760
    %1817 = vmatprep.subr.mxu0 %v1816
    %v1818 = vand.u32 %v182, 4294901760
    %v1819 = vsub.f32 %v182, %v1818
    %v1820 = vand.u32 %v1819, 4294901760
    %v1821 = vsub.f32 %v1819, %v1820
    %v1822 = vand.u32 %v1821, 4294901760
    %1823 = vmatpush1.msra.mxu0 %v1822
    %v1824 = vand.u32 %v187, 4294901760
    %v1825 = vsub.f32 %v187, %v1824
    %v1826 = vand.u32 %v1825, 4294901760
    %v1827 = vsub.f32 %v1825, %v1826
    %v1828 = vand.u32 %v1827, 4294901760
    %1829 = vmatprep.subr.mxu0 %v1828
    %v1830 = vand.u32 %v186, 4294901760
    %v1831 = vsub.f32 %v186, %v1830
    %v1832 = vand.u32 %v1831, 4294901760
    %v1833 = vsub.f32 %v1831, %v1832
    %v1834 = vand.u32 %v1833, 4294901760
    %1835 = vmatpush1.msra.mxu0 %v1834
    %v1836 = vand.u32 %v191, 4294901760
    %v1837 = vsub.f32 %v191, %v1836
    %v1838 = vand.u32 %v1837, 4294901760
    %v1839 = vsub.f32 %v1837, %v1838
    %v1840 = vand.u32 %v1839, 4294901760
    %1841 = vmatprep.subr.mxu0 %v1840
    %v1842 = vand.u32 %v190, 4294901760
    %v1843 = vsub.f32 %v190, %v1842
    %v1844 = vand.u32 %v1843, 4294901760
    %v1845 = vsub.f32 %v1843, %v1844
    %v1846 = vand.u32 %v1845, 4294901760
    %1847 = vmatpush1.msra.mxu0 %v1846
    %v1848 = vand.u32 %v195, 4294901760
    %v1849 = vsub.f32 %v195, %v1848
    %v1850 = vand.u32 %v1849, 4294901760
    %v1851 = vsub.f32 %v1849, %v1850
    %v1852 = vand.u32 %v1851, 4294901760
    %1853 = vmatprep.subr.mxu0 %v1852
    %v1854 = vand.u32 %v194, 4294901760
    %v1855 = vsub.f32 %v194, %v1854
    %v1856 = vand.u32 %v1855, 4294901760
    %v1857 = vsub.f32 %v1855, %v1856
    %v1858 = vand.u32 %v1857, 4294901760
    %1859 = vmatpush1.msra.mxu0 %v1858
    %v1860 = vand.u32 %v199, 4294901760
    %v1861 = vsub.f32 %v199, %v1860
    %v1862 = vand.u32 %v1861, 4294901760
    %v1863 = vsub.f32 %v1861, %v1862
    %v1864 = vand.u32 %v1863, 4294901760
    %1865 = vmatprep.subr.mxu0 %v1864
    %v1866 = vand.u32 %v198, 4294901760
    %v1867 = vsub.f32 %v198, %v1866
    %v1868 = vand.u32 %v1867, 4294901760
    %v1869 = vsub.f32 %v1867, %v1868
    %v1870 = vand.u32 %v1869, 4294901760
    %1871 = vmatpush1.msra.mxu0 %v1870
    %v1872 = vand.u32 %v203, 4294901760
    %v1873 = vsub.f32 %v203, %v1872
    %v1874 = vand.u32 %v1873, 4294901760
    %v1875 = vsub.f32 %v1873, %v1874
    %v1876 = vand.u32 %v1875, 4294901760
    %1877 = vmatprep.subr.mxu0 %v1876
    %v1878 = vand.u32 %v202, 4294901760
    %v1879 = vsub.f32 %v202, %v1878
    %v1880 = vand.u32 %v1879, 4294901760
    %v1881 = vsub.f32 %v1879, %v1880
    %v1882 = vand.u32 %v1881, 4294901760
    %1883 = vmatpush1.msra.mxu0 %v1882
    %v1884 = vand.u32 %v207, 4294901760
    %v1885 = vsub.f32 %v207, %v1884
    %v1886 = vand.u32 %v1885, 4294901760
    %v1887 = vsub.f32 %v1885, %v1886
    %v1888 = vand.u32 %v1887, 4294901760
    %1889 = vmatprep.subr.mxu0 %v1888
    %v1890 = vand.u32 %v206, 4294901760
    %v1891 = vsub.f32 %v206, %v1890
    %v1892 = vand.u32 %v1891, 4294901760
    %v1893 = vsub.f32 %v1891, %v1892
    %v1894 = vand.u32 %v1893, 4294901760
    %1895 = vmatpush1.msra.mxu0 %v1894
    %v1896 = vand.u32 %v211, 4294901760
    %v1897 = vsub.f32 %v211, %v1896
    %v1898 = vand.u32 %v1897, 4294901760
    %v1899 = vsub.f32 %v1897, %v1898
    %v1900 = vand.u32 %v1899, 4294901760
    %1901 = vmatprep.subr.mxu0 %v1900
    %v1902 = vand.u32 %v210, 4294901760
    %v1903 = vsub.f32 %v210, %v1902
    %v1904 = vand.u32 %v1903, 4294901760
    %v1905 = vsub.f32 %v1903, %v1904
    %v1906 = vand.u32 %v1905, 4294901760
    %1907 = vmatpush1.msra.mxu0 %v1906
    %v1908 = vand.u32 %v215, 4294901760
    %v1909 = vsub.f32 %v215, %v1908
    %v1910 = vand.u32 %v1909, 4294901760
    %v1911 = vsub.f32 %v1909, %v1910
    %v1912 = vand.u32 %v1911, 4294901760
    %1913 = vmatprep.subr.mxu0 %v1912
    %v1914 = vand.u32 %v214, 4294901760
    %v1915 = vsub.f32 %v214, %v1914
    %v1916 = vand.u32 %v1915, 4294901760
    %v1917 = vsub.f32 %v1915, %v1916
    %v1918 = vand.u32 %v1917, 4294901760
    %1919 = vmatpush1.msra.mxu0 %v1918
    %v1920 = vand.u32 %v219, 4294901760
    %v1921 = vsub.f32 %v219, %v1920
    %v1922 = vand.u32 %v1921, 4294901760
    %v1923 = vsub.f32 %v1921, %v1922
    %v1924 = vand.u32 %v1923, 4294901760
    %1925 = vmatprep.subr.mxu0 %v1924
    %v1926 = vand.u32 %v218, 4294901760
    %v1927 = vsub.f32 %v218, %v1926
    %v1928 = vand.u32 %v1927, 4294901760
    %v1929 = vsub.f32 %v1927, %v1928
    %v1930 = vand.u32 %v1929, 4294901760
    %1931 = vmatpush1.msra.mxu0 %v1930
    %v1932 = vand.u32 %v223, 4294901760
    %v1933 = vsub.f32 %v223, %v1932
    %v1934 = vand.u32 %v1933, 4294901760
    %v1935 = vsub.f32 %v1933, %v1934
    %v1936 = vand.u32 %v1935, 4294901760
    %1937 = vmatprep.subr.mxu0 %v1936
    %v1938 = vand.u32 %v222, 4294901760
    %v1939 = vsub.f32 %v222, %v1938
    %v1940 = vand.u32 %v1939, 4294901760
    %v1941 = vsub.f32 %v1939, %v1940
    %v1942 = vand.u32 %v1941, 4294901760
    %1943 = vmatpush1.msra.mxu0 %v1942
    %v1944 = vand.u32 %v227, 4294901760
    %v1945 = vsub.f32 %v227, %v1944
    %v1946 = vand.u32 %v1945, 4294901760
    %v1947 = vsub.f32 %v1945, %v1946
    %v1948 = vand.u32 %v1947, 4294901760
    %1949 = vmatprep.subr.mxu0 %v1948
    %v1950 = vand.u32 %v226, 4294901760
    %v1951 = vsub.f32 %v226, %v1950
    %v1952 = vand.u32 %v1951, 4294901760
    %v1953 = vsub.f32 %v1951, %v1952
    %v1954 = vand.u32 %v1953, 4294901760
    %1955 = vmatpush1.msra.mxu0 %v1954
    %v1956 = vand.u32 %v231, 4294901760
    %v1957 = vsub.f32 %v231, %v1956
    %v1958 = vand.u32 %v1957, 4294901760
    %v1959 = vsub.f32 %v1957, %v1958
    %v1960 = vand.u32 %v1959, 4294901760
    %1961 = vmatprep.subr.mxu0 %v1960
    %v1962 = vand.u32 %v230, 4294901760
    %v1963 = vsub.f32 %v230, %v1962
    %v1964 = vand.u32 %v1963, 4294901760
    %v1965 = vsub.f32 %v1963, %v1964
    %v1966 = vand.u32 %v1965, 4294901760
    %1967 = vmatpush1.msra.mxu0 %v1966
    %v1968 = vand.u32 %v235, 4294901760
    %v1969 = vsub.f32 %v235, %v1968
    %v1970 = vand.u32 %v1969, 4294901760
    %v1971 = vsub.f32 %v1969, %v1970
    %v1972 = vand.u32 %v1971, 4294901760
    %1973 = vmatprep.subr.mxu0 %v1972
    %v1974 = vand.u32 %v234, 4294901760
    %v1975 = vsub.f32 %v234, %v1974
    %v1976 = vand.u32 %v1975, 4294901760
    %v1977 = vsub.f32 %v1975, %v1976
    %v1978 = vand.u32 %v1977, 4294901760
    %1979 = vmatpush1.msra.mxu0 %v1978
    %v1980 = vand.u32 %v239, 4294901760
    %v1981 = vsub.f32 %v239, %v1980
    %v1982 = vand.u32 %v1981, 4294901760
    %v1983 = vsub.f32 %v1981, %v1982
    %v1984 = vand.u32 %v1983, 4294901760
    %1985 = vmatprep.subr.mxu0 %v1984
    %v1986 = vand.u32 %v238, 4294901760
    %v1987 = vsub.f32 %v238, %v1986
    %v1988 = vand.u32 %v1987, 4294901760
    %v1989 = vsub.f32 %v1987, %v1988
    %v1990 = vand.u32 %v1989, 4294901760
    %1991 = vmatpush1.msra.mxu0 %v1990
    %v1992 = vand.u32 %v243, 4294901760
    %v1993 = vsub.f32 %v243, %v1992
    %v1994 = vand.u32 %v1993, 4294901760
    %v1995 = vsub.f32 %v1993, %v1994
    %v1996 = vand.u32 %v1995, 4294901760
    %1997 = vmatprep.subr.mxu0 %v1996
    %v1998 = vand.u32 %v242, 4294901760
    %v1999 = vsub.f32 %v242, %v1998
    %v2000 = vand.u32 %v1999, 4294901760
    %v2001 = vsub.f32 %v1999, %v2000
    %v2002 = vand.u32 %v2001, 4294901760
    %2003 = vmatpush1.msra.mxu0 %v2002
    %v2004 = vand.u32 %v247, 4294901760
    %v2005 = vsub.f32 %v247, %v2004
    %v2006 = vand.u32 %v2005, 4294901760
    %v2007 = vsub.f32 %v2005, %v2006
    %v2008 = vand.u32 %v2007, 4294901760
    %2009 = vmatprep.subr.mxu0 %v2008
    %v2010 = vand.u32 %v246, 4294901760
    %v2011 = vsub.f32 %v246, %v2010
    %v2012 = vand.u32 %v2011, 4294901760
    %v2013 = vsub.f32 %v2011, %v2012
    %v2014 = vand.u32 %v2013, 4294901760
    %2015 = vmatpush1.msra.mxu0 %v2014
    %v2016 = vand.u32 %v251, 4294901760
    %v2017 = vsub.f32 %v251, %v2016
    %v2018 = vand.u32 %v2017, 4294901760
    %v2019 = vsub.f32 %v2017, %v2018
    %v2020 = vand.u32 %v2019, 4294901760
    %2021 = vmatprep.subr.mxu0 %v2020
    %v2022 = vand.u32 %v250, 4294901760
    %v2023 = vsub.f32 %v250, %v2022
    %v2024 = vand.u32 %v2023, 4294901760
    %v2025 = vsub.f32 %v2023, %v2024
    %v2026 = vand.u32 %v2025, 4294901760
    %2027 = vmatpush1.msra.mxu0 %v2026
    %v2028 = vand.u32 %v255, 4294901760
    %v2029 = vsub.f32 %v255, %v2028
    %v2030 = vand.u32 %v2029, 4294901760
    %v2031 = vsub.f32 %v2029, %v2030
    %v2032 = vand.u32 %v2031, 4294901760
    %2033 = vmatprep.subr.mxu0 %v2032
    %v2034 = vand.u32 %v254, 4294901760
    %v2035 = vsub.f32 %v254, %v2034
    %v2036 = vand.u32 %v2035, 4294901760
    %v2037 = vsub.f32 %v2035, %v2036
    %v2038 = vand.u32 %v2037, 4294901760
    %2039 = vmatpush1.msra.mxu0 %v2038
    %v2040 = vand.u32 %v259, 4294901760
    %v2041 = vsub.f32 %v259, %v2040
    %v2042 = vand.u32 %v2041, 4294901760
    %v2043 = vsub.f32 %v2041, %v2042
    %v2044 = vand.u32 %v2043, 4294901760
    %2045 = vmatprep.subr.mxu0 %v2044
    %v2046 = vand.u32 %v258, 4294901760
    %v2047 = vsub.f32 %v258, %v2046
    %v2048 = vand.u32 %v2047, 4294901760
    %v2049 = vsub.f32 %v2047, %v2048
    %v2050 = vand.u32 %v2049, 4294901760
    %2051 = vmatpush1.msra.mxu0 %v2050
    %v2052 = vand.u32 %v263, 4294901760
    %v2053 = vsub.f32 %v263, %v2052
    %v2054 = vand.u32 %v2053, 4294901760
    %v2055 = vsub.f32 %v2053, %v2054
    %v2056 = vand.u32 %v2055, 4294901760
    %2057 = vmatprep.subr.mxu0 %v2056
    %v2058 = vand.u32 %v262, 4294901760
    %v2059 = vsub.f32 %v262, %v2058
    %v2060 = vand.u32 %v2059, 4294901760
    %v2061 = vsub.f32 %v2059, %v2060
    %v2062 = vand.u32 %v2061, 4294901760
    %2063 = vmatpush1.msra.mxu0 %v2062
    %v2064 = vand.u32 %v267, 4294901760
    %v2065 = vsub.f32 %v267, %v2064
    %v2066 = vand.u32 %v2065, 4294901760
    %v2067 = vsub.f32 %v2065, %v2066
    %v2068 = vand.u32 %v2067, 4294901760
    %2069 = vmatprep.subr.mxu0 %v2068
    %v2070 = vand.u32 %v266, 4294901760
    %v2071 = vsub.f32 %v266, %v2070
    %v2072 = vand.u32 %v2071, 4294901760
    %v2073 = vsub.f32 %v2071, %v2072
    %v2074 = vand.u32 %v2073, 4294901760
    %2075 = vmatpush1.msra.mxu0 %v2074
    %v2076 = vand.u32 %v271, 4294901760
    %v2077 = vsub.f32 %v271, %v2076
    %v2078 = vand.u32 %v2077, 4294901760
    %v2079 = vsub.f32 %v2077, %v2078
    %v2080 = vand.u32 %v2079, 4294901760
    %2081 = vmatprep.subr.mxu0 %v2080
    %v2082 = vand.u32 %v270, 4294901760
    %v2083 = vsub.f32 %v270, %v2082
    %v2084 = vand.u32 %v2083, 4294901760
    %v2085 = vsub.f32 %v2083, %v2084
    %v2086 = vand.u32 %v2085, 4294901760
    %2087 = vmatpush1.msra.mxu0 %v2086
    %v2088 = vand.u32 %v273, 4294901760
    %2089 = vmatprep.mubr.f32.mxu0 %v2088
    %v2090 = vand.u32 %v143, 4294901760
    %2091 = vmatmul.mubr.f32.gmra.mrb[0].mxu0 %v2090
    %v2092 = vpop.f32.mrb[0].mxu0
    %v2093 = vadd.f32 %v1700, %v2092
    %v2094 = vpop.f32.mrb[0].mxu0
    %v2095 = vadd.f32 %v1702, %v2094
    %2096 = vdwg.mxu0
    %v2097 = vand.u32 %v147, 4294901760
    %v2098 = vsub.f32 %v147, %v2097
    %2099 = vmatprep.subr.mxu0 %v2098
    %v2100 = vand.u32 %v146, 4294901760
    %v2101 = vsub.f32 %v146, %v2100
    %2102 = vmatpush1.msra.mxu0 %v2101
    %v2103 = vand.u32 %v151, 4294901760
    %v2104 = vsub.f32 %v151, %v2103
    %2105 = vmatprep.subr.mxu0 %v2104
    %v2106 = vand.u32 %v150, 4294901760
    %v2107 = vsub.f32 %v150, %v2106
    %2108 = vmatpush1.msra.mxu0 %v2107
    %v2109 = vand.u32 %v155, 4294901760
    %v2110 = vsub.f32 %v155, %v2109
    %2111 = vmatprep.subr.mxu0 %v2110
    %v2112 = vand.u32 %v154, 4294901760
    %v2113 = vsub.f32 %v154, %v2112
    %2114 = vmatpush1.msra.mxu0 %v2113
    %v2115 = vand.u32 %v159, 4294901760
    %v2116 = vsub.f32 %v159, %v2115
    %2117 = vmatprep.subr.mxu0 %v2116
    %v2118 = vand.u32 %v158, 4294901760
    %v2119 = vsub.f32 %v158, %v2118
    %2120 = vmatpush1.msra.mxu0 %v2119
    %v2121 = vand.u32 %v163, 4294901760
    %v2122 = vsub.f32 %v163, %v2121
    %2123 = vmatprep.subr.mxu0 %v2122
    %v2124 = vand.u32 %v162, 4294901760
    %v2125 = vsub.f32 %v162, %v2124
    %2126 = vmatpush1.msra.mxu0 %v2125
    %v2127 = vand.u32 %v167, 4294901760
    %v2128 = vsub.f32 %v167, %v2127
    %2129 = vmatprep.subr.mxu0 %v2128
    %v2130 = vand.u32 %v166, 4294901760
    %v2131 = vsub.f32 %v166, %v2130
    %2132 = vmatpush1.msra.mxu0 %v2131
    %v2133 = vand.u32 %v171, 4294901760
    %v2134 = vsub.f32 %v171, %v2133
    %2135 = vmatprep.subr.mxu0 %v2134
    %v2136 = vand.u32 %v170, 4294901760
    %v2137 = vsub.f32 %v170, %v2136
    %2138 = vmatpush1.msra.mxu0 %v2137
    %v2139 = vand.u32 %v175, 4294901760
    %v2140 = vsub.f32 %v175, %v2139
    %2141 = vmatprep.subr.mxu0 %v2140
    %v2142 = vand.u32 %v174, 4294901760
    %v2143 = vsub.f32 %v174, %v2142
    %2144 = vmatpush1.msra.mxu0 %v2143
    %v2145 = vand.u32 %v179, 4294901760
    %v2146 = vsub.f32 %v179, %v2145
    %2147 = vmatprep.subr.mxu0 %v2146
    %v2148 = vand.u32 %v178, 4294901760
    %v2149 = vsub.f32 %v178, %v2148
    %2150 = vmatpush1.msra.mxu0 %v2149
    %v2151 = vand.u32 %v183, 4294901760
    %v2152 = vsub.f32 %v183, %v2151
    %2153 = vmatprep.subr.mxu0 %v2152
    %v2154 = vand.u32 %v182, 4294901760
    %v2155 = vsub.f32 %v182, %v2154
    %2156 = vmatpush1.msra.mxu0 %v2155
    %v2157 = vand.u32 %v187, 4294901760
    %v2158 = vsub.f32 %v187, %v2157
    %2159 = vmatprep.subr.mxu0 %v2158
    %v2160 = vand.u32 %v186, 4294901760
    %v2161 = vsub.f32 %v186, %v2160
    %2162 = vmatpush1.msra.mxu0 %v2161
    %v2163 = vand.u32 %v191, 4294901760
    %v2164 = vsub.f32 %v191, %v2163
    %2165 = vmatprep.subr.mxu0 %v2164
    %v2166 = vand.u32 %v190, 4294901760
    %v2167 = vsub.f32 %v190, %v2166
    %2168 = vmatpush1.msra.mxu0 %v2167
    %v2169 = vand.u32 %v195, 4294901760
    %v2170 = vsub.f32 %v195, %v2169
    %2171 = vmatprep.subr.mxu0 %v2170
    %v2172 = vand.u32 %v194, 4294901760
    %v2173 = vsub.f32 %v194, %v2172
    %2174 = vmatpush1.msra.mxu0 %v2173
    %v2175 = vand.u32 %v199, 4294901760
    %v2176 = vsub.f32 %v199, %v2175
    %2177 = vmatprep.subr.mxu0 %v2176
    %v2178 = vand.u32 %v198, 4294901760
    %v2179 = vsub.f32 %v198, %v2178
    %2180 = vmatpush1.msra.mxu0 %v2179
    %v2181 = vand.u32 %v203, 4294901760
    %v2182 = vsub.f32 %v203, %v2181
    %2183 = vmatprep.subr.mxu0 %v2182
    %v2184 = vand.u32 %v202, 4294901760
    %v2185 = vsub.f32 %v202, %v2184
    %2186 = vmatpush1.msra.mxu0 %v2185
    %v2187 = vand.u32 %v207, 4294901760
    %v2188 = vsub.f32 %v207, %v2187
    %2189 = vmatprep.subr.mxu0 %v2188
    %v2190 = vand.u32 %v206, 4294901760
    %v2191 = vsub.f32 %v206, %v2190
    %2192 = vmatpush1.msra.mxu0 %v2191
    %v2193 = vand.u32 %v211, 4294901760
    %v2194 = vsub.f32 %v211, %v2193
    %2195 = vmatprep.subr.mxu0 %v2194
    %v2196 = vand.u32 %v210, 4294901760
    %v2197 = vsub.f32 %v210, %v2196
    %2198 = vmatpush1.msra.mxu0 %v2197
    %v2199 = vand.u32 %v215, 4294901760
    %v2200 = vsub.f32 %v215, %v2199
    %2201 = vmatprep.subr.mxu0 %v2200
    %v2202 = vand.u32 %v214, 4294901760
    %v2203 = vsub.f32 %v214, %v2202
    %2204 = vmatpush1.msra.mxu0 %v2203
    %v2205 = vand.u32 %v219, 4294901760
    %v2206 = vsub.f32 %v219, %v2205
    %2207 = vmatprep.subr.mxu0 %v2206
    %v2208 = vand.u32 %v218, 4294901760
    %v2209 = vsub.f32 %v218, %v2208
    %2210 = vmatpush1.msra.mxu0 %v2209
    %v2211 = vand.u32 %v223, 4294901760
    %v2212 = vsub.f32 %v223, %v2211
    %2213 = vmatprep.subr.mxu0 %v2212
    %v2214 = vand.u32 %v222, 4294901760
    %v2215 = vsub.f32 %v222, %v2214
    %2216 = vmatpush1.msra.mxu0 %v2215
    %v2217 = vand.u32 %v227, 4294901760
    %v2218 = vsub.f32 %v227, %v2217
    %2219 = vmatprep.subr.mxu0 %v2218
    %v2220 = vand.u32 %v226, 4294901760
    %v2221 = vsub.f32 %v226, %v2220
    %2222 = vmatpush1.msra.mxu0 %v2221
    %v2223 = vand.u32 %v231, 4294901760
    %v2224 = vsub.f32 %v231, %v2223
    %2225 = vmatprep.subr.mxu0 %v2224
    %v2226 = vand.u32 %v230, 4294901760
    %v2227 = vsub.f32 %v230, %v2226
    %2228 = vmatpush1.msra.mxu0 %v2227
    %v2229 = vand.u32 %v235, 4294901760
    %v2230 = vsub.f32 %v235, %v2229
    %2231 = vmatprep.subr.mxu0 %v2230
    %v2232 = vand.u32 %v234, 4294901760
    %v2233 = vsub.f32 %v234, %v2232
    %2234 = vmatpush1.msra.mxu0 %v2233
    %v2235 = vand.u32 %v239, 4294901760
    %v2236 = vsub.f32 %v239, %v2235
    %2237 = vmatprep.subr.mxu0 %v2236
    %v2238 = vand.u32 %v238, 4294901760
    %v2239 = vsub.f32 %v238, %v2238
    %2240 = vmatpush1.msra.mxu0 %v2239
    %v2241 = vand.u32 %v243, 4294901760
    %v2242 = vsub.f32 %v243, %v2241
    %2243 = vmatprep.subr.mxu0 %v2242
    %v2244 = vand.u32 %v242, 4294901760
    %v2245 = vsub.f32 %v242, %v2244
    %2246 = vmatpush1.msra.mxu0 %v2245
    %v2247 = vand.u32 %v247, 4294901760
    %v2248 = vsub.f32 %v247, %v2247
    %2249 = vmatprep.subr.mxu0 %v2248
    %v2250 = vand.u32 %v246, 4294901760
    %v2251 = vsub.f32 %v246, %v2250
    %2252 = vmatpush1.msra.mxu0 %v2251
    %v2253 = vand.u32 %v251, 4294901760
    %v2254 = vsub.f32 %v251, %v2253
    %2255 = vmatprep.subr.mxu0 %v2254
    %v2256 = vand.u32 %v250, 4294901760
    %v2257 = vsub.f32 %v250, %v2256
    %2258 = vmatpush1.msra.mxu0 %v2257
    %v2259 = vand.u32 %v255, 4294901760
    %v2260 = vsub.f32 %v255, %v2259
    %2261 = vmatprep.subr.mxu0 %v2260
    %v2262 = vand.u32 %v254, 4294901760
    %v2263 = vsub.f32 %v254, %v2262
    %2264 = vmatpush1.msra.mxu0 %v2263
    %v2265 = vand.u32 %v259, 4294901760
    %v2266 = vsub.f32 %v259, %v2265
    %2267 = vmatprep.subr.mxu0 %v2266
    %v2268 = vand.u32 %v258, 4294901760
    %v2269 = vsub.f32 %v258, %v2268
    %2270 = vmatpush1.msra.mxu0 %v2269
    %v2271 = vand.u32 %v263, 4294901760
    %v2272 = vsub.f32 %v263, %v2271
    %2273 = vmatprep.subr.mxu0 %v2272
    %v2274 = vand.u32 %v262, 4294901760
    %v2275 = vsub.f32 %v262, %v2274
    %2276 = vmatpush1.msra.mxu0 %v2275
    %v2277 = vand.u32 %v267, 4294901760
    %v2278 = vsub.f32 %v267, %v2277
    %2279 = vmatprep.subr.mxu0 %v2278
    %v2280 = vand.u32 %v266, 4294901760
    %v2281 = vsub.f32 %v266, %v2280
    %2282 = vmatpush1.msra.mxu0 %v2281
    %v2283 = vand.u32 %v271, 4294901760
    %v2284 = vsub.f32 %v271, %v2283
    %2285 = vmatprep.subr.mxu0 %v2284
    %v2286 = vand.u32 %v270, 4294901760
    %v2287 = vsub.f32 %v270, %v2286
    %2288 = vmatpush1.msra.mxu0 %v2287
    %v2289 = vand.u32 %v273, 4294901760
    %v2290 = vsub.f32 %v273, %v2289
    %2291 = vmatprep.mubr.f32.mxu0 %v2290
    %v2292 = vand.u32 %v143, 4294901760
    %v2293 = vsub.f32 %v143, %v2292
    %2294 = vmatmul.mubr.f32.gmra.mrb[0].mxu0 %v2293
    %v2295 = vpop.f32.mrb[0].mxu0
    %v2296 = vadd.f32 %v2093, %v2295
    %v2297 = vpop.f32.mrb[0].mxu0
    %v2298 = vadd.f32 %v2095, %v2297
    %2299 = vdwg.mxu0
    %v2300 = vand.u32 %v147, 4294901760
    %2301 = vmatprep.subr.mxu0 %v2300
    %v2302 = vand.u32 %v146, 4294901760
    %2303 = vmatpush1.msra.mxu0 %v2302
    %v2304 = vand.u32 %v151, 4294901760
    %2305 = vmatprep.subr.mxu0 %v2304
    %v2306 = vand.u32 %v150, 4294901760
    %2307 = vmatpush1.msra.mxu0 %v2306
    %v2308 = vand.u32 %v155, 4294901760
    %2309 = vmatprep.subr.mxu0 %v2308
    %v2310 = vand.u32 %v154, 4294901760
    %2311 = vmatpush1.msra.mxu0 %v2310
    %v2312 = vand.u32 %v159, 4294901760
    %2313 = vmatprep.subr.mxu0 %v2312
    %v2314 = vand.u32 %v158, 4294901760
    %2315 = vmatpush1.msra.mxu0 %v2314
    %v2316 = vand.u32 %v163, 4294901760
    %2317 = vmatprep.subr.mxu0 %v2316
    %v2318 = vand.u32 %v162, 4294901760
    %2319 = vmatpush1.msra.mxu0 %v2318
    %v2320 = vand.u32 %v167, 4294901760
    %2321 = vmatprep.subr.mxu0 %v2320
    %v2322 = vand.u32 %v166, 4294901760
    %2323 = vmatpush1.msra.mxu0 %v2322
    %v2324 = vand.u32 %v171, 4294901760
    %2325 = vmatprep.subr.mxu0 %v2324
    %v2326 = vand.u32 %v170, 4294901760
    %2327 = vmatpush1.msra.mxu0 %v2326
    %v2328 = vand.u32 %v175, 4294901760
    %2329 = vmatprep.subr.mxu0 %v2328
    %v2330 = vand.u32 %v174, 4294901760
    %2331 = vmatpush1.msra.mxu0 %v2330
    %v2332 = vand.u32 %v179, 4294901760
    %2333 = vmatprep.subr.mxu0 %v2332
    %v2334 = vand.u32 %v178, 4294901760
    %2335 = vmatpush1.msra.mxu0 %v2334
    %v2336 = vand.u32 %v183, 4294901760
    %2337 = vmatprep.subr.mxu0 %v2336
    %v2338 = vand.u32 %v182, 4294901760
    %2339 = vmatpush1.msra.mxu0 %v2338
    %v2340 = vand.u32 %v187, 4294901760
    %2341 = vmatprep.subr.mxu0 %v2340
    %v2342 = vand.u32 %v186, 4294901760
    %2343 = vmatpush1.msra.mxu0 %v2342
    %v2344 = vand.u32 %v191, 4294901760
    %2345 = vmatprep.subr.mxu0 %v2344
    %v2346 = vand.u32 %v190, 4294901760
    %2347 = vmatpush1.msra.mxu0 %v2346
    %v2348 = vand.u32 %v195, 4294901760
    %2349 = vmatprep.subr.mxu0 %v2348
    %v2350 = vand.u32 %v194, 4294901760
    %2351 = vmatpush1.msra.mxu0 %v2350
    %v2352 = vand.u32 %v199, 4294901760
    %2353 = vmatprep.subr.mxu0 %v2352
    %v2354 = vand.u32 %v198, 4294901760
    %2355 = vmatpush1.msra.mxu0 %v2354
    %v2356 = vand.u32 %v203, 4294901760
    %2357 = vmatprep.subr.mxu0 %v2356
    %v2358 = vand.u32 %v202, 4294901760
    %2359 = vmatpush1.msra.mxu0 %v2358
    %v2360 = vand.u32 %v207, 4294901760
    %2361 = vmatprep.subr.mxu0 %v2360
    %v2362 = vand.u32 %v206, 4294901760
    %2363 = vmatpush1.msra.mxu0 %v2362
    %v2364 = vand.u32 %v211, 4294901760
    %2365 = vmatprep.subr.mxu0 %v2364
    %v2366 = vand.u32 %v210, 4294901760
    %2367 = vmatpush1.msra.mxu0 %v2366
    %v2368 = vand.u32 %v215, 4294901760
    %2369 = vmatprep.subr.mxu0 %v2368
    %v2370 = vand.u32 %v214, 4294901760
    %2371 = vmatpush1.msra.mxu0 %v2370
    %v2372 = vand.u32 %v219, 4294901760
    %2373 = vmatprep.subr.mxu0 %v2372
    %v2374 = vand.u32 %v218, 4294901760
    %2375 = vmatpush1.msra.mxu0 %v2374
    %v2376 = vand.u32 %v223, 4294901760
    %2377 = vmatprep.subr.mxu0 %v2376
    %v2378 = vand.u32 %v222, 4294901760
    %2379 = vmatpush1.msra.mxu0 %v2378
    %v2380 = vand.u32 %v227, 4294901760
    %2381 = vmatprep.subr.mxu0 %v2380
    %v2382 = vand.u32 %v226, 4294901760
    %2383 = vmatpush1.msra.mxu0 %v2382
    %v2384 = vand.u32 %v231, 4294901760
    %2385 = vmatprep.subr.mxu0 %v2384
    %v2386 = vand.u32 %v230, 4294901760
    %2387 = vmatpush1.msra.mxu0 %v2386
    %v2388 = vand.u32 %v235, 4294901760
    %2389 = vmatprep.subr.mxu0 %v2388
    %v2390 = vand.u32 %v234, 4294901760
    %2391 = vmatpush1.msra.mxu0 %v2390
    %v2392 = vand.u32 %v239, 4294901760
    %2393 = vmatprep.subr.mxu0 %v2392
    %v2394 = vand.u32 %v238, 4294901760
    %2395 = vmatpush1.msra.mxu0 %v2394
    %v2396 = vand.u32 %v243, 4294901760
    %2397 = vmatprep.subr.mxu0 %v2396
    %v2398 = vand.u32 %v242, 4294901760
    %2399 = vmatpush1.msra.mxu0 %v2398
    %v2400 = vand.u32 %v247, 4294901760
    %2401 = vmatprep.subr.mxu0 %v2400
    %v2402 = vand.u32 %v246, 4294901760
    %2403 = vmatpush1.msra.mxu0 %v2402
    %v2404 = vand.u32 %v251, 4294901760
    %2405 = vmatprep.subr.mxu0 %v2404
    %v2406 = vand.u32 %v250, 4294901760
    %2407 = vmatpush1.msra.mxu0 %v2406
    %v2408 = vand.u32 %v255, 4294901760
    %2409 = vmatprep.subr.mxu0 %v2408
    %v2410 = vand.u32 %v254, 4294901760
    %2411 = vmatpush1.msra.mxu0 %v2410
    %v2412 = vand.u32 %v259, 4294901760
    %2413 = vmatprep.subr.mxu0 %v2412
    %v2414 = vand.u32 %v258, 4294901760
    %2415 = vmatpush1.msra.mxu0 %v2414
    %v2416 = vand.u32 %v263, 4294901760
    %2417 = vmatprep.subr.mxu0 %v2416
    %v2418 = vand.u32 %v262, 4294901760
    %2419 = vmatpush1.msra.mxu0 %v2418
    %v2420 = vand.u32 %v267, 4294901760
    %2421 = vmatprep.subr.mxu0 %v2420
    %v2422 = vand.u32 %v266, 4294901760
    %2423 = vmatpush1.msra.mxu0 %v2422
    %v2424 = vand.u32 %v271, 4294901760
    %2425 = vmatprep.subr.mxu0 %v2424
    %v2426 = vand.u32 %v270, 4294901760
    %2427 = vmatpush1.msra.mxu0 %v2426
    %v2428 = vand.u32 %v273, 4294901760
    %v2429 = vsub.f32 %v273, %v2428
    %v2430 = vand.u32 %v2429, 4294901760
    %2431 = vmatprep.mubr.f32.mxu0 %v2430
    %v2432 = vand.u32 %v143, 4294901760
    %v2433 = vsub.f32 %v143, %v2432
    %v2434 = vand.u32 %v2433, 4294901760
    %2435 = vmatmul.mubr.f32.gmra.mrb[0].mxu0 %v2434
    %v2436 = vpop.f32.mrb[0].mxu0
    %v2437 = vadd.f32 %v2296, %v2436
    %v2438 = vpop.f32.mrb[0].mxu0
    %v2439 = vadd.f32 %v2298, %v2438
    %2440 = vdwg.mxu0
    %v2441 = vand.u32 %v147, 4294901760
    %v2442 = vsub.f32 %v147, %v2441
    %v2443 = vand.u32 %v2442, 4294901760
    %2444 = vmatprep.subr.mxu0 %v2443
    %v2445 = vand.u32 %v146, 4294901760
    %v2446 = vsub.f32 %v146, %v2445
    %v2447 = vand.u32 %v2446, 4294901760
    %2448 = vmatpush1.msra.mxu0 %v2447
    %v2449 = vand.u32 %v151, 4294901760
    %v2450 = vsub.f32 %v151, %v2449
    %v2451 = vand.u32 %v2450, 4294901760
    %2452 = vmatprep.subr.mxu0 %v2451
    %v2453 = vand.u32 %v150, 4294901760
    %v2454 = vsub.f32 %v150, %v2453
    %v2455 = vand.u32 %v2454, 4294901760
    %2456 = vmatpush1.msra.mxu0 %v2455
    %v2457 = vand.u32 %v155, 4294901760
    %v2458 = vsub.f32 %v155, %v2457
    %v2459 = vand.u32 %v2458, 4294901760
    %2460 = vmatprep.subr.mxu0 %v2459
    %v2461 = vand.u32 %v154, 4294901760
    %v2462 = vsub.f32 %v154, %v2461
    %v2463 = vand.u32 %v2462, 4294901760
    %2464 = vmatpush1.msra.mxu0 %v2463
    %v2465 = vand.u32 %v159, 4294901760
    %v2466 = vsub.f32 %v159, %v2465
    %v2467 = vand.u32 %v2466, 4294901760
    %2468 = vmatprep.subr.mxu0 %v2467
    %v2469 = vand.u32 %v158, 4294901760
    %v2470 = vsub.f32 %v158, %v2469
    %v2471 = vand.u32 %v2470, 4294901760
    %2472 = vmatpush1.msra.mxu0 %v2471
    %v2473 = vand.u32 %v163, 4294901760
    %v2474 = vsub.f32 %v163, %v2473
    %v2475 = vand.u32 %v2474, 4294901760
    %2476 = vmatprep.subr.mxu0 %v2475
    %v2477 = vand.u32 %v162, 4294901760
    %v2478 = vsub.f32 %v162, %v2477
    %v2479 = vand.u32 %v2478, 4294901760
    %2480 = vmatpush1.msra.mxu0 %v2479
    %v2481 = vand.u32 %v167, 4294901760
    %v2482 = vsub.f32 %v167, %v2481
    %v2483 = vand.u32 %v2482, 4294901760
    %2484 = vmatprep.subr.mxu0 %v2483
    %v2485 = vand.u32 %v166, 4294901760
    %v2486 = vsub.f32 %v166, %v2485
    %v2487 = vand.u32 %v2486, 4294901760
    %2488 = vmatpush1.msra.mxu0 %v2487
    %v2489 = vand.u32 %v171, 4294901760
    %v2490 = vsub.f32 %v171, %v2489
    %v2491 = vand.u32 %v2490, 4294901760
    %2492 = vmatprep.subr.mxu0 %v2491
    %v2493 = vand.u32 %v170, 4294901760
    %v2494 = vsub.f32 %v170, %v2493
    %v2495 = vand.u32 %v2494, 4294901760
    %2496 = vmatpush1.msra.mxu0 %v2495
    %v2497 = vand.u32 %v175, 4294901760
    %v2498 = vsub.f32 %v175, %v2497
    %v2499 = vand.u32 %v2498, 4294901760
    %2500 = vmatprep.subr.mxu0 %v2499
    %v2501 = vand.u32 %v174, 4294901760
    %v2502 = vsub.f32 %v174, %v2501
    %v2503 = vand.u32 %v2502, 4294901760
    %2504 = vmatpush1.msra.mxu0 %v2503
    %v2505 = vand.u32 %v179, 4294901760
    %v2506 = vsub.f32 %v179, %v2505
    %v2507 = vand.u32 %v2506, 4294901760
    %2508 = vmatprep.subr.mxu0 %v2507
    %v2509 = vand.u32 %v178, 4294901760
    %v2510 = vsub.f32 %v178, %v2509
    %v2511 = vand.u32 %v2510, 4294901760
    %2512 = vmatpush1.msra.mxu0 %v2511
    %v2513 = vand.u32 %v183, 4294901760
    %v2514 = vsub.f32 %v183, %v2513
    %v2515 = vand.u32 %v2514, 4294901760
    %2516 = vmatprep.subr.mxu0 %v2515
    %v2517 = vand.u32 %v182, 4294901760
    %v2518 = vsub.f32 %v182, %v2517
    %v2519 = vand.u32 %v2518, 4294901760
    %2520 = vmatpush1.msra.mxu0 %v2519
    %v2521 = vand.u32 %v187, 4294901760
    %v2522 = vsub.f32 %v187, %v2521
    %v2523 = vand.u32 %v2522, 4294901760
    %2524 = vmatprep.subr.mxu0 %v2523
    %v2525 = vand.u32 %v186, 4294901760
    %v2526 = vsub.f32 %v186, %v2525
    %v2527 = vand.u32 %v2526, 4294901760
    %2528 = vmatpush1.msra.mxu0 %v2527
    %v2529 = vand.u32 %v191, 4294901760
    %v2530 = vsub.f32 %v191, %v2529
    %v2531 = vand.u32 %v2530, 4294901760
    %2532 = vmatprep.subr.mxu0 %v2531
    %v2533 = vand.u32 %v190, 4294901760
    %v2534 = vsub.f32 %v190, %v2533
    %v2535 = vand.u32 %v2534, 4294901760
    %2536 = vmatpush1.msra.mxu0 %v2535
    %v2537 = vand.u32 %v195, 4294901760
    %v2538 = vsub.f32 %v195, %v2537
    %v2539 = vand.u32 %v2538, 4294901760
    %2540 = vmatprep.subr.mxu0 %v2539
    %v2541 = vand.u32 %v194, 4294901760
    %v2542 = vsub.f32 %v194, %v2541
    %v2543 = vand.u32 %v2542, 4294901760
    %2544 = vmatpush1.msra.mxu0 %v2543
    %v2545 = vand.u32 %v199, 4294901760
    %v2546 = vsub.f32 %v199, %v2545
    %v2547 = vand.u32 %v2546, 4294901760
    %2548 = vmatprep.subr.mxu0 %v2547
    %v2549 = vand.u32 %v198, 4294901760
    %v2550 = vsub.f32 %v198, %v2549
    %v2551 = vand.u32 %v2550, 4294901760
    %2552 = vmatpush1.msra.mxu0 %v2551
    %v2553 = vand.u32 %v203, 4294901760
    %v2554 = vsub.f32 %v203, %v2553
    %v2555 = vand.u32 %v2554, 4294901760
    %2556 = vmatprep.subr.mxu0 %v2555
    %v2557 = vand.u32 %v202, 4294901760
    %v2558 = vsub.f32 %v202, %v2557
    %v2559 = vand.u32 %v2558, 4294901760
    %2560 = vmatpush1.msra.mxu0 %v2559
    %v2561 = vand.u32 %v207, 4294901760
    %v2562 = vsub.f32 %v207, %v2561
    %v2563 = vand.u32 %v2562, 4294901760
    %2564 = vmatprep.subr.mxu0 %v2563
    %v2565 = vand.u32 %v206, 4294901760
    %v2566 = vsub.f32 %v206, %v2565
    %v2567 = vand.u32 %v2566, 4294901760
    %2568 = vmatpush1.msra.mxu0 %v2567
    %v2569 = vand.u32 %v211, 4294901760
    %v2570 = vsub.f32 %v211, %v2569
    %v2571 = vand.u32 %v2570, 4294901760
    %2572 = vmatprep.subr.mxu0 %v2571
    %v2573 = vand.u32 %v210, 4294901760
    %v2574 = vsub.f32 %v210, %v2573
    %v2575 = vand.u32 %v2574, 4294901760
    %2576 = vmatpush1.msra.mxu0 %v2575
    %v2577 = vand.u32 %v215, 4294901760
    %v2578 = vsub.f32 %v215, %v2577
    %v2579 = vand.u32 %v2578, 4294901760
    %2580 = vmatprep.subr.mxu0 %v2579
    %v2581 = vand.u32 %v214, 4294901760
    %v2582 = vsub.f32 %v214, %v2581
    %v2583 = vand.u32 %v2582, 4294901760
    %2584 = vmatpush1.msra.mxu0 %v2583
    %v2585 = vand.u32 %v219, 4294901760
    %v2586 = vsub.f32 %v219, %v2585
    %v2587 = vand.u32 %v2586, 4294901760
    %2588 = vmatprep.subr.mxu0 %v2587
    %v2589 = vand.u32 %v218, 4294901760
    %v2590 = vsub.f32 %v218, %v2589
    %v2591 = vand.u32 %v2590, 4294901760
    %2592 = vmatpush1.msra.mxu0 %v2591
    %v2593 = vand.u32 %v223, 4294901760
    %v2594 = vsub.f32 %v223, %v2593
    %v2595 = vand.u32 %v2594, 4294901760
    %2596 = vmatprep.subr.mxu0 %v2595
    %v2597 = vand.u32 %v222, 4294901760
    %v2598 = vsub.f32 %v222, %v2597
    %v2599 = vand.u32 %v2598, 4294901760
    %2600 = vmatpush1.msra.mxu0 %v2599
    %v2601 = vand.u32 %v227, 4294901760
    %v2602 = vsub.f32 %v227, %v2601
    %v2603 = vand.u32 %v2602, 4294901760
    %2604 = vmatprep.subr.mxu0 %v2603
    %v2605 = vand.u32 %v226, 4294901760
    %v2606 = vsub.f32 %v226, %v2605
    %v2607 = vand.u32 %v2606, 4294901760
    %2608 = vmatpush1.msra.mxu0 %v2607
    %v2609 = vand.u32 %v231, 4294901760
    %v2610 = vsub.f32 %v231, %v2609
    %v2611 = vand.u32 %v2610, 4294901760
    %2612 = vmatprep.subr.mxu0 %v2611
    %v2613 = vand.u32 %v230, 4294901760
    %v2614 = vsub.f32 %v230, %v2613
    %v2615 = vand.u32 %v2614, 4294901760
    %2616 = vmatpush1.msra.mxu0 %v2615
    %v2617 = vand.u32 %v235, 4294901760
    %v2618 = vsub.f32 %v235, %v2617
    %v2619 = vand.u32 %v2618, 4294901760
    %2620 = vmatprep.subr.mxu0 %v2619
    %v2621 = vand.u32 %v234, 4294901760
    %v2622 = vsub.f32 %v234, %v2621
    %v2623 = vand.u32 %v2622, 4294901760
    %2624 = vmatpush1.msra.mxu0 %v2623
    %v2625 = vand.u32 %v239, 4294901760
    %v2626 = vsub.f32 %v239, %v2625
    %v2627 = vand.u32 %v2626, 4294901760
    %2628 = vmatprep.subr.mxu0 %v2627
    %v2629 = vand.u32 %v238, 4294901760
    %v2630 = vsub.f32 %v238, %v2629
    %v2631 = vand.u32 %v2630, 4294901760
    %2632 = vmatpush1.msra.mxu0 %v2631
    %v2633 = vand.u32 %v243, 4294901760
    %v2634 = vsub.f32 %v243, %v2633
    %v2635 = vand.u32 %v2634, 4294901760
    %2636 = vmatprep.subr.mxu0 %v2635
    %v2637 = vand.u32 %v242, 4294901760
    %v2638 = vsub.f32 %v242, %v2637
    %v2639 = vand.u32 %v2638, 4294901760
    %2640 = vmatpush1.msra.mxu0 %v2639
    %v2641 = vand.u32 %v247, 4294901760
    %v2642 = vsub.f32 %v247, %v2641
    %v2643 = vand.u32 %v2642, 4294901760
    %2644 = vmatprep.subr.mxu0 %v2643
    %v2645 = vand.u32 %v246, 4294901760
    %v2646 = vsub.f32 %v246, %v2645
    %v2647 = vand.u32 %v2646, 4294901760
    %2648 = vmatpush1.msra.mxu0 %v2647
    %v2649 = vand.u32 %v251, 4294901760
    %v2650 = vsub.f32 %v251, %v2649
    %v2651 = vand.u32 %v2650, 4294901760
    %2652 = vmatprep.subr.mxu0 %v2651
    %v2653 = vand.u32 %v250, 4294901760
    %v2654 = vsub.f32 %v250, %v2653
    %v2655 = vand.u32 %v2654, 4294901760
    %2656 = vmatpush1.msra.mxu0 %v2655
    %v2657 = vand.u32 %v255, 4294901760
    %v2658 = vsub.f32 %v255, %v2657
    %v2659 = vand.u32 %v2658, 4294901760
    %2660 = vmatprep.subr.mxu0 %v2659
    %v2661 = vand.u32 %v254, 4294901760
    %v2662 = vsub.f32 %v254, %v2661
    %v2663 = vand.u32 %v2662, 4294901760
    %2664 = vmatpush1.msra.mxu0 %v2663
    %v2665 = vand.u32 %v259, 4294901760
    %v2666 = vsub.f32 %v259, %v2665
    %v2667 = vand.u32 %v2666, 4294901760
    %2668 = vmatprep.subr.mxu0 %v2667
    %v2669 = vand.u32 %v258, 4294901760
    %v2670 = vsub.f32 %v258, %v2669
    %v2671 = vand.u32 %v2670, 4294901760
    %2672 = vmatpush1.msra.mxu0 %v2671
    %v2673 = vand.u32 %v263, 4294901760
    %v2674 = vsub.f32 %v263, %v2673
    %v2675 = vand.u32 %v2674, 4294901760
    %2676 = vmatprep.subr.mxu0 %v2675
    %v2677 = vand.u32 %v262, 4294901760
    %v2678 = vsub.f32 %v262, %v2677
    %v2679 = vand.u32 %v2678, 4294901760
    %2680 = vmatpush1.msra.mxu0 %v2679
    %v2681 = vand.u32 %v267, 4294901760
    %v2682 = vsub.f32 %v267, %v2681
    %v2683 = vand.u32 %v2682, 4294901760
    %2684 = vmatprep.subr.mxu0 %v2683
    %v2685 = vand.u32 %v266, 4294901760
    %v2686 = vsub.f32 %v266, %v2685
    %v2687 = vand.u32 %v2686, 4294901760
    %2688 = vmatpush1.msra.mxu0 %v2687
    %v2689 = vand.u32 %v271, 4294901760
    %v2690 = vsub.f32 %v271, %v2689
    %v2691 = vand.u32 %v2690, 4294901760
    %2692 = vmatprep.subr.mxu0 %v2691
    %v2693 = vand.u32 %v270, 4294901760
    %v2694 = vsub.f32 %v270, %v2693
    %v2695 = vand.u32 %v2694, 4294901760
    %2696 = vmatpush1.msra.mxu0 %v2695
    %v2697 = vand.u32 %v273, 4294901760
    %2698 = vmatprep.mubr.f32.mxu0 %v2697
    %v2699 = vand.u32 %v143, 4294901760
    %2700 = vmatmul.mubr.f32.gmra.mrb[0].mxu0 %v2699
    %v2701 = vpop.f32.mrb[0].mxu0
    %v2702 = vadd.f32 %v2437, %v2701
    %v2703 = vpop.f32.mrb[0].mxu0
    %v2704 = vadd.f32 %v2439, %v2703
    %2705 = vdwg.mxu0
    %v2706 = vand.u32 %v147, 4294901760
    %2707 = vmatprep.subr.mxu0 %v2706
    %v2708 = vand.u32 %v146, 4294901760
    %2709 = vmatpush1.msra.mxu0 %v2708
    %v2710 = vand.u32 %v151, 4294901760
    %2711 = vmatprep.subr.mxu0 %v2710
    %v2712 = vand.u32 %v150, 4294901760
    %2713 = vmatpush1.msra.mxu0 %v2712
    %v2714 = vand.u32 %v155, 4294901760
    %2715 = vmatprep.subr.mxu0 %v2714
    %v2716 = vand.u32 %v154, 4294901760
    %2717 = vmatpush1.msra.mxu0 %v2716
    %v2718 = vand.u32 %v159, 4294901760
    %2719 = vmatprep.subr.mxu0 %v2718
    %v2720 = vand.u32 %v158, 4294901760
    %2721 = vmatpush1.msra.mxu0 %v2720
    %v2722 = vand.u32 %v163, 4294901760
    %2723 = vmatprep.subr.mxu0 %v2722
    %v2724 = vand.u32 %v162, 4294901760
    %2725 = vmatpush1.msra.mxu0 %v2724
    %v2726 = vand.u32 %v167, 4294901760
    %2727 = vmatprep.subr.mxu0 %v2726
    %v2728 = vand.u32 %v166, 4294901760
    %2729 = vmatpush1.msra.mxu0 %v2728
    %v2730 = vand.u32 %v171, 4294901760
    %2731 = vmatprep.subr.mxu0 %v2730
    %v2732 = vand.u32 %v170, 4294901760
    %2733 = vmatpush1.msra.mxu0 %v2732
    %v2734 = vand.u32 %v175, 4294901760
    %2735 = vmatprep.subr.mxu0 %v2734
    %v2736 = vand.u32 %v174, 4294901760
    %2737 = vmatpush1.msra.mxu0 %v2736
    %v2738 = vand.u32 %v179, 4294901760
    %2739 = vmatprep.subr.mxu0 %v2738
    %v2740 = vand.u32 %v178, 4294901760
    %2741 = vmatpush1.msra.mxu0 %v2740
    %v2742 = vand.u32 %v183, 4294901760
    %2743 = vmatprep.subr.mxu0 %v2742
    %v2744 = vand.u32 %v182, 4294901760
    %2745 = vmatpush1.msra.mxu0 %v2744
    %v2746 = vand.u32 %v187, 4294901760
    %2747 = vmatprep.subr.mxu0 %v2746
    %v2748 = vand.u32 %v186, 4294901760
    %2749 = vmatpush1.msra.mxu0 %v2748
    %v2750 = vand.u32 %v191, 4294901760
    %2751 = vmatprep.subr.mxu0 %v2750
    %v2752 = vand.u32 %v190, 4294901760
    %2753 = vmatpush1.msra.mxu0 %v2752
    %v2754 = vand.u32 %v195, 4294901760
    %2755 = vmatprep.subr.mxu0 %v2754
    %v2756 = vand.u32 %v194, 4294901760
    %2757 = vmatpush1.msra.mxu0 %v2756
    %v2758 = vand.u32 %v199, 4294901760
    %2759 = vmatprep.subr.mxu0 %v2758
    %v2760 = vand.u32 %v198, 4294901760
    %2761 = vmatpush1.msra.mxu0 %v2760
    %v2762 = vand.u32 %v203, 4294901760
    %2763 = vmatprep.subr.mxu0 %v2762
    %v2764 = vand.u32 %v202, 4294901760
    %2765 = vmatpush1.msra.mxu0 %v2764
    %v2766 = vand.u32 %v207, 4294901760
    %2767 = vmatprep.subr.mxu0 %v2766
    %v2768 = vand.u32 %v206, 4294901760
    %2769 = vmatpush1.msra.mxu0 %v2768
    %v2770 = vand.u32 %v211, 4294901760
    %2771 = vmatprep.subr.mxu0 %v2770
    %v2772 = vand.u32 %v210, 4294901760
    %2773 = vmatpush1.msra.mxu0 %v2772
    %v2774 = vand.u32 %v215, 4294901760
    %2775 = vmatprep.subr.mxu0 %v2774
    %v2776 = vand.u32 %v214, 4294901760
    %2777 = vmatpush1.msra.mxu0 %v2776
    %v2778 = vand.u32 %v219, 4294901760
    %2779 = vmatprep.subr.mxu0 %v2778
    %v2780 = vand.u32 %v218, 4294901760
    %2781 = vmatpush1.msra.mxu0 %v2780
    %v2782 = vand.u32 %v223, 4294901760
    %2783 = vmatprep.subr.mxu0 %v2782
    %v2784 = vand.u32 %v222, 4294901760
    %2785 = vmatpush1.msra.mxu0 %v2784
    %v2786 = vand.u32 %v227, 4294901760
    %2787 = vmatprep.subr.mxu0 %v2786
    %v2788 = vand.u32 %v226, 4294901760
    %2789 = vmatpush1.msra.mxu0 %v2788
    %v2790 = vand.u32 %v231, 4294901760
    %2791 = vmatprep.subr.mxu0 %v2790
    %v2792 = vand.u32 %v230, 4294901760
    %2793 = vmatpush1.msra.mxu0 %v2792
    %v2794 = vand.u32 %v235, 4294901760
    %2795 = vmatprep.subr.mxu0 %v2794
    %v2796 = vand.u32 %v234, 4294901760
    %2797 = vmatpush1.msra.mxu0 %v2796
    %v2798 = vand.u32 %v239, 4294901760
    %2799 = vmatprep.subr.mxu0 %v2798
    %v2800 = vand.u32 %v238, 4294901760
    %2801 = vmatpush1.msra.mxu0 %v2800
    %v2802 = vand.u32 %v243, 4294901760
    %2803 = vmatprep.subr.mxu0 %v2802
    %v2804 = vand.u32 %v242, 4294901760
    %2805 = vmatpush1.msra.mxu0 %v2804
    %v2806 = vand.u32 %v247, 4294901760
    %2807 = vmatprep.subr.mxu0 %v2806
    %v2808 = vand.u32 %v246, 4294901760
    %2809 = vmatpush1.msra.mxu0 %v2808
    %v2810 = vand.u32 %v251, 4294901760
    %2811 = vmatprep.subr.mxu0 %v2810
    %v2812 = vand.u32 %v250, 4294901760
    %2813 = vmatpush1.msra.mxu0 %v2812
    %v2814 = vand.u32 %v255, 4294901760
    %2815 = vmatprep.subr.mxu0 %v2814
    %v2816 = vand.u32 %v254, 4294901760
    %2817 = vmatpush1.msra.mxu0 %v2816
    %v2818 = vand.u32 %v259, 4294901760
    %2819 = vmatprep.subr.mxu0 %v2818
    %v2820 = vand.u32 %v258, 4294901760
    %2821 = vmatpush1.msra.mxu0 %v2820
    %v2822 = vand.u32 %v263, 4294901760
    %2823 = vmatprep.subr.mxu0 %v2822
    %v2824 = vand.u32 %v262, 4294901760
    %2825 = vmatpush1.msra.mxu0 %v2824
    %v2826 = vand.u32 %v267, 4294901760
    %2827 = vmatprep.subr.mxu0 %v2826
    %v2828 = vand.u32 %v266, 4294901760
    %2829 = vmatpush1.msra.mxu0 %v2828
    %v2830 = vand.u32 %v271, 4294901760
    %2831 = vmatprep.subr.mxu0 %v2830
    %v2832 = vand.u32 %v270, 4294901760
    %2833 = vmatpush1.msra.mxu0 %v2832
    %v2834 = vand.u32 %v273, 4294901760
    %2835 = vmatprep.mubr.f32.mxu0 %v2834
    %v2836 = vand.u32 %v143, 4294901760
    %2837 = vmatmul.mubr.f32.gmra.mrb[0].mxu0 %v2836
    %v2838 = vpop.f32.mrb[0].mxu0
    %v2839 = vadd.f32 %v2702, %v2838
    %v2840 = vpop.f32.mrb[0].mxu0
    %v2841 = vadd.f32 %v2704, %v2840
    %2842 = vdwg.mxu0
    %v2843 = vld [vmem:[#allocation5] sm:$0xff]
    %v2844 = vld [vmem:[#allocation7] sm:$0xff]
    %v2847 = vcombine.low %v1555, %v1557
    %v2849 = vmul.f32 %v2843, %v2847
    %v2852 = vcombine.low %v2839, %v2841
    %v2854 = vmul.f32 %v2844, %v2852
    %v2855 = vsub.f32 %v2849, %v2854
    %v2857 = vcombine.high %v2855, %v2855
    %vm2859 = vcmask 1043456
    %v2860 = vsel %vm2859, %v2855, 0.0
    %v2861 = vrot.slane %v2860, 4
    %v2862 = vadd.f32 %v2860, %v2861
    %v2863 = vrot.slane %v2862, 2
    %v2864 = vadd.f32 %v2862, %v2863
    %v2865 = vrot.slane %v2864, 1
    %v2866 = vadd.f32 %v2864, %v2865
    %v2867 = vsel %vm2859, %v2857, 0.0
    %v2868 = vrot.slane %v2867, 4
    %v2869 = vadd.f32 %v2867, %v2868
    %v2870 = vrot.slane %v2869, 2
    %v2871 = vadd.f32 %v2869, %v2870
    %v2872 = vrot.slane %v2871, 1
    %v2873 = vadd.f32 %v2871, %v2872
    %v2874 = vmul.f32 %v2843, %v2852
    %v2875 = vmul.f32 %v2844, %v2847
    %v2876 = vadd.f32 %v2874, %v2875
    %v2878 = vcombine.high %v2876, %v2876
    %v2880 = vsel %vm2859, %v2876, 0.0
    %v2881 = vrot.slane %v2880, 4
    %v2882 = vadd.f32 %v2880, %v2881
    %v2883 = vrot.slane %v2882, 2
    %v2884 = vadd.f32 %v2882, %v2883
    %v2885 = vrot.slane %v2884, 1
    %v2886 = vadd.f32 %v2884, %v2885
    %v2887 = vsel %vm2859, %v2878, 0.0
    %v2888 = vrot.slane %v2887, 4
    %v2889 = vadd.f32 %v2887, %v2888
    %v2890 = vrot.slane %v2889, 2
    %v2891 = vadd.f32 %v2889, %v2890
    %v2892 = vrot.slane %v2891, 1
    %v2893 = vadd.f32 %v2891, %v2892
    %v2894 = vld [vmem:[#allocation8] sm:$0xff]
    %v2895 = vld [vmem:[#allocation10] sm:$0xff]
    %v2898 = vcombine.low %v2866, %v2873
    %v2900 = vmul.f32 %v2894, %v2898
    %v2903 = vcombine.low %v2886, %v2893
    %v2905 = vmul.f32 %v2895, %v2903
    %v2906 = vsub.f32 %v2900, %v2905
    %v2907 = vadd.f32 %v2906, 0.0
    %v2908 = vmul.f32 %v2894, %v2903
    %v2909 = vmul.f32 %v2895, %v2898
    %v2910 = vadd.f32 %v2908, %v2909
    %v2911 = vadd.f32 %v2910, 0.0
    %s2912 = scalar_lea.vmem [#allocation5], 8
    %v2913 = vld [vmem:[%s2912] sm:$0xff]
    %s2914 = scalar_lea.vmem [#allocation7], 8
    %v2915 = vld [vmem:[%s2914] sm:$0xff]
    %v2916 = vmul.f32 %v2913, %v2847
    %v2917 = vmul.f32 %v2915, %v2852
    %v2918 = vsub.f32 %v2916, %v2917
    %v2920 = vcombine.high %v2918, %v2918
    %v2922 = vsel %vm2859, %v2918, 0.0
    %v2923 = vrot.slane %v2922, 4
    %v2924 = vadd.f32 %v2922, %v2923
    %v2925 = vrot.slane %v2924, 2
    %v2926 = vadd.f32 %v2924, %v2925
    %v2927 = vrot.slane %v2926, 1
    %v2928 = vadd.f32 %v2926, %v2927
    %v2929 = vsel %vm2859, %v2920, 0.0
    %v2930 = vrot.slane %v2929, 4
    %v2931 = vadd.f32 %v2929, %v2930
    %v2932 = vrot.slane %v2931, 2
    %v2933 = vadd.f32 %v2931, %v2932
    %v2934 = vrot.slane %v2933, 1
    %v2935 = vadd.f32 %v2933, %v2934
    %v2936 = vmul.f32 %v2913, %v2852
    %v2937 = vmul.f32 %v2915, %v2847
    %v2938 = vadd.f32 %v2936, %v2937
    %v2940 = vcombine.high %v2938, %v2938
    %v2942 = vsel %vm2859, %v2938, 0.0
    %v2943 = vrot.slane %v2942, 4
    %v2944 = vadd.f32 %v2942, %v2943
    %v2945 = vrot.slane %v2944, 2
    %v2946 = vadd.f32 %v2944, %v2945
    %v2947 = vrot.slane %v2946, 1
    %v2948 = vadd.f32 %v2946, %v2947
    %v2949 = vsel %vm2859, %v2940, 0.0
    %v2950 = vrot.slane %v2949, 4
    %v2951 = vadd.f32 %v2949, %v2950
    %v2952 = vrot.slane %v2951, 2
    %v2953 = vadd.f32 %v2951, %v2952
    %v2954 = vrot.slane %v2953, 1
    %v2955 = vadd.f32 %v2953, %v2954
    %s2956 = scalar_lea.vmem [#allocation8], 8
    %v2957 = vld [vmem:[%s2956] sm:$0xff]
    %s2958 = scalar_lea.vmem [#allocation10], 8
    %v2959 = vld [vmem:[%s2958] sm:$0xff]
    %v2962 = vcombine.low %v2928, %v2935
    %v2964 = vmul.f32 %v2957, %v2962
    %v2967 = vcombine.low %v2948, %v2955
    %v2969 = vmul.f32 %v2959, %v2967
    %v2970 = vsub.f32 %v2964, %v2969
    %v2971 = vadd.f32 %v2907, %v2970
    %v2972 = vmul.f32 %v2957, %v2967
    %v2973 = vmul.f32 %v2959, %v2962
    %v2974 = vadd.f32 %v2972, %v2973
    %v2975 = vadd.f32 %v2911, %v2974
    %s2976 = scalar_lea.vmem [#allocation5], 16
    %v2977 = vld [vmem:[%s2976] sm:$0xff]
    %s2978 = scalar_lea.vmem [#allocation7], 16
    %v2979 = vld [vmem:[%s2978] sm:$0xff]
    %v2980 = vmul.f32 %v2977, %v2847
    %v2981 = vmul.f32 %v2979, %v2852
    %v2982 = vsub.f32 %v2980, %v2981
    %v2984 = vcombine.high %v2982, %v2982
    %v2986 = vsel %vm2859, %v2982, 0.0
    %v2987 = vrot.slane %v2986, 4
    %v2988 = vadd.f32 %v2986, %v2987
    %v2989 = vrot.slane %v2988, 2
    %v2990 = vadd.f32 %v2988, %v2989
    %v2991 = vrot.slane %v2990, 1
    %v2992 = vadd.f32 %v2990, %v2991
    %v2993 = vsel %vm2859, %v2984, 0.0
    %v2994 = vrot.slane %v2993, 4
    %v2995 = vadd.f32 %v2993, %v2994
    %v2996 = vrot.slane %v2995, 2
    %v2997 = vadd.f32 %v2995, %v2996
    %v2998 = vrot.slane %v2997, 1
    %v2999 = vadd.f32 %v2997, %v2998
    %v3000 = vmul.f32 %v2977, %v2852
    %v3001 = vmul.f32 %v2979, %v2847
    %v3002 = vadd.f32 %v3000, %v3001
    %v3004 = vcombine.high %v3002, %v3002
    %v3006 = vsel %vm2859, %v3002, 0.0
    %v3007 = vrot.slane %v3006, 4
    %v3008 = vadd.f32 %v3006, %v3007
    %v3009 = vrot.slane %v3008, 2
    %v3010 = vadd.f32 %v3008, %v3009
    %v3011 = vrot.slane %v3010, 1
    %v3012 = vadd.f32 %v3010, %v3011
    %v3013 = vsel %vm2859, %v3004, 0.0
    %v3014 = vrot.slane %v3013, 4
    %v3015 = vadd.f32 %v3013, %v3014
    %v3016 = vrot.slane %v3015, 2
    %v3017 = vadd.f32 %v3015, %v3016
    %v3018 = vrot.slane %v3017, 1
    %v3019 = vadd.f32 %v3017, %v3018
    %s3020 = scalar_lea.vmem [#allocation8], 16
    %v3021 = vld [vmem:[%s3020] sm:$0xff]
    %s3022 = scalar_lea.vmem [#allocation10], 16
    %v3023 = vld [vmem:[%s3022] sm:$0xff]
    %v3026 = vcombine.low %v2992, %v2999
    %v3028 = vmul.f32 %v3021, %v3026
    %v3031 = vcombine.low %v3012, %v3019
    %v3033 = vmul.f32 %v3023, %v3031
    %v3034 = vsub.f32 %v3028, %v3033
    %v3035 = vadd.f32 %v2971, %v3034
    %v3036 = vmul.f32 %v3021, %v3031
    %v3037 = vmul.f32 %v3023, %v3026
    %v3038 = vadd.f32 %v3036, %v3037
    %v3039 = vadd.f32 %v2975, %v3038
    %s3040 = scalar_lea.vmem [#allocation5], 24
    %v3041 = vld [vmem:[%s3040] sm:$0xff]
    %s3042 = scalar_lea.vmem [#allocation7], 24
    %v3043 = vld [vmem:[%s3042] sm:$0xff]
    %v3044 = vmul.f32 %v3041, %v2847
    %v3045 = vmul.f32 %v3043, %v2852
    %v3046 = vsub.f32 %v3044, %v3045
    %v3048 = vcombine.high %v3046, %v3046
    %v3050 = vsel %vm2859, %v3046, 0.0
    %v3051 = vrot.slane %v3050, 4
    %v3052 = vadd.f32 %v3050, %v3051
    %v3053 = vrot.slane %v3052, 2
    %v3054 = vadd.f32 %v3052, %v3053
    %v3055 = vrot.slane %v3054, 1
    %v3056 = vadd.f32 %v3054, %v3055
    %v3057 = vsel %vm2859, %v3048, 0.0
    %v3058 = vrot.slane %v3057, 4
    %v3059 = vadd.f32 %v3057, %v3058
    %v3060 = vrot.slane %v3059, 2
    %v3061 = vadd.f32 %v3059, %v3060
    %v3062 = vrot.slane %v3061, 1
    %v3063 = vadd.f32 %v3061, %v3062
    %v3064 = vmul.f32 %v3041, %v2852
    %v3065 = vmul.f32 %v3043, %v2847
    %v3066 = vadd.f32 %v3064, %v3065
    %v3068 = vcombine.high %v3066, %v3066
    %v3070 = vsel %vm2859, %v3066, 0.0
    %v3071 = vrot.slane %v3070, 4
    %v3072 = vadd.f32 %v3070, %v3071
    %v3073 = vrot.slane %v3072, 2
    %v3074 = vadd.f32 %v3072, %v3073
    %v3075 = vrot.slane %v3074, 1
    %v3076 = vadd.f32 %v3074, %v3075
    %v3077 = vsel %vm2859, %v3068, 0.0
    %v3078 = vrot.slane %v3077, 4
    %v3079 = vadd.f32 %v3077, %v3078
    %v3080 = vrot.slane %v3079, 2
    %v3081 = vadd.f32 %v3079, %v3080
    %v3082 = vrot.slane %v3081, 1
    %v3083 = vadd.f32 %v3081, %v3082
    %s3084 = scalar_lea.vmem [#allocation8], 24
    %v3085 = vld [vmem:[%s3084] sm:$0xff]
    %s3086 = scalar_lea.vmem [#allocation10], 24
    %v3087 = vld [vmem:[%s3086] sm:$0xff]
    %v3090 = vcombine.low %v3056, %v3063
    %v3092 = vmul.f32 %v3085, %v3090
    %v3095 = vcombine.low %v3076, %v3083
    %v3097 = vmul.f32 %v3087, %v3095
    %v3098 = vsub.f32 %v3092, %v3097
    %v3099 = vadd.f32 %v3035, %v3098
    %v3100 = vmul.f32 %v3085, %v3095
    %v3101 = vmul.f32 %v3087, %v3090
    %v3102 = vadd.f32 %v3100, %v3101
    %v3103 = vadd.f32 %v3039, %v3102
    %v3104 = vld [vmem:[#allocation13] sm:$0xff]
    %v3105 = vld [vmem:[#allocation13 + $0x8] sm:$0xff]
    %v3106 = vld [vmem:[#allocation13 + $0x10] sm:$0xff]
    %v3107 = vld [vmem:[#allocation13 + $0x18] sm:$0xff]
    %v3108 = vld [vmem:[#allocation13 + $0x20] sm:$0xff]
    %v3109 = vld [vmem:[#allocation13 + $0x28] sm:$0xff]
    %v3110 = vld [vmem:[#allocation13 + $0x30] sm:$0xff]
    %v3111 = vld [vmem:[#allocation13 + $0x38] sm:$0xff]
    %v3112 = vld [vmem:[#allocation13 + $0x40] sm:$0xff]
    %v3113 = vld [vmem:[#allocation13 + $0x48] sm:$0xff]
    %v3114 = vld [vmem:[#allocation13 + $0x50] sm:$0xff]
    %v3115 = vld [vmem:[#allocation13 + $0x58] sm:$0xff]
    %v3116 = vld [vmem:[#allocation13 + $0x60] sm:$0xff]
    %v3117 = vld [vmem:[#allocation13 + $0x68] sm:$0xff]
    %v3118 = vld [vmem:[#allocation13 + $0x70] sm:$0xff]
    %v3119 = vld [vmem:[#allocation13 + $0x78] sm:$0xff]
    %v3120 = vld [vmem:[#allocation13 + $0x80] sm:$0xff]
    %v3121 = vld [vmem:[#allocation13 + $0x88] sm:$0xff]
    %v3122 = vld [vmem:[#allocation13 + $0x90] sm:$0xff]
    %v3123 = vld [vmem:[#allocation13 + $0x98] sm:$0xff]
    %v3124 = vld [vmem:[#allocation13 + $0xa0] sm:$0xff]
    %v3125 = vld [vmem:[#allocation13 + $0xa8] sm:$0xff]
    %v3126 = vld [vmem:[#allocation13 + $0xb0] sm:$0xff]
    %v3127 = vld [vmem:[#allocation13 + $0xb8] sm:$0xff]
    %v3128 = vld [vmem:[#allocation13 + $0xc0] sm:$0xff]
    %v3129 = vld [vmem:[#allocation13 + $0xc8] sm:$0xff]
    %v3130 = vld [vmem:[#allocation13 + $0xd0] sm:$0xff]
    %v3131 = vld [vmem:[#allocation13 + $0xd8] sm:$0xff]
    %v3132 = vld [vmem:[#allocation13 + $0xe0] sm:$0xff]
    %v3133 = vld [vmem:[#allocation13 + $0xe8] sm:$0xff]
    %v3134 = vld [vmem:[#allocation13 + $0xf0] sm:$0xff]
    %v3135 = vld [vmem:[#allocation13 + $0xf8] sm:$0xff]
    %v3136 = vld [vmem:[#allocation13 + $0x100] sm:$0xff]
    %v3137 = vld [vmem:[#allocation13 + $0x108] sm:$0xff]
    %v3138 = vld [vmem:[#allocation13 + $0x110] sm:$0xff]
    %v3139 = vld [vmem:[#allocation13 + $0x118] sm:$0xff]
    %v3140 = vld [vmem:[#allocation13 + $0x120] sm:$0xff]
    %v3141 = vld [vmem:[#allocation13 + $0x128] sm:$0xff]
    %v3142 = vld [vmem:[#allocation13 + $0x130] sm:$0xff]
    %v3143 = vld [vmem:[#allocation13 + $0x138] sm:$0xff]
    %v3144 = vld [vmem:[#allocation13 + $0x140] sm:$0xff]
    %v3145 = vld [vmem:[#allocation13 + $0x148] sm:$0xff]
    %v3146 = vld [vmem:[#allocation13 + $0x150] sm:$0xff]
    %v3147 = vld [vmem:[#allocation13 + $0x158] sm:$0xff]
    %v3148 = vld [vmem:[#allocation13 + $0x160] sm:$0xff]
    %v3149 = vld [vmem:[#allocation13 + $0x168] sm:$0xff]
    %v3150 = vld [vmem:[#allocation13 + $0x170] sm:$0xff]
    %v3151 = vld [vmem:[#allocation13 + $0x178] sm:$0xff]
    %v3152 = vld [vmem:[#allocation13 + $0x180] sm:$0xff]
    %v3153 = vld [vmem:[#allocation13 + $0x188] sm:$0xff]
    %v3154 = vld [vmem:[#allocation13 + $0x190] sm:$0xff]
    %v3155 = vld [vmem:[#allocation13 + $0x198] sm:$0xff]
    %v3156 = vld [vmem:[#allocation13 + $0x1a0] sm:$0xff]
    %v3157 = vld [vmem:[#allocation13 + $0x1a8] sm:$0xff]
    %v3158 = vld [vmem:[#allocation13 + $0x1b0] sm:$0xff]
    %v3159 = vld [vmem:[#allocation13 + $0x1b8] sm:$0xff]
    %v3160 = vld [vmem:[#allocation13 + $0x1c0] sm:$0xff]
    %v3161 = vld [vmem:[#allocation13 + $0x1c8] sm:$0xff]
    %v3162 = vld [vmem:[#allocation13 + $0x1d0] sm:$0xff]
    %v3163 = vld [vmem:[#allocation13 + $0x1d8] sm:$0xff]
    %v3164 = vld [vmem:[#allocation13 + $0x1e0] sm:$0xff]
    %v3165 = vld [vmem:[#allocation13 + $0x1e8] sm:$0xff]
    %v3166 = vld [vmem:[#allocation13 + $0x1f0] sm:$0xff]
    %v3167 = vld [vmem:[#allocation13 + $0x1f8] sm:$0xff]
    %v3168 = vld [vmem:[#allocation13 + $0x200] sm:$0xff]
    %v3169 = vld [vmem:[#allocation13 + $0x208] sm:$0xff]
    %v3170 = vld [vmem:[#allocation13 + $0x210] sm:$0xff]
    %v3171 = vld [vmem:[#allocation13 + $0x218] sm:$0xff]
    %v3172 = vld [vmem:[#allocation13 + $0x220] sm:$0xff]
    %v3173 = vld [vmem:[#allocation13 + $0x228] sm:$0xff]
    %v3174 = vld [vmem:[#allocation13 + $0x230] sm:$0xff]
    %v3175 = vld [vmem:[#allocation13 + $0x238] sm:$0xff]
    %v3176 = vld [vmem:[#allocation13 + $0x240] sm:$0xff]
    %v3177 = vld [vmem:[#allocation13 + $0x248] sm:$0xff]
    %v3178 = vld [vmem:[#allocation13 + $0x250] sm:$0xff]
    %v3179 = vld [vmem:[#allocation13 + $0x258] sm:$0xff]
    %v3180 = vld [vmem:[#allocation13 + $0x260] sm:$0xff]
    %v3181 = vld [vmem:[#allocation13 + $0x268] sm:$0xff]
    %v3182 = vld [vmem:[#allocation13 + $0x270] sm:$0xff]
    %v3183 = vld [vmem:[#allocation13 + $0x278] sm:$0xff]
    %v3184 = vld [vmem:[#allocation13 + $0x280] sm:$0xff]
    %v3185 = vld [vmem:[#allocation13 + $0x288] sm:$0xff]
    %v3186 = vld [vmem:[#allocation13 + $0x290] sm:$0xff]
    %v3187 = vld [vmem:[#allocation13 + $0x298] sm:$0xff]
    %v3188 = vld [vmem:[#allocation13 + $0x2a0] sm:$0xff]
    %v3189 = vld [vmem:[#allocation13 + $0x2a8] sm:$0xff]
    %v3190 = vld [vmem:[#allocation13 + $0x2b0] sm:$0xff]
    %v3191 = vld [vmem:[#allocation13 + $0x2b8] sm:$0xff]
    %v3192 = vld [vmem:[#allocation13 + $0x2c0] sm:$0xff]
    %v3193 = vld [vmem:[#allocation13 + $0x2c8] sm:$0xff]
    %v3194 = vld [vmem:[#allocation13 + $0x2d0] sm:$0xff]
    %v3195 = vld [vmem:[#allocation13 + $0x2d8] sm:$0xff]
    %v3196 = vld [vmem:[#allocation13 + $0x2e0] sm:$0xff]
    %v3197 = vld [vmem:[#allocation13 + $0x2e8] sm:$0xff]
    %v3198 = vld [vmem:[#allocation13 + $0x2f0] sm:$0xff]
    %v3199 = vld [vmem:[#allocation13 + $0x2f8] sm:$0xff]
    %v3200 = vld [vmem:[#allocation13 + $0x300] sm:$0xff]
    %v3201 = vld [vmem:[#allocation13 + $0x308] sm:$0xff]
    %v3202 = vld [vmem:[#allocation13 + $0x310] sm:$0xff]
    %v3203 = vld [vmem:[#allocation13 + $0x318] sm:$0xff]
    %v3204 = vld [vmem:[#allocation13 + $0x320] sm:$0xff]
    %v3205 = vld [vmem:[#allocation13 + $0x328] sm:$0xff]
    %v3206 = vld [vmem:[#allocation13 + $0x330] sm:$0xff]
    %v3207 = vld [vmem:[#allocation13 + $0x338] sm:$0xff]
    %v3208 = vld [vmem:[#allocation13 + $0x340] sm:$0xff]
    %v3209 = vld [vmem:[#allocation13 + $0x348] sm:$0xff]
    %v3210 = vld [vmem:[#allocation13 + $0x350] sm:$0xff]
    %v3211 = vld [vmem:[#allocation13 + $0x358] sm:$0xff]
    %v3212 = vld [vmem:[#allocation13 + $0x360] sm:$0xff]
    %v3213 = vld [vmem:[#allocation13 + $0x368] sm:$0xff]
    %v3214 = vld [vmem:[#allocation13 + $0x370] sm:$0xff]
    %v3215 = vld [vmem:[#allocation13 + $0x378] sm:$0xff]
    %v3216 = vld [vmem:[#allocation13 + $0x380] sm:$0xff]
    %v3217 = vld [vmem:[#allocation13 + $0x388] sm:$0xff]
    %v3218 = vld [vmem:[#allocation13 + $0x390] sm:$0xff]
    %v3219 = vld [vmem:[#allocation13 + $0x398] sm:$0xff]
    %v3220 = vld [vmem:[#allocation13 + $0x3a0] sm:$0xff]
    %v3221 = vld [vmem:[#allocation13 + $0x3a8] sm:$0xff]
    %v3222 = vld [vmem:[#allocation13 + $0x3b0] sm:$0xff]
    %v3223 = vld [vmem:[#allocation13 + $0x3b8] sm:$0xff]
    %v3224 = vld [vmem:[#allocation13 + $0x3c0] sm:$0xff]
    %v3225 = vld [vmem:[#allocation13 + $0x3c8] sm:$0xff]
    %v3226 = vld [vmem:[#allocation13 + $0x3d0] sm:$0xff]
    %v3227 = vld [vmem:[#allocation13 + $0x3d8] sm:$0xff]
    %v3228 = vld [vmem:[#allocation13 + $0x3e0] sm:$0xff]
    %v3229 = vld [vmem:[#allocation13 + $0x3e8] sm:$0xff]
    %v3230 = vld [vmem:[#allocation13 + $0x3f0] sm:$0xff]
    %v3231 = vld [vmem:[#allocation13 + $0x3f8] sm:$0xff]
    %v3232 = vld [vmem:[#allocation14] sm:$0xff]
    %v3233 = vld [vmem:[#allocation14 + $0x8] sm:$0xff]
    %v3234 = vld [vmem:[#allocation14 + $0x10] sm:$0xff]
    %v3235 = vld [vmem:[#allocation14 + $0x18] sm:$0xff]
    %v3236 = vld [vmem:[#allocation14 + $0x20] sm:$0xff]
    %v3237 = vld [vmem:[#allocation14 + $0x28] sm:$0xff]
    %v3238 = vld [vmem:[#allocation14 + $0x30] sm:$0xff]
    %v3239 = vld [vmem:[#allocation14 + $0x38] sm:$0xff]
    %v3240 = vld [vmem:[#allocation14 + $0x40] sm:$0xff]
    %v3241 = vld [vmem:[#allocation14 + $0x48] sm:$0xff]
    %v3242 = vld [vmem:[#allocation14 + $0x50] sm:$0xff]
    %v3243 = vld [vmem:[#allocation14 + $0x58] sm:$0xff]
    %v3244 = vld [vmem:[#allocation14 + $0x60] sm:$0xff]
    %v3245 = vld [vmem:[#allocation14 + $0x68] sm:$0xff]
    %v3246 = vld [vmem:[#allocation14 + $0x70] sm:$0xff]
    %v3247 = vld [vmem:[#allocation14 + $0x78] sm:$0xff]
    %v3248 = vld [vmem:[#allocation14 + $0x80] sm:$0xff]
    %v3249 = vld [vmem:[#allocation14 + $0x88] sm:$0xff]
    %v3250 = vld [vmem:[#allocation14 + $0x90] sm:$0xff]
    %v3251 = vld [vmem:[#allocation14 + $0x98] sm:$0xff]
    %v3252 = vld [vmem:[#allocation14 + $0xa0] sm:$0xff]
    %v3253 = vld [vmem:[#allocation14 + $0xa8] sm:$0xff]
    %v3254 = vld [vmem:[#allocation14 + $0xb0] sm:$0xff]
    %v3255 = vld [vmem:[#allocation14 + $0xb8] sm:$0xff]
    %v3256 = vld [vmem:[#allocation14 + $0xc0] sm:$0xff]
    %v3257 = vld [vmem:[#allocation14 + $0xc8] sm:$0xff]
    %v3258 = vld [vmem:[#allocation14 + $0xd0] sm:$0xff]
    %v3259 = vld [vmem:[#allocation14 + $0xd8] sm:$0xff]
    %v3260 = vld [vmem:[#allocation14 + $0xe0] sm:$0xff]
    %v3261 = vld [vmem:[#allocation14 + $0xe8] sm:$0xff]
    %v3262 = vld [vmem:[#allocation14 + $0xf0] sm:$0xff]
    %v3263 = vld [vmem:[#allocation14 + $0xf8] sm:$0xff]
    %v3264 = vld [vmem:[#allocation14 + $0x100] sm:$0xff]
    %v3265 = vld [vmem:[#allocation14 + $0x108] sm:$0xff]
    %v3266 = vld [vmem:[#allocation14 + $0x110] sm:$0xff]
    %v3267 = vld [vmem:[#allocation14 + $0x118] sm:$0xff]
    %v3268 = vld [vmem:[#allocation14 + $0x120] sm:$0xff]
    %v3269 = vld [vmem:[#allocation14 + $0x128] sm:$0xff]
    %v3270 = vld [vmem:[#allocation14 + $0x130] sm:$0xff]
    %v3271 = vld [vmem:[#allocation14 + $0x138] sm:$0xff]
    %v3272 = vld [vmem:[#allocation14 + $0x140] sm:$0xff]
    %v3273 = vld [vmem:[#allocation14 + $0x148] sm:$0xff]
    %v3274 = vld [vmem:[#allocation14 + $0x150] sm:$0xff]
    %v3275 = vld [vmem:[#allocation14 + $0x158] sm:$0xff]
    %v3276 = vld [vmem:[#allocation14 + $0x160] sm:$0xff]
    %v3277 = vld [vmem:[#allocation14 + $0x168] sm:$0xff]
    %v3278 = vld [vmem:[#allocation14 + $0x170] sm:$0xff]
    %v3279 = vld [vmem:[#allocation14 + $0x178] sm:$0xff]
    %v3280 = vld [vmem:[#allocation14 + $0x180] sm:$0xff]
    %v3281 = vld [vmem:[#allocation14 + $0x188] sm:$0xff]
    %v3282 = vld [vmem:[#allocation14 + $0x190] sm:$0xff]
    %v3283 = vld [vmem:[#allocation14 + $0x198] sm:$0xff]
    %v3284 = vld [vmem:[#allocation14 + $0x1a0] sm:$0xff]
    %v3285 = vld [vmem:[#allocation14 + $0x1a8] sm:$0xff]
    %v3286 = vld [vmem:[#allocation14 + $0x1b0] sm:$0xff]
    %v3287 = vld [vmem:[#allocation14 + $0x1b8] sm:$0xff]
    %v3288 = vld [vmem:[#allocation14 + $0x1c0] sm:$0xff]
    %v3289 = vld [vmem:[#allocation14 + $0x1c8] sm:$0xff]
    %v3290 = vld [vmem:[#allocation14 + $0x1d0] sm:$0xff]
    %v3291 = vld [vmem:[#allocation14 + $0x1d8] sm:$0xff]
    %v3292 = vld [vmem:[#allocation14 + $0x1e0] sm:$0xff]
    %v3293 = vld [vmem:[#allocation14 + $0x1e8] sm:$0xff]
    %v3294 = vld [vmem:[#allocation14 + $0x1f0] sm:$0xff]
    %v3295 = vld [vmem:[#allocation14 + $0x1f8] sm:$0xff]
    %v3296 = vld [vmem:[#allocation14 + $0x200] sm:$0xff]
    %v3297 = vld [vmem:[#allocation14 + $0x208] sm:$0xff]
    %v3298 = vld [vmem:[#allocation14 + $0x210] sm:$0xff]
    %v3299 = vld [vmem:[#allocation14 + $0x218] sm:$0xff]
    %v3300 = vld [vmem:[#allocation14 + $0x220] sm:$0xff]
    %v3301 = vld [vmem:[#allocation14 + $0x228] sm:$0xff]
    %v3302 = vld [vmem:[#allocation14 + $0x230] sm:$0xff]
    %v3303 = vld [vmem:[#allocation14 + $0x238] sm:$0xff]
    %v3304 = vld [vmem:[#allocation14 + $0x240] sm:$0xff]
    %v3305 = vld [vmem:[#allocation14 + $0x248] sm:$0xff]
    %v3306 = vld [vmem:[#allocation14 + $0x250] sm:$0xff]
    %v3307 = vld [vmem:[#allocation14 + $0x258] sm:$0xff]
    %v3308 = vld [vmem:[#allocation14 + $0x260] sm:$0xff]
    %v3309 = vld [vmem:[#allocation14 + $0x268] sm:$0xff]
    %v3310 = vld [vmem:[#allocation14 + $0x270] sm:$0xff]
    %v3311 = vld [vmem:[#allocation14 + $0x278] sm:$0xff]
    %v3312 = vld [vmem:[#allocation14 + $0x280] sm:$0xff]
    %v3313 = vld [vmem:[#allocation14 + $0x288] sm:$0xff]
    %v3314 = vld [vmem:[#allocation14 + $0x290] sm:$0xff]
    %v3315 = vld [vmem:[#allocation14 + $0x298] sm:$0xff]
    %v3316 = vld [vmem:[#allocation14 + $0x2a0] sm:$0xff]
    %v3317 = vld [vmem:[#allocation14 + $0x2a8] sm:$0xff]
    %v3318 = vld [vmem:[#allocation14 + $0x2b0] sm:$0xff]
    %v3319 = vld [vmem:[#allocation14 + $0x2b8] sm:$0xff]
    %v3320 = vld [vmem:[#allocation14 + $0x2c0] sm:$0xff]
    %v3321 = vld [vmem:[#allocation14 + $0x2c8] sm:$0xff]
    %v3322 = vld [vmem:[#allocation14 + $0x2d0] sm:$0xff]
    %v3323 = vld [vmem:[#allocation14 + $0x2d8] sm:$0xff]
    %v3324 = vld [vmem:[#allocation14 + $0x2e0] sm:$0xff]
    %v3325 = vld [vmem:[#allocation14 + $0x2e8] sm:$0xff]
    %v3326 = vld [vmem:[#allocation14 + $0x2f0] sm:$0xff]
    %v3327 = vld [vmem:[#allocation14 + $0x2f8] sm:$0xff]
    %v3328 = vld [vmem:[#allocation14 + $0x300] sm:$0xff]
    %v3329 = vld [vmem:[#allocation14 + $0x308] sm:$0xff]
    %v3330 = vld [vmem:[#allocation14 + $0x310] sm:$0xff]
    %v3331 = vld [vmem:[#allocation14 + $0x318] sm:$0xff]
    %v3332 = vld [vmem:[#allocation14 + $0x320] sm:$0xff]
    %v3333 = vld [vmem:[#allocation14 + $0x328] sm:$0xff]
    %v3334 = vld [vmem:[#allocation14 + $0x330] sm:$0xff]
    %v3335 = vld [vmem:[#allocation14 + $0x338] sm:$0xff]
    %v3336 = vld [vmem:[#allocation14 + $0x340] sm:$0xff]
    %v3337 = vld [vmem:[#allocation14 + $0x348] sm:$0xff]
    %v3338 = vld [vmem:[#allocation14 + $0x350] sm:$0xff]
    %v3339 = vld [vmem:[#allocation14 + $0x358] sm:$0xff]
    %v3340 = vld [vmem:[#allocation14 + $0x360] sm:$0xff]
    %v3341 = vld [vmem:[#allocation14 + $0x368] sm:$0xff]
    %v3342 = vld [vmem:[#allocation14 + $0x370] sm:$0xff]
    %v3343 = vld [vmem:[#allocation14 + $0x378] sm:$0xff]
    %v3344 = vld [vmem:[#allocation14 + $0x380] sm:$0xff]
    %v3345 = vld [vmem:[#allocation14 + $0x388] sm:$0xff]
    %v3346 = vld [vmem:[#allocation14 + $0x390] sm:$0xff]
    %v3347 = vld [vmem:[#allocation14 + $0x398] sm:$0xff]
    %v3348 = vld [vmem:[#allocation14 + $0x3a0] sm:$0xff]
    %v3349 = vld [vmem:[#allocation14 + $0x3a8] sm:$0xff]
    %v3350 = vld [vmem:[#allocation14 + $0x3b0] sm:$0xff]
    %v3351 = vld [vmem:[#allocation14 + $0x3b8] sm:$0xff]
    %v3352 = vld [vmem:[#allocation14 + $0x3c0] sm:$0xff]
    %v3353 = vld [vmem:[#allocation14 + $0x3c8] sm:$0xff]
    %v3354 = vld [vmem:[#allocation14 + $0x3d0] sm:$0xff]
    %v3355 = vld [vmem:[#allocation14 + $0x3d8] sm:$0xff]
    %v3356 = vld [vmem:[#allocation14 + $0x3e0] sm:$0xff]
    %v3357 = vld [vmem:[#allocation14 + $0x3e8] sm:$0xff]
    %v3358 = vld [vmem:[#allocation14 + $0x3f0] sm:$0xff]
    %v3359 = vld [vmem:[#allocation14 + $0x3f8] sm:$0xff]
    %v3361 = vcombine.high %v3103, %v3103
    %v3363 = vand.u32 %v3233, 4294901760
    %3364 = vmatprep.subr.mxu0 %v3363
    %v3365 = vand.u32 %v3232, 4294901760
    %3366 = vmatpush1.msra.mxu0 %v3365
    %v3367 = vand.u32 %v3237, 4294901760
    %3368 = vmatprep.subr.mxu0 %v3367
    %v3369 = vand.u32 %v3236, 4294901760
    %3370 = vmatpush1.msra.mxu0 %v3369
    %v3371 = vand.u32 %v3241, 4294901760
    %3372 = vmatprep.subr.mxu0 %v3371
    %v3373 = vand.u32 %v3240, 4294901760
    %3374 = vmatpush1.msra.mxu0 %v3373
    %v3375 = vand.u32 %v3245, 4294901760
    %3376 = vmatprep.subr.mxu0 %v3375
    %v3377 = vand.u32 %v3244, 4294901760
    %3378 = vmatpush1.msra.mxu0 %v3377
    %v3379 = vand.u32 %v3249, 4294901760
    %3380 = vmatprep.subr.mxu0 %v3379
    %v3381 = vand.u32 %v3248, 4294901760
    %3382 = vmatpush1.msra.mxu0 %v3381
    %v3383 = vand.u32 %v3253, 4294901760
    %3384 = vmatprep.subr.mxu0 %v3383
    %v3385 = vand.u32 %v3252, 4294901760
    %3386 = vmatpush1.msra.mxu0 %v3385
    %v3387 = vand.u32 %v3257, 4294901760
    %3388 = vmatprep.subr.mxu0 %v3387
    %v3389 = vand.u32 %v3256, 4294901760
    %3390 = vmatpush1.msra.mxu0 %v3389
    %v3391 = vand.u32 %v3261, 4294901760
    %3392 = vmatprep.subr.mxu0 %v3391
    %v3393 = vand.u32 %v3260, 4294901760
    %3394 = vmatpush1.msra.mxu0 %v3393
    %v3395 = vand.u32 %v3265, 4294901760
    %3396 = vmatprep.subr.mxu0 %v3395
    %v3397 = vand.u32 %v3264, 4294901760
    %3398 = vmatpush1.msra.mxu0 %v3397
    %v3399 = vand.u32 %v3269, 4294901760
    %3400 = vmatprep.subr.mxu0 %v3399
    %v3401 = vand.u32 %v3268, 4294901760
    %3402 = vmatpush1.msra.mxu0 %v3401
    %v3403 = vand.u32 %v3273, 4294901760
    %3404 = vmatprep.subr.mxu0 %v3403
    %v3405 = vand.u32 %v3272, 4294901760
    %3406 = vmatpush1.msra.mxu0 %v3405
    %v3407 = vand.u32 %v3277, 4294901760
    %3408 = vmatprep.subr.mxu0 %v3407
    %v3409 = vand.u32 %v3276, 4294901760
    %3410 = vmatpush1.msra.mxu0 %v3409
    %v3411 = vand.u32 %v3281, 4294901760
    %3412 = vmatprep.subr.mxu0 %v3411
    %v3413 = vand.u32 %v3280, 4294901760
    %3414 = vmatpush1.msra.mxu0 %v3413
    %v3415 = vand.u32 %v3285, 4294901760
    %3416 = vmatprep.subr.mxu0 %v3415
    %v3417 = vand.u32 %v3284, 4294901760
    %3418 = vmatpush1.msra.mxu0 %v3417
    %v3419 = vand.u32 %v3289, 4294901760
    %3420 = vmatprep.subr.mxu0 %v3419
    %v3421 = vand.u32 %v3288, 4294901760
    %3422 = vmatpush1.msra.mxu0 %v3421
    %v3423 = vand.u32 %v3293, 4294901760
    %3424 = vmatprep.subr.mxu0 %v3423
    %v3425 = vand.u32 %v3292, 4294901760
    %3426 = vmatpush1.msra.mxu0 %v3425
    %v3427 = vand.u32 %v3297, 4294901760
    %3428 = vmatprep.subr.mxu0 %v3427
    %v3429 = vand.u32 %v3296, 4294901760
    %3430 = vmatpush1.msra.mxu0 %v3429
    %v3431 = vand.u32 %v3301, 4294901760
    %3432 = vmatprep.subr.mxu0 %v3431
    %v3433 = vand.u32 %v3300, 4294901760
    %3434 = vmatpush1.msra.mxu0 %v3433
    %v3435 = vand.u32 %v3305, 4294901760
    %3436 = vmatprep.subr.mxu0 %v3435
    %v3437 = vand.u32 %v3304, 4294901760
    %3438 = vmatpush1.msra.mxu0 %v3437
    %v3439 = vand.u32 %v3309, 4294901760
    %3440 = vmatprep.subr.mxu0 %v3439
    %v3441 = vand.u32 %v3308, 4294901760
    %3442 = vmatpush1.msra.mxu0 %v3441
    %v3443 = vand.u32 %v3313, 4294901760
    %3444 = vmatprep.subr.mxu0 %v3443
    %v3445 = vand.u32 %v3312, 4294901760
    %3446 = vmatpush1.msra.mxu0 %v3445
    %v3447 = vand.u32 %v3317, 4294901760
    %3448 = vmatprep.subr.mxu0 %v3447
    %v3449 = vand.u32 %v3316, 4294901760
    %3450 = vmatpush1.msra.mxu0 %v3449
    %v3451 = vand.u32 %v3321, 4294901760
    %3452 = vmatprep.subr.mxu0 %v3451
    %v3453 = vand.u32 %v3320, 4294901760
    %3454 = vmatpush1.msra.mxu0 %v3453
    %v3455 = vand.u32 %v3325, 4294901760
    %3456 = vmatprep.subr.mxu0 %v3455
    %v3457 = vand.u32 %v3324, 4294901760
    %3458 = vmatpush1.msra.mxu0 %v3457
    %v3459 = vand.u32 %v3329, 4294901760
    %3460 = vmatprep.subr.mxu0 %v3459
    %v3461 = vand.u32 %v3328, 4294901760
    %3462 = vmatpush1.msra.mxu0 %v3461
    %v3463 = vand.u32 %v3333, 4294901760
    %3464 = vmatprep.subr.mxu0 %v3463
    %v3465 = vand.u32 %v3332, 4294901760
    %3466 = vmatpush1.msra.mxu0 %v3465
    %v3467 = vand.u32 %v3337, 4294901760
    %3468 = vmatprep.subr.mxu0 %v3467
    %v3469 = vand.u32 %v3336, 4294901760
    %3470 = vmatpush1.msra.mxu0 %v3469
    %v3471 = vand.u32 %v3341, 4294901760
    %3472 = vmatprep.subr.mxu0 %v3471
    %v3473 = vand.u32 %v3340, 4294901760
    %3474 = vmatpush1.msra.mxu0 %v3473
    %v3475 = vand.u32 %v3345, 4294901760
    %3476 = vmatprep.subr.mxu0 %v3475
    %v3477 = vand.u32 %v3344, 4294901760
    %3478 = vmatpush1.msra.mxu0 %v3477
    %v3479 = vand.u32 %v3349, 4294901760
    %3480 = vmatprep.subr.mxu0 %v3479
    %v3481 = vand.u32 %v3348, 4294901760
    %3482 = vmatpush1.msra.mxu0 %v3481
    %v3483 = vand.u32 %v3353, 4294901760
    %3484 = vmatprep.subr.mxu0 %v3483
    %v3485 = vand.u32 %v3352, 4294901760
    %3486 = vmatpush1.msra.mxu0 %v3485
    %v3487 = vand.u32 %v3357, 4294901760
    %3488 = vmatprep.subr.mxu0 %v3487
    %v3489 = vand.u32 %v3356, 4294901760
    %3490 = vmatpush1.msra.mxu0 %v3489
    %v3491 = vand.u32 %v3361, 4294901760
    %v3492 = vsub.f32 %v3361, %v3491
    %v3493 = vand.u32 %v3492, 4294901760
    %v3494 = vsub.f32 %v3492, %v3493
    %v3495 = vand.u32 %v3494, 4294901760
    %3496 = vmatprep.mubr.f32.mxu0 %v3495
    %v3497 = vand.u32 %v3103, 4294901760
    %v3498 = vsub.f32 %v3103, %v3497
    %v3499 = vand.u32 %v3498, 4294901760
    %v3500 = vsub.f32 %v3498, %v3499
    %v3501 = vand.u32 %v3500, 4294901760
    %3502 = vmatmul.mubr.f32.gmra.mrb[0].mxu0 %v3501
    %v3503 = vpop.f32.mrb[0].mxu0
    %v3504 = vadd.f32 0.0, %v3503
    %v3505 = vpop.f32.mrb[0].mxu0
    %v3506 = vadd.f32 0.0, %v3505
    %3507 = vdwg.mxu0
    %v3508 = vand.u32 %v3233, 4294901760
    %v3509 = vsub.f32 %v3233, %v3508
    %v3510 = vand.u32 %v3509, 4294901760
    %v3511 = vsub.f32 %v3509, %v3510
    %v3512 = vand.u32 %v3511, 4294901760
    %3513 = vmatprep.subr.mxu0 %v3512
    %v3514 = vand.u32 %v3232, 4294901760
    %v3515 = vsub.f32 %v3232, %v3514
    %v3516 = vand.u32 %v3515, 4294901760
    %v3517 = vsub.f32 %v3515, %v3516
    %v3518 = vand.u32 %v3517, 4294901760
    %3519 = vmatpush1.msra.mxu0 %v3518
    %v3520 = vand.u32 %v3237, 4294901760
    %v3521 = vsub.f32 %v3237, %v3520
    %v3522 = vand.u32 %v3521, 4294901760
    %v3523 = vsub.f32 %v3521, %v3522
    %v3524 = vand.u32 %v3523, 4294901760
    %3525 = vmatprep.subr.mxu0 %v3524
    %v3526 = vand.u32 %v3236, 4294901760
    %v3527 = vsub.f32 %v3236, %v3526
    %v3528 = vand.u32 %v3527, 4294901760
    %v3529 = vsub.f32 %v3527, %v3528
    %v3530 = vand.u32 %v3529, 4294901760
    %3531 = vmatpush1.msra.mxu0 %v3530
    %v3532 = vand.u32 %v3241, 4294901760
    %v3533 = vsub.f32 %v3241, %v3532
    %v3534 = vand.u32 %v3533, 4294901760
    %v3535 = vsub.f32 %v3533, %v3534
    %v3536 = vand.u32 %v3535, 4294901760
    %3537 = vmatprep.subr.mxu0 %v3536
    %v3538 = vand.u32 %v3240, 4294901760
    %v3539 = vsub.f32 %v3240, %v3538
    %v3540 = vand.u32 %v3539, 4294901760
    %v3541 = vsub.f32 %v3539, %v3540
    %v3542 = vand.u32 %v3541, 4294901760
    %3543 = vmatpush1.msra.mxu0 %v3542
    %v3544 = vand.u32 %v3245, 4294901760
    %v3545 = vsub.f32 %v3245, %v3544
    %v3546 = vand.u32 %v3545, 4294901760
    %v3547 = vsub.f32 %v3545, %v3546
    %v3548 = vand.u32 %v3547, 4294901760
    %3549 = vmatprep.subr.mxu0 %v3548
    %v3550 = vand.u32 %v3244, 4294901760
    %v3551 = vsub.f32 %v3244, %v3550
    %v3552 = vand.u32 %v3551, 4294901760
    %v3553 = vsub.f32 %v3551, %v3552
    %v3554 = vand.u32 %v3553, 4294901760
    %3555 = vmatpush1.msra.mxu0 %v3554
    %v3556 = vand.u32 %v3249, 4294901760
    %v3557 = vsub.f32 %v3249, %v3556
    %v3558 = vand.u32 %v3557, 4294901760
    %v3559 = vsub.f32 %v3557, %v3558
    %v3560 = vand.u32 %v3559, 4294901760
    %3561 = vmatprep.subr.mxu0 %v3560
    %v3562 = vand.u32 %v3248, 4294901760
    %v3563 = vsub.f32 %v3248, %v3562
    %v3564 = vand.u32 %v3563, 4294901760
    %v3565 = vsub.f32 %v3563, %v3564
    %v3566 = vand.u32 %v3565, 4294901760
    %3567 = vmatpush1.msra.mxu0 %v3566
    %v3568 = vand.u32 %v3253, 4294901760
    %v3569 = vsub.f32 %v3253, %v3568
    %v3570 = vand.u32 %v3569, 4294901760
    %v3571 = vsub.f32 %v3569, %v3570
    %v3572 = vand.u32 %v3571, 4294901760
    %3573 = vmatprep.subr.mxu0 %v3572
    %v3574 = vand.u32 %v3252, 4294901760
    %v3575 = vsub.f32 %v3252, %v3574
    %v3576 = vand.u32 %v3575, 4294901760
    %v3577 = vsub.f32 %v3575, %v3576
    %v3578 = vand.u32 %v3577, 4294901760
    %3579 = vmatpush1.msra.mxu0 %v3578
    %v3580 = vand.u32 %v3257, 4294901760
    %v3581 = vsub.f32 %v3257, %v3580
    %v3582 = vand.u32 %v3581, 4294901760
    %v3583 = vsub.f32 %v3581, %v3582
    %v3584 = vand.u32 %v3583, 4294901760
    %3585 = vmatprep.subr.mxu0 %v3584
    %v3586 = vand.u32 %v3256, 4294901760
    %v3587 = vsub.f32 %v3256, %v3586
    %v3588 = vand.u32 %v3587, 4294901760
    %v3589 = vsub.f32 %v3587, %v3588
    %v3590 = vand.u32 %v3589, 4294901760
    %3591 = vmatpush1.msra.mxu0 %v3590
    %v3592 = vand.u32 %v3261, 4294901760
    %v3593 = vsub.f32 %v3261, %v3592
    %v3594 = vand.u32 %v3593, 4294901760
    %v3595 = vsub.f32 %v3593, %v3594
    %v3596 = vand.u32 %v3595, 4294901760
    %3597 = vmatprep.subr.mxu0 %v3596
    %v3598 = vand.u32 %v3260, 4294901760
    %v3599 = vsub.f32 %v3260, %v3598
    %v3600 = vand.u32 %v3599, 4294901760
    %v3601 = vsub.f32 %v3599, %v3600
    %v3602 = vand.u32 %v3601, 4294901760
    %3603 = vmatpush1.msra.mxu0 %v3602
    %v3604 = vand.u32 %v3265, 4294901760
    %v3605 = vsub.f32 %v3265, %v3604
    %v3606 = vand.u32 %v3605, 4294901760
    %v3607 = vsub.f32 %v3605, %v3606
    %v3608 = vand.u32 %v3607, 4294901760
    %3609 = vmatprep.subr.mxu0 %v3608
    %v3610 = vand.u32 %v3264, 4294901760
    %v3611 = vsub.f32 %v3264, %v3610
    %v3612 = vand.u32 %v3611, 4294901760
    %v3613 = vsub.f32 %v3611, %v3612
    %v3614 = vand.u32 %v3613, 4294901760
    %3615 = vmatpush1.msra.mxu0 %v3614
    %v3616 = vand.u32 %v3269, 4294901760
    %v3617 = vsub.f32 %v3269, %v3616
    %v3618 = vand.u32 %v3617, 4294901760
    %v3619 = vsub.f32 %v3617, %v3618
    %v3620 = vand.u32 %v3619, 4294901760
    %3621 = vmatprep.subr.mxu0 %v3620
    %v3622 = vand.u32 %v3268, 4294901760
    %v3623 = vsub.f32 %v3268, %v3622
    %v3624 = vand.u32 %v3623, 4294901760
    %v3625 = vsub.f32 %v3623, %v3624
    %v3626 = vand.u32 %v3625, 4294901760
    %3627 = vmatpush1.msra.mxu0 %v3626
    %v3628 = vand.u32 %v3273, 4294901760
    %v3629 = vsub.f32 %v3273, %v3628
    %v3630 = vand.u32 %v3629, 4294901760
    %v3631 = vsub.f32 %v3629, %v3630
    %v3632 = vand.u32 %v3631, 4294901760
    %3633 = vmatprep.subr.mxu0 %v3632
    %v3634 = vand.u32 %v3272, 4294901760
    %v3635 = vsub.f32 %v3272, %v3634
    %v3636 = vand.u32 %v3635, 4294901760
    %v3637 = vsub.f32 %v3635, %v3636
    %v3638 = vand.u32 %v3637, 4294901760
    %3639 = vmatpush1.msra.mxu0 %v3638
    %v3640 = vand.u32 %v3277, 4294901760
    %v3641 = vsub.f32 %v3277, %v3640
    %v3642 = vand.u32 %v3641, 4294901760
    %v3643 = vsub.f32 %v3641, %v3642
    %v3644 = vand.u32 %v3643, 4294901760
    %3645 = vmatprep.subr.mxu0 %v3644
    %v3646 = vand.u32 %v3276, 4294901760
    %v3647 = vsub.f32 %v3276, %v3646
    %v3648 = vand.u32 %v3647, 4294901760
    %v3649 = vsub.f32 %v3647, %v3648
    %v3650 = vand.u32 %v3649, 4294901760
    %3651 = vmatpush1.msra.mxu0 %v3650
    %v3652 = vand.u32 %v3281, 4294901760
    %v3653 = vsub.f32 %v3281, %v3652
    %v3654 = vand.u32 %v3653, 4294901760
    %v3655 = vsub.f32 %v3653, %v3654
    %v3656 = vand.u32 %v3655, 4294901760
    %3657 = vmatprep.subr.mxu0 %v3656
    %v3658 = vand.u32 %v3280, 4294901760
    %v3659 = vsub.f32 %v3280, %v3658
    %v3660 = vand.u32 %v3659, 4294901760
    %v3661 = vsub.f32 %v3659, %v3660
    %v3662 = vand.u32 %v3661, 4294901760
    %3663 = vmatpush1.msra.mxu0 %v3662
    %v3664 = vand.u32 %v3285, 4294901760
    %v3665 = vsub.f32 %v3285, %v3664
    %v3666 = vand.u32 %v3665, 4294901760
    %v3667 = vsub.f32 %v3665, %v3666
    %v3668 = vand.u32 %v3667, 4294901760
    %3669 = vmatprep.subr.mxu0 %v3668
    %v3670 = vand.u32 %v3284, 4294901760
    %v3671 = vsub.f32 %v3284, %v3670
    %v3672 = vand.u32 %v3671, 4294901760
    %v3673 = vsub.f32 %v3671, %v3672
    %v3674 = vand.u32 %v3673, 4294901760
    %3675 = vmatpush1.msra.mxu0 %v3674
    %v3676 = vand.u32 %v3289, 4294901760
    %v3677 = vsub.f32 %v3289, %v3676
    %v3678 = vand.u32 %v3677, 4294901760
    %v3679 = vsub.f32 %v3677, %v3678
    %v3680 = vand.u32 %v3679, 4294901760
    %3681 = vmatprep.subr.mxu0 %v3680
    %v3682 = vand.u32 %v3288, 4294901760
    %v3683 = vsub.f32 %v3288, %v3682
    %v3684 = vand.u32 %v3683, 4294901760
    %v3685 = vsub.f32 %v3683, %v3684
    %v3686 = vand.u32 %v3685, 4294901760
    %3687 = vmatpush1.msra.mxu0 %v3686
    %v3688 = vand.u32 %v3293, 4294901760
    %v3689 = vsub.f32 %v3293, %v3688
    %v3690 = vand.u32 %v3689, 4294901760
    %v3691 = vsub.f32 %v3689, %v3690
    %v3692 = vand.u32 %v3691, 4294901760
    %3693 = vmatprep.subr.mxu0 %v3692
    %v3694 = vand.u32 %v3292, 4294901760
    %v3695 = vsub.f32 %v3292, %v3694
    %v3696 = vand.u32 %v3695, 4294901760
    %v3697 = vsub.f32 %v3695, %v3696
    %v3698 = vand.u32 %v3697, 4294901760
    %3699 = vmatpush1.msra.mxu0 %v3698
    %v3700 = vand.u32 %v3297, 4294901760
    %v3701 = vsub.f32 %v3297, %v3700
    %v3702 = vand.u32 %v3701, 4294901760
    %v3703 = vsub.f32 %v3701, %v3702
    %v3704 = vand.u32 %v3703, 4294901760
    %3705 = vmatprep.subr.mxu0 %v3704
    %v3706 = vand.u32 %v3296, 4294901760
    %v3707 = vsub.f32 %v3296, %v3706
    %v3708 = vand.u32 %v3707, 4294901760
    %v3709 = vsub.f32 %v3707, %v3708
    %v3710 = vand.u32 %v3709, 4294901760
    %3711 = vmatpush1.msra.mxu0 %v3710
    %v3712 = vand.u32 %v3301, 4294901760
    %v3713 = vsub.f32 %v3301, %v3712
    %v3714 = vand.u32 %v3713, 4294901760
    %v3715 = vsub.f32 %v3713, %v3714
    %v3716 = vand.u32 %v3715, 4294901760
    %3717 = vmatprep.subr.mxu0 %v3716
    %v3718 = vand.u32 %v3300, 4294901760
    %v3719 = vsub.f32 %v3300, %v3718
    %v3720 = vand.u32 %v3719, 4294901760
    %v3721 = vsub.f32 %v3719, %v3720
    %v3722 = vand.u32 %v3721, 4294901760
    %3723 = vmatpush1.msra.mxu0 %v3722
    %v3724 = vand.u32 %v3305, 4294901760
    %v3725 = vsub.f32 %v3305, %v3724
    %v3726 = vand.u32 %v3725, 4294901760
    %v3727 = vsub.f32 %v3725, %v3726
    %v3728 = vand.u32 %v3727, 4294901760
    %3729 = vmatprep.subr.mxu0 %v3728
    %v3730 = vand.u32 %v3304, 4294901760
    %v3731 = vsub.f32 %v3304, %v3730
    %v3732 = vand.u32 %v3731, 4294901760
    %v3733 = vsub.f32 %v3731, %v3732
    %v3734 = vand.u32 %v3733, 4294901760
    %3735 = vmatpush1.msra.mxu0 %v3734
    %v3736 = vand.u32 %v3309, 4294901760
    %v3737 = vsub.f32 %v3309, %v3736
    %v3738 = vand.u32 %v3737, 4294901760
    %v3739 = vsub.f32 %v3737, %v3738
    %v3740 = vand.u32 %v3739, 4294901760
    %3741 = vmatprep.subr.mxu0 %v3740
    %v3742 = vand.u32 %v3308, 4294901760
    %v3743 = vsub.f32 %v3308, %v3742
    %v3744 = vand.u32 %v3743, 4294901760
    %v3745 = vsub.f32 %v3743, %v3744
    %v3746 = vand.u32 %v3745, 4294901760
    %3747 = vmatpush1.msra.mxu0 %v3746
    %v3748 = vand.u32 %v3313, 4294901760
    %v3749 = vsub.f32 %v3313, %v3748
    %v3750 = vand.u32 %v3749, 4294901760
    %v3751 = vsub.f32 %v3749, %v3750
    %v3752 = vand.u32 %v3751, 4294901760
    %3753 = vmatprep.subr.mxu0 %v3752
    %v3754 = vand.u32 %v3312, 4294901760
    %v3755 = vsub.f32 %v3312, %v3754
    %v3756 = vand.u32 %v3755, 4294901760
    %v3757 = vsub.f32 %v3755, %v3756
    %v3758 = vand.u32 %v3757, 4294901760
    %3759 = vmatpush1.msra.mxu0 %v3758
    %v3760 = vand.u32 %v3317, 4294901760
    %v3761 = vsub.f32 %v3317, %v3760
    %v3762 = vand.u32 %v3761, 4294901760
    %v3763 = vsub.f32 %v3761, %v3762
    %v3764 = vand.u32 %v3763, 4294901760
    %3765 = vmatprep.subr.mxu0 %v3764
    %v3766 = vand.u32 %v3316, 4294901760
    %v3767 = vsub.f32 %v3316, %v3766
    %v3768 = vand.u32 %v3767, 4294901760
    %v3769 = vsub.f32 %v3767, %v3768
    %v3770 = vand.u32 %v3769, 4294901760
    %3771 = vmatpush1.msra.mxu0 %v3770
    %v3772 = vand.u32 %v3321, 4294901760
    %v3773 = vsub.f32 %v3321, %v3772
    %v3774 = vand.u32 %v3773, 4294901760
    %v3775 = vsub.f32 %v3773, %v3774
    %v3776 = vand.u32 %v3775, 4294901760
    %3777 = vmatprep.subr.mxu0 %v3776
    %v3778 = vand.u32 %v3320, 4294901760
    %v3779 = vsub.f32 %v3320, %v3778
    %v3780 = vand.u32 %v3779, 4294901760
    %v3781 = vsub.f32 %v3779, %v3780
    %v3782 = vand.u32 %v3781, 4294901760
    %3783 = vmatpush1.msra.mxu0 %v3782
    %v3784 = vand.u32 %v3325, 4294901760
    %v3785 = vsub.f32 %v3325, %v3784
    %v3786 = vand.u32 %v3785, 4294901760
    %v3787 = vsub.f32 %v3785, %v3786
    %v3788 = vand.u32 %v3787, 4294901760
    %3789 = vmatprep.subr.mxu0 %v3788
    %v3790 = vand.u32 %v3324, 4294901760
    %v3791 = vsub.f32 %v3324, %v3790
    %v3792 = vand.u32 %v3791, 4294901760
    %v3793 = vsub.f32 %v3791, %v3792
    %v3794 = vand.u32 %v3793, 4294901760
    %3795 = vmatpush1.msra.mxu0 %v3794
    %v3796 = vand.u32 %v3329, 4294901760
    %v3797 = vsub.f32 %v3329, %v3796
    %v3798 = vand.u32 %v3797, 4294901760
    %v3799 = vsub.f32 %v3797, %v3798
    %v3800 = vand.u32 %v3799, 4294901760
    %3801 = vmatprep.subr.mxu0 %v3800
    %v3802 = vand.u32 %v3328, 4294901760
    %v3803 = vsub.f32 %v3328, %v3802
    %v3804 = vand.u32 %v3803, 4294901760
    %v3805 = vsub.f32 %v3803, %v3804
    %v3806 = vand.u32 %v3805, 4294901760
    %3807 = vmatpush1.msra.mxu0 %v3806
    %v3808 = vand.u32 %v3333, 4294901760
    %v3809 = vsub.f32 %v3333, %v3808
    %v3810 = vand.u32 %v3809, 4294901760
    %v3811 = vsub.f32 %v3809, %v3810
    %v3812 = vand.u32 %v3811, 4294901760
    %3813 = vmatprep.subr.mxu0 %v3812
    %v3814 = vand.u32 %v3332, 4294901760
    %v3815 = vsub.f32 %v3332, %v3814
    %v3816 = vand.u32 %v3815, 4294901760
    %v3817 = vsub.f32 %v3815, %v3816
    %v3818 = vand.u32 %v3817, 4294901760
    %3819 = vmatpush1.msra.mxu0 %v3818
    %v3820 = vand.u32 %v3337, 4294901760
    %v3821 = vsub.f32 %v3337, %v3820
    %v3822 = vand.u32 %v3821, 4294901760
    %v3823 = vsub.f32 %v3821, %v3822
    %v3824 = vand.u32 %v3823, 4294901760
    %3825 = vmatprep.subr.mxu0 %v3824
    %v3826 = vand.u32 %v3336, 4294901760
    %v3827 = vsub.f32 %v3336, %v3826
    %v3828 = vand.u32 %v3827, 4294901760
    %v3829 = vsub.f32 %v3827, %v3828
    %v3830 = vand.u32 %v3829, 4294901760
    %3831 = vmatpush1.msra.mxu0 %v3830
    %v3832 = vand.u32 %v3341, 4294901760
    %v3833 = vsub.f32 %v3341, %v3832
    %v3834 = vand.u32 %v3833, 4294901760
    %v3835 = vsub.f32 %v3833, %v3834
    %v3836 = vand.u32 %v3835, 4294901760
    %3837 = vmatprep.subr.mxu0 %v3836
    %v3838 = vand.u32 %v3340, 4294901760
    %v3839 = vsub.f32 %v3340, %v3838
    %v3840 = vand.u32 %v3839, 4294901760
    %v3841 = vsub.f32 %v3839, %v3840
    %v3842 = vand.u32 %v3841, 4294901760
    %3843 = vmatpush1.msra.mxu0 %v3842
    %v3844 = vand.u32 %v3345, 4294901760
    %v3845 = vsub.f32 %v3345, %v3844
    %v3846 = vand.u32 %v3845, 4294901760
    %v3847 = vsub.f32 %v3845, %v3846
    %v3848 = vand.u32 %v3847, 4294901760
    %3849 = vmatprep.subr.mxu0 %v3848
    %v3850 = vand.u32 %v3344, 4294901760
    %v3851 = vsub.f32 %v3344, %v3850
    %v3852 = vand.u32 %v3851, 4294901760
    %v3853 = vsub.f32 %v3851, %v3852
    %v3854 = vand.u32 %v3853, 4294901760
    %3855 = vmatpush1.msra.mxu0 %v3854
    %v3856 = vand.u32 %v3349, 4294901760
    %v3857 = vsub.f32 %v3349, %v3856
    %v3858 = vand.u32 %v3857, 4294901760
    %v3859 = vsub.f32 %v3857, %v3858
    %v3860 = vand.u32 %v3859, 4294901760
    %3861 = vmatprep.subr.mxu0 %v3860
    %v3862 = vand.u32 %v3348, 4294901760
    %v3863 = vsub.f32 %v3348, %v3862
    %v3864 = vand.u32 %v3863, 4294901760
    %v3865 = vsub.f32 %v3863, %v3864
    %v3866 = vand.u32 %v3865, 4294901760
    %3867 = vmatpush1.msra.mxu0 %v3866
    %v3868 = vand.u32 %v3353, 4294901760
    %v3869 = vsub.f32 %v3353, %v3868
    %v3870 = vand.u32 %v3869, 4294901760
    %v3871 = vsub.f32 %v3869, %v3870
    %v3872 = vand.u32 %v3871, 4294901760
    %3873 = vmatprep.subr.mxu0 %v3872
    %v3874 = vand.u32 %v3352, 4294901760
    %v3875 = vsub.f32 %v3352, %v3874
    %v3876 = vand.u32 %v3875, 4294901760
    %v3877 = vsub.f32 %v3875, %v3876
    %v3878 = vand.u32 %v3877, 4294901760
    %3879 = vmatpush1.msra.mxu0 %v3878
    %v3880 = vand.u32 %v3357, 4294901760
    %v3881 = vsub.f32 %v3357, %v3880
    %v3882 = vand.u32 %v3881, 4294901760
    %v3883 = vsub.f32 %v3881, %v3882
    %v3884 = vand.u32 %v3883, 4294901760
    %3885 = vmatprep.subr.mxu0 %v3884
    %v3886 = vand.u32 %v3356, 4294901760
    %v3887 = vsub.f32 %v3356, %v3886
    %v3888 = vand.u32 %v3887, 4294901760
    %v3889 = vsub.f32 %v3887, %v3888
    %v3890 = vand.u32 %v3889, 4294901760
    %3891 = vmatpush1.msra.mxu0 %v3890
    %v3892 = vand.u32 %v3361, 4294901760
    %3893 = vmatprep.mubr.f32.mxu0 %v3892
    %v3894 = vand.u32 %v3103, 4294901760
    %3895 = vmatmul.mubr.f32.gmra.mrb[0].mxu0 %v3894
    %v3896 = vpop.f32.mrb[0].mxu0
    %v3897 = vadd.f32 %v3504, %v3896
    %v3898 = vpop.f32.mrb[0].mxu0
    %v3899 = vadd.f32 %v3506, %v3898
    %3900 = vdwg.mxu0
    %v3901 = vand.u32 %v3233, 4294901760
    %v3902 = vsub.f32 %v3233, %v3901
    %3903 = vmatprep.subr.mxu0 %v3902
    %v3904 = vand.u32 %v3232, 4294901760
    %v3905 = vsub.f32 %v3232, %v3904
    %3906 = vmatpush1.msra.mxu0 %v3905
    %v3907 = vand.u32 %v3237, 4294901760
    %v3908 = vsub.f32 %v3237, %v3907
    %3909 = vmatprep.subr.mxu0 %v3908
    %v3910 = vand.u32 %v3236, 4294901760
    %v3911 = vsub.f32 %v3236, %v3910
    %3912 = vmatpush1.msra.mxu0 %v3911
    %v3913 = vand.u32 %v3241, 4294901760
    %v3914 = vsub.f32 %v3241, %v3913
    %3915 = vmatprep.subr.mxu0 %v3914
    %v3916 = vand.u32 %v3240, 4294901760
    %v3917 = vsub.f32 %v3240, %v3916
    %3918 = vmatpush1.msra.mxu0 %v3917
    %v3919 = vand.u32 %v3245, 4294901760
    %v3920 = vsub.f32 %v3245, %v3919
    %3921 = vmatprep.subr.mxu0 %v3920
    %v3922 = vand.u32 %v3244, 4294901760
    %v3923 = vsub.f32 %v3244, %v3922
    %3924 = vmatpush1.msra.mxu0 %v3923
    %v3925 = vand.u32 %v3249, 4294901760
    %v3926 = vsub.f32 %v3249, %v3925
    %3927 = vmatprep.subr.mxu0 %v3926
    %v3928 = vand.u32 %v3248, 4294901760
    %v3929 = vsub.f32 %v3248, %v3928
    %3930 = vmatpush1.msra.mxu0 %v3929
    %v3931 = vand.u32 %v3253, 4294901760
    %v3932 = vsub.f32 %v3253, %v3931
    %3933 = vmatprep.subr.mxu0 %v3932
    %v3934 = vand.u32 %v3252, 4294901760
    %v3935 = vsub.f32 %v3252, %v3934
    %3936 = vmatpush1.msra.mxu0 %v3935
    %v3937 = vand.u32 %v3257, 4294901760
    %v3938 = vsub.f32 %v3257, %v3937
    %3939 = vmatprep.subr.mxu0 %v3938
    %v3940 = vand.u32 %v3256, 4294901760
    %v3941 = vsub.f32 %v3256, %v3940
    %3942 = vmatpush1.msra.mxu0 %v3941
    %v3943 = vand.u32 %v3261, 4294901760
    %v3944 = vsub.f32 %v3261, %v3943
    %3945 = vmatprep.subr.mxu0 %v3944
    %v3946 = vand.u32 %v3260, 4294901760
    %v3947 = vsub.f32 %v3260, %v3946
    %3948 = vmatpush1.msra.mxu0 %v3947
    %v3949 = vand.u32 %v3265, 4294901760
    %v3950 = vsub.f32 %v3265, %v3949
    %3951 = vmatprep.subr.mxu0 %v3950
    %v3952 = vand.u32 %v3264, 4294901760
    %v3953 = vsub.f32 %v3264, %v3952
    %3954 = vmatpush1.msra.mxu0 %v3953
    %v3955 = vand.u32 %v3269, 4294901760
    %v3956 = vsub.f32 %v3269, %v3955
    %3957 = vmatprep.subr.mxu0 %v3956
    %v3958 = vand.u32 %v3268, 4294901760
    %v3959 = vsub.f32 %v3268, %v3958
    %3960 = vmatpush1.msra.mxu0 %v3959
    %v3961 = vand.u32 %v3273, 4294901760
    %v3962 = vsub.f32 %v3273, %v3961
    %3963 = vmatprep.subr.mxu0 %v3962
    %v3964 = vand.u32 %v3272, 4294901760
    %v3965 = vsub.f32 %v3272, %v3964
    %3966 = vmatpush1.msra.mxu0 %v3965
    %v3967 = vand.u32 %v3277, 4294901760
    %v3968 = vsub.f32 %v3277, %v3967
    %3969 = vmatprep.subr.mxu0 %v3968
    %v3970 = vand.u32 %v3276, 4294901760
    %v3971 = vsub.f32 %v3276, %v3970
    %3972 = vmatpush1.msra.mxu0 %v3971
    %v3973 = vand.u32 %v3281, 4294901760
    %v3974 = vsub.f32 %v3281, %v3973
    %3975 = vmatprep.subr.mxu0 %v3974
    %v3976 = vand.u32 %v3280, 4294901760
    %v3977 = vsub.f32 %v3280, %v3976
    %3978 = vmatpush1.msra.mxu0 %v3977
    %v3979 = vand.u32 %v3285, 4294901760
    %v3980 = vsub.f32 %v3285, %v3979
    %3981 = vmatprep.subr.mxu0 %v3980
    %v3982 = vand.u32 %v3284, 4294901760
    %v3983 = vsub.f32 %v3284, %v3982
    %3984 = vmatpush1.msra.mxu0 %v3983
    %v3985 = vand.u32 %v3289, 4294901760
    %v3986 = vsub.f32 %v3289, %v3985
    %3987 = vmatprep.subr.mxu0 %v3986
    %v3988 = vand.u32 %v3288, 4294901760
    %v3989 = vsub.f32 %v3288, %v3988
    %3990 = vmatpush1.msra.mxu0 %v3989
    %v3991 = vand.u32 %v3293, 4294901760
    %v3992 = vsub.f32 %v3293, %v3991
    %3993 = vmatprep.subr.mxu0 %v3992
    %v3994 = vand.u32 %v3292, 4294901760
    %v3995 = vsub.f32 %v3292, %v3994
    %3996 = vmatpush1.msra.mxu0 %v3995
    %v3997 = vand.u32 %v3297, 4294901760
    %v3998 = vsub.f32 %v3297, %v3997
    %3999 = vmatprep.subr.mxu0 %v3998
    %v4000 = vand.u32 %v3296, 4294901760
    %v4001 = vsub.f32 %v3296, %v4000
    %4002 = vmatpush1.msra.mxu0 %v4001
    %v4003 = vand.u32 %v3301, 4294901760
    %v4004 = vsub.f32 %v3301, %v4003
    %4005 = vmatprep.subr.mxu0 %v4004
    %v4006 = vand.u32 %v3300, 4294901760
    %v4007 = vsub.f32 %v3300, %v4006
    %4008 = vmatpush1.msra.mxu0 %v4007
    %v4009 = vand.u32 %v3305, 4294901760
    %v4010 = vsub.f32 %v3305, %v4009
    %4011 = vmatprep.subr.mxu0 %v4010
    %v4012 = vand.u32 %v3304, 4294901760
    %v4013 = vsub.f32 %v3304, %v4012
    %4014 = vmatpush1.msra.mxu0 %v4013
    %v4015 = vand.u32 %v3309, 4294901760
    %v4016 = vsub.f32 %v3309, %v4015
    %4017 = vmatprep.subr.mxu0 %v4016
    %v4018 = vand.u32 %v3308, 4294901760
    %v4019 = vsub.f32 %v3308, %v4018
    %4020 = vmatpush1.msra.mxu0 %v4019
    %v4021 = vand.u32 %v3313, 4294901760
    %v4022 = vsub.f32 %v3313, %v4021
    %4023 = vmatprep.subr.mxu0 %v4022
    %v4024 = vand.u32 %v3312, 4294901760
    %v4025 = vsub.f32 %v3312, %v4024
    %4026 = vmatpush1.msra.mxu0 %v4025
    %v4027 = vand.u32 %v3317, 4294901760
    %v4028 = vsub.f32 %v3317, %v4027
    %4029 = vmatprep.subr.mxu0 %v4028
    %v4030 = vand.u32 %v3316, 4294901760
    %v4031 = vsub.f32 %v3316, %v4030
    %4032 = vmatpush1.msra.mxu0 %v4031
    %v4033 = vand.u32 %v3321, 4294901760
    %v4034 = vsub.f32 %v3321, %v4033
    %4035 = vmatprep.subr.mxu0 %v4034
    %v4036 = vand.u32 %v3320, 4294901760
    %v4037 = vsub.f32 %v3320, %v4036
    %4038 = vmatpush1.msra.mxu0 %v4037
    %v4039 = vand.u32 %v3325, 4294901760
    %v4040 = vsub.f32 %v3325, %v4039
    %4041 = vmatprep.subr.mxu0 %v4040
    %v4042 = vand.u32 %v3324, 4294901760
    %v4043 = vsub.f32 %v3324, %v4042
    %4044 = vmatpush1.msra.mxu0 %v4043
    %v4045 = vand.u32 %v3329, 4294901760
    %v4046 = vsub.f32 %v3329, %v4045
    %4047 = vmatprep.subr.mxu0 %v4046
    %v4048 = vand.u32 %v3328, 4294901760
    %v4049 = vsub.f32 %v3328, %v4048
    %4050 = vmatpush1.msra.mxu0 %v4049
    %v4051 = vand.u32 %v3333, 4294901760
    %v4052 = vsub.f32 %v3333, %v4051
    %4053 = vmatprep.subr.mxu0 %v4052
    %v4054 = vand.u32 %v3332, 4294901760
    %v4055 = vsub.f32 %v3332, %v4054
    %4056 = vmatpush1.msra.mxu0 %v4055
    %v4057 = vand.u32 %v3337, 4294901760
    %v4058 = vsub.f32 %v3337, %v4057
    %4059 = vmatprep.subr.mxu0 %v4058
    %v4060 = vand.u32 %v3336, 4294901760
    %v4061 = vsub.f32 %v3336, %v4060
    %4062 = vmatpush1.msra.mxu0 %v4061
    %v4063 = vand.u32 %v3341, 4294901760
    %v4064 = vsub.f32 %v3341, %v4063
    %4065 = vmatprep.subr.mxu0 %v4064
    %v4066 = vand.u32 %v3340, 4294901760
    %v4067 = vsub.f32 %v3340, %v4066
    %4068 = vmatpush1.msra.mxu0 %v4067
    %v4069 = vand.u32 %v3345, 4294901760
    %v4070 = vsub.f32 %v3345, %v4069
    %4071 = vmatprep.subr.mxu0 %v4070
    %v4072 = vand.u32 %v3344, 4294901760
    %v4073 = vsub.f32 %v3344, %v4072
    %4074 = vmatpush1.msra.mxu0 %v4073
    %v4075 = vand.u32 %v3349, 4294901760
    %v4076 = vsub.f32 %v3349, %v4075
    %4077 = vmatprep.subr.mxu0 %v4076
    %v4078 = vand.u32 %v3348, 4294901760
    %v4079 = vsub.f32 %v3348, %v4078
    %4080 = vmatpush1.msra.mxu0 %v4079
    %v4081 = vand.u32 %v3353, 4294901760
    %v4082 = vsub.f32 %v3353, %v4081
    %4083 = vmatprep.subr.mxu0 %v4082
    %v4084 = vand.u32 %v3352, 4294901760
    %v4085 = vsub.f32 %v3352, %v4084
    %4086 = vmatpush1.msra.mxu0 %v4085
    %v4087 = vand.u32 %v3357, 4294901760
    %v4088 = vsub.f32 %v3357, %v4087
    %4089 = vmatprep.subr.mxu0 %v4088
    %v4090 = vand.u32 %v3356, 4294901760
    %v4091 = vsub.f32 %v3356, %v4090
    %4092 = vmatpush1.msra.mxu0 %v4091
    %v4093 = vand.u32 %v3361, 4294901760
    %v4094 = vsub.f32 %v3361, %v4093
    %4095 = vmatprep.mubr.f32.mxu0 %v4094
    %v4096 = vand.u32 %v3103, 4294901760
    %v4097 = vsub.f32 %v3103, %v4096
    %4098 = vmatmul.mubr.f32.gmra.mrb[0].mxu0 %v4097
    %v4099 = vpop.f32.mrb[0].mxu0
    %v4100 = vadd.f32 %v3897, %v4099
    %v4101 = vpop.f32.mrb[0].mxu0
    %v4102 = vadd.f32 %v3899, %v4101
    %4103 = vdwg.mxu0
    %v4104 = vand.u32 %v3233, 4294901760
    %4105 = vmatprep.subr.mxu0 %v4104
    %v4106 = vand.u32 %v3232, 4294901760
    %4107 = vmatpush1.msra.mxu0 %v4106
    %v4108 = vand.u32 %v3237, 4294901760
    %4109 = vmatprep.subr.mxu0 %v4108
    %v4110 = vand.u32 %v3236, 4294901760
    %4111 = vmatpush1.msra.mxu0 %v4110
    %v4112 = vand.u32 %v3241, 4294901760
    %4113 = vmatprep.subr.mxu0 %v4112
    %v4114 = vand.u32 %v3240, 4294901760
    %4115 = vmatpush1.msra.mxu0 %v4114
    %v4116 = vand.u32 %v3245, 4294901760
    %4117 = vmatprep.subr.mxu0 %v4116
    %v4118 = vand.u32 %v3244, 4294901760
    %4119 = vmatpush1.msra.mxu0 %v4118
    %v4120 = vand.u32 %v3249, 4294901760
    %4121 = vmatprep.subr.mxu0 %v4120
    %v4122 = vand.u32 %v3248, 4294901760
    %4123 = vmatpush1.msra.mxu0 %v4122
    %v4124 = vand.u32 %v3253, 4294901760
    %4125 = vmatprep.subr.mxu0 %v4124
    %v4126 = vand.u32 %v3252, 4294901760
    %4127 = vmatpush1.msra.mxu0 %v4126
    %v4128 = vand.u32 %v3257, 4294901760
    %4129 = vmatprep.subr.mxu0 %v4128
    %v4130 = vand.u32 %v3256, 4294901760
    %4131 = vmatpush1.msra.mxu0 %v4130
    %v4132 = vand.u32 %v3261, 4294901760
    %4133 = vmatprep.subr.mxu0 %v4132
    %v4134 = vand.u32 %v3260, 4294901760
    %4135 = vmatpush1.msra.mxu0 %v4134
    %v4136 = vand.u32 %v3265, 4294901760
    %4137 = vmatprep.subr.mxu0 %v4136
    %v4138 = vand.u32 %v3264, 4294901760
    %4139 = vmatpush1.msra.mxu0 %v4138
    %v4140 = vand.u32 %v3269, 4294901760
    %4141 = vmatprep.subr.mxu0 %v4140
    %v4142 = vand.u32 %v3268, 4294901760
    %4143 = vmatpush1.msra.mxu0 %v4142
    %v4144 = vand.u32 %v3273, 4294901760
    %4145 = vmatprep.subr.mxu0 %v4144
    %v4146 = vand.u32 %v3272, 4294901760
    %4147 = vmatpush1.msra.mxu0 %v4146
    %v4148 = vand.u32 %v3277, 4294901760
    %4149 = vmatprep.subr.mxu0 %v4148
    %v4150 = vand.u32 %v3276, 4294901760
    %4151 = vmatpush1.msra.mxu0 %v4150
    %v4152 = vand.u32 %v3281, 4294901760
    %4153 = vmatprep.subr.mxu0 %v4152
    %v4154 = vand.u32 %v3280, 4294901760
    %4155 = vmatpush1.msra.mxu0 %v4154
    %v4156 = vand.u32 %v3285, 4294901760
    %4157 = vmatprep.subr.mxu0 %v4156
    %v4158 = vand.u32 %v3284, 4294901760
    %4159 = vmatpush1.msra.mxu0 %v4158
    %v4160 = vand.u32 %v3289, 4294901760
    %4161 = vmatprep.subr.mxu0 %v4160
    %v4162 = vand.u32 %v3288, 4294901760
    %4163 = vmatpush1.msra.mxu0 %v4162
    %v4164 = vand.u32 %v3293, 4294901760
    %4165 = vmatprep.subr.mxu0 %v4164
    %v4166 = vand.u32 %v3292, 4294901760
    %4167 = vmatpush1.msra.mxu0 %v4166
    %v4168 = vand.u32 %v3297, 4294901760
    %4169 = vmatprep.subr.mxu0 %v4168
    %v4170 = vand.u32 %v3296, 4294901760
    %4171 = vmatpush1.msra.mxu0 %v4170
    %v4172 = vand.u32 %v3301, 4294901760
    %4173 = vmatprep.subr.mxu0 %v4172
    %v4174 = vand.u32 %v3300, 4294901760
    %4175 = vmatpush1.msra.mxu0 %v4174
    %v4176 = vand.u32 %v3305, 4294901760
    %4177 = vmatprep.subr.mxu0 %v4176
    %v4178 = vand.u32 %v3304, 4294901760
    %4179 = vmatpush1.msra.mxu0 %v4178
    %v4180 = vand.u32 %v3309, 4294901760
    %4181 = vmatprep.subr.mxu0 %v4180
    %v4182 = vand.u32 %v3308, 4294901760
    %4183 = vmatpush1.msra.mxu0 %v4182
    %v4184 = vand.u32 %v3313, 4294901760
    %4185 = vmatprep.subr.mxu0 %v4184
    %v4186 = vand.u32 %v3312, 4294901760
    %4187 = vmatpush1.msra.mxu0 %v4186
    %v4188 = vand.u32 %v3317, 4294901760
    %4189 = vmatprep.subr.mxu0 %v4188
    %v4190 = vand.u32 %v3316, 4294901760
    %4191 = vmatpush1.msra.mxu0 %v4190
    %v4192 = vand.u32 %v3321, 4294901760
    %4193 = vmatprep.subr.mxu0 %v4192
    %v4194 = vand.u32 %v3320, 4294901760
    %4195 = vmatpush1.msra.mxu0 %v4194
    %v4196 = vand.u32 %v3325, 4294901760
    %4197 = vmatprep.subr.mxu0 %v4196
    %v4198 = vand.u32 %v3324, 4294901760
    %4199 = vmatpush1.msra.mxu0 %v4198
    %v4200 = vand.u32 %v3329, 4294901760
    %4201 = vmatprep.subr.mxu0 %v4200
    %v4202 = vand.u32 %v3328, 4294901760
    %4203 = vmatpush1.msra.mxu0 %v4202
    %v4204 = vand.u32 %v3333, 4294901760
    %4205 = vmatprep.subr.mxu0 %v4204
    %v4206 = vand.u32 %v3332, 4294901760
    %4207 = vmatpush1.msra.mxu0 %v4206
    %v4208 = vand.u32 %v3337, 4294901760
    %4209 = vmatprep.subr.mxu0 %v4208
    %v4210 = vand.u32 %v3336, 4294901760
    %4211 = vmatpush1.msra.mxu0 %v4210
    %v4212 = vand.u32 %v3341, 4294901760
    %4213 = vmatprep.subr.mxu0 %v4212
    %v4214 = vand.u32 %v3340, 4294901760
    %4215 = vmatpush1.msra.mxu0 %v4214
    %v4216 = vand.u32 %v3345, 4294901760
    %4217 = vmatprep.subr.mxu0 %v4216
    %v4218 = vand.u32 %v3344, 4294901760
    %4219 = vmatpush1.msra.mxu0 %v4218
    %v4220 = vand.u32 %v3349, 4294901760
    %4221 = vmatprep.subr.mxu0 %v4220
    %v4222 = vand.u32 %v3348, 4294901760
    %4223 = vmatpush1.msra.mxu0 %v4222
    %v4224 = vand.u32 %v3353, 4294901760
    %4225 = vmatprep.subr.mxu0 %v4224
    %v4226 = vand.u32 %v3352, 4294901760
    %4227 = vmatpush1.msra.mxu0 %v4226
    %v4228 = vand.u32 %v3357, 4294901760
    %4229 = vmatprep.subr.mxu0 %v4228
    %v4230 = vand.u32 %v3356, 4294901760
    %4231 = vmatpush1.msra.mxu0 %v4230
    %v4232 = vand.u32 %v3361, 4294901760
    %v4233 = vsub.f32 %v3361, %v4232
    %v4234 = vand.u32 %v4233, 4294901760
    %4235 = vmatprep.mubr.f32.mxu0 %v4234
    %v4236 = vand.u32 %v3103, 4294901760
    %v4237 = vsub.f32 %v3103, %v4236
    %v4238 = vand.u32 %v4237, 4294901760
    %4239 = vmatmul.mubr.f32.gmra.mrb[0].mxu0 %v4238
    %v4240 = vpop.f32.mrb[0].mxu0
    %v4241 = vadd.f32 %v4100, %v4240
    %v4242 = vpop.f32.mrb[0].mxu0
    %v4243 = vadd.f32 %v4102, %v4242
    %4244 = vdwg.mxu0
    %v4245 = vand.u32 %v3233, 4294901760
    %v4246 = vsub.f32 %v3233, %v4245
    %v4247 = vand.u32 %v4246, 4294901760
    %4248 = vmatprep.subr.mxu0 %v4247
    %v4249 = vand.u32 %v3232, 4294901760
    %v4250 = vsub.f32 %v3232, %v4249
    %v4251 = vand.u32 %v4250, 4294901760
    %4252 = vmatpush1.msra.mxu0 %v4251
    %v4253 = vand.u32 %v3237, 4294901760
    %v4254 = vsub.f32 %v3237, %v4253
    %v4255 = vand.u32 %v4254, 4294901760
    %4256 = vmatprep.subr.mxu0 %v4255
    %v4257 = vand.u32 %v3236, 4294901760
    %v4258 = vsub.f32 %v3236, %v4257
    %v4259 = vand.u32 %v4258, 4294901760
    %4260 = vmatpush1.msra.mxu0 %v4259
    %v4261 = vand.u32 %v3241, 4294901760
    %v4262 = vsub.f32 %v3241, %v4261
    %v4263 = vand.u32 %v4262, 4294901760
    %4264 = vmatprep.subr.mxu0 %v4263
    %v4265 = vand.u32 %v3240, 4294901760
    %v4266 = vsub.f32 %v3240, %v4265
    %v4267 = vand.u32 %v4266, 4294901760
    %4268 = vmatpush1.msra.mxu0 %v4267
    %v4269 = vand.u32 %v3245, 4294901760
    %v4270 = vsub.f32 %v3245, %v4269
    %v4271 = vand.u32 %v4270, 4294901760
    %4272 = vmatprep.subr.mxu0 %v4271
    %v4273 = vand.u32 %v3244, 4294901760
    %v4274 = vsub.f32 %v3244, %v4273
    %v4275 = vand.u32 %v4274, 4294901760
    %4276 = vmatpush1.msra.mxu0 %v4275
    %v4277 = vand.u32 %v3249, 4294901760
    %v4278 = vsub.f32 %v3249, %v4277
    %v4279 = vand.u32 %v4278, 4294901760
    %4280 = vmatprep.subr.mxu0 %v4279
    %v4281 = vand.u32 %v3248, 4294901760
    %v4282 = vsub.f32 %v3248, %v4281
    %v4283 = vand.u32 %v4282, 4294901760
    %4284 = vmatpush1.msra.mxu0 %v4283
    %v4285 = vand.u32 %v3253, 4294901760
    %v4286 = vsub.f32 %v3253, %v4285
    %v4287 = vand.u32 %v4286, 4294901760
    %4288 = vmatprep.subr.mxu0 %v4287
    %v4289 = vand.u32 %v3252, 4294901760
    %v4290 = vsub.f32 %v3252, %v4289
    %v4291 = vand.u32 %v4290, 4294901760
    %4292 = vmatpush1.msra.mxu0 %v4291
    %v4293 = vand.u32 %v3257, 4294901760
    %v4294 = vsub.f32 %v3257, %v4293
    %v4295 = vand.u32 %v4294, 4294901760
    %4296 = vmatprep.subr.mxu0 %v4295
    %v4297 = vand.u32 %v3256, 4294901760
    %v4298 = vsub.f32 %v3256, %v4297
    %v4299 = vand.u32 %v4298, 4294901760
    %4300 = vmatpush1.msra.mxu0 %v4299
    %v4301 = vand.u32 %v3261, 4294901760
    %v4302 = vsub.f32 %v3261, %v4301
    %v4303 = vand.u32 %v4302, 4294901760
    %4304 = vmatprep.subr.mxu0 %v4303
    %v4305 = vand.u32 %v3260, 4294901760
    %v4306 = vsub.f32 %v3260, %v4305
    %v4307 = vand.u32 %v4306, 4294901760
    %4308 = vmatpush1.msra.mxu0 %v4307
    %v4309 = vand.u32 %v3265, 4294901760
    %v4310 = vsub.f32 %v3265, %v4309
    %v4311 = vand.u32 %v4310, 4294901760
    %4312 = vmatprep.subr.mxu0 %v4311
    %v4313 = vand.u32 %v3264, 4294901760
    %v4314 = vsub.f32 %v3264, %v4313
    %v4315 = vand.u32 %v4314, 4294901760
    %4316 = vmatpush1.msra.mxu0 %v4315
    %v4317 = vand.u32 %v3269, 4294901760
    %v4318 = vsub.f32 %v3269, %v4317
    %v4319 = vand.u32 %v4318, 4294901760
    %4320 = vmatprep.subr.mxu0 %v4319
    %v4321 = vand.u32 %v3268, 4294901760
    %v4322 = vsub.f32 %v3268, %v4321
    %v4323 = vand.u32 %v4322, 4294901760
    %4324 = vmatpush1.msra.mxu0 %v4323
    %v4325 = vand.u32 %v3273, 4294901760
    %v4326 = vsub.f32 %v3273, %v4325
    %v4327 = vand.u32 %v4326, 4294901760
    %4328 = vmatprep.subr.mxu0 %v4327
    %v4329 = vand.u32 %v3272, 4294901760
    %v4330 = vsub.f32 %v3272, %v4329
    %v4331 = vand.u32 %v4330, 4294901760
    %4332 = vmatpush1.msra.mxu0 %v4331
    %v4333 = vand.u32 %v3277, 4294901760
    %v4334 = vsub.f32 %v3277, %v4333
    %v4335 = vand.u32 %v4334, 4294901760
    %4336 = vmatprep.subr.mxu0 %v4335
    %v4337 = vand.u32 %v3276, 4294901760
    %v4338 = vsub.f32 %v3276, %v4337
    %v4339 = vand.u32 %v4338, 4294901760
    %4340 = vmatpush1.msra.mxu0 %v4339
    %v4341 = vand.u32 %v3281, 4294901760
    %v4342 = vsub.f32 %v3281, %v4341
    %v4343 = vand.u32 %v4342, 4294901760
    %4344 = vmatprep.subr.mxu0 %v4343
    %v4345 = vand.u32 %v3280, 4294901760
    %v4346 = vsub.f32 %v3280, %v4345
    %v4347 = vand.u32 %v4346, 4294901760
    %4348 = vmatpush1.msra.mxu0 %v4347
    %v4349 = vand.u32 %v3285, 4294901760
    %v4350 = vsub.f32 %v3285, %v4349
    %v4351 = vand.u32 %v4350, 4294901760
    %4352 = vmatprep.subr.mxu0 %v4351
    %v4353 = vand.u32 %v3284, 4294901760
    %v4354 = vsub.f32 %v3284, %v4353
    %v4355 = vand.u32 %v4354, 4294901760
    %4356 = vmatpush1.msra.mxu0 %v4355
    %v4357 = vand.u32 %v3289, 4294901760
    %v4358 = vsub.f32 %v3289, %v4357
    %v4359 = vand.u32 %v4358, 4294901760
    %4360 = vmatprep.subr.mxu0 %v4359
    %v4361 = vand.u32 %v3288, 4294901760
    %v4362 = vsub.f32 %v3288, %v4361
    %v4363 = vand.u32 %v4362, 4294901760
    %4364 = vmatpush1.msra.mxu0 %v4363
    %v4365 = vand.u32 %v3293, 4294901760
    %v4366 = vsub.f32 %v3293, %v4365
    %v4367 = vand.u32 %v4366, 4294901760
    %4368 = vmatprep.subr.mxu0 %v4367
    %v4369 = vand.u32 %v3292, 4294901760
    %v4370 = vsub.f32 %v3292, %v4369
    %v4371 = vand.u32 %v4370, 4294901760
    %4372 = vmatpush1.msra.mxu0 %v4371
    %v4373 = vand.u32 %v3297, 4294901760
    %v4374 = vsub.f32 %v3297, %v4373
    %v4375 = vand.u32 %v4374, 4294901760
    %4376 = vmatprep.subr.mxu0 %v4375
    %v4377 = vand.u32 %v3296, 4294901760
    %v4378 = vsub.f32 %v3296, %v4377
    %v4379 = vand.u32 %v4378, 4294901760
    %4380 = vmatpush1.msra.mxu0 %v4379
    %v4381 = vand.u32 %v3301, 4294901760
    %v4382 = vsub.f32 %v3301, %v4381
    %v4383 = vand.u32 %v4382, 4294901760
    %4384 = vmatprep.subr.mxu0 %v4383
    %v4385 = vand.u32 %v3300, 4294901760
    %v4386 = vsub.f32 %v3300, %v4385
    %v4387 = vand.u32 %v4386, 4294901760
    %4388 = vmatpush1.msra.mxu0 %v4387
    %v4389 = vand.u32 %v3305, 4294901760
    %v4390 = vsub.f32 %v3305, %v4389
    %v4391 = vand.u32 %v4390, 4294901760
    %4392 = vmatprep.subr.mxu0 %v4391
    %v4393 = vand.u32 %v3304, 4294901760
    %v4394 = vsub.f32 %v3304, %v4393
    %v4395 = vand.u32 %v4394, 4294901760
    %4396 = vmatpush1.msra.mxu0 %v4395
    %v4397 = vand.u32 %v3309, 4294901760
    %v4398 = vsub.f32 %v3309, %v4397
    %v4399 = vand.u32 %v4398, 4294901760
    %4400 = vmatprep.subr.mxu0 %v4399
    %v4401 = vand.u32 %v3308, 4294901760
    %v4402 = vsub.f32 %v3308, %v4401
    %v4403 = vand.u32 %v4402, 4294901760
    %4404 = vmatpush1.msra.mxu0 %v4403
    %v4405 = vand.u32 %v3313, 4294901760
    %v4406 = vsub.f32 %v3313, %v4405
    %v4407 = vand.u32 %v4406, 4294901760
    %4408 = vmatprep.subr.mxu0 %v4407
    %v4409 = vand.u32 %v3312, 4294901760
    %v4410 = vsub.f32 %v3312, %v4409
    %v4411 = vand.u32 %v4410, 4294901760
    %4412 = vmatpush1.msra.mxu0 %v4411
    %v4413 = vand.u32 %v3317, 4294901760
    %v4414 = vsub.f32 %v3317, %v4413
    %v4415 = vand.u32 %v4414, 4294901760
    %4416 = vmatprep.subr.mxu0 %v4415
    %v4417 = vand.u32 %v3316, 4294901760
    %v4418 = vsub.f32 %v3316, %v4417
    %v4419 = vand.u32 %v4418, 4294901760
    %4420 = vmatpush1.msra.mxu0 %v4419
    %v4421 = vand.u32 %v3321, 4294901760
    %v4422 = vsub.f32 %v3321, %v4421
    %v4423 = vand.u32 %v4422, 4294901760
    %4424 = vmatprep.subr.mxu0 %v4423
    %v4425 = vand.u32 %v3320, 4294901760
    %v4426 = vsub.f32 %v3320, %v4425
    %v4427 = vand.u32 %v4426, 4294901760
    %4428 = vmatpush1.msra.mxu0 %v4427
    %v4429 = vand.u32 %v3325, 4294901760
    %v4430 = vsub.f32 %v3325, %v4429
    %v4431 = vand.u32 %v4430, 4294901760
    %4432 = vmatprep.subr.mxu0 %v4431
    %v4433 = vand.u32 %v3324, 4294901760
    %v4434 = vsub.f32 %v3324, %v4433
    %v4435 = vand.u32 %v4434, 4294901760
    %4436 = vmatpush1.msra.mxu0 %v4435
    %v4437 = vand.u32 %v3329, 4294901760
    %v4438 = vsub.f32 %v3329, %v4437
    %v4439 = vand.u32 %v4438, 4294901760
    %4440 = vmatprep.subr.mxu0 %v4439
    %v4441 = vand.u32 %v3328, 4294901760
    %v4442 = vsub.f32 %v3328, %v4441
    %v4443 = vand.u32 %v4442, 4294901760
    %4444 = vmatpush1.msra.mxu0 %v4443
    %v4445 = vand.u32 %v3333, 4294901760
    %v4446 = vsub.f32 %v3333, %v4445
    %v4447 = vand.u32 %v4446, 4294901760
    %4448 = vmatprep.subr.mxu0 %v4447
    %v4449 = vand.u32 %v3332, 4294901760
    %v4450 = vsub.f32 %v3332, %v4449
    %v4451 = vand.u32 %v4450, 4294901760
    %4452 = vmatpush1.msra.mxu0 %v4451
    %v4453 = vand.u32 %v3337, 4294901760
    %v4454 = vsub.f32 %v3337, %v4453
    %v4455 = vand.u32 %v4454, 4294901760
    %4456 = vmatprep.subr.mxu0 %v4455
    %v4457 = vand.u32 %v3336, 4294901760
    %v4458 = vsub.f32 %v3336, %v4457
    %v4459 = vand.u32 %v4458, 4294901760
    %4460 = vmatpush1.msra.mxu0 %v4459
    %v4461 = vand.u32 %v3341, 4294901760
    %v4462 = vsub.f32 %v3341, %v4461
    %v4463 = vand.u32 %v4462, 4294901760
    %4464 = vmatprep.subr.mxu0 %v4463
    %v4465 = vand.u32 %v3340, 4294901760
    %v4466 = vsub.f32 %v3340, %v4465
    %v4467 = vand.u32 %v4466, 4294901760
    %4468 = vmatpush1.msra.mxu0 %v4467
    %v4469 = vand.u32 %v3345, 4294901760
    %v4470 = vsub.f32 %v3345, %v4469
    %v4471 = vand.u32 %v4470, 4294901760
    %4472 = vmatprep.subr.mxu0 %v4471
    %v4473 = vand.u32 %v3344, 4294901760
    %v4474 = vsub.f32 %v3344, %v4473
    %v4475 = vand.u32 %v4474, 4294901760
    %4476 = vmatpush1.msra.mxu0 %v4475
    %v4477 = vand.u32 %v3349, 4294901760
    %v4478 = vsub.f32 %v3349, %v4477
    %v4479 = vand.u32 %v4478, 4294901760
    %4480 = vmatprep.subr.mxu0 %v4479
    %v4481 = vand.u32 %v3348, 4294901760
    %v4482 = vsub.f32 %v3348, %v4481
    %v4483 = vand.u32 %v4482, 4294901760
    %4484 = vmatpush1.msra.mxu0 %v4483
    %v4485 = vand.u32 %v3353, 4294901760
    %v4486 = vsub.f32 %v3353, %v4485
    %v4487 = vand.u32 %v4486, 4294901760
    %4488 = vmatprep.subr.mxu0 %v4487
    %v4489 = vand.u32 %v3352, 4294901760
    %v4490 = vsub.f32 %v3352, %v4489
    %v4491 = vand.u32 %v4490, 4294901760
    %4492 = vmatpush1.msra.mxu0 %v4491
    %v4493 = vand.u32 %v3357, 4294901760
    %v4494 = vsub.f32 %v3357, %v4493
    %v4495 = vand.u32 %v4494, 4294901760
    %4496 = vmatprep.subr.mxu0 %v4495
    %v4497 = vand.u32 %v3356, 4294901760
    %v4498 = vsub.f32 %v3356, %v4497
    %v4499 = vand.u32 %v4498, 4294901760
    %4500 = vmatpush1.msra.mxu0 %v4499
    %v4501 = vand.u32 %v3361, 4294901760
    %4502 = vmatprep.mubr.f32.mxu0 %v4501
    %v4503 = vand.u32 %v3103, 4294901760
    %4504 = vmatmul.mubr.f32.gmra.mrb[0].mxu0 %v4503
    %v4505 = vpop.f32.mrb[0].mxu0
    %v4506 = vadd.f32 %v4241, %v4505
    %v4507 = vpop.f32.mrb[0].mxu0
    %v4508 = vadd.f32 %v4243, %v4507
    %4509 = vdwg.mxu0
    %v4510 = vand.u32 %v3233, 4294901760
    %4511 = vmatprep.subr.mxu0 %v4510
    %v4512 = vand.u32 %v3232, 4294901760
    %4513 = vmatpush1.msra.mxu0 %v4512
    %v4514 = vand.u32 %v3237, 4294901760
    %4515 = vmatprep.subr.mxu0 %v4514
    %v4516 = vand.u32 %v3236, 4294901760
    %4517 = vmatpush1.msra.mxu0 %v4516
    %v4518 = vand.u32 %v3241, 4294901760
    %4519 = vmatprep.subr.mxu0 %v4518
    %v4520 = vand.u32 %v3240, 4294901760
    %4521 = vmatpush1.msra.mxu0 %v4520
    %v4522 = vand.u32 %v3245, 4294901760
    %4523 = vmatprep.subr.mxu0 %v4522
    %v4524 = vand.u32 %v3244, 4294901760
    %4525 = vmatpush1.msra.mxu0 %v4524
    %v4526 = vand.u32 %v3249, 4294901760
    %4527 = vmatprep.subr.mxu0 %v4526
    %v4528 = vand.u32 %v3248, 4294901760
    %4529 = vmatpush1.msra.mxu0 %v4528
    %v4530 = vand.u32 %v3253, 4294901760
    %4531 = vmatprep.subr.mxu0 %v4530
    %v4532 = vand.u32 %v3252, 4294901760
    %4533 = vmatpush1.msra.mxu0 %v4532
    %v4534 = vand.u32 %v3257, 4294901760
    %4535 = vmatprep.subr.mxu0 %v4534
    %v4536 = vand.u32 %v3256, 4294901760
    %4537 = vmatpush1.msra.mxu0 %v4536
    %v4538 = vand.u32 %v3261, 4294901760
    %4539 = vmatprep.subr.mxu0 %v4538
    %v4540 = vand.u32 %v3260, 4294901760
    %4541 = vmatpush1.msra.mxu0 %v4540
    %v4542 = vand.u32 %v3265, 4294901760
    %4543 = vmatprep.subr.mxu0 %v4542
    %v4544 = vand.u32 %v3264, 4294901760
    %4545 = vmatpush1.msra.mxu0 %v4544
    %v4546 = vand.u32 %v3269, 4294901760
    %4547 = vmatprep.subr.mxu0 %v4546
    %v4548 = vand.u32 %v3268, 4294901760
    %4549 = vmatpush1.msra.mxu0 %v4548
    %v4550 = vand.u32 %v3273, 4294901760
    %4551 = vmatprep.subr.mxu0 %v4550
    %v4552 = vand.u32 %v3272, 4294901760
    %4553 = vmatpush1.msra.mxu0 %v4552
    %v4554 = vand.u32 %v3277, 4294901760
    %4555 = vmatprep.subr.mxu0 %v4554
    %v4556 = vand.u32 %v3276, 4294901760
    %4557 = vmatpush1.msra.mxu0 %v4556
    %v4558 = vand.u32 %v3281, 4294901760
    %4559 = vmatprep.subr.mxu0 %v4558
    %v4560 = vand.u32 %v3280, 4294901760
    %4561 = vmatpush1.msra.mxu0 %v4560
    %v4562 = vand.u32 %v3285, 4294901760
    %4563 = vmatprep.subr.mxu0 %v4562
    %v4564 = vand.u32 %v3284, 4294901760
    %4565 = vmatpush1.msra.mxu0 %v4564
    %v4566 = vand.u32 %v3289, 4294901760
    %4567 = vmatprep.subr.mxu0 %v4566
    %v4568 = vand.u32 %v3288, 4294901760
    %4569 = vmatpush1.msra.mxu0 %v4568
    %v4570 = vand.u32 %v3293, 4294901760
    %4571 = vmatprep.subr.mxu0 %v4570
    %v4572 = vand.u32 %v3292, 4294901760
    %4573 = vmatpush1.msra.mxu0 %v4572
    %v4574 = vand.u32 %v3297, 4294901760
    %4575 = vmatprep.subr.mxu0 %v4574
    %v4576 = vand.u32 %v3296, 4294901760
    %4577 = vmatpush1.msra.mxu0 %v4576
    %v4578 = vand.u32 %v3301, 4294901760
    %4579 = vmatprep.subr.mxu0 %v4578
    %v4580 = vand.u32 %v3300, 4294901760
    %4581 = vmatpush1.msra.mxu0 %v4580
    %v4582 = vand.u32 %v3305, 4294901760
    %4583 = vmatprep.subr.mxu0 %v4582
    %v4584 = vand.u32 %v3304, 4294901760
    %4585 = vmatpush1.msra.mxu0 %v4584
    %v4586 = vand.u32 %v3309, 4294901760
    %4587 = vmatprep.subr.mxu0 %v4586
    %v4588 = vand.u32 %v3308, 4294901760
    %4589 = vmatpush1.msra.mxu0 %v4588
    %v4590 = vand.u32 %v3313, 4294901760
    %4591 = vmatprep.subr.mxu0 %v4590
    %v4592 = vand.u32 %v3312, 4294901760
    %4593 = vmatpush1.msra.mxu0 %v4592
    %v4594 = vand.u32 %v3317, 4294901760
    %4595 = vmatprep.subr.mxu0 %v4594
    %v4596 = vand.u32 %v3316, 4294901760
    %4597 = vmatpush1.msra.mxu0 %v4596
    %v4598 = vand.u32 %v3321, 4294901760
    %4599 = vmatprep.subr.mxu0 %v4598
    %v4600 = vand.u32 %v3320, 4294901760
    %4601 = vmatpush1.msra.mxu0 %v4600
    %v4602 = vand.u32 %v3325, 4294901760
    %4603 = vmatprep.subr.mxu0 %v4602
    %v4604 = vand.u32 %v3324, 4294901760
    %4605 = vmatpush1.msra.mxu0 %v4604
    %v4606 = vand.u32 %v3329, 4294901760
    %4607 = vmatprep.subr.mxu0 %v4606
    %v4608 = vand.u32 %v3328, 4294901760
    %4609 = vmatpush1.msra.mxu0 %v4608
    %v4610 = vand.u32 %v3333, 4294901760
    %4611 = vmatprep.subr.mxu0 %v4610
    %v4612 = vand.u32 %v3332, 4294901760
    %4613 = vmatpush1.msra.mxu0 %v4612
    %v4614 = vand.u32 %v3337, 4294901760
    %4615 = vmatprep.subr.mxu0 %v4614
    %v4616 = vand.u32 %v3336, 4294901760
    %4617 = vmatpush1.msra.mxu0 %v4616
    %v4618 = vand.u32 %v3341, 4294901760
    %4619 = vmatprep.subr.mxu0 %v4618
    %v4620 = vand.u32 %v3340, 4294901760
    %4621 = vmatpush1.msra.mxu0 %v4620
    %v4622 = vand.u32 %v3345, 4294901760
    %4623 = vmatprep.subr.mxu0 %v4622
    %v4624 = vand.u32 %v3344, 4294901760
    %4625 = vmatpush1.msra.mxu0 %v4624
    %v4626 = vand.u32 %v3349, 4294901760
    %4627 = vmatprep.subr.mxu0 %v4626
    %v4628 = vand.u32 %v3348, 4294901760
    %4629 = vmatpush1.msra.mxu0 %v4628
    %v4630 = vand.u32 %v3353, 4294901760
    %4631 = vmatprep.subr.mxu0 %v4630
    %v4632 = vand.u32 %v3352, 4294901760
    %4633 = vmatpush1.msra.mxu0 %v4632
    %v4634 = vand.u32 %v3357, 4294901760
    %4635 = vmatprep.subr.mxu0 %v4634
    %v4636 = vand.u32 %v3356, 4294901760
    %4637 = vmatpush1.msra.mxu0 %v4636
    %v4638 = vand.u32 %v3361, 4294901760
    %4639 = vmatprep.mubr.f32.mxu0 %v4638
    %v4640 = vand.u32 %v3103, 4294901760
    %4641 = vmatmul.mubr.f32.gmra.mrb[0].mxu0 %v4640
    %v4642 = vpop.f32.mrb[0].mxu0
    %v4643 = vadd.f32 %v4506, %v4642
    %v4644 = vpop.f32.mrb[0].mxu0
    %v4645 = vadd.f32 %v4508, %v4644
    %4646 = vdwg.mxu0
    %v4647 = vand.u32 %v3235, 4294901760
    %4648 = vmatprep.subr.mxu0 %v4647
    %v4649 = vand.u32 %v3234, 4294901760
    %4650 = vmatpush1.msra.mxu0 %v4649
    %v4651 = vand.u32 %v3239, 4294901760
    %4652 = vmatprep.subr.mxu0 %v4651
    %v4653 = vand.u32 %v3238, 4294901760
    %4654 = vmatpush1.msra.mxu0 %v4653
    %v4655 = vand.u32 %v3243, 4294901760
    %4656 = vmatprep.subr.mxu0 %v4655
    %v4657 = vand.u32 %v3242, 4294901760
    %4658 = vmatpush1.msra.mxu0 %v4657
    %v4659 = vand.u32 %v3247, 4294901760
    %4660 = vmatprep.subr.mxu0 %v4659
    %v4661 = vand.u32 %v3246, 4294901760
    %4662 = vmatpush1.msra.mxu0 %v4661
    %v4663 = vand.u32 %v3251, 4294901760
    %4664 = vmatprep.subr.mxu0 %v4663
    %v4665 = vand.u32 %v3250, 4294901760
    %4666 = vmatpush1.msra.mxu0 %v4665
    %v4667 = vand.u32 %v3255, 4294901760
    %4668 = vmatprep.subr.mxu0 %v4667
    %v4669 = vand.u32 %v3254, 4294901760
    %4670 = vmatpush1.msra.mxu0 %v4669
    %v4671 = vand.u32 %v3259, 4294901760
    %4672 = vmatprep.subr.mxu0 %v4671
    %v4673 = vand.u32 %v3258, 4294901760
    %4674 = vmatpush1.msra.mxu0 %v4673
    %v4675 = vand.u32 %v3263, 4294901760
    %4676 = vmatprep.subr.mxu0 %v4675
    %v4677 = vand.u32 %v3262, 4294901760
    %4678 = vmatpush1.msra.mxu0 %v4677
    %v4679 = vand.u32 %v3267, 4294901760
    %4680 = vmatprep.subr.mxu0 %v4679
    %v4681 = vand.u32 %v3266, 4294901760
    %4682 = vmatpush1.msra.mxu0 %v4681
    %v4683 = vand.u32 %v3271, 4294901760
    %4684 = vmatprep.subr.mxu0 %v4683
    %v4685 = vand.u32 %v3270, 4294901760
    %4686 = vmatpush1.msra.mxu0 %v4685
    %v4687 = vand.u32 %v3275, 4294901760
    %4688 = vmatprep.subr.mxu0 %v4687
    %v4689 = vand.u32 %v3274, 4294901760
    %4690 = vmatpush1.msra.mxu0 %v4689
    %v4691 = vand.u32 %v3279, 4294901760
    %4692 = vmatprep.subr.mxu0 %v4691
    %v4693 = vand.u32 %v3278, 4294901760
    %4694 = vmatpush1.msra.mxu0 %v4693
    %v4695 = vand.u32 %v3283, 4294901760
    %4696 = vmatprep.subr.mxu0 %v4695
    %v4697 = vand.u32 %v3282, 4294901760
    %4698 = vmatpush1.msra.mxu0 %v4697
    %v4699 = vand.u32 %v3287, 4294901760
    %4700 = vmatprep.subr.mxu0 %v4699
    %v4701 = vand.u32 %v3286, 4294901760
    %4702 = vmatpush1.msra.mxu0 %v4701
    %v4703 = vand.u32 %v3291, 4294901760
    %4704 = vmatprep.subr.mxu0 %v4703
    %v4705 = vand.u32 %v3290, 4294901760
    %4706 = vmatpush1.msra.mxu0 %v4705
    %v4707 = vand.u32 %v3295, 4294901760
    %4708 = vmatprep.subr.mxu0 %v4707
    %v4709 = vand.u32 %v3294, 4294901760
    %4710 = vmatpush1.msra.mxu0 %v4709
    %v4711 = vand.u32 %v3299, 4294901760
    %4712 = vmatprep.subr.mxu0 %v4711
    %v4713 = vand.u32 %v3298, 4294901760
    %4714 = vmatpush1.msra.mxu0 %v4713
    %v4715 = vand.u32 %v3303, 4294901760
    %4716 = vmatprep.subr.mxu0 %v4715
    %v4717 = vand.u32 %v3302, 4294901760
    %4718 = vmatpush1.msra.mxu0 %v4717
    %v4719 = vand.u32 %v3307, 4294901760
    %4720 = vmatprep.subr.mxu0 %v4719
    %v4721 = vand.u32 %v3306, 4294901760
    %4722 = vmatpush1.msra.mxu0 %v4721
    %v4723 = vand.u32 %v3311, 4294901760
    %4724 = vmatprep.subr.mxu0 %v4723
    %v4725 = vand.u32 %v3310, 4294901760
    %4726 = vmatpush1.msra.mxu0 %v4725
    %v4727 = vand.u32 %v3315, 4294901760
    %4728 = vmatprep.subr.mxu0 %v4727
    %v4729 = vand.u32 %v3314, 4294901760
    %4730 = vmatpush1.msra.mxu0 %v4729
    %v4731 = vand.u32 %v3319, 4294901760
    %4732 = vmatprep.subr.mxu0 %v4731
    %v4733 = vand.u32 %v3318, 4294901760
    %4734 = vmatpush1.msra.mxu0 %v4733
    %v4735 = vand.u32 %v3323, 4294901760
    %4736 = vmatprep.subr.mxu0 %v4735
    %v4737 = vand.u32 %v3322, 4294901760
    %4738 = vmatpush1.msra.mxu0 %v4737
    %v4739 = vand.u32 %v3327, 4294901760
    %4740 = vmatprep.subr.mxu0 %v4739
    %v4741 = vand.u32 %v3326, 4294901760
    %4742 = vmatpush1.msra.mxu0 %v4741
    %v4743 = vand.u32 %v3331, 4294901760
    %4744 = vmatprep.subr.mxu0 %v4743
    %v4745 = vand.u32 %v3330, 4294901760
    %4746 = vmatpush1.msra.mxu0 %v4745
    %v4747 = vand.u32 %v3335, 4294901760
    %4748 = vmatprep.subr.mxu0 %v4747
    %v4749 = vand.u32 %v3334, 4294901760
    %4750 = vmatpush1.msra.mxu0 %v4749
    %v4751 = vand.u32 %v3339, 4294901760
    %4752 = vmatprep.subr.mxu0 %v4751
    %v4753 = vand.u32 %v3338, 4294901760
    %4754 = vmatpush1.msra.mxu0 %v4753
    %v4755 = vand.u32 %v3343, 4294901760
    %4756 = vmatprep.subr.mxu0 %v4755
    %v4757 = vand.u32 %v3342, 4294901760
    %4758 = vmatpush1.msra.mxu0 %v4757
    %v4759 = vand.u32 %v3347, 4294901760
    %4760 = vmatprep.subr.mxu0 %v4759
    %v4761 = vand.u32 %v3346, 4294901760
    %4762 = vmatpush1.msra.mxu0 %v4761
    %v4763 = vand.u32 %v3351, 4294901760
    %4764 = vmatprep.subr.mxu0 %v4763
    %v4765 = vand.u32 %v3350, 4294901760
    %4766 = vmatpush1.msra.mxu0 %v4765
    %v4767 = vand.u32 %v3355, 4294901760
    %4768 = vmatprep.subr.mxu0 %v4767
    %v4769 = vand.u32 %v3354, 4294901760
    %4770 = vmatpush1.msra.mxu0 %v4769
    %v4771 = vand.u32 %v3359, 4294901760
    %4772 = vmatprep.subr.mxu0 %v4771
    %v4773 = vand.u32 %v3358, 4294901760
    %4774 = vmatpush1.msra.mxu0 %v4773
    %v4775 = vand.u32 %v3361, 4294901760
    %v4776 = vsub.f32 %v3361, %v4775
    %v4777 = vand.u32 %v4776, 4294901760
    %v4778 = vsub.f32 %v4776, %v4777
    %v4779 = vand.u32 %v4778, 4294901760
    %4780 = vmatprep.mubr.f32.mxu0 %v4779
    %v4781 = vand.u32 %v3103, 4294901760
    %v4782 = vsub.f32 %v3103, %v4781
    %v4783 = vand.u32 %v4782, 4294901760
    %v4784 = vsub.f32 %v4782, %v4783
    %v4785 = vand.u32 %v4784, 4294901760
    %4786 = vmatmul.mubr.f32.gmra.mrb[0].mxu0 %v4785
    %v4787 = vpop.f32.mrb[0].mxu0
    %v4788 = vadd.f32 0.0, %v4787
    %v4789 = vpop.f32.mrb[0].mxu0
    %v4790 = vadd.f32 0.0, %v4789
    %4791 = vdwg.mxu0
    %v4792 = vand.u32 %v3235, 4294901760
    %v4793 = vsub.f32 %v3235, %v4792
    %v4794 = vand.u32 %v4793, 4294901760
    %v4795 = vsub.f32 %v4793, %v4794
    %v4796 = vand.u32 %v4795, 4294901760
    %4797 = vmatprep.subr.mxu0 %v4796
    %v4798 = vand.u32 %v3234, 4294901760
    %v4799 = vsub.f32 %v3234, %v4798
    %v4800 = vand.u32 %v4799, 4294901760
    %v4801 = vsub.f32 %v4799, %v4800
    %v4802 = vand.u32 %v4801, 4294901760
    %4803 = vmatpush1.msra.mxu0 %v4802
    %v4804 = vand.u32 %v3239, 4294901760
    %v4805 = vsub.f32 %v3239, %v4804
    %v4806 = vand.u32 %v4805, 4294901760
    %v4807 = vsub.f32 %v4805, %v4806
    %v4808 = vand.u32 %v4807, 4294901760
    %4809 = vmatprep.subr.mxu0 %v4808
    %v4810 = vand.u32 %v3238, 4294901760
    %v4811 = vsub.f32 %v3238, %v4810
    %v4812 = vand.u32 %v4811, 4294901760
    %v4813 = vsub.f32 %v4811, %v4812
    %v4814 = vand.u32 %v4813, 4294901760
    %4815 = vmatpush1.msra.mxu0 %v4814
    %v4816 = vand.u32 %v3243, 4294901760
    %v4817 = vsub.f32 %v3243, %v4816
    %v4818 = vand.u32 %v4817, 4294901760
    %v4819 = vsub.f32 %v4817, %v4818
    %v4820 = vand.u32 %v4819, 4294901760
    %4821 = vmatprep.subr.mxu0 %v4820
    %v4822 = vand.u32 %v3242, 4294901760
    %v4823 = vsub.f32 %v3242, %v4822
    %v4824 = vand.u32 %v4823, 4294901760
    %v4825 = vsub.f32 %v4823, %v4824
    %v4826 = vand.u32 %v4825, 4294901760
    %4827 = vmatpush1.msra.mxu0 %v4826
    %v4828 = vand.u32 %v3247, 4294901760
    %v4829 = vsub.f32 %v3247, %v4828
    %v4830 = vand.u32 %v4829, 4294901760
    %v4831 = vsub.f32 %v4829, %v4830
    %v4832 = vand.u32 %v4831, 4294901760
    %4833 = vmatprep.subr.mxu0 %v4832
    %v4834 = vand.u32 %v3246, 4294901760
    %v4835 = vsub.f32 %v3246, %v4834
    %v4836 = vand.u32 %v4835, 4294901760
    %v4837 = vsub.f32 %v4835, %v4836
    %v4838 = vand.u32 %v4837, 4294901760
    %4839 = vmatpush1.msra.mxu0 %v4838
    %v4840 = vand.u32 %v3251, 4294901760
    %v4841 = vsub.f32 %v3251, %v4840
    %v4842 = vand.u32 %v4841, 4294901760
    %v4843 = vsub.f32 %v4841, %v4842
    %v4844 = vand.u32 %v4843, 4294901760
    %4845 = vmatprep.subr.mxu0 %v4844
    %v4846 = vand.u32 %v3250, 4294901760
    %v4847 = vsub.f32 %v3250, %v4846
    %v4848 = vand.u32 %v4847, 4294901760
    %v4849 = vsub.f32 %v4847, %v4848
    %v4850 = vand.u32 %v4849, 4294901760
    %4851 = vmatpush1.msra.mxu0 %v4850
    %v4852 = vand.u32 %v3255, 4294901760
    %v4853 = vsub.f32 %v3255, %v4852
    %v4854 = vand.u32 %v4853, 4294901760
    %v4855 = vsub.f32 %v4853, %v4854
    %v4856 = vand.u32 %v4855, 4294901760
    %4857 = vmatprep.subr.mxu0 %v4856
    %v4858 = vand.u32 %v3254, 4294901760
    %v4859 = vsub.f32 %v3254, %v4858
    %v4860 = vand.u32 %v4859, 4294901760
    %v4861 = vsub.f32 %v4859, %v4860
    %v4862 = vand.u32 %v4861, 4294901760
    %4863 = vmatpush1.msra.mxu0 %v4862
    %v4864 = vand.u32 %v3259, 4294901760
    %v4865 = vsub.f32 %v3259, %v4864
    %v4866 = vand.u32 %v4865, 4294901760
    %v4867 = vsub.f32 %v4865, %v4866
    %v4868 = vand.u32 %v4867, 4294901760
    %4869 = vmatprep.subr.mxu0 %v4868
    %v4870 = vand.u32 %v3258, 4294901760
    %v4871 = vsub.f32 %v3258, %v4870
    %v4872 = vand.u32 %v4871, 4294901760
    %v4873 = vsub.f32 %v4871, %v4872
    %v4874 = vand.u32 %v4873, 4294901760
    %4875 = vmatpush1.msra.mxu0 %v4874
    %v4876 = vand.u32 %v3263, 4294901760
    %v4877 = vsub.f32 %v3263, %v4876
    %v4878 = vand.u32 %v4877, 4294901760
    %v4879 = vsub.f32 %v4877, %v4878
    %v4880 = vand.u32 %v4879, 4294901760
    %4881 = vmatprep.subr.mxu0 %v4880
    %v4882 = vand.u32 %v3262, 4294901760
    %v4883 = vsub.f32 %v3262, %v4882
    %v4884 = vand.u32 %v4883, 4294901760
    %v4885 = vsub.f32 %v4883, %v4884
    %v4886 = vand.u32 %v4885, 4294901760
    %4887 = vmatpush1.msra.mxu0 %v4886
    %v4888 = vand.u32 %v3267, 4294901760
    %v4889 = vsub.f32 %v3267, %v4888
    %v4890 = vand.u32 %v4889, 4294901760
    %v4891 = vsub.f32 %v4889, %v4890
    %v4892 = vand.u32 %v4891, 4294901760
    %4893 = vmatprep.subr.mxu0 %v4892
    %v4894 = vand.u32 %v3266, 4294901760
    %v4895 = vsub.f32 %v3266, %v4894
    %v4896 = vand.u32 %v4895, 4294901760
    %v4897 = vsub.f32 %v4895, %v4896
    %v4898 = vand.u32 %v4897, 4294901760
    %4899 = vmatpush1.msra.mxu0 %v4898
    %v4900 = vand.u32 %v3271, 4294901760
    %v4901 = vsub.f32 %v3271, %v4900
    %v4902 = vand.u32 %v4901, 4294901760
    %v4903 = vsub.f32 %v4901, %v4902
    %v4904 = vand.u32 %v4903, 4294901760
    %4905 = vmatprep.subr.mxu0 %v4904
    %v4906 = vand.u32 %v3270, 4294901760
    %v4907 = vsub.f32 %v3270, %v4906
    %v4908 = vand.u32 %v4907, 4294901760
    %v4909 = vsub.f32 %v4907, %v4908
    %v4910 = vand.u32 %v4909, 4294901760
    %4911 = vmatpush1.msra.mxu0 %v4910
    %v4912 = vand.u32 %v3275, 4294901760
    %v4913 = vsub.f32 %v3275, %v4912
    %v4914 = vand.u32 %v4913, 4294901760
    %v4915 = vsub.f32 %v4913, %v4914
    %v4916 = vand.u32 %v4915, 4294901760
    %4917 = vmatprep.subr.mxu0 %v4916
    %v4918 = vand.u32 %v3274, 4294901760
    %v4919 = vsub.f32 %v3274, %v4918
    %v4920 = vand.u32 %v4919, 4294901760
    %v4921 = vsub.f32 %v4919, %v4920
    %v4922 = vand.u32 %v4921, 4294901760
    %4923 = vmatpush1.msra.mxu0 %v4922
    %v4924 = vand.u32 %v3279, 4294901760
    %v4925 = vsub.f32 %v3279, %v4924
    %v4926 = vand.u32 %v4925, 4294901760
    %v4927 = vsub.f32 %v4925, %v4926
    %v4928 = vand.u32 %v4927, 4294901760
    %4929 = vmatprep.subr.mxu0 %v4928
    %v4930 = vand.u32 %v3278, 4294901760
    %v4931 = vsub.f32 %v3278, %v4930
    %v4932 = vand.u32 %v4931, 4294901760
    %v4933 = vsub.f32 %v4931, %v4932
    %v4934 = vand.u32 %v4933, 4294901760
    %4935 = vmatpush1.msra.mxu0 %v4934
    %v4936 = vand.u32 %v3283, 4294901760
    %v4937 = vsub.f32 %v3283, %v4936
    %v4938 = vand.u32 %v4937, 4294901760
    %v4939 = vsub.f32 %v4937, %v4938
    %v4940 = vand.u32 %v4939, 4294901760
    %4941 = vmatprep.subr.mxu0 %v4940
    %v4942 = vand.u32 %v3282, 4294901760
    %v4943 = vsub.f32 %v3282, %v4942
    %v4944 = vand.u32 %v4943, 4294901760
    %v4945 = vsub.f32 %v4943, %v4944
    %v4946 = vand.u32 %v4945, 4294901760
    %4947 = vmatpush1.msra.mxu0 %v4946
    %v4948 = vand.u32 %v3287, 4294901760
    %v4949 = vsub.f32 %v3287, %v4948
    %v4950 = vand.u32 %v4949, 4294901760
    %v4951 = vsub.f32 %v4949, %v4950
    %v4952 = vand.u32 %v4951, 4294901760
    %4953 = vmatprep.subr.mxu0 %v4952
    %v4954 = vand.u32 %v3286, 4294901760
    %v4955 = vsub.f32 %v3286, %v4954
    %v4956 = vand.u32 %v4955, 4294901760
    %v4957 = vsub.f32 %v4955, %v4956
    %v4958 = vand.u32 %v4957, 4294901760
    %4959 = vmatpush1.msra.mxu0 %v4958
    %v4960 = vand.u32 %v3291, 4294901760
    %v4961 = vsub.f32 %v3291, %v4960
    %v4962 = vand.u32 %v4961, 4294901760
    %v4963 = vsub.f32 %v4961, %v4962
    %v4964 = vand.u32 %v4963, 4294901760
    %4965 = vmatprep.subr.mxu0 %v4964
    %v4966 = vand.u32 %v3290, 4294901760
    %v4967 = vsub.f32 %v3290, %v4966
    %v4968 = vand.u32 %v4967, 4294901760
    %v4969 = vsub.f32 %v4967, %v4968
    %v4970 = vand.u32 %v4969, 4294901760
    %4971 = vmatpush1.msra.mxu0 %v4970
    %v4972 = vand.u32 %v3295, 4294901760
    %v4973 = vsub.f32 %v3295, %v4972
    %v4974 = vand.u32 %v4973, 4294901760
    %v4975 = vsub.f32 %v4973, %v4974
    %v4976 = vand.u32 %v4975, 4294901760
    %4977 = vmatprep.subr.mxu0 %v4976
    %v4978 = vand.u32 %v3294, 4294901760
    %v4979 = vsub.f32 %v3294, %v4978
    %v4980 = vand.u32 %v4979, 4294901760
    %v4981 = vsub.f32 %v4979, %v4980
    %v4982 = vand.u32 %v4981, 4294901760
    %4983 = vmatpush1.msra.mxu0 %v4982
    %v4984 = vand.u32 %v3299, 4294901760
    %v4985 = vsub.f32 %v3299, %v4984
    %v4986 = vand.u32 %v4985, 4294901760
    %v4987 = vsub.f32 %v4985, %v4986
    %v4988 = vand.u32 %v4987, 4294901760
    %4989 = vmatprep.subr.mxu0 %v4988
    %v4990 = vand.u32 %v3298, 4294901760
    %v4991 = vsub.f32 %v3298, %v4990
    %v4992 = vand.u32 %v4991, 4294901760
    %v4993 = vsub.f32 %v4991, %v4992
    %v4994 = vand.u32 %v4993, 4294901760
    %4995 = vmatpush1.msra.mxu0 %v4994
    %v4996 = vand.u32 %v3303, 4294901760
    %v4997 = vsub.f32 %v3303, %v4996
    %v4998 = vand.u32 %v4997, 4294901760
    %v4999 = vsub.f32 %v4997, %v4998
    %v5000 = vand.u32 %v4999, 4294901760
    %5001 = vmatprep.subr.mxu0 %v5000
    %v5002 = vand.u32 %v3302, 4294901760
    %v5003 = vsub.f32 %v3302, %v5002
    %v5004 = vand.u32 %v5003, 4294901760
    %v5005 = vsub.f32 %v5003, %v5004
    %v5006 = vand.u32 %v5005, 4294901760
    %5007 = vmatpush1.msra.mxu0 %v5006
    %v5008 = vand.u32 %v3307, 4294901760
    %v5009 = vsub.f32 %v3307, %v5008
    %v5010 = vand.u32 %v5009, 4294901760
    %v5011 = vsub.f32 %v5009, %v5010
    %v5012 = vand.u32 %v5011, 4294901760
    %5013 = vmatprep.subr.mxu0 %v5012
    %v5014 = vand.u32 %v3306, 4294901760
    %v5015 = vsub.f32 %v3306, %v5014
    %v5016 = vand.u32 %v5015, 4294901760
    %v5017 = vsub.f32 %v5015, %v5016
    %v5018 = vand.u32 %v5017, 4294901760
    %5019 = vmatpush1.msra.mxu0 %v5018
    %v5020 = vand.u32 %v3311, 4294901760
    %v5021 = vsub.f32 %v3311, %v5020
    %v5022 = vand.u32 %v5021, 4294901760
    %v5023 = vsub.f32 %v5021, %v5022
    %v5024 = vand.u32 %v5023, 4294901760
    %5025 = vmatprep.subr.mxu0 %v5024
    %v5026 = vand.u32 %v3310, 4294901760
    %v5027 = vsub.f32 %v3310, %v5026
    %v5028 = vand.u32 %v5027, 4294901760
    %v5029 = vsub.f32 %v5027, %v5028
    %v5030 = vand.u32 %v5029, 4294901760
    %5031 = vmatpush1.msra.mxu0 %v5030
    %v5032 = vand.u32 %v3315, 4294901760
    %v5033 = vsub.f32 %v3315, %v5032
    %v5034 = vand.u32 %v5033, 4294901760
    %v5035 = vsub.f32 %v5033, %v5034
    %v5036 = vand.u32 %v5035, 4294901760
    %5037 = vmatprep.subr.mxu0 %v5036
    %v5038 = vand.u32 %v3314, 4294901760
    %v5039 = vsub.f32 %v3314, %v5038
    %v5040 = vand.u32 %v5039, 4294901760
    %v5041 = vsub.f32 %v5039, %v5040
    %v5042 = vand.u32 %v5041, 4294901760
    %5043 = vmatpush1.msra.mxu0 %v5042
    %v5044 = vand.u32 %v3319, 4294901760
    %v5045 = vsub.f32 %v3319, %v5044
    %v5046 = vand.u32 %v5045, 4294901760
    %v5047 = vsub.f32 %v5045, %v5046
    %v5048 = vand.u32 %v5047, 4294901760
    %5049 = vmatprep.subr.mxu0 %v5048
    %v5050 = vand.u32 %v3318, 4294901760
    %v5051 = vsub.f32 %v3318, %v5050
    %v5052 = vand.u32 %v5051, 4294901760
    %v5053 = vsub.f32 %v5051, %v5052
    %v5054 = vand.u32 %v5053, 4294901760
    %5055 = vmatpush1.msra.mxu0 %v5054
    %v5056 = vand.u32 %v3323, 4294901760
    %v5057 = vsub.f32 %v3323, %v5056
    %v5058 = vand.u32 %v5057, 4294901760
    %v5059 = vsub.f32 %v5057, %v5058
    %v5060 = vand.u32 %v5059, 4294901760
    %5061 = vmatprep.subr.mxu0 %v5060
    %v5062 = vand.u32 %v3322, 4294901760
    %v5063 = vsub.f32 %v3322, %v5062
    %v5064 = vand.u32 %v5063, 4294901760
    %v5065 = vsub.f32 %v5063, %v5064
    %v5066 = vand.u32 %v5065, 4294901760
    %5067 = vmatpush1.msra.mxu0 %v5066
    %v5068 = vand.u32 %v3327, 4294901760
    %v5069 = vsub.f32 %v3327, %v5068
    %v5070 = vand.u32 %v5069, 4294901760
    %v5071 = vsub.f32 %v5069, %v5070
    %v5072 = vand.u32 %v5071, 4294901760
    %5073 = vmatprep.subr.mxu0 %v5072
    %v5074 = vand.u32 %v3326, 4294901760
    %v5075 = vsub.f32 %v3326, %v5074
    %v5076 = vand.u32 %v5075, 4294901760
    %v5077 = vsub.f32 %v5075, %v5076
    %v5078 = vand.u32 %v5077, 4294901760
    %5079 = vmatpush1.msra.mxu0 %v5078
    %v5080 = vand.u32 %v3331, 4294901760
    %v5081 = vsub.f32 %v3331, %v5080
    %v5082 = vand.u32 %v5081, 4294901760
    %v5083 = vsub.f32 %v5081, %v5082
    %v5084 = vand.u32 %v5083, 4294901760
    %5085 = vmatprep.subr.mxu0 %v5084
    %v5086 = vand.u32 %v3330, 4294901760
    %v5087 = vsub.f32 %v3330, %v5086
    %v5088 = vand.u32 %v5087, 4294901760
    %v5089 = vsub.f32 %v5087, %v5088
    %v5090 = vand.u32 %v5089, 4294901760
    %5091 = vmatpush1.msra.mxu0 %v5090
    %v5092 = vand.u32 %v3335, 4294901760
    %v5093 = vsub.f32 %v3335, %v5092
    %v5094 = vand.u32 %v5093, 4294901760
    %v5095 = vsub.f32 %v5093, %v5094
    %v5096 = vand.u32 %v5095, 4294901760
    %5097 = vmatprep.subr.mxu0 %v5096
    %v5098 = vand.u32 %v3334, 4294901760
    %v5099 = vsub.f32 %v3334, %v5098
    %v5100 = vand.u32 %v5099, 4294901760
    %v5101 = vsub.f32 %v5099, %v5100
    %v5102 = vand.u32 %v5101, 4294901760
    %5103 = vmatpush1.msra.mxu0 %v5102
    %v5104 = vand.u32 %v3339, 4294901760
    %v5105 = vsub.f32 %v3339, %v5104
    %v5106 = vand.u32 %v5105, 4294901760
    %v5107 = vsub.f32 %v5105, %v5106
    %v5108 = vand.u32 %v5107, 4294901760
    %5109 = vmatprep.subr.mxu0 %v5108
    %v5110 = vand.u32 %v3338, 4294901760
    %v5111 = vsub.f32 %v3338, %v5110
    %v5112 = vand.u32 %v5111, 4294901760
    %v5113 = vsub.f32 %v5111, %v5112
    %v5114 = vand.u32 %v5113, 4294901760
    %5115 = vmatpush1.msra.mxu0 %v5114
    %v5116 = vand.u32 %v3343, 4294901760
    %v5117 = vsub.f32 %v3343, %v5116
    %v5118 = vand.u32 %v5117, 4294901760
    %v5119 = vsub.f32 %v5117, %v5118
    %v5120 = vand.u32 %v5119, 4294901760
    %5121 = vmatprep.subr.mxu0 %v5120
    %v5122 = vand.u32 %v3342, 4294901760
    %v5123 = vsub.f32 %v3342, %v5122
    %v5124 = vand.u32 %v5123, 4294901760
    %v5125 = vsub.f32 %v5123, %v5124
    %v5126 = vand.u32 %v5125, 4294901760
    %5127 = vmatpush1.msra.mxu0 %v5126
    %v5128 = vand.u32 %v3347, 4294901760
    %v5129 = vsub.f32 %v3347, %v5128
    %v5130 = vand.u32 %v5129, 4294901760
    %v5131 = vsub.f32 %v5129, %v5130
    %v5132 = vand.u32 %v5131, 4294901760
    %5133 = vmatprep.subr.mxu0 %v5132
    %v5134 = vand.u32 %v3346, 4294901760
    %v5135 = vsub.f32 %v3346, %v5134
    %v5136 = vand.u32 %v5135, 4294901760
    %v5137 = vsub.f32 %v5135, %v5136
    %v5138 = vand.u32 %v5137, 4294901760
    %5139 = vmatpush1.msra.mxu0 %v5138
    %v5140 = vand.u32 %v3351, 4294901760
    %v5141 = vsub.f32 %v3351, %v5140
    %v5142 = vand.u32 %v5141, 4294901760
    %v5143 = vsub.f32 %v5141, %v5142
    %v5144 = vand.u32 %v5143, 4294901760
    %5145 = vmatprep.subr.mxu0 %v5144
    %v5146 = vand.u32 %v3350, 4294901760
    %v5147 = vsub.f32 %v3350, %v5146
    %v5148 = vand.u32 %v5147, 4294901760
    %v5149 = vsub.f32 %v5147, %v5148
    %v5150 = vand.u32 %v5149, 4294901760
    %5151 = vmatpush1.msra.mxu0 %v5150
    %v5152 = vand.u32 %v3355, 4294901760
    %v5153 = vsub.f32 %v3355, %v5152
    %v5154 = vand.u32 %v5153, 4294901760
    %v5155 = vsub.f32 %v5153, %v5154
    %v5156 = vand.u32 %v5155, 4294901760
    %5157 = vmatprep.subr.mxu0 %v5156
    %v5158 = vand.u32 %v3354, 4294901760
    %v5159 = vsub.f32 %v3354, %v5158
    %v5160 = vand.u32 %v5159, 4294901760
    %v5161 = vsub.f32 %v5159, %v5160
    %v5162 = vand.u32 %v5161, 4294901760
    %5163 = vmatpush1.msra.mxu0 %v5162
    %v5164 = vand.u32 %v3359, 4294901760
    %v5165 = vsub.f32 %v3359, %v5164
    %v5166 = vand.u32 %v5165, 4294901760
    %v5167 = vsub.f32 %v5165, %v5166
    %v5168 = vand.u32 %v5167, 4294901760
    %5169 = vmatprep.subr.mxu0 %v5168
    %v5170 = vand.u32 %v3358, 4294901760
    %v5171 = vsub.f32 %v3358, %v5170
    %v5172 = vand.u32 %v5171, 4294901760
    %v5173 = vsub.f32 %v5171, %v5172
    %v5174 = vand.u32 %v5173, 4294901760
    %5175 = vmatpush1.msra.mxu0 %v5174
    %v5176 = vand.u32 %v3361, 4294901760
    %5177 = vmatprep.mubr.f32.mxu0 %v5176
    %v5178 = vand.u32 %v3103, 4294901760
    %5179 = vmatmul.mubr.f32.gmra.mrb[0].mxu0 %v5178
    %v5180 = vpop.f32.mrb[0].mxu0
    %v5181 = vadd.f32 %v4788, %v5180
    %v5182 = vpop.f32.mrb[0].mxu0
    %v5183 = vadd.f32 %v4790, %v5182
    %5184 = vdwg.mxu0
    %v5185 = vand.u32 %v3235, 4294901760
    %v5186 = vsub.f32 %v3235, %v5185
    %5187 = vmatprep.subr.mxu0 %v5186
    %v5188 = vand.u32 %v3234, 4294901760
    %v5189 = vsub.f32 %v3234, %v5188
    %5190 = vmatpush1.msra.mxu0 %v5189
    %v5191 = vand.u32 %v3239, 4294901760
    %v5192 = vsub.f32 %v3239, %v5191
    %5193 = vmatprep.subr.mxu0 %v5192
    %v5194 = vand.u32 %v3238, 4294901760
    %v5195 = vsub.f32 %v3238, %v5194
    %5196 = vmatpush1.msra.mxu0 %v5195
    %v5197 = vand.u32 %v3243, 4294901760
    %v5198 = vsub.f32 %v3243, %v5197
    %5199 = vmatprep.subr.mxu0 %v5198
    %v5200 = vand.u32 %v3242, 4294901760
    %v5201 = vsub.f32 %v3242, %v5200
    %5202 = vmatpush1.msra.mxu0 %v5201
    %v5203 = vand.u32 %v3247, 4294901760
    %v5204 = vsub.f32 %v3247, %v5203
    %5205 = vmatprep.subr.mxu0 %v5204
    %v5206 = vand.u32 %v3246, 4294901760
    %v5207 = vsub.f32 %v3246, %v5206
    %5208 = vmatpush1.msra.mxu0 %v5207
    %v5209 = vand.u32 %v3251, 4294901760
    %v5210 = vsub.f32 %v3251, %v5209
    %5211 = vmatprep.subr.mxu0 %v5210
    %v5212 = vand.u32 %v3250, 4294901760
    %v5213 = vsub.f32 %v3250, %v5212
    %5214 = vmatpush1.msra.mxu0 %v5213
    %v5215 = vand.u32 %v3255, 4294901760
    %v5216 = vsub.f32 %v3255, %v5215
    %5217 = vmatprep.subr.mxu0 %v5216
    %v5218 = vand.u32 %v3254, 4294901760
    %v5219 = vsub.f32 %v3254, %v5218
    %5220 = vmatpush1.msra.mxu0 %v5219
    %v5221 = vand.u32 %v3259, 4294901760
    %v5222 = vsub.f32 %v3259, %v5221
    %5223 = vmatprep.subr.mxu0 %v5222
    %v5224 = vand.u32 %v3258, 4294901760
    %v5225 = vsub.f32 %v3258, %v5224
    %5226 = vmatpush1.msra.mxu0 %v5225
    %v5227 = vand.u32 %v3263, 4294901760
    %v5228 = vsub.f32 %v3263, %v5227
    %5229 = vmatprep.subr.mxu0 %v5228
    %v5230 = vand.u32 %v3262, 4294901760
    %v5231 = vsub.f32 %v3262, %v5230
    %5232 = vmatpush1.msra.mxu0 %v5231
    %v5233 = vand.u32 %v3267, 4294901760
    %v5234 = vsub.f32 %v3267, %v5233
    %5235 = vmatprep.subr.mxu0 %v5234
    %v5236 = vand.u32 %v3266, 4294901760
    %v5237 = vsub.f32 %v3266, %v5236
    %5238 = vmatpush1.msra.mxu0 %v5237
    %v5239 = vand.u32 %v3271, 4294901760
    %v5240 = vsub.f32 %v3271, %v5239
    %5241 = vmatprep.subr.mxu0 %v5240
    %v5242 = vand.u32 %v3270, 4294901760
    %v5243 = vsub.f32 %v3270, %v5242
    %5244 = vmatpush1.msra.mxu0 %v5243
    %v5245 = vand.u32 %v3275, 4294901760
    %v5246 = vsub.f32 %v3275, %v5245
    %5247 = vmatprep.subr.mxu0 %v5246
    %v5248 = vand.u32 %v3274, 4294901760
    %v5249 = vsub.f32 %v3274, %v5248
    %5250 = vmatpush1.msra.mxu0 %v5249
    %v5251 = vand.u32 %v3279, 4294901760
    %v5252 = vsub.f32 %v3279, %v5251
    %5253 = vmatprep.subr.mxu0 %v5252
    %v5254 = vand.u32 %v3278, 4294901760
    %v5255 = vsub.f32 %v3278, %v5254
    %5256 = vmatpush1.msra.mxu0 %v5255
    %v5257 = vand.u32 %v3283, 4294901760
    %v5258 = vsub.f32 %v3283, %v5257
    %5259 = vmatprep.subr.mxu0 %v5258
    %v5260 = vand.u32 %v3282, 4294901760
    %v5261 = vsub.f32 %v3282, %v5260
    %5262 = vmatpush1.msra.mxu0 %v5261
    %v5263 = vand.u32 %v3287, 4294901760
    %v5264 = vsub.f32 %v3287, %v5263
    %5265 = vmatprep.subr.mxu0 %v5264
    %v5266 = vand.u32 %v3286, 4294901760
    %v5267 = vsub.f32 %v3286, %v5266
    %5268 = vmatpush1.msra.mxu0 %v5267
    %v5269 = vand.u32 %v3291, 4294901760
    %v5270 = vsub.f32 %v3291, %v5269
    %5271 = vmatprep.subr.mxu0 %v5270
    %v5272 = vand.u32 %v3290, 4294901760
    %v5273 = vsub.f32 %v3290, %v5272
    %5274 = vmatpush1.msra.mxu0 %v5273
    %v5275 = vand.u32 %v3295, 4294901760
    %v5276 = vsub.f32 %v3295, %v5275
    %5277 = vmatprep.subr.mxu0 %v5276
    %v5278 = vand.u32 %v3294, 4294901760
    %v5279 = vsub.f32 %v3294, %v5278
    %5280 = vmatpush1.msra.mxu0 %v5279
    %v5281 = vand.u32 %v3299, 4294901760
    %v5282 = vsub.f32 %v3299, %v5281
    %5283 = vmatprep.subr.mxu0 %v5282
    %v5284 = vand.u32 %v3298, 4294901760
    %v5285 = vsub.f32 %v3298, %v5284
    %5286 = vmatpush1.msra.mxu0 %v5285
    %v5287 = vand.u32 %v3303, 4294901760
    %v5288 = vsub.f32 %v3303, %v5287
    %5289 = vmatprep.subr.mxu0 %v5288
    %v5290 = vand.u32 %v3302, 4294901760
    %v5291 = vsub.f32 %v3302, %v5290
    %5292 = vmatpush1.msra.mxu0 %v5291
    %v5293 = vand.u32 %v3307, 4294901760
    %v5294 = vsub.f32 %v3307, %v5293
    %5295 = vmatprep.subr.mxu0 %v5294
    %v5296 = vand.u32 %v3306, 4294901760
    %v5297 = vsub.f32 %v3306, %v5296
    %5298 = vmatpush1.msra.mxu0 %v5297
    %v5299 = vand.u32 %v3311, 4294901760
    %v5300 = vsub.f32 %v3311, %v5299
    %5301 = vmatprep.subr.mxu0 %v5300
    %v5302 = vand.u32 %v3310, 4294901760
    %v5303 = vsub.f32 %v3310, %v5302
    %5304 = vmatpush1.msra.mxu0 %v5303
    %v5305 = vand.u32 %v3315, 4294901760
    %v5306 = vsub.f32 %v3315, %v5305
    %5307 = vmatprep.subr.mxu0 %v5306
    %v5308 = vand.u32 %v3314, 4294901760
    %v5309 = vsub.f32 %v3314, %v5308
    %5310 = vmatpush1.msra.mxu0 %v5309
    %v5311 = vand.u32 %v3319, 4294901760
    %v5312 = vsub.f32 %v3319, %v5311
    %5313 = vmatprep.subr.mxu0 %v5312
    %v5314 = vand.u32 %v3318, 4294901760
    %v5315 = vsub.f32 %v3318, %v5314
    %5316 = vmatpush1.msra.mxu0 %v5315
    %v5317 = vand.u32 %v3323, 4294901760
    %v5318 = vsub.f32 %v3323, %v5317
    %5319 = vmatprep.subr.mxu0 %v5318
    %v5320 = vand.u32 %v3322, 4294901760
    %v5321 = vsub.f32 %v3322, %v5320
    %5322 = vmatpush1.msra.mxu0 %v5321
    %v5323 = vand.u32 %v3327, 4294901760
    %v5324 = vsub.f32 %v3327, %v5323
    %5325 = vmatprep.subr.mxu0 %v5324
    %v5326 = vand.u32 %v3326, 4294901760
    %v5327 = vsub.f32 %v3326, %v5326
    %5328 = vmatpush1.msra.mxu0 %v5327
    %v5329 = vand.u32 %v3331, 4294901760
    %v5330 = vsub.f32 %v3331, %v5329
    %5331 = vmatprep.subr.mxu0 %v5330
    %v5332 = vand.u32 %v3330, 4294901760
    %v5333 = vsub.f32 %v3330, %v5332
    %5334 = vmatpush1.msra.mxu0 %v5333
    %v5335 = vand.u32 %v3335, 4294901760
    %v5336 = vsub.f32 %v3335, %v5335
    %5337 = vmatprep.subr.mxu0 %v5336
    %v5338 = vand.u32 %v3334, 4294901760
    %v5339 = vsub.f32 %v3334, %v5338
    %5340 = vmatpush1.msra.mxu0 %v5339
    %v5341 = vand.u32 %v3339, 4294901760
    %v5342 = vsub.f32 %v3339, %v5341
    %5343 = vmatprep.subr.mxu0 %v5342
    %v5344 = vand.u32 %v3338, 4294901760
    %v5345 = vsub.f32 %v3338, %v5344
    %5346 = vmatpush1.msra.mxu0 %v5345
    %v5347 = vand.u32 %v3343, 4294901760
    %v5348 = vsub.f32 %v3343, %v5347
    %5349 = vmatprep.subr.mxu0 %v5348
    %v5350 = vand.u32 %v3342, 4294901760
    %v5351 = vsub.f32 %v3342, %v5350
    %5352 = vmatpush1.msra.mxu0 %v5351
    %v5353 = vand.u32 %v3347, 4294901760
    %v5354 = vsub.f32 %v3347, %v5353
    %5355 = vmatprep.subr.mxu0 %v5354
    %v5356 = vand.u32 %v3346, 4294901760
    %v5357 = vsub.f32 %v3346, %v5356
    %5358 = vmatpush1.msra.mxu0 %v5357
    %v5359 = vand.u32 %v3351, 4294901760
    %v5360 = vsub.f32 %v3351, %v5359
    %5361 = vmatprep.subr.mxu0 %v5360
    %v5362 = vand.u32 %v3350, 4294901760
    %v5363 = vsub.f32 %v3350, %v5362
    %5364 = vmatpush1.msra.mxu0 %v5363
    %v5365 = vand.u32 %v3355, 4294901760
    %v5366 = vsub.f32 %v3355, %v5365
    %5367 = vmatprep.subr.mxu0 %v5366
    %v5368 = vand.u32 %v3354, 4294901760
    %v5369 = vsub.f32 %v3354, %v5368
    %5370 = vmatpush1.msra.mxu0 %v5369
    %v5371 = vand.u32 %v3359, 4294901760
    %v5372 = vsub.f32 %v3359, %v5371
    %5373 = vmatprep.subr.mxu0 %v5372
    %v5374 = vand.u32 %v3358, 4294901760
    %v5375 = vsub.f32 %v3358, %v5374
    %5376 = vmatpush1.msra.mxu0 %v5375
    %v5377 = vand.u32 %v3361, 4294901760
    %v5378 = vsub.f32 %v3361, %v5377
    %5379 = vmatprep.mubr.f32.mxu0 %v5378
    %v5380 = vand.u32 %v3103, 4294901760
    %v5381 = vsub.f32 %v3103, %v5380
    %5382 = vmatmul.mubr.f32.gmra.mrb[0].mxu0 %v5381
    %v5383 = vpop.f32.mrb[0].mxu0
    %v5384 = vadd.f32 %v5181, %v5383
    %v5385 = vpop.f32.mrb[0].mxu0
    %v5386 = vadd.f32 %v5183, %v5385
    %5387 = vdwg.mxu0
    %v5388 = vand.u32 %v3235, 4294901760
    %5389 = vmatprep.subr.mxu0 %v5388
    %v5390 = vand.u32 %v3234, 4294901760
    %5391 = vmatpush1.msra.mxu0 %v5390
    %v5392 = vand.u32 %v3239, 4294901760
    %5393 = vmatprep.subr.mxu0 %v5392
    %v5394 = vand.u32 %v3238, 4294901760
    %5395 = vmatpush1.msra.mxu0 %v5394
    %v5396 = vand.u32 %v3243, 4294901760
    %5397 = vmatprep.subr.mxu0 %v5396
    %v5398 = vand.u32 %v3242, 4294901760
    %5399 = vmatpush1.msra.mxu0 %v5398
    %v5400 = vand.u32 %v3247, 4294901760
    %5401 = vmatprep.subr.mxu0 %v5400
    %v5402 = vand.u32 %v3246, 4294901760
    %5403 = vmatpush1.msra.mxu0 %v5402
    %v5404 = vand.u32 %v3251, 4294901760
    %5405 = vmatprep.subr.mxu0 %v5404
    %v5406 = vand.u32 %v3250, 4294901760
    %5407 = vmatpush1.msra.mxu0 %v5406
    %v5408 = vand.u32 %v3255, 4294901760
    %5409 = vmatprep.subr.mxu0 %v5408
    %v5410 = vand.u32 %v3254, 4294901760
    %5411 = vmatpush1.msra.mxu0 %v5410
    %v5412 = vand.u32 %v3259, 4294901760
    %5413 = vmatprep.subr.mxu0 %v5412
    %v5414 = vand.u32 %v3258, 4294901760
    %5415 = vmatpush1.msra.mxu0 %v5414
    %v5416 = vand.u32 %v3263, 4294901760
    %5417 = vmatprep.subr.mxu0 %v5416
    %v5418 = vand.u32 %v3262, 4294901760
    %5419 = vmatpush1.msra.mxu0 %v5418
    %v5420 = vand.u32 %v3267, 4294901760
    %5421 = vmatprep.subr.mxu0 %v5420
    %v5422 = vand.u32 %v3266, 4294901760
    %5423 = vmatpush1.msra.mxu0 %v5422
    %v5424 = vand.u32 %v3271, 4294901760
    %5425 = vmatprep.subr.mxu0 %v5424
    %v5426 = vand.u32 %v3270, 4294901760
    %5427 = vmatpush1.msra.mxu0 %v5426
    %v5428 = vand.u32 %v3275, 4294901760
    %5429 = vmatprep.subr.mxu0 %v5428
    %v5430 = vand.u32 %v3274, 4294901760
    %5431 = vmatpush1.msra.mxu0 %v5430
    %v5432 = vand.u32 %v3279, 4294901760
    %5433 = vmatprep.subr.mxu0 %v5432
    %v5434 = vand.u32 %v3278, 4294901760
    %5435 = vmatpush1.msra.mxu0 %v5434
    %v5436 = vand.u32 %v3283, 4294901760
    %5437 = vmatprep.subr.mxu0 %v5436
    %v5438 = vand.u32 %v3282, 4294901760
    %5439 = vmatpush1.msra.mxu0 %v5438
    %v5440 = vand.u32 %v3287, 4294901760
    %5441 = vmatprep.subr.mxu0 %v5440
    %v5442 = vand.u32 %v3286, 4294901760
    %5443 = vmatpush1.msra.mxu0 %v5442
    %v5444 = vand.u32 %v3291, 4294901760
    %5445 = vmatprep.subr.mxu0 %v5444
    %v5446 = vand.u32 %v3290, 4294901760
    %5447 = vmatpush1.msra.mxu0 %v5446
    %v5448 = vand.u32 %v3295, 4294901760
    %5449 = vmatprep.subr.mxu0 %v5448
    %v5450 = vand.u32 %v3294, 4294901760
    %5451 = vmatpush1.msra.mxu0 %v5450
    %v5452 = vand.u32 %v3299, 4294901760
    %5453 = vmatprep.subr.mxu0 %v5452
    %v5454 = vand.u32 %v3298, 4294901760
    %5455 = vmatpush1.msra.mxu0 %v5454
    %v5456 = vand.u32 %v3303, 4294901760
    %5457 = vmatprep.subr.mxu0 %v5456
    %v5458 = vand.u32 %v3302, 4294901760
    %5459 = vmatpush1.msra.mxu0 %v5458
    %v5460 = vand.u32 %v3307, 4294901760
    %5461 = vmatprep.subr.mxu0 %v5460
    %v5462 = vand.u32 %v3306, 4294901760
    %5463 = vmatpush1.msra.mxu0 %v5462
    %v5464 = vand.u32 %v3311, 4294901760
    %5465 = vmatprep.subr.mxu0 %v5464
    %v5466 = vand.u32 %v3310, 4294901760
    %5467 = vmatpush1.msra.mxu0 %v5466
    %v5468 = vand.u32 %v3315, 4294901760
    %5469 = vmatprep.subr.mxu0 %v5468
    %v5470 = vand.u32 %v3314, 4294901760
    %5471 = vmatpush1.msra.mxu0 %v5470
    %v5472 = vand.u32 %v3319, 4294901760
    %5473 = vmatprep.subr.mxu0 %v5472
    %v5474 = vand.u32 %v3318, 4294901760
    %5475 = vmatpush1.msra.mxu0 %v5474
    %v5476 = vand.u32 %v3323, 4294901760
    %5477 = vmatprep.subr.mxu0 %v5476
    %v5478 = vand.u32 %v3322, 4294901760
    %5479 = vmatpush1.msra.mxu0 %v5478
    %v5480 = vand.u32 %v3327, 4294901760
    %5481 = vmatprep.subr.mxu0 %v5480
    %v5482 = vand.u32 %v3326, 4294901760
    %5483 = vmatpush1.msra.mxu0 %v5482
    %v5484 = vand.u32 %v3331, 4294901760
    %5485 = vmatprep.subr.mxu0 %v5484
    %v5486 = vand.u32 %v3330, 4294901760
    %5487 = vmatpush1.msra.mxu0 %v5486
    %v5488 = vand.u32 %v3335, 4294901760
    %5489 = vmatprep.subr.mxu0 %v5488
    %v5490 = vand.u32 %v3334, 4294901760
    %5491 = vmatpush1.msra.mxu0 %v5490
    %v5492 = vand.u32 %v3339, 4294901760
    %5493 = vmatprep.subr.mxu0 %v5492
    %v5494 = vand.u32 %v3338, 4294901760
    %5495 = vmatpush1.msra.mxu0 %v5494
    %v5496 = vand.u32 %v3343, 4294901760
    %5497 = vmatprep.subr.mxu0 %v5496
    %v5498 = vand.u32 %v3342, 4294901760
    %5499 = vmatpush1.msra.mxu0 %v5498
    %v5500 = vand.u32 %v3347, 4294901760
    %5501 = vmatprep.subr.mxu0 %v5500
    %v5502 = vand.u32 %v3346, 4294901760
    %5503 = vmatpush1.msra.mxu0 %v5502
    %v5504 = vand.u32 %v3351, 4294901760
    %5505 = vmatprep.subr.mxu0 %v5504
    %v5506 = vand.u32 %v3350, 4294901760
    %5507 = vmatpush1.msra.mxu0 %v5506
    %v5508 = vand.u32 %v3355, 4294901760
    %5509 = vmatprep.subr.mxu0 %v5508
    %v5510 = vand.u32 %v3354, 4294901760
    %5511 = vmatpush1.msra.mxu0 %v5510
    %v5512 = vand.u32 %v3359, 4294901760
    %5513 = vmatprep.subr.mxu0 %v5512
    %v5514 = vand.u32 %v3358, 4294901760
    %5515 = vmatpush1.msra.mxu0 %v5514
    %v5516 = vand.u32 %v3361, 4294901760
    %v5517 = vsub.f32 %v3361, %v5516
    %v5518 = vand.u32 %v5517, 4294901760
    %5519 = vmatprep.mubr.f32.mxu0 %v5518
    %v5520 = vand.u32 %v3103, 4294901760
    %v5521 = vsub.f32 %v3103, %v5520
    %v5522 = vand.u32 %v5521, 4294901760
    %5523 = vmatmul.mubr.f32.gmra.mrb[0].mxu0 %v5522
    %v5524 = vpop.f32.mrb[0].mxu0
    %v5525 = vadd.f32 %v5384, %v5524
    %v5526 = vpop.f32.mrb[0].mxu0
    %v5527 = vadd.f32 %v5386, %v5526
    %5528 = vdwg.mxu0
    %v5529 = vand.u32 %v3235, 4294901760
    %v5530 = vsub.f32 %v3235, %v5529
    %v5531 = vand.u32 %v5530, 4294901760
    %5532 = vmatprep.subr.mxu0 %v5531
    %v5533 = vand.u32 %v3234, 4294901760
    %v5534 = vsub.f32 %v3234, %v5533
    %v5535 = vand.u32 %v5534, 4294901760
    %5536 = vmatpush1.msra.mxu0 %v5535
    %v5537 = vand.u32 %v3239, 4294901760
    %v5538 = vsub.f32 %v3239, %v5537
    %v5539 = vand.u32 %v5538, 4294901760
    %5540 = vmatprep.subr.mxu0 %v5539
    %v5541 = vand.u32 %v3238, 4294901760
    %v5542 = vsub.f32 %v3238, %v5541
    %v5543 = vand.u32 %v5542, 4294901760
    %5544 = vmatpush1.msra.mxu0 %v5543
    %v5545 = vand.u32 %v3243, 4294901760
    %v5546 = vsub.f32 %v3243, %v5545
    %v5547 = vand.u32 %v5546, 4294901760
    %5548 = vmatprep.subr.mxu0 %v5547
    %v5549 = vand.u32 %v3242, 4294901760
    %v5550 = vsub.f32 %v3242, %v5549
    %v5551 = vand.u32 %v5550, 4294901760
    %5552 = vmatpush1.msra.mxu0 %v5551
    %v5553 = vand.u32 %v3247, 4294901760
    %v5554 = vsub.f32 %v3247, %v5553
    %v5555 = vand.u32 %v5554, 4294901760
    %5556 = vmatprep.subr.mxu0 %v5555
    %v5557 = vand.u32 %v3246, 4294901760
    %v5558 = vsub.f32 %v3246, %v5557
    %v5559 = vand.u32 %v5558, 4294901760
    %5560 = vmatpush1.msra.mxu0 %v5559
    %v5561 = vand.u32 %v3251, 4294901760
    %v5562 = vsub.f32 %v3251, %v5561
    %v5563 = vand.u32 %v5562, 4294901760
    %5564 = vmatprep.subr.mxu0 %v5563
    %v5565 = vand.u32 %v3250, 4294901760
    %v5566 = vsub.f32 %v3250, %v5565
    %v5567 = vand.u32 %v5566, 4294901760
    %5568 = vmatpush1.msra.mxu0 %v5567
    %v5569 = vand.u32 %v3255, 4294901760
    %v5570 = vsub.f32 %v3255, %v5569
    %v5571 = vand.u32 %v5570, 4294901760
    %5572 = vmatprep.subr.mxu0 %v5571
    %v5573 = vand.u32 %v3254, 4294901760
    %v5574 = vsub.f32 %v3254, %v5573
    %v5575 = vand.u32 %v5574, 4294901760
    %5576 = vmatpush1.msra.mxu0 %v5575
    %v5577 = vand.u32 %v3259, 4294901760
    %v5578 = vsub.f32 %v3259, %v5577
    %v5579 = vand.u32 %v5578, 4294901760
    %5580 = vmatprep.subr.mxu0 %v5579
    %v5581 = vand.u32 %v3258, 4294901760
    %v5582 = vsub.f32 %v3258, %v5581
    %v5583 = vand.u32 %v5582, 4294901760
    %5584 = vmatpush1.msra.mxu0 %v5583
    %v5585 = vand.u32 %v3263, 4294901760
    %v5586 = vsub.f32 %v3263, %v5585
    %v5587 = vand.u32 %v5586, 4294901760
    %5588 = vmatprep.subr.mxu0 %v5587
    %v5589 = vand.u32 %v3262, 4294901760
    %v5590 = vsub.f32 %v3262, %v5589
    %v5591 = vand.u32 %v5590, 4294901760
    %5592 = vmatpush1.msra.mxu0 %v5591
    %v5593 = vand.u32 %v3267, 4294901760
    %v5594 = vsub.f32 %v3267, %v5593
    %v5595 = vand.u32 %v5594, 4294901760
    %5596 = vmatprep.subr.mxu0 %v5595
    %v5597 = vand.u32 %v3266, 4294901760
    %v5598 = vsub.f32 %v3266, %v5597
    %v5599 = vand.u32 %v5598, 4294901760
    %5600 = vmatpush1.msra.mxu0 %v5599
    %v5601 = vand.u32 %v3271, 4294901760
    %v5602 = vsub.f32 %v3271, %v5601
    %v5603 = vand.u32 %v5602, 4294901760
    %5604 = vmatprep.subr.mxu0 %v5603
    %v5605 = vand.u32 %v3270, 4294901760
    %v5606 = vsub.f32 %v3270, %v5605
    %v5607 = vand.u32 %v5606, 4294901760
    %5608 = vmatpush1.msra.mxu0 %v5607
    %v5609 = vand.u32 %v3275, 4294901760
    %v5610 = vsub.f32 %v3275, %v5609
    %v5611 = vand.u32 %v5610, 4294901760
    %5612 = vmatprep.subr.mxu0 %v5611
    %v5613 = vand.u32 %v3274, 4294901760
    %v5614 = vsub.f32 %v3274, %v5613
    %v5615 = vand.u32 %v5614, 4294901760
    %5616 = vmatpush1.msra.mxu0 %v5615
    %v5617 = vand.u32 %v3279, 4294901760
    %v5618 = vsub.f32 %v3279, %v5617
    %v5619 = vand.u32 %v5618, 4294901760
    %5620 = vmatprep.subr.mxu0 %v5619
    %v5621 = vand.u32 %v3278, 4294901760
    %v5622 = vsub.f32 %v3278, %v5621
    %v5623 = vand.u32 %v5622, 4294901760
    %5624 = vmatpush1.msra.mxu0 %v5623
    %v5625 = vand.u32 %v3283, 4294901760
    %v5626 = vsub.f32 %v3283, %v5625
    %v5627 = vand.u32 %v5626, 4294901760
    %5628 = vmatprep.subr.mxu0 %v5627
    %v5629 = vand.u32 %v3282, 4294901760
    %v5630 = vsub.f32 %v3282, %v5629
    %v5631 = vand.u32 %v5630, 4294901760
    %5632 = vmatpush1.msra.mxu0 %v5631
    %v5633 = vand.u32 %v3287, 4294901760
    %v5634 = vsub.f32 %v3287, %v5633
    %v5635 = vand.u32 %v5634, 4294901760
    %5636 = vmatprep.subr.mxu0 %v5635
    %v5637 = vand.u32 %v3286, 4294901760
    %v5638 = vsub.f32 %v3286, %v5637
    %v5639 = vand.u32 %v5638, 4294901760
    %5640 = vmatpush1.msra.mxu0 %v5639
    %v5641 = vand.u32 %v3291, 4294901760
    %v5642 = vsub.f32 %v3291, %v5641
    %v5643 = vand.u32 %v5642, 4294901760
    %5644 = vmatprep.subr.mxu0 %v5643
    %v5645 = vand.u32 %v3290, 4294901760
    %v5646 = vsub.f32 %v3290, %v5645
    %v5647 = vand.u32 %v5646, 4294901760
    %5648 = vmatpush1.msra.mxu0 %v5647
    %v5649 = vand.u32 %v3295, 4294901760
    %v5650 = vsub.f32 %v3295, %v5649
    %v5651 = vand.u32 %v5650, 4294901760
    %5652 = vmatprep.subr.mxu0 %v5651
    %v5653 = vand.u32 %v3294, 4294901760
    %v5654 = vsub.f32 %v3294, %v5653
    %v5655 = vand.u32 %v5654, 4294901760
    %5656 = vmatpush1.msra.mxu0 %v5655
    %v5657 = vand.u32 %v3299, 4294901760
    %v5658 = vsub.f32 %v3299, %v5657
    %v5659 = vand.u32 %v5658, 4294901760
    %5660 = vmatprep.subr.mxu0 %v5659
    %v5661 = vand.u32 %v3298, 4294901760
    %v5662 = vsub.f32 %v3298, %v5661
    %v5663 = vand.u32 %v5662, 4294901760
    %5664 = vmatpush1.msra.mxu0 %v5663
    %v5665 = vand.u32 %v3303, 4294901760
    %v5666 = vsub.f32 %v3303, %v5665
    %v5667 = vand.u32 %v5666, 4294901760
    %5668 = vmatprep.subr.mxu0 %v5667
    %v5669 = vand.u32 %v3302, 4294901760
    %v5670 = vsub.f32 %v3302, %v5669
    %v5671 = vand.u32 %v5670, 4294901760
    %5672 = vmatpush1.msra.mxu0 %v5671
    %v5673 = vand.u32 %v3307, 4294901760
    %v5674 = vsub.f32 %v3307, %v5673
    %v5675 = vand.u32 %v5674, 4294901760
    %5676 = vmatprep.subr.mxu0 %v5675
    %v5677 = vand.u32 %v3306, 4294901760
    %v5678 = vsub.f32 %v3306, %v5677
    %v5679 = vand.u32 %v5678, 4294901760
    %5680 = vmatpush1.msra.mxu0 %v5679
    %v5681 = vand.u32 %v3311, 4294901760
    %v5682 = vsub.f32 %v3311, %v5681
    %v5683 = vand.u32 %v5682, 4294901760
    %5684 = vmatprep.subr.mxu0 %v5683
    %v5685 = vand.u32 %v3310, 4294901760
    %v5686 = vsub.f32 %v3310, %v5685
    %v5687 = vand.u32 %v5686, 4294901760
    %5688 = vmatpush1.msra.mxu0 %v5687
    %v5689 = vand.u32 %v3315, 4294901760
    %v5690 = vsub.f32 %v3315, %v5689
    %v5691 = vand.u32 %v5690, 4294901760
    %5692 = vmatprep.subr.mxu0 %v5691
    %v5693 = vand.u32 %v3314, 4294901760
    %v5694 = vsub.f32 %v3314, %v5693
    %v5695 = vand.u32 %v5694, 4294901760
    %5696 = vmatpush1.msra.mxu0 %v5695
    %v5697 = vand.u32 %v3319, 4294901760
    %v5698 = vsub.f32 %v3319, %v5697
    %v5699 = vand.u32 %v5698, 4294901760
    %5700 = vmatprep.subr.mxu0 %v5699
    %v5701 = vand.u32 %v3318, 4294901760
    %v5702 = vsub.f32 %v3318, %v5701
    %v5703 = vand.u32 %v5702, 4294901760
    %5704 = vmatpush1.msra.mxu0 %v5703
    %v5705 = vand.u32 %v3323, 4294901760
    %v5706 = vsub.f32 %v3323, %v5705
    %v5707 = vand.u32 %v5706, 4294901760
    %5708 = vmatprep.subr.mxu0 %v5707
    %v5709 = vand.u32 %v3322, 4294901760
    %v5710 = vsub.f32 %v3322, %v5709
    %v5711 = vand.u32 %v5710, 4294901760
    %5712 = vmatpush1.msra.mxu0 %v5711
    %v5713 = vand.u32 %v3327, 4294901760
    %v5714 = vsub.f32 %v3327, %v5713
    %v5715 = vand.u32 %v5714, 4294901760
    %5716 = vmatprep.subr.mxu0 %v5715
    %v5717 = vand.u32 %v3326, 4294901760
    %v5718 = vsub.f32 %v3326, %v5717
    %v5719 = vand.u32 %v5718, 4294901760
    %5720 = vmatpush1.msra.mxu0 %v5719
    %v5721 = vand.u32 %v3331, 4294901760
    %v5722 = vsub.f32 %v3331, %v5721
    %v5723 = vand.u32 %v5722, 4294901760
    %5724 = vmatprep.subr.mxu0 %v5723
    %v5725 = vand.u32 %v3330, 4294901760
    %v5726 = vsub.f32 %v3330, %v5725
    %v5727 = vand.u32 %v5726, 4294901760
    %5728 = vmatpush1.msra.mxu0 %v5727
    %v5729 = vand.u32 %v3335, 4294901760
    %v5730 = vsub.f32 %v3335, %v5729
    %v5731 = vand.u32 %v5730, 4294901760
    %5732 = vmatprep.subr.mxu0 %v5731
    %v5733 = vand.u32 %v3334, 4294901760
    %v5734 = vsub.f32 %v3334, %v5733
    %v5735 = vand.u32 %v5734, 4294901760
    %5736 = vmatpush1.msra.mxu0 %v5735
    %v5737 = vand.u32 %v3339, 4294901760
    %v5738 = vsub.f32 %v3339, %v5737
    %v5739 = vand.u32 %v5738, 4294901760
    %5740 = vmatprep.subr.mxu0 %v5739
    %v5741 = vand.u32 %v3338, 4294901760
    %v5742 = vsub.f32 %v3338, %v5741
    %v5743 = vand.u32 %v5742, 4294901760
    %5744 = vmatpush1.msra.mxu0 %v5743
    %v5745 = vand.u32 %v3343, 4294901760
    %v5746 = vsub.f32 %v3343, %v5745
    %v5747 = vand.u32 %v5746, 4294901760
    %5748 = vmatprep.subr.mxu0 %v5747
    %v5749 = vand.u32 %v3342, 4294901760
    %v5750 = vsub.f32 %v3342, %v5749
    %v5751 = vand.u32 %v5750, 4294901760
    %5752 = vmatpush1.msra.mxu0 %v5751
    %v5753 = vand.u32 %v3347, 4294901760
    %v5754 = vsub.f32 %v3347, %v5753
    %v5755 = vand.u32 %v5754, 4294901760
    %5756 = vmatprep.subr.mxu0 %v5755
    %v5757 = vand.u32 %v3346, 4294901760
    %v5758 = vsub.f32 %v3346, %v5757
    %v5759 = vand.u32 %v5758, 4294901760
    %5760 = vmatpush1.msra.mxu0 %v5759
    %v5761 = vand.u32 %v3351, 4294901760
    %v5762 = vsub.f32 %v3351, %v5761
    %v5763 = vand.u32 %v5762, 4294901760
    %5764 = vmatprep.subr.mxu0 %v5763
    %v5765 = vand.u32 %v3350, 4294901760
    %v5766 = vsub.f32 %v3350, %v5765
    %v5767 = vand.u32 %v5766, 4294901760
    %5768 = vmatpush1.msra.mxu0 %v5767
    %v5769 = vand.u32 %v3355, 4294901760
    %v5770 = vsub.f32 %v3355, %v5769
    %v5771 = vand.u32 %v5770, 4294901760
    %5772 = vmatprep.subr.mxu0 %v5771
    %v5773 = vand.u32 %v3354, 4294901760
    %v5774 = vsub.f32 %v3354, %v5773
    %v5775 = vand.u32 %v5774, 4294901760
    %5776 = vmatpush1.msra.mxu0 %v5775
    %v5777 = vand.u32 %v3359, 4294901760
    %v5778 = vsub.f32 %v3359, %v5777
    %v5779 = vand.u32 %v5778, 4294901760
    %5780 = vmatprep.subr.mxu0 %v5779
    %v5781 = vand.u32 %v3358, 4294901760
    %v5782 = vsub.f32 %v3358, %v5781
    %v5783 = vand.u32 %v5782, 4294901760
    %5784 = vmatpush1.msra.mxu0 %v5783
    %v5785 = vand.u32 %v3361, 4294901760
    %5786 = vmatprep.mubr.f32.mxu0 %v5785
    %v5787 = vand.u32 %v3103, 4294901760
    %5788 = vmatmul.mubr.f32.gmra.mrb[0].mxu0 %v5787
    %v5789 = vpop.f32.mrb[0].mxu0
    %v5790 = vadd.f32 %v5525, %v5789
    %v5791 = vpop.f32.mrb[0].mxu0
    %v5792 = vadd.f32 %v5527, %v5791
    %5793 = vdwg.mxu0
    %v5794 = vand.u32 %v3235, 4294901760
    %5795 = vmatprep.subr.mxu0 %v5794
    %v5796 = vand.u32 %v3234, 4294901760
    %5797 = vmatpush1.msra.mxu0 %v5796
    %v5798 = vand.u32 %v3239, 4294901760
    %5799 = vmatprep.subr.mxu0 %v5798
    %v5800 = vand.u32 %v3238, 4294901760
    %5801 = vmatpush1.msra.mxu0 %v5800
    %v5802 = vand.u32 %v3243, 4294901760
    %5803 = vmatprep.subr.mxu0 %v5802
    %v5804 = vand.u32 %v3242, 4294901760
    %5805 = vmatpush1.msra.mxu0 %v5804
    %v5806 = vand.u32 %v3247, 4294901760
    %5807 = vmatprep.subr.mxu0 %v5806
    %v5808 = vand.u32 %v3246, 4294901760
    %5809 = vmatpush1.msra.mxu0 %v5808
    %v5810 = vand.u32 %v3251, 4294901760
    %5811 = vmatprep.subr.mxu0 %v5810
    %v5812 = vand.u32 %v3250, 4294901760
    %5813 = vmatpush1.msra.mxu0 %v5812
    %v5814 = vand.u32 %v3255, 4294901760
    %5815 = vmatprep.subr.mxu0 %v5814
    %v5816 = vand.u32 %v3254, 4294901760
    %5817 = vmatpush1.msra.mxu0 %v5816
    %v5818 = vand.u32 %v3259, 4294901760
    %5819 = vmatprep.subr.mxu0 %v5818
    %v5820 = vand.u32 %v3258, 4294901760
    %5821 = vmatpush1.msra.mxu0 %v5820
    %v5822 = vand.u32 %v3263, 4294901760
    %5823 = vmatprep.subr.mxu0 %v5822
    %v5824 = vand.u32 %v3262, 4294901760
    %5825 = vmatpush1.msra.mxu0 %v5824
    %v5826 = vand.u32 %v3267, 4294901760
    %5827 = vmatprep.subr.mxu0 %v5826
    %v5828 = vand.u32 %v3266, 4294901760
    %5829 = vmatpush1.msra.mxu0 %v5828
    %v5830 = vand.u32 %v3271, 4294901760
    %5831 = vmatprep.subr.mxu0 %v5830
    %v5832 = vand.u32 %v3270, 4294901760
    %5833 = vmatpush1.msra.mxu0 %v5832
    %v5834 = vand.u32 %v3275, 4294901760
    %5835 = vmatprep.subr.mxu0 %v5834
    %v5836 = vand.u32 %v3274, 4294901760
    %5837 = vmatpush1.msra.mxu0 %v5836
    %v5838 = vand.u32 %v3279, 4294901760
    %5839 = vmatprep.subr.mxu0 %v5838
    %v5840 = vand.u32 %v3278, 4294901760
    %5841 = vmatpush1.msra.mxu0 %v5840
    %v5842 = vand.u32 %v3283, 4294901760
    %5843 = vmatprep.subr.mxu0 %v5842
    %v5844 = vand.u32 %v3282, 4294901760
    %5845 = vmatpush1.msra.mxu0 %v5844
    %v5846 = vand.u32 %v3287, 4294901760
    %5847 = vmatprep.subr.mxu0 %v5846
    %v5848 = vand.u32 %v3286, 4294901760
    %5849 = vmatpush1.msra.mxu0 %v5848
    %v5850 = vand.u32 %v3291, 4294901760
    %5851 = vmatprep.subr.mxu0 %v5850
    %v5852 = vand.u32 %v3290, 4294901760
    %5853 = vmatpush1.msra.mxu0 %v5852
    %v5854 = vand.u32 %v3295, 4294901760
    %5855 = vmatprep.subr.mxu0 %v5854
    %v5856 = vand.u32 %v3294, 4294901760
    %5857 = vmatpush1.msra.mxu0 %v5856
    %v5858 = vand.u32 %v3299, 4294901760
    %5859 = vmatprep.subr.mxu0 %v5858
    %v5860 = vand.u32 %v3298, 4294901760
    %5861 = vmatpush1.msra.mxu0 %v5860
    %v5862 = vand.u32 %v3303, 4294901760
    %5863 = vmatprep.subr.mxu0 %v5862
    %v5864 = vand.u32 %v3302, 4294901760
    %5865 = vmatpush1.msra.mxu0 %v5864
    %v5866 = vand.u32 %v3307, 4294901760
    %5867 = vmatprep.subr.mxu0 %v5866
    %v5868 = vand.u32 %v3306, 4294901760
    %5869 = vmatpush1.msra.mxu0 %v5868
    %v5870 = vand.u32 %v3311, 4294901760
    %5871 = vmatprep.subr.mxu0 %v5870
    %v5872 = vand.u32 %v3310, 4294901760
    %5873 = vmatpush1.msra.mxu0 %v5872
    %v5874 = vand.u32 %v3315, 4294901760
    %5875 = vmatprep.subr.mxu0 %v5874
    %v5876 = vand.u32 %v3314, 4294901760
    %5877 = vmatpush1.msra.mxu0 %v5876
    %v5878 = vand.u32 %v3319, 4294901760
    %5879 = vmatprep.subr.mxu0 %v5878
    %v5880 = vand.u32 %v3318, 4294901760
    %5881 = vmatpush1.msra.mxu0 %v5880
    %v5882 = vand.u32 %v3323, 4294901760
    %5883 = vmatprep.subr.mxu0 %v5882
    %v5884 = vand.u32 %v3322, 4294901760
    %5885 = vmatpush1.msra.mxu0 %v5884
    %v5886 = vand.u32 %v3327, 4294901760
    %5887 = vmatprep.subr.mxu0 %v5886
    %v5888 = vand.u32 %v3326, 4294901760
    %5889 = vmatpush1.msra.mxu0 %v5888
    %v5890 = vand.u32 %v3331, 4294901760
    %5891 = vmatprep.subr.mxu0 %v5890
    %v5892 = vand.u32 %v3330, 4294901760
    %5893 = vmatpush1.msra.mxu0 %v5892
    %v5894 = vand.u32 %v3335, 4294901760
    %5895 = vmatprep.subr.mxu0 %v5894
    %v5896 = vand.u32 %v3334, 4294901760
    %5897 = vmatpush1.msra.mxu0 %v5896
    %v5898 = vand.u32 %v3339, 4294901760
    %5899 = vmatprep.subr.mxu0 %v5898
    %v5900 = vand.u32 %v3338, 4294901760
    %5901 = vmatpush1.msra.mxu0 %v5900
    %v5902 = vand.u32 %v3343, 4294901760
    %5903 = vmatprep.subr.mxu0 %v5902
    %v5904 = vand.u32 %v3342, 4294901760
    %5905 = vmatpush1.msra.mxu0 %v5904
    %v5906 = vand.u32 %v3347, 4294901760
    %5907 = vmatprep.subr.mxu0 %v5906
    %v5908 = vand.u32 %v3346, 4294901760
    %5909 = vmatpush1.msra.mxu0 %v5908
    %v5910 = vand.u32 %v3351, 4294901760
    %5911 = vmatprep.subr.mxu0 %v5910
    %v5912 = vand.u32 %v3350, 4294901760
    %5913 = vmatpush1.msra.mxu0 %v5912
    %v5914 = vand.u32 %v3355, 4294901760
    %5915 = vmatprep.subr.mxu0 %v5914
    %v5916 = vand.u32 %v3354, 4294901760
    %5917 = vmatpush1.msra.mxu0 %v5916
    %v5918 = vand.u32 %v3359, 4294901760
    %5919 = vmatprep.subr.mxu0 %v5918
    %v5920 = vand.u32 %v3358, 4294901760
    %5921 = vmatpush1.msra.mxu0 %v5920
    %v5922 = vand.u32 %v3361, 4294901760
    %5923 = vmatprep.mubr.f32.mxu0 %v5922
    %v5924 = vand.u32 %v3103, 4294901760
    %5925 = vmatmul.mubr.f32.gmra.mrb[0].mxu0 %v5924
    %v5926 = vpop.f32.mrb[0].mxu0
    %v5927 = vadd.f32 %v5790, %v5926
    %v5928 = vpop.f32.mrb[0].mxu0
    %v5929 = vadd.f32 %v5792, %v5928
    %5930 = vdwg.mxu0
    %v5932 = vcombine.high %v3099, %v3099
    %v5934 = vand.u32 %v3105, 4294901760
    %5935 = vmatprep.subr.mxu0 %v5934
    %v5936 = vand.u32 %v3104, 4294901760
    %5937 = vmatpush1.msra.mxu0 %v5936
    %v5938 = vand.u32 %v3109, 4294901760
    %5939 = vmatprep.subr.mxu0 %v5938
    %v5940 = vand.u32 %v3108, 4294901760
    %5941 = vmatpush1.msra.mxu0 %v5940
    %v5942 = vand.u32 %v3113, 4294901760
    %5943 = vmatprep.subr.mxu0 %v5942
    %v5944 = vand.u32 %v3112, 4294901760
    %5945 = vmatpush1.msra.mxu0 %v5944
    %v5946 = vand.u32 %v3117, 4294901760
    %5947 = vmatprep.subr.mxu0 %v5946
    %v5948 = vand.u32 %v3116, 4294901760
    %5949 = vmatpush1.msra.mxu0 %v5948
    %v5950 = vand.u32 %v3121, 4294901760
    %5951 = vmatprep.subr.mxu0 %v5950
    %v5952 = vand.u32 %v3120, 4294901760
    %5953 = vmatpush1.msra.mxu0 %v5952
    %v5954 = vand.u32 %v3125, 4294901760
    %5955 = vmatprep.subr.mxu0 %v5954
    %v5956 = vand.u32 %v3124, 4294901760
    %5957 = vmatpush1.msra.mxu0 %v5956
    %v5958 = vand.u32 %v3129, 4294901760
    %5959 = vmatprep.subr.mxu0 %v5958
    %v5960 = vand.u32 %v3128, 4294901760
    %5961 = vmatpush1.msra.mxu0 %v5960
    %v5962 = vand.u32 %v3133, 4294901760
    %5963 = vmatprep.subr.mxu0 %v5962
    %v5964 = vand.u32 %v3132, 4294901760
    %5965 = vmatpush1.msra.mxu0 %v5964
    %v5966 = vand.u32 %v3137, 4294901760
    %5967 = vmatprep.subr.mxu0 %v5966
    %v5968 = vand.u32 %v3136, 4294901760
    %5969 = vmatpush1.msra.mxu0 %v5968
    %v5970 = vand.u32 %v3141, 4294901760
    %5971 = vmatprep.subr.mxu0 %v5970
    %v5972 = vand.u32 %v3140, 4294901760
    %5973 = vmatpush1.msra.mxu0 %v5972
    %v5974 = vand.u32 %v3145, 4294901760
    %5975 = vmatprep.subr.mxu0 %v5974
    %v5976 = vand.u32 %v3144, 4294901760
    %5977 = vmatpush1.msra.mxu0 %v5976
    %v5978 = vand.u32 %v3149, 4294901760
    %5979 = vmatprep.subr.mxu0 %v5978
    %v5980 = vand.u32 %v3148, 4294901760
    %5981 = vmatpush1.msra.mxu0 %v5980
    %v5982 = vand.u32 %v3153, 4294901760
    %5983 = vmatprep.subr.mxu0 %v5982
    %v5984 = vand.u32 %v3152, 4294901760
    %5985 = vmatpush1.msra.mxu0 %v5984
    %v5986 = vand.u32 %v3157, 4294901760
    %5987 = vmatprep.subr.mxu0 %v5986
    %v5988 = vand.u32 %v3156, 4294901760
    %5989 = vmatpush1.msra.mxu0 %v5988
    %v5990 = vand.u32 %v3161, 4294901760
    %5991 = vmatprep.subr.mxu0 %v5990
    %v5992 = vand.u32 %v3160, 4294901760
    %5993 = vmatpush1.msra.mxu0 %v5992
    %v5994 = vand.u32 %v3165, 4294901760
    %5995 = vmatprep.subr.mxu0 %v5994
    %v5996 = vand.u32 %v3164, 4294901760
    %5997 = vmatpush1.msra.mxu0 %v5996
    %v5998 = vand.u32 %v3169, 4294901760
    %5999 = vmatprep.subr.mxu0 %v5998
    %v6000 = vand.u32 %v3168, 4294901760
    %6001 = vmatpush1.msra.mxu0 %v6000
    %v6002 = vand.u32 %v3173, 4294901760
    %6003 = vmatprep.subr.mxu0 %v6002
    %v6004 = vand.u32 %v3172, 4294901760
    %6005 = vmatpush1.msra.mxu0 %v6004
    %v6006 = vand.u32 %v3177, 4294901760
    %6007 = vmatprep.subr.mxu0 %v6006
    %v6008 = vand.u32 %v3176, 4294901760
    %6009 = vmatpush1.msra.mxu0 %v6008
    %v6010 = vand.u32 %v3181, 4294901760
    %6011 = vmatprep.subr.mxu0 %v6010
    %v6012 = vand.u32 %v3180, 4294901760
    %6013 = vmatpush1.msra.mxu0 %v6012
    %v6014 = vand.u32 %v3185, 4294901760
    %6015 = vmatprep.subr.mxu0 %v6014
    %v6016 = vand.u32 %v3184, 4294901760
    %6017 = vmatpush1.msra.mxu0 %v6016
    %v6018 = vand.u32 %v3189, 4294901760
    %6019 = vmatprep.subr.mxu0 %v6018
    %v6020 = vand.u32 %v3188, 4294901760
    %6021 = vmatpush1.msra.mxu0 %v6020
    %v6022 = vand.u32 %v3193, 4294901760
    %6023 = vmatprep.subr.mxu0 %v6022
    %v6024 = vand.u32 %v3192, 4294901760
    %6025 = vmatpush1.msra.mxu0 %v6024
    %v6026 = vand.u32 %v3197, 4294901760
    %6027 = vmatprep.subr.mxu0 %v6026
    %v6028 = vand.u32 %v3196, 4294901760
    %6029 = vmatpush1.msra.mxu0 %v6028
    %v6030 = vand.u32 %v3201, 4294901760
    %6031 = vmatprep.subr.mxu0 %v6030
    %v6032 = vand.u32 %v3200, 4294901760
    %6033 = vmatpush1.msra.mxu0 %v6032
    %v6034 = vand.u32 %v3205, 4294901760
    %6035 = vmatprep.subr.mxu0 %v6034
    %v6036 = vand.u32 %v3204, 4294901760
    %6037 = vmatpush1.msra.mxu0 %v6036
    %v6038 = vand.u32 %v3209, 4294901760
    %6039 = vmatprep.subr.mxu0 %v6038
    %v6040 = vand.u32 %v3208, 4294901760
    %6041 = vmatpush1.msra.mxu0 %v6040
    %v6042 = vand.u32 %v3213, 4294901760
    %6043 = vmatprep.subr.mxu0 %v6042
    %v6044 = vand.u32 %v3212, 4294901760
    %6045 = vmatpush1.msra.mxu0 %v6044
    %v6046 = vand.u32 %v3217, 4294901760
    %6047 = vmatprep.subr.mxu0 %v6046
    %v6048 = vand.u32 %v3216, 4294901760
    %6049 = vmatpush1.msra.mxu0 %v6048
    %v6050 = vand.u32 %v3221, 4294901760
    %6051 = vmatprep.subr.mxu0 %v6050
    %v6052 = vand.u32 %v3220, 4294901760
    %6053 = vmatpush1.msra.mxu0 %v6052
    %v6054 = vand.u32 %v3225, 4294901760
    %6055 = vmatprep.subr.mxu0 %v6054
    %v6056 = vand.u32 %v3224, 4294901760
    %6057 = vmatpush1.msra.mxu0 %v6056
    %v6058 = vand.u32 %v3229, 4294901760
    %6059 = vmatprep.subr.mxu0 %v6058
    %v6060 = vand.u32 %v3228, 4294901760
    %6061 = vmatpush1.msra.mxu0 %v6060
    %v6062 = vand.u32 %v5932, 4294901760
    %v6063 = vsub.f32 %v5932, %v6062
    %v6064 = vand.u32 %v6063, 4294901760
    %v6065 = vsub.f32 %v6063, %v6064
    %v6066 = vand.u32 %v6065, 4294901760
    %6067 = vmatprep.mubr.f32.mxu0 %v6066
    %v6068 = vand.u32 %v3099, 4294901760
    %v6069 = vsub.f32 %v3099, %v6068
    %v6070 = vand.u32 %v6069, 4294901760
    %v6071 = vsub.f32 %v6069, %v6070
    %v6072 = vand.u32 %v6071, 4294901760
    %6073 = vmatmul.mubr.f32.gmra.mrb[0].mxu0 %v6072
    %v6074 = vpop.f32.mrb[0].mxu0
    %v6075 = vadd.f32 %v4643, %v6074
    %v6076 = vpop.f32.mrb[0].mxu0
    %v6077 = vadd.f32 %v4645, %v6076
    %6078 = vdwg.mxu0
    %v6079 = vand.u32 %v3105, 4294901760
    %v6080 = vsub.f32 %v3105, %v6079
    %v6081 = vand.u32 %v6080, 4294901760
    %v6082 = vsub.f32 %v6080, %v6081
    %v6083 = vand.u32 %v6082, 4294901760
    %6084 = vmatprep.subr.mxu0 %v6083
    %v6085 = vand.u32 %v3104, 4294901760
    %v6086 = vsub.f32 %v3104, %v6085
    %v6087 = vand.u32 %v6086, 4294901760
    %v6088 = vsub.f32 %v6086, %v6087
    %v6089 = vand.u32 %v6088, 4294901760
    %6090 = vmatpush1.msra.mxu0 %v6089
    %v6091 = vand.u32 %v3109, 4294901760
    %v6092 = vsub.f32 %v3109, %v6091
    %v6093 = vand.u32 %v6092, 4294901760
    %v6094 = vsub.f32 %v6092, %v6093
    %v6095 = vand.u32 %v6094, 4294901760
    %6096 = vmatprep.subr.mxu0 %v6095
    %v6097 = vand.u32 %v3108, 4294901760
    %v6098 = vsub.f32 %v3108, %v6097
    %v6099 = vand.u32 %v6098, 4294901760
    %v6100 = vsub.f32 %v6098, %v6099
    %v6101 = vand.u32 %v6100, 4294901760
    %6102 = vmatpush1.msra.mxu0 %v6101
    %v6103 = vand.u32 %v3113, 4294901760
    %v6104 = vsub.f32 %v3113, %v6103
    %v6105 = vand.u32 %v6104, 4294901760
    %v6106 = vsub.f32 %v6104, %v6105
    %v6107 = vand.u32 %v6106, 4294901760
    %6108 = vmatprep.subr.mxu0 %v6107
    %v6109 = vand.u32 %v3112, 4294901760
    %v6110 = vsub.f32 %v3112, %v6109
    %v6111 = vand.u32 %v6110, 4294901760
    %v6112 = vsub.f32 %v6110, %v6111
    %v6113 = vand.u32 %v6112, 4294901760
    %6114 = vmatpush1.msra.mxu0 %v6113
    %v6115 = vand.u32 %v3117, 4294901760
    %v6116 = vsub.f32 %v3117, %v6115
    %v6117 = vand.u32 %v6116, 4294901760
    %v6118 = vsub.f32 %v6116, %v6117
    %v6119 = vand.u32 %v6118, 4294901760
    %6120 = vmatprep.subr.mxu0 %v6119
    %v6121 = vand.u32 %v3116, 4294901760
    %v6122 = vsub.f32 %v3116, %v6121
    %v6123 = vand.u32 %v6122, 4294901760
    %v6124 = vsub.f32 %v6122, %v6123
    %v6125 = vand.u32 %v6124, 4294901760
    %6126 = vmatpush1.msra.mxu0 %v6125
    %v6127 = vand.u32 %v3121, 4294901760
    %v6128 = vsub.f32 %v3121, %v6127
    %v6129 = vand.u32 %v6128, 4294901760
    %v6130 = vsub.f32 %v6128, %v6129
    %v6131 = vand.u32 %v6130, 4294901760
    %6132 = vmatprep.subr.mxu0 %v6131
    %v6133 = vand.u32 %v3120, 4294901760
    %v6134 = vsub.f32 %v3120, %v6133
    %v6135 = vand.u32 %v6134, 4294901760
    %v6136 = vsub.f32 %v6134, %v6135
    %v6137 = vand.u32 %v6136, 4294901760
    %6138 = vmatpush1.msra.mxu0 %v6137
    %v6139 = vand.u32 %v3125, 4294901760
    %v6140 = vsub.f32 %v3125, %v6139
    %v6141 = vand.u32 %v6140, 4294901760
    %v6142 = vsub.f32 %v6140, %v6141
    %v6143 = vand.u32 %v6142, 4294901760
    %6144 = vmatprep.subr.mxu0 %v6143
    %v6145 = vand.u32 %v3124, 4294901760
    %v6146 = vsub.f32 %v3124, %v6145
    %v6147 = vand.u32 %v6146, 4294901760
    %v6148 = vsub.f32 %v6146, %v6147
    %v6149 = vand.u32 %v6148, 4294901760
    %6150 = vmatpush1.msra.mxu0 %v6149
    %v6151 = vand.u32 %v3129, 4294901760
    %v6152 = vsub.f32 %v3129, %v6151
    %v6153 = vand.u32 %v6152, 4294901760
    %v6154 = vsub.f32 %v6152, %v6153
    %v6155 = vand.u32 %v6154, 4294901760
    %6156 = vmatprep.subr.mxu0 %v6155
    %v6157 = vand.u32 %v3128, 4294901760
    %v6158 = vsub.f32 %v3128, %v6157
    %v6159 = vand.u32 %v6158, 4294901760
    %v6160 = vsub.f32 %v6158, %v6159
    %v6161 = vand.u32 %v6160, 4294901760
    %6162 = vmatpush1.msra.mxu0 %v6161
    %v6163 = vand.u32 %v3133, 4294901760
    %v6164 = vsub.f32 %v3133, %v6163
    %v6165 = vand.u32 %v6164, 4294901760
    %v6166 = vsub.f32 %v6164, %v6165
    %v6167 = vand.u32 %v6166, 4294901760
    %6168 = vmatprep.subr.mxu0 %v6167
    %v6169 = vand.u32 %v3132, 4294901760
    %v6170 = vsub.f32 %v3132, %v6169
    %v6171 = vand.u32 %v6170, 4294901760
    %v6172 = vsub.f32 %v6170, %v6171
    %v6173 = vand.u32 %v6172, 4294901760
    %6174 = vmatpush1.msra.mxu0 %v6173
    %v6175 = vand.u32 %v3137, 4294901760
    %v6176 = vsub.f32 %v3137, %v6175
    %v6177 = vand.u32 %v6176, 4294901760
    %v6178 = vsub.f32 %v6176, %v6177
    %v6179 = vand.u32 %v6178, 4294901760
    %6180 = vmatprep.subr.mxu0 %v6179
    %v6181 = vand.u32 %v3136, 4294901760
    %v6182 = vsub.f32 %v3136, %v6181
    %v6183 = vand.u32 %v6182, 4294901760
    %v6184 = vsub.f32 %v6182, %v6183
    %v6185 = vand.u32 %v6184, 4294901760
    %6186 = vmatpush1.msra.mxu0 %v6185
    %v6187 = vand.u32 %v3141, 4294901760
    %v6188 = vsub.f32 %v3141, %v6187
    %v6189 = vand.u32 %v6188, 4294901760
    %v6190 = vsub.f32 %v6188, %v6189
    %v6191 = vand.u32 %v6190, 4294901760
    %6192 = vmatprep.subr.mxu0 %v6191
    %v6193 = vand.u32 %v3140, 4294901760
    %v6194 = vsub.f32 %v3140, %v6193
    %v6195 = vand.u32 %v6194, 4294901760
    %v6196 = vsub.f32 %v6194, %v6195
    %v6197 = vand.u32 %v6196, 4294901760
    %6198 = vmatpush1.msra.mxu0 %v6197
    %v6199 = vand.u32 %v3145, 4294901760
    %v6200 = vsub.f32 %v3145, %v6199
    %v6201 = vand.u32 %v6200, 4294901760
    %v6202 = vsub.f32 %v6200, %v6201
    %v6203 = vand.u32 %v6202, 4294901760
    %6204 = vmatprep.subr.mxu0 %v6203
    %v6205 = vand.u32 %v3144, 4294901760
    %v6206 = vsub.f32 %v3144, %v6205
    %v6207 = vand.u32 %v6206, 4294901760
    %v6208 = vsub.f32 %v6206, %v6207
    %v6209 = vand.u32 %v6208, 4294901760
    %6210 = vmatpush1.msra.mxu0 %v6209
    %v6211 = vand.u32 %v3149, 4294901760
    %v6212 = vsub.f32 %v3149, %v6211
    %v6213 = vand.u32 %v6212, 4294901760
    %v6214 = vsub.f32 %v6212, %v6213
    %v6215 = vand.u32 %v6214, 4294901760
    %6216 = vmatprep.subr.mxu0 %v6215
    %v6217 = vand.u32 %v3148, 4294901760
    %v6218 = vsub.f32 %v3148, %v6217
    %v6219 = vand.u32 %v6218, 4294901760
    %v6220 = vsub.f32 %v6218, %v6219
    %v6221 = vand.u32 %v6220, 4294901760
    %6222 = vmatpush1.msra.mxu0 %v6221
    %v6223 = vand.u32 %v3153, 4294901760
    %v6224 = vsub.f32 %v3153, %v6223
    %v6225 = vand.u32 %v6224, 4294901760
    %v6226 = vsub.f32 %v6224, %v6225
    %v6227 = vand.u32 %v6226, 4294901760
    %6228 = vmatprep.subr.mxu0 %v6227
    %v6229 = vand.u32 %v3152, 4294901760
    %v6230 = vsub.f32 %v3152, %v6229
    %v6231 = vand.u32 %v6230, 4294901760
    %v6232 = vsub.f32 %v6230, %v6231
    %v6233 = vand.u32 %v6232, 4294901760
    %6234 = vmatpush1.msra.mxu0 %v6233
    %v6235 = vand.u32 %v3157, 4294901760
    %v6236 = vsub.f32 %v3157, %v6235
    %v6237 = vand.u32 %v6236, 4294901760
    %v6238 = vsub.f32 %v6236, %v6237
    %v6239 = vand.u32 %v6238, 4294901760
    %6240 = vmatprep.subr.mxu0 %v6239
    %v6241 = vand.u32 %v3156, 4294901760
    %v6242 = vsub.f32 %v3156, %v6241
    %v6243 = vand.u32 %v6242, 4294901760
    %v6244 = vsub.f32 %v6242, %v6243
    %v6245 = vand.u32 %v6244, 4294901760
    %6246 = vmatpush1.msra.mxu0 %v6245
    %v6247 = vand.u32 %v3161, 4294901760
    %v6248 = vsub.f32 %v3161, %v6247
    %v6249 = vand.u32 %v6248, 4294901760
    %v6250 = vsub.f32 %v6248, %v6249
    %v6251 = vand.u32 %v6250, 4294901760
    %6252 = vmatprep.subr.mxu0 %v6251
    %v6253 = vand.u32 %v3160, 4294901760
    %v6254 = vsub.f32 %v3160, %v6253
    %v6255 = vand.u32 %v6254, 4294901760
    %v6256 = vsub.f32 %v6254, %v6255
    %v6257 = vand.u32 %v6256, 4294901760
    %6258 = vmatpush1.msra.mxu0 %v6257
    %v6259 = vand.u32 %v3165, 4294901760
    %v6260 = vsub.f32 %v3165, %v6259
    %v6261 = vand.u32 %v6260, 4294901760
    %v6262 = vsub.f32 %v6260, %v6261
    %v6263 = vand.u32 %v6262, 4294901760
    %6264 = vmatprep.subr.mxu0 %v6263
    %v6265 = vand.u32 %v3164, 4294901760
    %v6266 = vsub.f32 %v3164, %v6265
    %v6267 = vand.u32 %v6266, 4294901760
    %v6268 = vsub.f32 %v6266, %v6267
    %v6269 = vand.u32 %v6268, 4294901760
    %6270 = vmatpush1.msra.mxu0 %v6269
    %v6271 = vand.u32 %v3169, 4294901760
    %v6272 = vsub.f32 %v3169, %v6271
    %v6273 = vand.u32 %v6272, 4294901760
    %v6274 = vsub.f32 %v6272, %v6273
    %v6275 = vand.u32 %v6274, 4294901760
    %6276 = vmatprep.subr.mxu0 %v6275
    %v6277 = vand.u32 %v3168, 4294901760
    %v6278 = vsub.f32 %v3168, %v6277
    %v6279 = vand.u32 %v6278, 4294901760
    %v6280 = vsub.f32 %v6278, %v6279
    %v6281 = vand.u32 %v6280, 4294901760
    %6282 = vmatpush1.msra.mxu0 %v6281
    %v6283 = vand.u32 %v3173, 4294901760
    %v6284 = vsub.f32 %v3173, %v6283
    %v6285 = vand.u32 %v6284, 4294901760
    %v6286 = vsub.f32 %v6284, %v6285
    %v6287 = vand.u32 %v6286, 4294901760
    %6288 = vmatprep.subr.mxu0 %v6287
    %v6289 = vand.u32 %v3172, 4294901760
    %v6290 = vsub.f32 %v3172, %v6289
    %v6291 = vand.u32 %v6290, 4294901760
    %v6292 = vsub.f32 %v6290, %v6291
    %v6293 = vand.u32 %v6292, 4294901760
    %6294 = vmatpush1.msra.mxu0 %v6293
    %v6295 = vand.u32 %v3177, 4294901760
    %v6296 = vsub.f32 %v3177, %v6295
    %v6297 = vand.u32 %v6296, 4294901760
    %v6298 = vsub.f32 %v6296, %v6297
    %v6299 = vand.u32 %v6298, 4294901760
    %6300 = vmatprep.subr.mxu0 %v6299
    %v6301 = vand.u32 %v3176, 4294901760
    %v6302 = vsub.f32 %v3176, %v6301
    %v6303 = vand.u32 %v6302, 4294901760
    %v6304 = vsub.f32 %v6302, %v6303
    %v6305 = vand.u32 %v6304, 4294901760
    %6306 = vmatpush1.msra.mxu0 %v6305
    %v6307 = vand.u32 %v3181, 4294901760
    %v6308 = vsub.f32 %v3181, %v6307
    %v6309 = vand.u32 %v6308, 4294901760
    %v6310 = vsub.f32 %v6308, %v6309
    %v6311 = vand.u32 %v6310, 4294901760
    %6312 = vmatprep.subr.mxu0 %v6311
    %v6313 = vand.u32 %v3180, 4294901760
    %v6314 = vsub.f32 %v3180, %v6313
    %v6315 = vand.u32 %v6314, 4294901760
    %v6316 = vsub.f32 %v6314, %v6315
    %v6317 = vand.u32 %v6316, 4294901760
    %6318 = vmatpush1.msra.mxu0 %v6317
    %v6319 = vand.u32 %v3185, 4294901760
    %v6320 = vsub.f32 %v3185, %v6319
    %v6321 = vand.u32 %v6320, 4294901760
    %v6322 = vsub.f32 %v6320, %v6321
    %v6323 = vand.u32 %v6322, 4294901760
    %6324 = vmatprep.subr.mxu0 %v6323
    %v6325 = vand.u32 %v3184, 4294901760
    %v6326 = vsub.f32 %v3184, %v6325
    %v6327 = vand.u32 %v6326, 4294901760
    %v6328 = vsub.f32 %v6326, %v6327
    %v6329 = vand.u32 %v6328, 4294901760
    %6330 = vmatpush1.msra.mxu0 %v6329
    %v6331 = vand.u32 %v3189, 4294901760
    %v6332 = vsub.f32 %v3189, %v6331
    %v6333 = vand.u32 %v6332, 4294901760
    %v6334 = vsub.f32 %v6332, %v6333
    %v6335 = vand.u32 %v6334, 4294901760
    %6336 = vmatprep.subr.mxu0 %v6335
    %v6337 = vand.u32 %v3188, 4294901760
    %v6338 = vsub.f32 %v3188, %v6337
    %v6339 = vand.u32 %v6338, 4294901760
    %v6340 = vsub.f32 %v6338, %v6339
    %v6341 = vand.u32 %v6340, 4294901760
    %6342 = vmatpush1.msra.mxu0 %v6341
    %v6343 = vand.u32 %v3193, 4294901760
    %v6344 = vsub.f32 %v3193, %v6343
    %v6345 = vand.u32 %v6344, 4294901760
    %v6346 = vsub.f32 %v6344, %v6345
    %v6347 = vand.u32 %v6346, 4294901760
    %6348 = vmatprep.subr.mxu0 %v6347
    %v6349 = vand.u32 %v3192, 4294901760
    %v6350 = vsub.f32 %v3192, %v6349
    %v6351 = vand.u32 %v6350, 4294901760
    %v6352 = vsub.f32 %v6350, %v6351
    %v6353 = vand.u32 %v6352, 4294901760
    %6354 = vmatpush1.msra.mxu0 %v6353
    %v6355 = vand.u32 %v3197, 4294901760
    %v6356 = vsub.f32 %v3197, %v6355
    %v6357 = vand.u32 %v6356, 4294901760
    %v6358 = vsub.f32 %v6356, %v6357
    %v6359 = vand.u32 %v6358, 4294901760
    %6360 = vmatprep.subr.mxu0 %v6359
    %v6361 = vand.u32 %v3196, 4294901760
    %v6362 = vsub.f32 %v3196, %v6361
    %v6363 = vand.u32 %v6362, 4294901760
    %v6364 = vsub.f32 %v6362, %v6363
    %v6365 = vand.u32 %v6364, 4294901760
    %6366 = vmatpush1.msra.mxu0 %v6365
    %v6367 = vand.u32 %v3201, 4294901760
    %v6368 = vsub.f32 %v3201, %v6367
    %v6369 = vand.u32 %v6368, 4294901760
    %v6370 = vsub.f32 %v6368, %v6369
    %v6371 = vand.u32 %v6370, 4294901760
    %6372 = vmatprep.subr.mxu0 %v6371
    %v6373 = vand.u32 %v3200, 4294901760
    %v6374 = vsub.f32 %v3200, %v6373
    %v6375 = vand.u32 %v6374, 4294901760
    %v6376 = vsub.f32 %v6374, %v6375
    %v6377 = vand.u32 %v6376, 4294901760
    %6378 = vmatpush1.msra.mxu0 %v6377
    %v6379 = vand.u32 %v3205, 4294901760
    %v6380 = vsub.f32 %v3205, %v6379
    %v6381 = vand.u32 %v6380, 4294901760
    %v6382 = vsub.f32 %v6380, %v6381
    %v6383 = vand.u32 %v6382, 4294901760
    %6384 = vmatprep.subr.mxu0 %v6383
    %v6385 = vand.u32 %v3204, 4294901760
    %v6386 = vsub.f32 %v3204, %v6385
    %v6387 = vand.u32 %v6386, 4294901760
    %v6388 = vsub.f32 %v6386, %v6387
    %v6389 = vand.u32 %v6388, 4294901760
    %6390 = vmatpush1.msra.mxu0 %v6389
    %v6391 = vand.u32 %v3209, 4294901760
    %v6392 = vsub.f32 %v3209, %v6391
    %v6393 = vand.u32 %v6392, 4294901760
    %v6394 = vsub.f32 %v6392, %v6393
    %v6395 = vand.u32 %v6394, 4294901760
    %6396 = vmatprep.subr.mxu0 %v6395
    %v6397 = vand.u32 %v3208, 4294901760
    %v6398 = vsub.f32 %v3208, %v6397
    %v6399 = vand.u32 %v6398, 4294901760
    %v6400 = vsub.f32 %v6398, %v6399
    %v6401 = vand.u32 %v6400, 4294901760
    %6402 = vmatpush1.msra.mxu0 %v6401
    %v6403 = vand.u32 %v3213, 4294901760
    %v6404 = vsub.f32 %v3213, %v6403
    %v6405 = vand.u32 %v6404, 4294901760
    %v6406 = vsub.f32 %v6404, %v6405
    %v6407 = vand.u32 %v6406, 4294901760
    %6408 = vmatprep.subr.mxu0 %v6407
    %v6409 = vand.u32 %v3212, 4294901760
    %v6410 = vsub.f32 %v3212, %v6409
    %v6411 = vand.u32 %v6410, 4294901760
    %v6412 = vsub.f32 %v6410, %v6411
    %v6413 = vand.u32 %v6412, 4294901760
    %6414 = vmatpush1.msra.mxu0 %v6413
    %v6415 = vand.u32 %v3217, 4294901760
    %v6416 = vsub.f32 %v3217, %v6415
    %v6417 = vand.u32 %v6416, 4294901760
    %v6418 = vsub.f32 %v6416, %v6417
    %v6419 = vand.u32 %v6418, 4294901760
    %6420 = vmatprep.subr.mxu0 %v6419
    %v6421 = vand.u32 %v3216, 4294901760
    %v6422 = vsub.f32 %v3216, %v6421
    %v6423 = vand.u32 %v6422, 4294901760
    %v6424 = vsub.f32 %v6422, %v6423
    %v6425 = vand.u32 %v6424, 4294901760
    %6426 = vmatpush1.msra.mxu0 %v6425
    %v6427 = vand.u32 %v3221, 4294901760
    %v6428 = vsub.f32 %v3221, %v6427
    %v6429 = vand.u32 %v6428, 4294901760
    %v6430 = vsub.f32 %v6428, %v6429
    %v6431 = vand.u32 %v6430, 4294901760
    %6432 = vmatprep.subr.mxu0 %v6431
    %v6433 = vand.u32 %v3220, 4294901760
    %v6434 = vsub.f32 %v3220, %v6433
    %v6435 = vand.u32 %v6434, 4294901760
    %v6436 = vsub.f32 %v6434, %v6435
    %v6437 = vand.u32 %v6436, 4294901760
    %6438 = vmatpush1.msra.mxu0 %v6437
    %v6439 = vand.u32 %v3225, 4294901760
    %v6440 = vsub.f32 %v3225, %v6439
    %v6441 = vand.u32 %v6440, 4294901760
    %v6442 = vsub.f32 %v6440, %v6441
    %v6443 = vand.u32 %v6442, 4294901760
    %6444 = vmatprep.subr.mxu0 %v6443
    %v6445 = vand.u32 %v3224, 4294901760
    %v6446 = vsub.f32 %v3224, %v6445
    %v6447 = vand.u32 %v6446, 4294901760
    %v6448 = vsub.f32 %v6446, %v6447
    %v6449 = vand.u32 %v6448, 4294901760
    %6450 = vmatpush1.msra.mxu0 %v6449
    %v6451 = vand.u32 %v3229, 4294901760
    %v6452 = vsub.f32 %v3229, %v6451
    %v6453 = vand.u32 %v6452, 4294901760
    %v6454 = vsub.f32 %v6452, %v6453
    %v6455 = vand.u32 %v6454, 4294901760
    %6456 = vmatprep.subr.mxu0 %v6455
    %v6457 = vand.u32 %v3228, 4294901760
    %v6458 = vsub.f32 %v3228, %v6457
    %v6459 = vand.u32 %v6458, 4294901760
    %v6460 = vsub.f32 %v6458, %v6459
    %v6461 = vand.u32 %v6460, 4294901760
    %6462 = vmatpush1.msra.mxu0 %v6461
    %v6463 = vand.u32 %v5932, 4294901760
    %6464 = vmatprep.mubr.f32.mxu0 %v6463
    %v6465 = vand.u32 %v3099, 4294901760
    %6466 = vmatmul.mubr.f32.gmra.mrb[0].mxu0 %v6465
    %v6467 = vpop.f32.mrb[0].mxu0
    %v6468 = vadd.f32 %v6075, %v6467
    %v6469 = vpop.f32.mrb[0].mxu0
    %v6470 = vadd.f32 %v6077, %v6469
    %6471 = vdwg.mxu0
    %v6472 = vand.u32 %v3105, 4294901760
    %v6473 = vsub.f32 %v3105, %v6472
    %6474 = vmatprep.subr.mxu0 %v6473
    %v6475 = vand.u32 %v3104, 4294901760
    %v6476 = vsub.f32 %v3104, %v6475
    %6477 = vmatpush1.msra.mxu0 %v6476
    %v6478 = vand.u32 %v3109, 4294901760
    %v6479 = vsub.f32 %v3109, %v6478
    %6480 = vmatprep.subr.mxu0 %v6479
    %v6481 = vand.u32 %v3108, 4294901760
    %v6482 = vsub.f32 %v3108, %v6481
    %6483 = vmatpush1.msra.mxu0 %v6482
    %v6484 = vand.u32 %v3113, 4294901760
    %v6485 = vsub.f32 %v3113, %v6484
    %6486 = vmatprep.subr.mxu0 %v6485
    %v6487 = vand.u32 %v3112, 4294901760
    %v6488 = vsub.f32 %v3112, %v6487
    %6489 = vmatpush1.msra.mxu0 %v6488
    %v6490 = vand.u32 %v3117, 4294901760
    %v6491 = vsub.f32 %v3117, %v6490
    %6492 = vmatprep.subr.mxu0 %v6491
    %v6493 = vand.u32 %v3116, 4294901760
    %v6494 = vsub.f32 %v3116, %v6493
    %6495 = vmatpush1.msra.mxu0 %v6494
    %v6496 = vand.u32 %v3121, 4294901760
    %v6497 = vsub.f32 %v3121, %v6496
    %6498 = vmatprep.subr.mxu0 %v6497
    %v6499 = vand.u32 %v3120, 4294901760
    %v6500 = vsub.f32 %v3120, %v6499
    %6501 = vmatpush1.msra.mxu0 %v6500
    %v6502 = vand.u32 %v3125, 4294901760
    %v6503 = vsub.f32 %v3125, %v6502
    %6504 = vmatprep.subr.mxu0 %v6503
    %v6505 = vand.u32 %v3124, 4294901760
    %v6506 = vsub.f32 %v3124, %v6505
    %6507 = vmatpush1.msra.mxu0 %v6506
    %v6508 = vand.u32 %v3129, 4294901760
    %v6509 = vsub.f32 %v3129, %v6508
    %6510 = vmatprep.subr.mxu0 %v6509
    %v6511 = vand.u32 %v3128, 4294901760
    %v6512 = vsub.f32 %v3128, %v6511
    %6513 = vmatpush1.msra.mxu0 %v6512
    %v6514 = vand.u32 %v3133, 4294901760
    %v6515 = vsub.f32 %v3133, %v6514
    %6516 = vmatprep.subr.mxu0 %v6515
    %v6517 = vand.u32 %v3132, 4294901760
    %v6518 = vsub.f32 %v3132, %v6517
    %6519 = vmatpush1.msra.mxu0 %v6518
    %v6520 = vand.u32 %v3137, 4294901760
    %v6521 = vsub.f32 %v3137, %v6520
    %6522 = vmatprep.subr.mxu0 %v6521
    %v6523 = vand.u32 %v3136, 4294901760
    %v6524 = vsub.f32 %v3136, %v6523
    %6525 = vmatpush1.msra.mxu0 %v6524
    %v6526 = vand.u32 %v3141, 4294901760
    %v6527 = vsub.f32 %v3141, %v6526
    %6528 = vmatprep.subr.mxu0 %v6527
    %v6529 = vand.u32 %v3140, 4294901760
    %v6530 = vsub.f32 %v3140, %v6529
    %6531 = vmatpush1.msra.mxu0 %v6530
    %v6532 = vand.u32 %v3145, 4294901760
    %v6533 = vsub.f32 %v3145, %v6532
    %6534 = vmatprep.subr.mxu0 %v6533
    %v6535 = vand.u32 %v3144, 4294901760
    %v6536 = vsub.f32 %v3144, %v6535
    %6537 = vmatpush1.msra.mxu0 %v6536
    %v6538 = vand.u32 %v3149, 4294901760
    %v6539 = vsub.f32 %v3149, %v6538
    %6540 = vmatprep.subr.mxu0 %v6539
    %v6541 = vand.u32 %v3148, 4294901760
    %v6542 = vsub.f32 %v3148, %v6541
    %6543 = vmatpush1.msra.mxu0 %v6542
    %v6544 = vand.u32 %v3153, 4294901760
    %v6545 = vsub.f32 %v3153, %v6544
    %6546 = vmatprep.subr.mxu0 %v6545
    %v6547 = vand.u32 %v3152, 4294901760
    %v6548 = vsub.f32 %v3152, %v6547
    %6549 = vmatpush1.msra.mxu0 %v6548
    %v6550 = vand.u32 %v3157, 4294901760
    %v6551 = vsub.f32 %v3157, %v6550
    %6552 = vmatprep.subr.mxu0 %v6551
    %v6553 = vand.u32 %v3156, 4294901760
    %v6554 = vsub.f32 %v3156, %v6553
    %6555 = vmatpush1.msra.mxu0 %v6554
    %v6556 = vand.u32 %v3161, 4294901760
    %v6557 = vsub.f32 %v3161, %v6556
    %6558 = vmatprep.subr.mxu0 %v6557
    %v6559 = vand.u32 %v3160, 4294901760
    %v6560 = vsub.f32 %v3160, %v6559
    %6561 = vmatpush1.msra.mxu0 %v6560
    %v6562 = vand.u32 %v3165, 4294901760
    %v6563 = vsub.f32 %v3165, %v6562
    %6564 = vmatprep.subr.mxu0 %v6563
    %v6565 = vand.u32 %v3164, 4294901760
    %v6566 = vsub.f32 %v3164, %v6565
    %6567 = vmatpush1.msra.mxu0 %v6566
    %v6568 = vand.u32 %v3169, 4294901760
    %v6569 = vsub.f32 %v3169, %v6568
    %6570 = vmatprep.subr.mxu0 %v6569
    %v6571 = vand.u32 %v3168, 4294901760
    %v6572 = vsub.f32 %v3168, %v6571
    %6573 = vmatpush1.msra.mxu0 %v6572
    %v6574 = vand.u32 %v3173, 4294901760
    %v6575 = vsub.f32 %v3173, %v6574
    %6576 = vmatprep.subr.mxu0 %v6575
    %v6577 = vand.u32 %v3172, 4294901760
    %v6578 = vsub.f32 %v3172, %v6577
    %6579 = vmatpush1.msra.mxu0 %v6578
    %v6580 = vand.u32 %v3177, 4294901760
    %v6581 = vsub.f32 %v3177, %v6580
    %6582 = vmatprep.subr.mxu0 %v6581
    %v6583 = vand.u32 %v3176, 4294901760
    %v6584 = vsub.f32 %v3176, %v6583
    %6585 = vmatpush1.msra.mxu0 %v6584
    %v6586 = vand.u32 %v3181, 4294901760
    %v6587 = vsub.f32 %v3181, %v6586
    %6588 = vmatprep.subr.mxu0 %v6587
    %v6589 = vand.u32 %v3180, 4294901760
    %v6590 = vsub.f32 %v3180, %v6589
    %6591 = vmatpush1.msra.mxu0 %v6590
    %v6592 = vand.u32 %v3185, 4294901760
    %v6593 = vsub.f32 %v3185, %v6592
    %6594 = vmatprep.subr.mxu0 %v6593
    %v6595 = vand.u32 %v3184, 4294901760
    %v6596 = vsub.f32 %v3184, %v6595
    %6597 = vmatpush1.msra.mxu0 %v6596
    %v6598 = vand.u32 %v3189, 4294901760
    %v6599 = vsub.f32 %v3189, %v6598
    %6600 = vmatprep.subr.mxu0 %v6599
    %v6601 = vand.u32 %v3188, 4294901760
    %v6602 = vsub.f32 %v3188, %v6601
    %6603 = vmatpush1.msra.mxu0 %v6602
    %v6604 = vand.u32 %v3193, 4294901760
    %v6605 = vsub.f32 %v3193, %v6604
    %6606 = vmatprep.subr.mxu0 %v6605
    %v6607 = vand.u32 %v3192, 4294901760
    %v6608 = vsub.f32 %v3192, %v6607
    %6609 = vmatpush1.msra.mxu0 %v6608
    %v6610 = vand.u32 %v3197, 4294901760
    %v6611 = vsub.f32 %v3197, %v6610
    %6612 = vmatprep.subr.mxu0 %v6611
    %v6613 = vand.u32 %v3196, 4294901760
    %v6614 = vsub.f32 %v3196, %v6613
    %6615 = vmatpush1.msra.mxu0 %v6614
    %v6616 = vand.u32 %v3201, 4294901760
    %v6617 = vsub.f32 %v3201, %v6616
    %6618 = vmatprep.subr.mxu0 %v6617
    %v6619 = vand.u32 %v3200, 4294901760
    %v6620 = vsub.f32 %v3200, %v6619
    %6621 = vmatpush1.msra.mxu0 %v6620
    %v6622 = vand.u32 %v3205, 4294901760
    %v6623 = vsub.f32 %v3205, %v6622
    %6624 = vmatprep.subr.mxu0 %v6623
    %v6625 = vand.u32 %v3204, 4294901760
    %v6626 = vsub.f32 %v3204, %v6625
    %6627 = vmatpush1.msra.mxu0 %v6626
    %v6628 = vand.u32 %v3209, 4294901760
    %v6629 = vsub.f32 %v3209, %v6628
    %6630 = vmatprep.subr.mxu0 %v6629
    %v6631 = vand.u32 %v3208, 4294901760
    %v6632 = vsub.f32 %v3208, %v6631
    %6633 = vmatpush1.msra.mxu0 %v6632
    %v6634 = vand.u32 %v3213, 4294901760
    %v6635 = vsub.f32 %v3213, %v6634
    %6636 = vmatprep.subr.mxu0 %v6635
    %v6637 = vand.u32 %v3212, 4294901760
    %v6638 = vsub.f32 %v3212, %v6637
    %6639 = vmatpush1.msra.mxu0 %v6638
    %v6640 = vand.u32 %v3217, 4294901760
    %v6641 = vsub.f32 %v3217, %v6640
    %6642 = vmatprep.subr.mxu0 %v6641
    %v6643 = vand.u32 %v3216, 4294901760
    %v6644 = vsub.f32 %v3216, %v6643
    %6645 = vmatpush1.msra.mxu0 %v6644
    %v6646 = vand.u32 %v3221, 4294901760
    %v6647 = vsub.f32 %v3221, %v6646
    %6648 = vmatprep.subr.mxu0 %v6647
    %v6649 = vand.u32 %v3220, 4294901760
    %v6650 = vsub.f32 %v3220, %v6649
    %6651 = vmatpush1.msra.mxu0 %v6650
    %v6652 = vand.u32 %v3225, 4294901760
    %v6653 = vsub.f32 %v3225, %v6652
    %6654 = vmatprep.subr.mxu0 %v6653
    %v6655 = vand.u32 %v3224, 4294901760
    %v6656 = vsub.f32 %v3224, %v6655
    %6657 = vmatpush1.msra.mxu0 %v6656
    %v6658 = vand.u32 %v3229, 4294901760
    %v6659 = vsub.f32 %v3229, %v6658
    %6660 = vmatprep.subr.mxu0 %v6659
    %v6661 = vand.u32 %v3228, 4294901760
    %v6662 = vsub.f32 %v3228, %v6661
    %6663 = vmatpush1.msra.mxu0 %v6662
    %v6664 = vand.u32 %v5932, 4294901760
    %v6665 = vsub.f32 %v5932, %v6664
    %6666 = vmatprep.mubr.f32.mxu0 %v6665
    %v6667 = vand.u32 %v3099, 4294901760
    %v6668 = vsub.f32 %v3099, %v6667
    %6669 = vmatmul.mubr.f32.gmra.mrb[0].mxu0 %v6668
    %v6670 = vpop.f32.mrb[0].mxu0
    %v6671 = vadd.f32 %v6468, %v6670
    %v6672 = vpop.f32.mrb[0].mxu0
    %v6673 = vadd.f32 %v6470, %v6672
    %6674 = vdwg.mxu0
    %v6675 = vand.u32 %v3105, 4294901760
    %6676 = vmatprep.subr.mxu0 %v6675
    %v6677 = vand.u32 %v3104, 4294901760
    %6678 = vmatpush1.msra.mxu0 %v6677
    %v6679 = vand.u32 %v3109, 4294901760
    %6680 = vmatprep.subr.mxu0 %v6679
    %v6681 = vand.u32 %v3108, 4294901760
    %6682 = vmatpush1.msra.mxu0 %v6681
    %v6683 = vand.u32 %v3113, 4294901760
    %6684 = vmatprep.subr.mxu0 %v6683
    %v6685 = vand.u32 %v3112, 4294901760
    %6686 = vmatpush1.msra.mxu0 %v6685
    %v6687 = vand.u32 %v3117, 4294901760
    %6688 = vmatprep.subr.mxu0 %v6687
    %v6689 = vand.u32 %v3116, 4294901760
    %6690 = vmatpush1.msra.mxu0 %v6689
    %v6691 = vand.u32 %v3121, 4294901760
    %6692 = vmatprep.subr.mxu0 %v6691
    %v6693 = vand.u32 %v3120, 4294901760
    %6694 = vmatpush1.msra.mxu0 %v6693
    %v6695 = vand.u32 %v3125, 4294901760
    %6696 = vmatprep.subr.mxu0 %v6695
    %v6697 = vand.u32 %v3124, 4294901760
    %6698 = vmatpush1.msra.mxu0 %v6697
    %v6699 = vand.u32 %v3129, 4294901760
    %6700 = vmatprep.subr.mxu0 %v6699
    %v6701 = vand.u32 %v3128, 4294901760
    %6702 = vmatpush1.msra.mxu0 %v6701
    %v6703 = vand.u32 %v3133, 4294901760
    %6704 = vmatprep.subr.mxu0 %v6703
    %v6705 = vand.u32 %v3132, 4294901760
    %6706 = vmatpush1.msra.mxu0 %v6705
    %v6707 = vand.u32 %v3137, 4294901760
    %6708 = vmatprep.subr.mxu0 %v6707
    %v6709 = vand.u32 %v3136, 4294901760
    %6710 = vmatpush1.msra.mxu0 %v6709
    %v6711 = vand.u32 %v3141, 4294901760
    %6712 = vmatprep.subr.mxu0 %v6711
    %v6713 = vand.u32 %v3140, 4294901760
    %6714 = vmatpush1.msra.mxu0 %v6713
    %v6715 = vand.u32 %v3145, 4294901760
    %6716 = vmatprep.subr.mxu0 %v6715
    %v6717 = vand.u32 %v3144, 4294901760
    %6718 = vmatpush1.msra.mxu0 %v6717
    %v6719 = vand.u32 %v3149, 4294901760
    %6720 = vmatprep.subr.mxu0 %v6719
    %v6721 = vand.u32 %v3148, 4294901760
    %6722 = vmatpush1.msra.mxu0 %v6721
    %v6723 = vand.u32 %v3153, 4294901760
    %6724 = vmatprep.subr.mxu0 %v6723
    %v6725 = vand.u32 %v3152, 4294901760
    %6726 = vmatpush1.msra.mxu0 %v6725
    %v6727 = vand.u32 %v3157, 4294901760
    %6728 = vmatprep.subr.mxu0 %v6727
    %v6729 = vand.u32 %v3156, 4294901760
    %6730 = vmatpush1.msra.mxu0 %v6729
    %v6731 = vand.u32 %v3161, 4294901760
    %6732 = vmatprep.subr.mxu0 %v6731
    %v6733 = vand.u32 %v3160, 4294901760
    %6734 = vmatpush1.msra.mxu0 %v6733
    %v6735 = vand.u32 %v3165, 4294901760
    %6736 = vmatprep.subr.mxu0 %v6735
    %v6737 = vand.u32 %v3164, 4294901760
    %6738 = vmatpush1.msra.mxu0 %v6737
    %v6739 = vand.u32 %v3169, 4294901760
    %6740 = vmatprep.subr.mxu0 %v6739
    %v6741 = vand.u32 %v3168, 4294901760
    %6742 = vmatpush1.msra.mxu0 %v6741
    %v6743 = vand.u32 %v3173, 4294901760
    %6744 = vmatprep.subr.mxu0 %v6743
    %v6745 = vand.u32 %v3172, 4294901760
    %6746 = vmatpush1.msra.mxu0 %v6745
    %v6747 = vand.u32 %v3177, 4294901760
    %6748 = vmatprep.subr.mxu0 %v6747
    %v6749 = vand.u32 %v3176, 4294901760
    %6750 = vmatpush1.msra.mxu0 %v6749
    %v6751 = vand.u32 %v3181, 4294901760
    %6752 = vmatprep.subr.mxu0 %v6751
    %v6753 = vand.u32 %v3180, 4294901760
    %6754 = vmatpush1.msra.mxu0 %v6753
    %v6755 = vand.u32 %v3185, 4294901760
    %6756 = vmatprep.subr.mxu0 %v6755
    %v6757 = vand.u32 %v3184, 4294901760
    %6758 = vmatpush1.msra.mxu0 %v6757
    %v6759 = vand.u32 %v3189, 4294901760
    %6760 = vmatprep.subr.mxu0 %v6759
    %v6761 = vand.u32 %v3188, 4294901760
    %6762 = vmatpush1.msra.mxu0 %v6761
    %v6763 = vand.u32 %v3193, 4294901760
    %6764 = vmatprep.subr.mxu0 %v6763
    %v6765 = vand.u32 %v3192, 4294901760
    %6766 = vmatpush1.msra.mxu0 %v6765
    %v6767 = vand.u32 %v3197, 4294901760
    %6768 = vmatprep.subr.mxu0 %v6767
    %v6769 = vand.u32 %v3196, 4294901760
    %6770 = vmatpush1.msra.mxu0 %v6769
    %v6771 = vand.u32 %v3201, 4294901760
    %6772 = vmatprep.subr.mxu0 %v6771
    %v6773 = vand.u32 %v3200, 4294901760
    %6774 = vmatpush1.msra.mxu0 %v6773
    %v6775 = vand.u32 %v3205, 4294901760
    %6776 = vmatprep.subr.mxu0 %v6775
    %v6777 = vand.u32 %v3204, 4294901760
    %6778 = vmatpush1.msra.mxu0 %v6777
    %v6779 = vand.u32 %v3209, 4294901760
    %6780 = vmatprep.subr.mxu0 %v6779
    %v6781 = vand.u32 %v3208, 4294901760
    %6782 = vmatpush1.msra.mxu0 %v6781
    %v6783 = vand.u32 %v3213, 4294901760
    %6784 = vmatprep.subr.mxu0 %v6783
    %v6785 = vand.u32 %v3212, 4294901760
    %6786 = vmatpush1.msra.mxu0 %v6785
    %v6787 = vand.u32 %v3217, 4294901760
    %6788 = vmatprep.subr.mxu0 %v6787
    %v6789 = vand.u32 %v3216, 4294901760
    %6790 = vmatpush1.msra.mxu0 %v6789
    %v6791 = vand.u32 %v3221, 4294901760
    %6792 = vmatprep.subr.mxu0 %v6791
    %v6793 = vand.u32 %v3220, 4294901760
    %6794 = vmatpush1.msra.mxu0 %v6793
    %v6795 = vand.u32 %v3225, 4294901760
    %6796 = vmatprep.subr.mxu0 %v6795
    %v6797 = vand.u32 %v3224, 4294901760
    %6798 = vmatpush1.msra.mxu0 %v6797
    %v6799 = vand.u32 %v3229, 4294901760
    %6800 = vmatprep.subr.mxu0 %v6799
    %v6801 = vand.u32 %v3228, 4294901760
    %6802 = vmatpush1.msra.mxu0 %v6801
    %v6803 = vand.u32 %v5932, 4294901760
    %v6804 = vsub.f32 %v5932, %v6803
    %v6805 = vand.u32 %v6804, 4294901760
    %6806 = vmatprep.mubr.f32.mxu0 %v6805
    %v6807 = vand.u32 %v3099, 4294901760
    %v6808 = vsub.f32 %v3099, %v6807
    %v6809 = vand.u32 %v6808, 4294901760
    %6810 = vmatmul.mubr.f32.gmra.mrb[0].mxu0 %v6809
    %v6811 = vpop.f32.mrb[0].mxu0
    %v6812 = vadd.f32 %v6671, %v6811
    %v6813 = vpop.f32.mrb[0].mxu0
    %v6814 = vadd.f32 %v6673, %v6813
    %6815 = vdwg.mxu0
    %v6816 = vand.u32 %v3105, 4294901760
    %v6817 = vsub.f32 %v3105, %v6816
    %v6818 = vand.u32 %v6817, 4294901760
    %6819 = vmatprep.subr.mxu0 %v6818
    %v6820 = vand.u32 %v3104, 4294901760
    %v6821 = vsub.f32 %v3104, %v6820
    %v6822 = vand.u32 %v6821, 4294901760
    %6823 = vmatpush1.msra.mxu0 %v6822
    %v6824 = vand.u32 %v3109, 4294901760
    %v6825 = vsub.f32 %v3109, %v6824
    %v6826 = vand.u32 %v6825, 4294901760
    %6827 = vmatprep.subr.mxu0 %v6826
    %v6828 = vand.u32 %v3108, 4294901760
    %v6829 = vsub.f32 %v3108, %v6828
    %v6830 = vand.u32 %v6829, 4294901760
    %6831 = vmatpush1.msra.mxu0 %v6830
    %v6832 = vand.u32 %v3113, 4294901760
    %v6833 = vsub.f32 %v3113, %v6832
    %v6834 = vand.u32 %v6833, 4294901760
    %6835 = vmatprep.subr.mxu0 %v6834
    %v6836 = vand.u32 %v3112, 4294901760
    %v6837 = vsub.f32 %v3112, %v6836
    %v6838 = vand.u32 %v6837, 4294901760
    %6839 = vmatpush1.msra.mxu0 %v6838
    %v6840 = vand.u32 %v3117, 4294901760
    %v6841 = vsub.f32 %v3117, %v6840
    %v6842 = vand.u32 %v6841, 4294901760
    %6843 = vmatprep.subr.mxu0 %v6842
    %v6844 = vand.u32 %v3116, 4294901760
    %v6845 = vsub.f32 %v3116, %v6844
    %v6846 = vand.u32 %v6845, 4294901760
    %6847 = vmatpush1.msra.mxu0 %v6846
    %v6848 = vand.u32 %v3121, 4294901760
    %v6849 = vsub.f32 %v3121, %v6848
    %v6850 = vand.u32 %v6849, 4294901760
    %6851 = vmatprep.subr.mxu0 %v6850
    %v6852 = vand.u32 %v3120, 4294901760
    %v6853 = vsub.f32 %v3120, %v6852
    %v6854 = vand.u32 %v6853, 4294901760
    %6855 = vmatpush1.msra.mxu0 %v6854
    %v6856 = vand.u32 %v3125, 4294901760
    %v6857 = vsub.f32 %v3125, %v6856
    %v6858 = vand.u32 %v6857, 4294901760
    %6859 = vmatprep.subr.mxu0 %v6858
    %v6860 = vand.u32 %v3124, 4294901760
    %v6861 = vsub.f32 %v3124, %v6860
    %v6862 = vand.u32 %v6861, 4294901760
    %6863 = vmatpush1.msra.mxu0 %v6862
    %v6864 = vand.u32 %v3129, 4294901760
    %v6865 = vsub.f32 %v3129, %v6864
    %v6866 = vand.u32 %v6865, 4294901760
    %6867 = vmatprep.subr.mxu0 %v6866
    %v6868 = vand.u32 %v3128, 4294901760
    %v6869 = vsub.f32 %v3128, %v6868
    %v6870 = vand.u32 %v6869, 4294901760
    %6871 = vmatpush1.msra.mxu0 %v6870
    %v6872 = vand.u32 %v3133, 4294901760
    %v6873 = vsub.f32 %v3133, %v6872
    %v6874 = vand.u32 %v6873, 4294901760
    %6875 = vmatprep.subr.mxu0 %v6874
    %v6876 = vand.u32 %v3132, 4294901760
    %v6877 = vsub.f32 %v3132, %v6876
    %v6878 = vand.u32 %v6877, 4294901760
    %6879 = vmatpush1.msra.mxu0 %v6878
    %v6880 = vand.u32 %v3137, 4294901760
    %v6881 = vsub.f32 %v3137, %v6880
    %v6882 = vand.u32 %v6881, 4294901760
    %6883 = vmatprep.subr.mxu0 %v6882
    %v6884 = vand.u32 %v3136, 4294901760
    %v6885 = vsub.f32 %v3136, %v6884
    %v6886 = vand.u32 %v6885, 4294901760
    %6887 = vmatpush1.msra.mxu0 %v6886
    %v6888 = vand.u32 %v3141, 4294901760
    %v6889 = vsub.f32 %v3141, %v6888
    %v6890 = vand.u32 %v6889, 4294901760
    %6891 = vmatprep.subr.mxu0 %v6890
    %v6892 = vand.u32 %v3140, 4294901760
    %v6893 = vsub.f32 %v3140, %v6892
    %v6894 = vand.u32 %v6893, 4294901760
    %6895 = vmatpush1.msra.mxu0 %v6894
    %v6896 = vand.u32 %v3145, 4294901760
    %v6897 = vsub.f32 %v3145, %v6896
    %v6898 = vand.u32 %v6897, 4294901760
    %6899 = vmatprep.subr.mxu0 %v6898
    %v6900 = vand.u32 %v3144, 4294901760
    %v6901 = vsub.f32 %v3144, %v6900
    %v6902 = vand.u32 %v6901, 4294901760
    %6903 = vmatpush1.msra.mxu0 %v6902
    %v6904 = vand.u32 %v3149, 4294901760
    %v6905 = vsub.f32 %v3149, %v6904
    %v6906 = vand.u32 %v6905, 4294901760
    %6907 = vmatprep.subr.mxu0 %v6906
    %v6908 = vand.u32 %v3148, 4294901760
    %v6909 = vsub.f32 %v3148, %v6908
    %v6910 = vand.u32 %v6909, 4294901760
    %6911 = vmatpush1.msra.mxu0 %v6910
    %v6912 = vand.u32 %v3153, 4294901760
    %v6913 = vsub.f32 %v3153, %v6912
    %v6914 = vand.u32 %v6913, 4294901760
    %6915 = vmatprep.subr.mxu0 %v6914
    %v6916 = vand.u32 %v3152, 4294901760
    %v6917 = vsub.f32 %v3152, %v6916
    %v6918 = vand.u32 %v6917, 4294901760
    %6919 = vmatpush1.msra.mxu0 %v6918
    %v6920 = vand.u32 %v3157, 4294901760
    %v6921 = vsub.f32 %v3157, %v6920
    %v6922 = vand.u32 %v6921, 4294901760
    %6923 = vmatprep.subr.mxu0 %v6922
    %v6924 = vand.u32 %v3156, 4294901760
    %v6925 = vsub.f32 %v3156, %v6924
    %v6926 = vand.u32 %v6925, 4294901760
    %6927 = vmatpush1.msra.mxu0 %v6926
    %v6928 = vand.u32 %v3161, 4294901760
    %v6929 = vsub.f32 %v3161, %v6928
    %v6930 = vand.u32 %v6929, 4294901760
    %6931 = vmatprep.subr.mxu0 %v6930
    %v6932 = vand.u32 %v3160, 4294901760
    %v6933 = vsub.f32 %v3160, %v6932
    %v6934 = vand.u32 %v6933, 4294901760
    %6935 = vmatpush1.msra.mxu0 %v6934
    %v6936 = vand.u32 %v3165, 4294901760
    %v6937 = vsub.f32 %v3165, %v6936
    %v6938 = vand.u32 %v6937, 4294901760
    %6939 = vmatprep.subr.mxu0 %v6938
    %v6940 = vand.u32 %v3164, 4294901760
    %v6941 = vsub.f32 %v3164, %v6940
    %v6942 = vand.u32 %v6941, 4294901760
    %6943 = vmatpush1.msra.mxu0 %v6942
    %v6944 = vand.u32 %v3169, 4294901760
    %v6945 = vsub.f32 %v3169, %v6944
    %v6946 = vand.u32 %v6945, 4294901760
    %6947 = vmatprep.subr.mxu0 %v6946
    %v6948 = vand.u32 %v3168, 4294901760
    %v6949 = vsub.f32 %v3168, %v6948
    %v6950 = vand.u32 %v6949, 4294901760
    %6951 = vmatpush1.msra.mxu0 %v6950
    %v6952 = vand.u32 %v3173, 4294901760
    %v6953 = vsub.f32 %v3173, %v6952
    %v6954 = vand.u32 %v6953, 4294901760
    %6955 = vmatprep.subr.mxu0 %v6954
    %v6956 = vand.u32 %v3172, 4294901760
    %v6957 = vsub.f32 %v3172, %v6956
    %v6958 = vand.u32 %v6957, 4294901760
    %6959 = vmatpush1.msra.mxu0 %v6958
    %v6960 = vand.u32 %v3177, 4294901760
    %v6961 = vsub.f32 %v3177, %v6960
    %v6962 = vand.u32 %v6961, 4294901760
    %6963 = vmatprep.subr.mxu0 %v6962
    %v6964 = vand.u32 %v3176, 4294901760
    %v6965 = vsub.f32 %v3176, %v6964
    %v6966 = vand.u32 %v6965, 4294901760
    %6967 = vmatpush1.msra.mxu0 %v6966
    %v6968 = vand.u32 %v3181, 4294901760
    %v6969 = vsub.f32 %v3181, %v6968
    %v6970 = vand.u32 %v6969, 4294901760
    %6971 = vmatprep.subr.mxu0 %v6970
    %v6972 = vand.u32 %v3180, 4294901760
    %v6973 = vsub.f32 %v3180, %v6972
    %v6974 = vand.u32 %v6973, 4294901760
    %6975 = vmatpush1.msra.mxu0 %v6974
    %v6976 = vand.u32 %v3185, 4294901760
    %v6977 = vsub.f32 %v3185, %v6976
    %v6978 = vand.u32 %v6977, 4294901760
    %6979 = vmatprep.subr.mxu0 %v6978
    %v6980 = vand.u32 %v3184, 4294901760
    %v6981 = vsub.f32 %v3184, %v6980
    %v6982 = vand.u32 %v6981, 4294901760
    %6983 = vmatpush1.msra.mxu0 %v6982
    %v6984 = vand.u32 %v3189, 4294901760
    %v6985 = vsub.f32 %v3189, %v6984
    %v6986 = vand.u32 %v6985, 4294901760
    %6987 = vmatprep.subr.mxu0 %v6986
    %v6988 = vand.u32 %v3188, 4294901760
    %v6989 = vsub.f32 %v3188, %v6988
    %v6990 = vand.u32 %v6989, 4294901760
    %6991 = vmatpush1.msra.mxu0 %v6990
    %v6992 = vand.u32 %v3193, 4294901760
    %v6993 = vsub.f32 %v3193, %v6992
    %v6994 = vand.u32 %v6993, 4294901760
    %6995 = vmatprep.subr.mxu0 %v6994
    %v6996 = vand.u32 %v3192, 4294901760
    %v6997 = vsub.f32 %v3192, %v6996
    %v6998 = vand.u32 %v6997, 4294901760
    %6999 = vmatpush1.msra.mxu0 %v6998
    %v7000 = vand.u32 %v3197, 4294901760
    %v7001 = vsub.f32 %v3197, %v7000
    %v7002 = vand.u32 %v7001, 4294901760
    %7003 = vmatprep.subr.mxu0 %v7002
    %v7004 = vand.u32 %v3196, 4294901760
    %v7005 = vsub.f32 %v3196, %v7004
    %v7006 = vand.u32 %v7005, 4294901760
    %7007 = vmatpush1.msra.mxu0 %v7006
    %v7008 = vand.u32 %v3201, 4294901760
    %v7009 = vsub.f32 %v3201, %v7008
    %v7010 = vand.u32 %v7009, 4294901760
    %7011 = vmatprep.subr.mxu0 %v7010
    %v7012 = vand.u32 %v3200, 4294901760
    %v7013 = vsub.f32 %v3200, %v7012
    %v7014 = vand.u32 %v7013, 4294901760
    %7015 = vmatpush1.msra.mxu0 %v7014
    %v7016 = vand.u32 %v3205, 4294901760
    %v7017 = vsub.f32 %v3205, %v7016
    %v7018 = vand.u32 %v7017, 4294901760
    %7019 = vmatprep.subr.mxu0 %v7018
    %v7020 = vand.u32 %v3204, 4294901760
    %v7021 = vsub.f32 %v3204, %v7020
    %v7022 = vand.u32 %v7021, 4294901760
    %7023 = vmatpush1.msra.mxu0 %v7022
    %v7024 = vand.u32 %v3209, 4294901760
    %v7025 = vsub.f32 %v3209, %v7024
    %v7026 = vand.u32 %v7025, 4294901760
    %7027 = vmatprep.subr.mxu0 %v7026
    %v7028 = vand.u32 %v3208, 4294901760
    %v7029 = vsub.f32 %v3208, %v7028
    %v7030 = vand.u32 %v7029, 4294901760
    %7031 = vmatpush1.msra.mxu0 %v7030
    %v7032 = vand.u32 %v3213, 4294901760
    %v7033 = vsub.f32 %v3213, %v7032
    %v7034 = vand.u32 %v7033, 4294901760
    %7035 = vmatprep.subr.mxu0 %v7034
    %v7036 = vand.u32 %v3212, 4294901760
    %v7037 = vsub.f32 %v3212, %v7036
    %v7038 = vand.u32 %v7037, 4294901760
    %7039 = vmatpush1.msra.mxu0 %v7038
    %v7040 = vand.u32 %v3217, 4294901760
    %v7041 = vsub.f32 %v3217, %v7040
    %v7042 = vand.u32 %v7041, 4294901760
    %7043 = vmatprep.subr.mxu0 %v7042
    %v7044 = vand.u32 %v3216, 4294901760
    %v7045 = vsub.f32 %v3216, %v7044
    %v7046 = vand.u32 %v7045, 4294901760
    %7047 = vmatpush1.msra.mxu0 %v7046
    %v7048 = vand.u32 %v3221, 4294901760
    %v7049 = vsub.f32 %v3221, %v7048
    %v7050 = vand.u32 %v7049, 4294901760
    %7051 = vmatprep.subr.mxu0 %v7050
    %v7052 = vand.u32 %v3220, 4294901760
    %v7053 = vsub.f32 %v3220, %v7052
    %v7054 = vand.u32 %v7053, 4294901760
    %7055 = vmatpush1.msra.mxu0 %v7054
    %v7056 = vand.u32 %v3225, 4294901760
    %v7057 = vsub.f32 %v3225, %v7056
    %v7058 = vand.u32 %v7057, 4294901760
    %7059 = vmatprep.subr.mxu0 %v7058
    %v7060 = vand.u32 %v3224, 4294901760
    %v7061 = vsub.f32 %v3224, %v7060
    %v7062 = vand.u32 %v7061, 4294901760
    %7063 = vmatpush1.msra.mxu0 %v7062
    %v7064 = vand.u32 %v3229, 4294901760
    %v7065 = vsub.f32 %v3229, %v7064
    %v7066 = vand.u32 %v7065, 4294901760
    %7067 = vmatprep.subr.mxu0 %v7066
    %v7068 = vand.u32 %v3228, 4294901760
    %v7069 = vsub.f32 %v3228, %v7068
    %v7070 = vand.u32 %v7069, 4294901760
    %7071 = vmatpush1.msra.mxu0 %v7070
    %v7072 = vand.u32 %v5932, 4294901760
    %7073 = vmatprep.mubr.f32.mxu0 %v7072
    %v7074 = vand.u32 %v3099, 4294901760
    %7075 = vmatmul.mubr.f32.gmra.mrb[0].mxu0 %v7074
    %v7076 = vpop.f32.mrb[0].mxu0
    %v7077 = vadd.f32 %v6812, %v7076
    %v7078 = vpop.f32.mrb[0].mxu0
    %v7079 = vadd.f32 %v6814, %v7078
    %7080 = vdwg.mxu0
    %v7081 = vand.u32 %v3105, 4294901760
    %7082 = vmatprep.subr.mxu0 %v7081
    %v7083 = vand.u32 %v3104, 4294901760
    %7084 = vmatpush1.msra.mxu0 %v7083
    %v7085 = vand.u32 %v3109, 4294901760
    %7086 = vmatprep.subr.mxu0 %v7085
    %v7087 = vand.u32 %v3108, 4294901760
    %7088 = vmatpush1.msra.mxu0 %v7087
    %v7089 = vand.u32 %v3113, 4294901760
    %7090 = vmatprep.subr.mxu0 %v7089
    %v7091 = vand.u32 %v3112, 4294901760
    %7092 = vmatpush1.msra.mxu0 %v7091
    %v7093 = vand.u32 %v3117, 4294901760
    %7094 = vmatprep.subr.mxu0 %v7093
    %v7095 = vand.u32 %v3116, 4294901760
    %7096 = vmatpush1.msra.mxu0 %v7095
    %v7097 = vand.u32 %v3121, 4294901760
    %7098 = vmatprep.subr.mxu0 %v7097
    %v7099 = vand.u32 %v3120, 4294901760
    %7100 = vmatpush1.msra.mxu0 %v7099
    %v7101 = vand.u32 %v3125, 4294901760
    %7102 = vmatprep.subr.mxu0 %v7101
    %v7103 = vand.u32 %v3124, 4294901760
    %7104 = vmatpush1.msra.mxu0 %v7103
    %v7105 = vand.u32 %v3129, 4294901760
    %7106 = vmatprep.subr.mxu0 %v7105
    %v7107 = vand.u32 %v3128, 4294901760
    %7108 = vmatpush1.msra.mxu0 %v7107
    %v7109 = vand.u32 %v3133, 4294901760
    %7110 = vmatprep.subr.mxu0 %v7109
    %v7111 = vand.u32 %v3132, 4294901760
    %7112 = vmatpush1.msra.mxu0 %v7111
    %v7113 = vand.u32 %v3137, 4294901760
    %7114 = vmatprep.subr.mxu0 %v7113
    %v7115 = vand.u32 %v3136, 4294901760
    %7116 = vmatpush1.msra.mxu0 %v7115
    %v7117 = vand.u32 %v3141, 4294901760
    %7118 = vmatprep.subr.mxu0 %v7117
    %v7119 = vand.u32 %v3140, 4294901760
    %7120 = vmatpush1.msra.mxu0 %v7119
    %v7121 = vand.u32 %v3145, 4294901760
    %7122 = vmatprep.subr.mxu0 %v7121
    %v7123 = vand.u32 %v3144, 4294901760
    %7124 = vmatpush1.msra.mxu0 %v7123
    %v7125 = vand.u32 %v3149, 4294901760
    %7126 = vmatprep.subr.mxu0 %v7125
    %v7127 = vand.u32 %v3148, 4294901760
    %7128 = vmatpush1.msra.mxu0 %v7127
    %v7129 = vand.u32 %v3153, 4294901760
    %7130 = vmatprep.subr.mxu0 %v7129
    %v7131 = vand.u32 %v3152, 4294901760
    %7132 = vmatpush1.msra.mxu0 %v7131
    %v7133 = vand.u32 %v3157, 4294901760
    %7134 = vmatprep.subr.mxu0 %v7133
    %v7135 = vand.u32 %v3156, 4294901760
    %7136 = vmatpush1.msra.mxu0 %v7135
    %v7137 = vand.u32 %v3161, 4294901760
    %7138 = vmatprep.subr.mxu0 %v7137
    %v7139 = vand.u32 %v3160, 4294901760
    %7140 = vmatpush1.msra.mxu0 %v7139
    %v7141 = vand.u32 %v3165, 4294901760
    %7142 = vmatprep.subr.mxu0 %v7141
    %v7143 = vand.u32 %v3164, 4294901760
    %7144 = vmatpush1.msra.mxu0 %v7143
    %v7145 = vand.u32 %v3169, 4294901760
    %7146 = vmatprep.subr.mxu0 %v7145
    %v7147 = vand.u32 %v3168, 4294901760
    %7148 = vmatpush1.msra.mxu0 %v7147
    %v7149 = vand.u32 %v3173, 4294901760
    %7150 = vmatprep.subr.mxu0 %v7149
    %v7151 = vand.u32 %v3172, 4294901760
    %7152 = vmatpush1.msra.mxu0 %v7151
    %v7153 = vand.u32 %v3177, 4294901760
    %7154 = vmatprep.subr.mxu0 %v7153
    %v7155 = vand.u32 %v3176, 4294901760
    %7156 = vmatpush1.msra.mxu0 %v7155
    %v7157 = vand.u32 %v3181, 4294901760
    %7158 = vmatprep.subr.mxu0 %v7157
    %v7159 = vand.u32 %v3180, 4294901760
    %7160 = vmatpush1.msra.mxu0 %v7159
    %v7161 = vand.u32 %v3185, 4294901760
    %7162 = vmatprep.subr.mxu0 %v7161
    %v7163 = vand.u32 %v3184, 4294901760
    %7164 = vmatpush1.msra.mxu0 %v7163
    %v7165 = vand.u32 %v3189, 4294901760
    %7166 = vmatprep.subr.mxu0 %v7165
    %v7167 = vand.u32 %v3188, 4294901760
    %7168 = vmatpush1.msra.mxu0 %v7167
    %v7169 = vand.u32 %v3193, 4294901760
    %7170 = vmatprep.subr.mxu0 %v7169
    %v7171 = vand.u32 %v3192, 4294901760
    %7172 = vmatpush1.msra.mxu0 %v7171
    %v7173 = vand.u32 %v3197, 4294901760
    %7174 = vmatprep.subr.mxu0 %v7173
    %v7175 = vand.u32 %v3196, 4294901760
    %7176 = vmatpush1.msra.mxu0 %v7175
    %v7177 = vand.u32 %v3201, 4294901760
    %7178 = vmatprep.subr.mxu0 %v7177
    %v7179 = vand.u32 %v3200, 4294901760
    %7180 = vmatpush1.msra.mxu0 %v7179
    %v7181 = vand.u32 %v3205, 4294901760
    %7182 = vmatprep.subr.mxu0 %v7181
    %v7183 = vand.u32 %v3204, 4294901760
    %7184 = vmatpush1.msra.mxu0 %v7183
    %v7185 = vand.u32 %v3209, 4294901760
    %7186 = vmatprep.subr.mxu0 %v7185
    %v7187 = vand.u32 %v3208, 4294901760
    %7188 = vmatpush1.msra.mxu0 %v7187
    %v7189 = vand.u32 %v3213, 4294901760
    %7190 = vmatprep.subr.mxu0 %v7189
    %v7191 = vand.u32 %v3212, 4294901760
    %7192 = vmatpush1.msra.mxu0 %v7191
    %v7193 = vand.u32 %v3217, 4294901760
    %7194 = vmatprep.subr.mxu0 %v7193
    %v7195 = vand.u32 %v3216, 4294901760
    %7196 = vmatpush1.msra.mxu0 %v7195
    %v7197 = vand.u32 %v3221, 4294901760
    %7198 = vmatprep.subr.mxu0 %v7197
    %v7199 = vand.u32 %v3220, 4294901760
    %7200 = vmatpush1.msra.mxu0 %v7199
    %v7201 = vand.u32 %v3225, 4294901760
    %7202 = vmatprep.subr.mxu0 %v7201
    %v7203 = vand.u32 %v3224, 4294901760
    %7204 = vmatpush1.msra.mxu0 %v7203
    %v7205 = vand.u32 %v3229, 4294901760
    %7206 = vmatprep.subr.mxu0 %v7205
    %v7207 = vand.u32 %v3228, 4294901760
    %7208 = vmatpush1.msra.mxu0 %v7207
    %v7209 = vand.u32 %v5932, 4294901760
    %7210 = vmatprep.mubr.f32.mxu0 %v7209
    %v7211 = vand.u32 %v3099, 4294901760
    %7212 = vmatmul.mubr.f32.gmra.mrb[0].mxu0 %v7211
    %v7213 = vpop.f32.mrb[0].mxu0
    %v7214 = vadd.f32 %v7077, %v7213
    %v7215 = vpop.f32.mrb[0].mxu0
    %v7216 = vadd.f32 %v7079, %v7215
    %7217 = vdwg.mxu0
    %v7218 = vand.u32 %v3107, 4294901760
    %7219 = vmatprep.subr.mxu0 %v7218
    %v7220 = vand.u32 %v3106, 4294901760
    %7221 = vmatpush1.msra.mxu0 %v7220
    %v7222 = vand.u32 %v3111, 4294901760
    %7223 = vmatprep.subr.mxu0 %v7222
    %v7224 = vand.u32 %v3110, 4294901760
    %7225 = vmatpush1.msra.mxu0 %v7224
    %v7226 = vand.u32 %v3115, 4294901760
    %7227 = vmatprep.subr.mxu0 %v7226
    %v7228 = vand.u32 %v3114, 4294901760
    %7229 = vmatpush1.msra.mxu0 %v7228
    %v7230 = vand.u32 %v3119, 4294901760
    %7231 = vmatprep.subr.mxu0 %v7230
    %v7232 = vand.u32 %v3118, 4294901760
    %7233 = vmatpush1.msra.mxu0 %v7232
    %v7234 = vand.u32 %v3123, 4294901760
    %7235 = vmatprep.subr.mxu0 %v7234
    %v7236 = vand.u32 %v3122, 4294901760
    %7237 = vmatpush1.msra.mxu0 %v7236
    %v7238 = vand.u32 %v3127, 4294901760
    %7239 = vmatprep.subr.mxu0 %v7238
    %v7240 = vand.u32 %v3126, 4294901760
    %7241 = vmatpush1.msra.mxu0 %v7240
    %v7242 = vand.u32 %v3131, 4294901760
    %7243 = vmatprep.subr.mxu0 %v7242
    %v7244 = vand.u32 %v3130, 4294901760
    %7245 = vmatpush1.msra.mxu0 %v7244
    %v7246 = vand.u32 %v3135, 4294901760
    %7247 = vmatprep.subr.mxu0 %v7246
    %v7248 = vand.u32 %v3134, 4294901760
    %7249 = vmatpush1.msra.mxu0 %v7248
    %v7250 = vand.u32 %v3139, 4294901760
    %7251 = vmatprep.subr.mxu0 %v7250
    %v7252 = vand.u32 %v3138, 4294901760
    %7253 = vmatpush1.msra.mxu0 %v7252
    %v7254 = vand.u32 %v3143, 4294901760
    %7255 = vmatprep.subr.mxu0 %v7254
    %v7256 = vand.u32 %v3142, 4294901760
    %7257 = vmatpush1.msra.mxu0 %v7256
    %v7258 = vand.u32 %v3147, 4294901760
    %7259 = vmatprep.subr.mxu0 %v7258
    %v7260 = vand.u32 %v3146, 4294901760
    %7261 = vmatpush1.msra.mxu0 %v7260
    %v7262 = vand.u32 %v3151, 4294901760
    %7263 = vmatprep.subr.mxu0 %v7262
    %v7264 = vand.u32 %v3150, 4294901760
    %7265 = vmatpush1.msra.mxu0 %v7264
    %v7266 = vand.u32 %v3155, 4294901760
    %7267 = vmatprep.subr.mxu0 %v7266
    %v7268 = vand.u32 %v3154, 4294901760
    %7269 = vmatpush1.msra.mxu0 %v7268
    %v7270 = vand.u32 %v3159, 4294901760
    %7271 = vmatprep.subr.mxu0 %v7270
    %v7272 = vand.u32 %v3158, 4294901760
    %7273 = vmatpush1.msra.mxu0 %v7272
    %v7274 = vand.u32 %v3163, 4294901760
    %7275 = vmatprep.subr.mxu0 %v7274
    %v7276 = vand.u32 %v3162, 4294901760
    %7277 = vmatpush1.msra.mxu0 %v7276
    %v7278 = vand.u32 %v3167, 4294901760
    %7279 = vmatprep.subr.mxu0 %v7278
    %v7280 = vand.u32 %v3166, 4294901760
    %7281 = vmatpush1.msra.mxu0 %v7280
    %v7282 = vand.u32 %v3171, 4294901760
    %7283 = vmatprep.subr.mxu0 %v7282
    %v7284 = vand.u32 %v3170, 4294901760
    %7285 = vmatpush1.msra.mxu0 %v7284
    %v7286 = vand.u32 %v3175, 4294901760
    %7287 = vmatprep.subr.mxu0 %v7286
    %v7288 = vand.u32 %v3174, 4294901760
    %7289 = vmatpush1.msra.mxu0 %v7288
    %v7290 = vand.u32 %v3179, 4294901760
    %7291 = vmatprep.subr.mxu0 %v7290
    %v7292 = vand.u32 %v3178, 4294901760
    %7293 = vmatpush1.msra.mxu0 %v7292
    %v7294 = vand.u32 %v3183, 4294901760
    %7295 = vmatprep.subr.mxu0 %v7294
    %v7296 = vand.u32 %v3182, 4294901760
    %7297 = vmatpush1.msra.mxu0 %v7296
    %v7298 = vand.u32 %v3187, 4294901760
    %7299 = vmatprep.subr.mxu0 %v7298
    %v7300 = vand.u32 %v3186, 4294901760
    %7301 = vmatpush1.msra.mxu0 %v7300
    %v7302 = vand.u32 %v3191, 4294901760
    %7303 = vmatprep.subr.mxu0 %v7302
    %v7304 = vand.u32 %v3190, 4294901760
    %7305 = vmatpush1.msra.mxu0 %v7304
    %v7306 = vand.u32 %v3195, 4294901760
    %7307 = vmatprep.subr.mxu0 %v7306
    %v7308 = vand.u32 %v3194, 4294901760
    %7309 = vmatpush1.msra.mxu0 %v7308
    %v7310 = vand.u32 %v3199, 4294901760
    %7311 = vmatprep.subr.mxu0 %v7310
    %v7312 = vand.u32 %v3198, 4294901760
    %7313 = vmatpush1.msra.mxu0 %v7312
    %v7314 = vand.u32 %v3203, 4294901760
    %7315 = vmatprep.subr.mxu0 %v7314
    %v7316 = vand.u32 %v3202, 4294901760
    %7317 = vmatpush1.msra.mxu0 %v7316
    %v7318 = vand.u32 %v3207, 4294901760
    %7319 = vmatprep.subr.mxu0 %v7318
    %v7320 = vand.u32 %v3206, 4294901760
    %7321 = vmatpush1.msra.mxu0 %v7320
    %v7322 = vand.u32 %v3211, 4294901760
    %7323 = vmatprep.subr.mxu0 %v7322
    %v7324 = vand.u32 %v3210, 4294901760
    %7325 = vmatpush1.msra.mxu0 %v7324
    %v7326 = vand.u32 %v3215, 4294901760
    %7327 = vmatprep.subr.mxu0 %v7326
    %v7328 = vand.u32 %v3214, 4294901760
    %7329 = vmatpush1.msra.mxu0 %v7328
    %v7330 = vand.u32 %v3219, 4294901760
    %7331 = vmatprep.subr.mxu0 %v7330
    %v7332 = vand.u32 %v3218, 4294901760
    %7333 = vmatpush1.msra.mxu0 %v7332
    %v7334 = vand.u32 %v3223, 4294901760
    %7335 = vmatprep.subr.mxu0 %v7334
    %v7336 = vand.u32 %v3222, 4294901760
    %7337 = vmatpush1.msra.mxu0 %v7336
    %v7338 = vand.u32 %v3227, 4294901760
    %7339 = vmatprep.subr.mxu0 %v7338
    %v7340 = vand.u32 %v3226, 4294901760
    %7341 = vmatpush1.msra.mxu0 %v7340
    %v7342 = vand.u32 %v3231, 4294901760
    %7343 = vmatprep.subr.mxu0 %v7342
    %v7344 = vand.u32 %v3230, 4294901760
    %7345 = vmatpush1.msra.mxu0 %v7344
    %v7346 = vand.u32 %v5932, 4294901760
    %v7347 = vsub.f32 %v5932, %v7346
    %v7348 = vand.u32 %v7347, 4294901760
    %v7349 = vsub.f32 %v7347, %v7348
    %v7350 = vand.u32 %v7349, 4294901760
    %7351 = vmatprep.mubr.f32.mxu0 %v7350
    %v7352 = vand.u32 %v3099, 4294901760
    %v7353 = vsub.f32 %v3099, %v7352
    %v7354 = vand.u32 %v7353, 4294901760
    %v7355 = vsub.f32 %v7353, %v7354
    %v7356 = vand.u32 %v7355, 4294901760
    %7357 = vmatmul.mubr.f32.gmra.mrb[0].mxu0 %v7356
    %v7358 = vpop.f32.mrb[0].mxu0
    %v7359 = vadd.f32 %v5927, %v7358
    %v7360 = vpop.f32.mrb[0].mxu0
    %v7361 = vadd.f32 %v5929, %v7360
    %7362 = vdwg.mxu0
    %v7363 = vand.u32 %v3107, 4294901760
    %v7364 = vsub.f32 %v3107, %v7363
    %v7365 = vand.u32 %v7364, 4294901760
    %v7366 = vsub.f32 %v7364, %v7365
    %v7367 = vand.u32 %v7366, 4294901760
    %7368 = vmatprep.subr.mxu0 %v7367
    %v7369 = vand.u32 %v3106, 4294901760
    %v7370 = vsub.f32 %v3106, %v7369
    %v7371 = vand.u32 %v7370, 4294901760
    %v7372 = vsub.f32 %v7370, %v7371
    %v7373 = vand.u32 %v7372, 4294901760
    %7374 = vmatpush1.msra.mxu0 %v7373
    %v7375 = vand.u32 %v3111, 4294901760
    %v7376 = vsub.f32 %v3111, %v7375
    %v7377 = vand.u32 %v7376, 4294901760
    %v7378 = vsub.f32 %v7376, %v7377
    %v7379 = vand.u32 %v7378, 4294901760
    %7380 = vmatprep.subr.mxu0 %v7379
    %v7381 = vand.u32 %v3110, 4294901760
    %v7382 = vsub.f32 %v3110, %v7381
    %v7383 = vand.u32 %v7382, 4294901760
    %v7384 = vsub.f32 %v7382, %v7383
    %v7385 = vand.u32 %v7384, 4294901760
    %7386 = vmatpush1.msra.mxu0 %v7385
    %v7387 = vand.u32 %v3115, 4294901760
    %v7388 = vsub.f32 %v3115, %v7387
    %v7389 = vand.u32 %v7388, 4294901760
    %v7390 = vsub.f32 %v7388, %v7389
    %v7391 = vand.u32 %v7390, 4294901760
    %7392 = vmatprep.subr.mxu0 %v7391
    %v7393 = vand.u32 %v3114, 4294901760
    %v7394 = vsub.f32 %v3114, %v7393
    %v7395 = vand.u32 %v7394, 4294901760
    %v7396 = vsub.f32 %v7394, %v7395
    %v7397 = vand.u32 %v7396, 4294901760
    %7398 = vmatpush1.msra.mxu0 %v7397
    %v7399 = vand.u32 %v3119, 4294901760
    %v7400 = vsub.f32 %v3119, %v7399
    %v7401 = vand.u32 %v7400, 4294901760
    %v7402 = vsub.f32 %v7400, %v7401
    %v7403 = vand.u32 %v7402, 4294901760
    %7404 = vmatprep.subr.mxu0 %v7403
    %v7405 = vand.u32 %v3118, 4294901760
    %v7406 = vsub.f32 %v3118, %v7405
    %v7407 = vand.u32 %v7406, 4294901760
    %v7408 = vsub.f32 %v7406, %v7407
    %v7409 = vand.u32 %v7408, 4294901760
    %7410 = vmatpush1.msra.mxu0 %v7409
    %v7411 = vand.u32 %v3123, 4294901760
    %v7412 = vsub.f32 %v3123, %v7411
    %v7413 = vand.u32 %v7412, 4294901760
    %v7414 = vsub.f32 %v7412, %v7413
    %v7415 = vand.u32 %v7414, 4294901760
    %7416 = vmatprep.subr.mxu0 %v7415
    %v7417 = vand.u32 %v3122, 4294901760
    %v7418 = vsub.f32 %v3122, %v7417
    %v7419 = vand.u32 %v7418, 4294901760
    %v7420 = vsub.f32 %v7418, %v7419
    %v7421 = vand.u32 %v7420, 4294901760
    %7422 = vmatpush1.msra.mxu0 %v7421
    %v7423 = vand.u32 %v3127, 4294901760
    %v7424 = vsub.f32 %v3127, %v7423
    %v7425 = vand.u32 %v7424, 4294901760
    %v7426 = vsub.f32 %v7424, %v7425
    %v7427 = vand.u32 %v7426, 4294901760
    %7428 = vmatprep.subr.mxu0 %v7427
    %v7429 = vand.u32 %v3126, 4294901760
    %v7430 = vsub.f32 %v3126, %v7429
    %v7431 = vand.u32 %v7430, 4294901760
    %v7432 = vsub.f32 %v7430, %v7431
    %v7433 = vand.u32 %v7432, 4294901760
    %7434 = vmatpush1.msra.mxu0 %v7433
    %v7435 = vand.u32 %v3131, 4294901760
    %v7436 = vsub.f32 %v3131, %v7435
    %v7437 = vand.u32 %v7436, 4294901760
    %v7438 = vsub.f32 %v7436, %v7437
    %v7439 = vand.u32 %v7438, 4294901760
    %7440 = vmatprep.subr.mxu0 %v7439
    %v7441 = vand.u32 %v3130, 4294901760
    %v7442 = vsub.f32 %v3130, %v7441
    %v7443 = vand.u32 %v7442, 4294901760
    %v7444 = vsub.f32 %v7442, %v7443
    %v7445 = vand.u32 %v7444, 4294901760
    %7446 = vmatpush1.msra.mxu0 %v7445
    %v7447 = vand.u32 %v3135, 4294901760
    %v7448 = vsub.f32 %v3135, %v7447
    %v7449 = vand.u32 %v7448, 4294901760
    %v7450 = vsub.f32 %v7448, %v7449
    %v7451 = vand.u32 %v7450, 4294901760
    %7452 = vmatprep.subr.mxu0 %v7451
    %v7453 = vand.u32 %v3134, 4294901760
    %v7454 = vsub.f32 %v3134, %v7453
    %v7455 = vand.u32 %v7454, 4294901760
    %v7456 = vsub.f32 %v7454, %v7455
    %v7457 = vand.u32 %v7456, 4294901760
    %7458 = vmatpush1.msra.mxu0 %v7457
    %v7459 = vand.u32 %v3139, 4294901760
    %v7460 = vsub.f32 %v3139, %v7459
    %v7461 = vand.u32 %v7460, 4294901760
    %v7462 = vsub.f32 %v7460, %v7461
    %v7463 = vand.u32 %v7462, 4294901760
    %7464 = vmatprep.subr.mxu0 %v7463
    %v7465 = vand.u32 %v3138, 4294901760
    %v7466 = vsub.f32 %v3138, %v7465
    %v7467 = vand.u32 %v7466, 4294901760
    %v7468 = vsub.f32 %v7466, %v7467
    %v7469 = vand.u32 %v7468, 4294901760
    %7470 = vmatpush1.msra.mxu0 %v7469
    %v7471 = vand.u32 %v3143, 4294901760
    %v7472 = vsub.f32 %v3143, %v7471
    %v7473 = vand.u32 %v7472, 4294901760
    %v7474 = vsub.f32 %v7472, %v7473
    %v7475 = vand.u32 %v7474, 4294901760
    %7476 = vmatprep.subr.mxu0 %v7475
    %v7477 = vand.u32 %v3142, 4294901760
    %v7478 = vsub.f32 %v3142, %v7477
    %v7479 = vand.u32 %v7478, 4294901760
    %v7480 = vsub.f32 %v7478, %v7479
    %v7481 = vand.u32 %v7480, 4294901760
    %7482 = vmatpush1.msra.mxu0 %v7481
    %v7483 = vand.u32 %v3147, 4294901760
    %v7484 = vsub.f32 %v3147, %v7483
    %v7485 = vand.u32 %v7484, 4294901760
    %v7486 = vsub.f32 %v7484, %v7485
    %v7487 = vand.u32 %v7486, 4294901760
    %7488 = vmatprep.subr.mxu0 %v7487
    %v7489 = vand.u32 %v3146, 4294901760
    %v7490 = vsub.f32 %v3146, %v7489
    %v7491 = vand.u32 %v7490, 4294901760
    %v7492 = vsub.f32 %v7490, %v7491
    %v7493 = vand.u32 %v7492, 4294901760
    %7494 = vmatpush1.msra.mxu0 %v7493
    %v7495 = vand.u32 %v3151, 4294901760
    %v7496 = vsub.f32 %v3151, %v7495
    %v7497 = vand.u32 %v7496, 4294901760
    %v7498 = vsub.f32 %v7496, %v7497
    %v7499 = vand.u32 %v7498, 4294901760
    %7500 = vmatprep.subr.mxu0 %v7499
    %v7501 = vand.u32 %v3150, 4294901760
    %v7502 = vsub.f32 %v3150, %v7501
    %v7503 = vand.u32 %v7502, 4294901760
    %v7504 = vsub.f32 %v7502, %v7503
    %v7505 = vand.u32 %v7504, 4294901760
    %7506 = vmatpush1.msra.mxu0 %v7505
    %v7507 = vand.u32 %v3155, 4294901760
    %v7508 = vsub.f32 %v3155, %v7507
    %v7509 = vand.u32 %v7508, 4294901760
    %v7510 = vsub.f32 %v7508, %v7509
    %v7511 = vand.u32 %v7510, 4294901760
    %7512 = vmatprep.subr.mxu0 %v7511
    %v7513 = vand.u32 %v3154, 4294901760
    %v7514 = vsub.f32 %v3154, %v7513
    %v7515 = vand.u32 %v7514, 4294901760
    %v7516 = vsub.f32 %v7514, %v7515
    %v7517 = vand.u32 %v7516, 4294901760
    %7518 = vmatpush1.msra.mxu0 %v7517
    %v7519 = vand.u32 %v3159, 4294901760
    %v7520 = vsub.f32 %v3159, %v7519
    %v7521 = vand.u32 %v7520, 4294901760
    %v7522 = vsub.f32 %v7520, %v7521
    %v7523 = vand.u32 %v7522, 4294901760
    %7524 = vmatprep.subr.mxu0 %v7523
    %v7525 = vand.u32 %v3158, 4294901760
    %v7526 = vsub.f32 %v3158, %v7525
    %v7527 = vand.u32 %v7526, 4294901760
    %v7528 = vsub.f32 %v7526, %v7527
    %v7529 = vand.u32 %v7528, 4294901760
    %7530 = vmatpush1.msra.mxu0 %v7529
    %v7531 = vand.u32 %v3163, 4294901760
    %v7532 = vsub.f32 %v3163, %v7531
    %v7533 = vand.u32 %v7532, 4294901760
    %v7534 = vsub.f32 %v7532, %v7533
    %v7535 = vand.u32 %v7534, 4294901760
    %7536 = vmatprep.subr.mxu0 %v7535
    %v7537 = vand.u32 %v3162, 4294901760
    %v7538 = vsub.f32 %v3162, %v7537
    %v7539 = vand.u32 %v7538, 4294901760
    %v7540 = vsub.f32 %v7538, %v7539
    %v7541 = vand.u32 %v7540, 4294901760
    %7542 = vmatpush1.msra.mxu0 %v7541
    %v7543 = vand.u32 %v3167, 4294901760
    %v7544 = vsub.f32 %v3167, %v7543
    %v7545 = vand.u32 %v7544, 4294901760
    %v7546 = vsub.f32 %v7544, %v7545
    %v7547 = vand.u32 %v7546, 4294901760
    %7548 = vmatprep.subr.mxu0 %v7547
    %v7549 = vand.u32 %v3166, 4294901760
    %v7550 = vsub.f32 %v3166, %v7549
    %v7551 = vand.u32 %v7550, 4294901760
    %v7552 = vsub.f32 %v7550, %v7551
    %v7553 = vand.u32 %v7552, 4294901760
    %7554 = vmatpush1.msra.mxu0 %v7553
    %v7555 = vand.u32 %v3171, 4294901760
    %v7556 = vsub.f32 %v3171, %v7555
    %v7557 = vand.u32 %v7556, 4294901760
    %v7558 = vsub.f32 %v7556, %v7557
    %v7559 = vand.u32 %v7558, 4294901760
    %7560 = vmatprep.subr.mxu0 %v7559
    %v7561 = vand.u32 %v3170, 4294901760
    %v7562 = vsub.f32 %v3170, %v7561
    %v7563 = vand.u32 %v7562, 4294901760
    %v7564 = vsub.f32 %v7562, %v7563
    %v7565 = vand.u32 %v7564, 4294901760
    %7566 = vmatpush1.msra.mxu0 %v7565
    %v7567 = vand.u32 %v3175, 4294901760
    %v7568 = vsub.f32 %v3175, %v7567
    %v7569 = vand.u32 %v7568, 4294901760
    %v7570 = vsub.f32 %v7568, %v7569
    %v7571 = vand.u32 %v7570, 4294901760
    %7572 = vmatprep.subr.mxu0 %v7571
    %v7573 = vand.u32 %v3174, 4294901760
    %v7574 = vsub.f32 %v3174, %v7573
    %v7575 = vand.u32 %v7574, 4294901760
    %v7576 = vsub.f32 %v7574, %v7575
    %v7577 = vand.u32 %v7576, 4294901760
    %7578 = vmatpush1.msra.mxu0 %v7577
    %v7579 = vand.u32 %v3179, 4294901760
    %v7580 = vsub.f32 %v3179, %v7579
    %v7581 = vand.u32 %v7580, 4294901760
    %v7582 = vsub.f32 %v7580, %v7581
    %v7583 = vand.u32 %v7582, 4294901760
    %7584 = vmatprep.subr.mxu0 %v7583
    %v7585 = vand.u32 %v3178, 4294901760
    %v7586 = vsub.f32 %v3178, %v7585
    %v7587 = vand.u32 %v7586, 4294901760
    %v7588 = vsub.f32 %v7586, %v7587
    %v7589 = vand.u32 %v7588, 4294901760
    %7590 = vmatpush1.msra.mxu0 %v7589
    %v7591 = vand.u32 %v3183, 4294901760
    %v7592 = vsub.f32 %v3183, %v7591
    %v7593 = vand.u32 %v7592, 4294901760
    %v7594 = vsub.f32 %v7592, %v7593
    %v7595 = vand.u32 %v7594, 4294901760
    %7596 = vmatprep.subr.mxu0 %v7595
    %v7597 = vand.u32 %v3182, 4294901760
    %v7598 = vsub.f32 %v3182, %v7597
    %v7599 = vand.u32 %v7598, 4294901760
    %v7600 = vsub.f32 %v7598, %v7599
    %v7601 = vand.u32 %v7600, 4294901760
    %7602 = vmatpush1.msra.mxu0 %v7601
    %v7603 = vand.u32 %v3187, 4294901760
    %v7604 = vsub.f32 %v3187, %v7603
    %v7605 = vand.u32 %v7604, 4294901760
    %v7606 = vsub.f32 %v7604, %v7605
    %v7607 = vand.u32 %v7606, 4294901760
    %7608 = vmatprep.subr.mxu0 %v7607
    %v7609 = vand.u32 %v3186, 4294901760
    %v7610 = vsub.f32 %v3186, %v7609
    %v7611 = vand.u32 %v7610, 4294901760
    %v7612 = vsub.f32 %v7610, %v7611
    %v7613 = vand.u32 %v7612, 4294901760
    %7614 = vmatpush1.msra.mxu0 %v7613
    %v7615 = vand.u32 %v3191, 4294901760
    %v7616 = vsub.f32 %v3191, %v7615
    %v7617 = vand.u32 %v7616, 4294901760
    %v7618 = vsub.f32 %v7616, %v7617
    %v7619 = vand.u32 %v7618, 4294901760
    %7620 = vmatprep.subr.mxu0 %v7619
    %v7621 = vand.u32 %v3190, 4294901760
    %v7622 = vsub.f32 %v3190, %v7621
    %v7623 = vand.u32 %v7622, 4294901760
    %v7624 = vsub.f32 %v7622, %v7623
    %v7625 = vand.u32 %v7624, 4294901760
    %7626 = vmatpush1.msra.mxu0 %v7625
    %v7627 = vand.u32 %v3195, 4294901760
    %v7628 = vsub.f32 %v3195, %v7627
    %v7629 = vand.u32 %v7628, 4294901760
    %v7630 = vsub.f32 %v7628, %v7629
    %v7631 = vand.u32 %v7630, 4294901760
    %7632 = vmatprep.subr.mxu0 %v7631
    %v7633 = vand.u32 %v3194, 4294901760
    %v7634 = vsub.f32 %v3194, %v7633
    %v7635 = vand.u32 %v7634, 4294901760
    %v7636 = vsub.f32 %v7634, %v7635
    %v7637 = vand.u32 %v7636, 4294901760
    %7638 = vmatpush1.msra.mxu0 %v7637
    %v7639 = vand.u32 %v3199, 4294901760
    %v7640 = vsub.f32 %v3199, %v7639
    %v7641 = vand.u32 %v7640, 4294901760
    %v7642 = vsub.f32 %v7640, %v7641
    %v7643 = vand.u32 %v7642, 4294901760
    %7644 = vmatprep.subr.mxu0 %v7643
    %v7645 = vand.u32 %v3198, 4294901760
    %v7646 = vsub.f32 %v3198, %v7645
    %v7647 = vand.u32 %v7646, 4294901760
    %v7648 = vsub.f32 %v7646, %v7647
    %v7649 = vand.u32 %v7648, 4294901760
    %7650 = vmatpush1.msra.mxu0 %v7649
    %v7651 = vand.u32 %v3203, 4294901760
    %v7652 = vsub.f32 %v3203, %v7651
    %v7653 = vand.u32 %v7652, 4294901760
    %v7654 = vsub.f32 %v7652, %v7653
    %v7655 = vand.u32 %v7654, 4294901760
    %7656 = vmatprep.subr.mxu0 %v7655
    %v7657 = vand.u32 %v3202, 4294901760
    %v7658 = vsub.f32 %v3202, %v7657
    %v7659 = vand.u32 %v7658, 4294901760
    %v7660 = vsub.f32 %v7658, %v7659
    %v7661 = vand.u32 %v7660, 4294901760
    %7662 = vmatpush1.msra.mxu0 %v7661
    %v7663 = vand.u32 %v3207, 4294901760
    %v7664 = vsub.f32 %v3207, %v7663
    %v7665 = vand.u32 %v7664, 4294901760
    %v7666 = vsub.f32 %v7664, %v7665
    %v7667 = vand.u32 %v7666, 4294901760
    %7668 = vmatprep.subr.mxu0 %v7667
    %v7669 = vand.u32 %v3206, 4294901760
    %v7670 = vsub.f32 %v3206, %v7669
    %v7671 = vand.u32 %v7670, 4294901760
    %v7672 = vsub.f32 %v7670, %v7671
    %v7673 = vand.u32 %v7672, 4294901760
    %7674 = vmatpush1.msra.mxu0 %v7673
    %v7675 = vand.u32 %v3211, 4294901760
    %v7676 = vsub.f32 %v3211, %v7675
    %v7677 = vand.u32 %v7676, 4294901760
    %v7678 = vsub.f32 %v7676, %v7677
    %v7679 = vand.u32 %v7678, 4294901760
    %7680 = vmatprep.subr.mxu0 %v7679
    %v7681 = vand.u32 %v3210, 4294901760
    %v7682 = vsub.f32 %v3210, %v7681
    %v7683 = vand.u32 %v7682, 4294901760
    %v7684 = vsub.f32 %v7682, %v7683
    %v7685 = vand.u32 %v7684, 4294901760
    %7686 = vmatpush1.msra.mxu0 %v7685
    %v7687 = vand.u32 %v3215, 4294901760
    %v7688 = vsub.f32 %v3215, %v7687
    %v7689 = vand.u32 %v7688, 4294901760
    %v7690 = vsub.f32 %v7688, %v7689
    %v7691 = vand.u32 %v7690, 4294901760
    %7692 = vmatprep.subr.mxu0 %v7691
    %v7693 = vand.u32 %v3214, 4294901760
    %v7694 = vsub.f32 %v3214, %v7693
    %v7695 = vand.u32 %v7694, 4294901760
    %v7696 = vsub.f32 %v7694, %v7695
    %v7697 = vand.u32 %v7696, 4294901760
    %7698 = vmatpush1.msra.mxu0 %v7697
    %v7699 = vand.u32 %v3219, 4294901760
    %v7700 = vsub.f32 %v3219, %v7699
    %v7701 = vand.u32 %v7700, 4294901760
    %v7702 = vsub.f32 %v7700, %v7701
    %v7703 = vand.u32 %v7702, 4294901760
    %7704 = vmatprep.subr.mxu0 %v7703
    %v7705 = vand.u32 %v3218, 4294901760
    %v7706 = vsub.f32 %v3218, %v7705
    %v7707 = vand.u32 %v7706, 4294901760
    %v7708 = vsub.f32 %v7706, %v7707
    %v7709 = vand.u32 %v7708, 4294901760
    %7710 = vmatpush1.msra.mxu0 %v7709
    %v7711 = vand.u32 %v3223, 4294901760
    %v7712 = vsub.f32 %v3223, %v7711
    %v7713 = vand.u32 %v7712, 4294901760
    %v7714 = vsub.f32 %v7712, %v7713
    %v7715 = vand.u32 %v7714, 4294901760
    %7716 = vmatprep.subr.mxu0 %v7715
    %v7717 = vand.u32 %v3222, 4294901760
    %v7718 = vsub.f32 %v3222, %v7717
    %v7719 = vand.u32 %v7718, 4294901760
    %v7720 = vsub.f32 %v7718, %v7719
    %v7721 = vand.u32 %v7720, 4294901760
    %7722 = vmatpush1.msra.mxu0 %v7721
    %v7723 = vand.u32 %v3227, 4294901760
    %v7724 = vsub.f32 %v3227, %v7723
    %v7725 = vand.u32 %v7724, 4294901760
    %v7726 = vsub.f32 %v7724, %v7725
    %v7727 = vand.u32 %v7726, 4294901760
    %7728 = vmatprep.subr.mxu0 %v7727
    %v7729 = vand.u32 %v3226, 4294901760
    %v7730 = vsub.f32 %v3226, %v7729
    %v7731 = vand.u32 %v7730, 4294901760
    %v7732 = vsub.f32 %v7730, %v7731
    %v7733 = vand.u32 %v7732, 4294901760
    %7734 = vmatpush1.msra.mxu0 %v7733
    %v7735 = vand.u32 %v3231, 4294901760
    %v7736 = vsub.f32 %v3231, %v7735
    %v7737 = vand.u32 %v7736, 4294901760
    %v7738 = vsub.f32 %v7736, %v7737
    %v7739 = vand.u32 %v7738, 4294901760
    %7740 = vmatprep.subr.mxu0 %v7739
    %v7741 = vand.u32 %v3230, 4294901760
    %v7742 = vsub.f32 %v3230, %v7741
    %v7743 = vand.u32 %v7742, 4294901760
    %v7744 = vsub.f32 %v7742, %v7743
    %v7745 = vand.u32 %v7744, 4294901760
    %7746 = vmatpush1.msra.mxu0 %v7745
    %v7747 = vand.u32 %v5932, 4294901760
    %7748 = vmatprep.mubr.f32.mxu0 %v7747
    %v7749 = vand.u32 %v3099, 4294901760
    %7750 = vmatmul.mubr.f32.gmra.mrb[0].mxu0 %v7749
    %v7751 = vpop.f32.mrb[0].mxu0
    %v7752 = vadd.f32 %v7359, %v7751
    %v7753 = vpop.f32.mrb[0].mxu0
    %v7754 = vadd.f32 %v7361, %v7753
    %7755 = vdwg.mxu0
    %v7756 = vand.u32 %v3107, 4294901760
    %v7757 = vsub.f32 %v3107, %v7756
    %7758 = vmatprep.subr.mxu0 %v7757
    %v7759 = vand.u32 %v3106, 4294901760
    %v7760 = vsub.f32 %v3106, %v7759
    %7761 = vmatpush1.msra.mxu0 %v7760
    %v7762 = vand.u32 %v3111, 4294901760
    %v7763 = vsub.f32 %v3111, %v7762
    %7764 = vmatprep.subr.mxu0 %v7763
    %v7765 = vand.u32 %v3110, 4294901760
    %v7766 = vsub.f32 %v3110, %v7765
    %7767 = vmatpush1.msra.mxu0 %v7766
    %v7768 = vand.u32 %v3115, 4294901760
    %v7769 = vsub.f32 %v3115, %v7768
    %7770 = vmatprep.subr.mxu0 %v7769
    %v7771 = vand.u32 %v3114, 4294901760
    %v7772 = vsub.f32 %v3114, %v7771
    %7773 = vmatpush1.msra.mxu0 %v7772
    %v7774 = vand.u32 %v3119, 4294901760
    %v7775 = vsub.f32 %v3119, %v7774
    %7776 = vmatprep.subr.mxu0 %v7775
    %v7777 = vand.u32 %v3118, 4294901760
    %v7778 = vsub.f32 %v3118, %v7777
    %7779 = vmatpush1.msra.mxu0 %v7778
    %v7780 = vand.u32 %v3123, 4294901760
    %v7781 = vsub.f32 %v3123, %v7780
    %7782 = vmatprep.subr.mxu0 %v7781
    %v7783 = vand.u32 %v3122, 4294901760
    %v7784 = vsub.f32 %v3122, %v7783
    %7785 = vmatpush1.msra.mxu0 %v7784
    %v7786 = vand.u32 %v3127, 4294901760
    %v7787 = vsub.f32 %v3127, %v7786
    %7788 = vmatprep.subr.mxu0 %v7787
    %v7789 = vand.u32 %v3126, 4294901760
    %v7790 = vsub.f32 %v3126, %v7789
    %7791 = vmatpush1.msra.mxu0 %v7790
    %v7792 = vand.u32 %v3131, 4294901760
    %v7793 = vsub.f32 %v3131, %v7792
    %7794 = vmatprep.subr.mxu0 %v7793
    %v7795 = vand.u32 %v3130, 4294901760
    %v7796 = vsub.f32 %v3130, %v7795
    %7797 = vmatpush1.msra.mxu0 %v7796
    %v7798 = vand.u32 %v3135, 4294901760
    %v7799 = vsub.f32 %v3135, %v7798
    %7800 = vmatprep.subr.mxu0 %v7799
    %v7801 = vand.u32 %v3134, 4294901760
    %v7802 = vsub.f32 %v3134, %v7801
    %7803 = vmatpush1.msra.mxu0 %v7802
    %v7804 = vand.u32 %v3139, 4294901760
    %v7805 = vsub.f32 %v3139, %v7804
    %7806 = vmatprep.subr.mxu0 %v7805
    %v7807 = vand.u32 %v3138, 4294901760
    %v7808 = vsub.f32 %v3138, %v7807
    %7809 = vmatpush1.msra.mxu0 %v7808
    %v7810 = vand.u32 %v3143, 4294901760
    %v7811 = vsub.f32 %v3143, %v7810
    %7812 = vmatprep.subr.mxu0 %v7811
    %v7813 = vand.u32 %v3142, 4294901760
    %v7814 = vsub.f32 %v3142, %v7813
    %7815 = vmatpush1.msra.mxu0 %v7814
    %v7816 = vand.u32 %v3147, 4294901760
    %v7817 = vsub.f32 %v3147, %v7816
    %7818 = vmatprep.subr.mxu0 %v7817
    %v7819 = vand.u32 %v3146, 4294901760
    %v7820 = vsub.f32 %v3146, %v7819
    %7821 = vmatpush1.msra.mxu0 %v7820
    %v7822 = vand.u32 %v3151, 4294901760
    %v7823 = vsub.f32 %v3151, %v7822
    %7824 = vmatprep.subr.mxu0 %v7823
    %v7825 = vand.u32 %v3150, 4294901760
    %v7826 = vsub.f32 %v3150, %v7825
    %7827 = vmatpush1.msra.mxu0 %v7826
    %v7828 = vand.u32 %v3155, 4294901760
    %v7829 = vsub.f32 %v3155, %v7828
    %7830 = vmatprep.subr.mxu0 %v7829
    %v7831 = vand.u32 %v3154, 4294901760
    %v7832 = vsub.f32 %v3154, %v7831
    %7833 = vmatpush1.msra.mxu0 %v7832
    %v7834 = vand.u32 %v3159, 4294901760
    %v7835 = vsub.f32 %v3159, %v7834
    %7836 = vmatprep.subr.mxu0 %v7835
    %v7837 = vand.u32 %v3158, 4294901760
    %v7838 = vsub.f32 %v3158, %v7837
    %7839 = vmatpush1.msra.mxu0 %v7838
    %v7840 = vand.u32 %v3163, 4294901760
    %v7841 = vsub.f32 %v3163, %v7840
    %7842 = vmatprep.subr.mxu0 %v7841
    %v7843 = vand.u32 %v3162, 4294901760
    %v7844 = vsub.f32 %v3162, %v7843
    %7845 = vmatpush1.msra.mxu0 %v7844
    %v7846 = vand.u32 %v3167, 4294901760
    %v7847 = vsub.f32 %v3167, %v7846
    %7848 = vmatprep.subr.mxu0 %v7847
    %v7849 = vand.u32 %v3166, 4294901760
    %v7850 = vsub.f32 %v3166, %v7849
    %7851 = vmatpush1.msra.mxu0 %v7850
    %v7852 = vand.u32 %v3171, 4294901760
    %v7853 = vsub.f32 %v3171, %v7852
    %7854 = vmatprep.subr.mxu0 %v7853
    %v7855 = vand.u32 %v3170, 4294901760
    %v7856 = vsub.f32 %v3170, %v7855
    %7857 = vmatpush1.msra.mxu0 %v7856
    %v7858 = vand.u32 %v3175, 4294901760
    %v7859 = vsub.f32 %v3175, %v7858
    %7860 = vmatprep.subr.mxu0 %v7859
    %v7861 = vand.u32 %v3174, 4294901760
    %v7862 = vsub.f32 %v3174, %v7861
    %7863 = vmatpush1.msra.mxu0 %v7862
    %v7864 = vand.u32 %v3179, 4294901760
    %v7865 = vsub.f32 %v3179, %v7864
    %7866 = vmatprep.subr.mxu0 %v7865
    %v7867 = vand.u32 %v3178, 4294901760
    %v7868 = vsub.f32 %v3178, %v7867
    %7869 = vmatpush1.msra.mxu0 %v7868
    %v7870 = vand.u32 %v3183, 4294901760
    %v7871 = vsub.f32 %v3183, %v7870
    %7872 = vmatprep.subr.mxu0 %v7871
    %v7873 = vand.u32 %v3182, 4294901760
    %v7874 = vsub.f32 %v3182, %v7873
    %7875 = vmatpush1.msra.mxu0 %v7874
    %v7876 = vand.u32 %v3187, 4294901760
    %v7877 = vsub.f32 %v3187, %v7876
    %7878 = vmatprep.subr.mxu0 %v7877
    %v7879 = vand.u32 %v3186, 4294901760
    %v7880 = vsub.f32 %v3186, %v7879
    %7881 = vmatpush1.msra.mxu0 %v7880
    %v7882 = vand.u32 %v3191, 4294901760
    %v7883 = vsub.f32 %v3191, %v7882
    %7884 = vmatprep.subr.mxu0 %v7883
    %v7885 = vand.u32 %v3190, 4294901760
    %v7886 = vsub.f32 %v3190, %v7885
    %7887 = vmatpush1.msra.mxu0 %v7886
    %v7888 = vand.u32 %v3195, 4294901760
    %v7889 = vsub.f32 %v3195, %v7888
    %7890 = vmatprep.subr.mxu0 %v7889
    %v7891 = vand.u32 %v3194, 4294901760
    %v7892 = vsub.f32 %v3194, %v7891
    %7893 = vmatpush1.msra.mxu0 %v7892
    %v7894 = vand.u32 %v3199, 4294901760
    %v7895 = vsub.f32 %v3199, %v7894
    %7896 = vmatprep.subr.mxu0 %v7895
    %v7897 = vand.u32 %v3198, 4294901760
    %v7898 = vsub.f32 %v3198, %v7897
    %7899 = vmatpush1.msra.mxu0 %v7898
    %v7900 = vand.u32 %v3203, 4294901760
    %v7901 = vsub.f32 %v3203, %v7900
    %7902 = vmatprep.subr.mxu0 %v7901
    %v7903 = vand.u32 %v3202, 4294901760
    %v7904 = vsub.f32 %v3202, %v7903
    %7905 = vmatpush1.msra.mxu0 %v7904
    %v7906 = vand.u32 %v3207, 4294901760
    %v7907 = vsub.f32 %v3207, %v7906
    %7908 = vmatprep.subr.mxu0 %v7907
    %v7909 = vand.u32 %v3206, 4294901760
    %v7910 = vsub.f32 %v3206, %v7909
    %7911 = vmatpush1.msra.mxu0 %v7910
    %v7912 = vand.u32 %v3211, 4294901760
    %v7913 = vsub.f32 %v3211, %v7912
    %7914 = vmatprep.subr.mxu0 %v7913
    %v7915 = vand.u32 %v3210, 4294901760
    %v7916 = vsub.f32 %v3210, %v7915
    %7917 = vmatpush1.msra.mxu0 %v7916
    %v7918 = vand.u32 %v3215, 4294901760
    %v7919 = vsub.f32 %v3215, %v7918
    %7920 = vmatprep.subr.mxu0 %v7919
    %v7921 = vand.u32 %v3214, 4294901760
    %v7922 = vsub.f32 %v3214, %v7921
    %7923 = vmatpush1.msra.mxu0 %v7922
    %v7924 = vand.u32 %v3219, 4294901760
    %v7925 = vsub.f32 %v3219, %v7924
    %7926 = vmatprep.subr.mxu0 %v7925
    %v7927 = vand.u32 %v3218, 4294901760
    %v7928 = vsub.f32 %v3218, %v7927
    %7929 = vmatpush1.msra.mxu0 %v7928
    %v7930 = vand.u32 %v3223, 4294901760
    %v7931 = vsub.f32 %v3223, %v7930
    %7932 = vmatprep.subr.mxu0 %v7931
    %v7933 = vand.u32 %v3222, 4294901760
    %v7934 = vsub.f32 %v3222, %v7933
    %7935 = vmatpush1.msra.mxu0 %v7934
    %v7936 = vand.u32 %v3227, 4294901760
    %v7937 = vsub.f32 %v3227, %v7936
    %7938 = vmatprep.subr.mxu0 %v7937
    %v7939 = vand.u32 %v3226, 4294901760
    %v7940 = vsub.f32 %v3226, %v7939
    %7941 = vmatpush1.msra.mxu0 %v7940
    %v7942 = vand.u32 %v3231, 4294901760
    %v7943 = vsub.f32 %v3231, %v7942
    %7944 = vmatprep.subr.mxu0 %v7943
    %v7945 = vand.u32 %v3230, 4294901760
    %v7946 = vsub.f32 %v3230, %v7945
    %7947 = vmatpush1.msra.mxu0 %v7946
    %v7948 = vand.u32 %v5932, 4294901760
    %v7949 = vsub.f32 %v5932, %v7948
    %7950 = vmatprep.mubr.f32.mxu0 %v7949
    %v7951 = vand.u32 %v3099, 4294901760
    %v7952 = vsub.f32 %v3099, %v7951
    %7953 = vmatmul.mubr.f32.gmra.mrb[0].mxu0 %v7952
    %v7954 = vpop.f32.mrb[0].mxu0
    %v7955 = vadd.f32 %v7752, %v7954
    %v7956 = vpop.f32.mrb[0].mxu0
    %v7957 = vadd.f32 %v7754, %v7956
    %7958 = vdwg.mxu0
    %v7959 = vand.u32 %v3107, 4294901760
    %7960 = vmatprep.subr.mxu0 %v7959
    %v7961 = vand.u32 %v3106, 4294901760
    %7962 = vmatpush1.msra.mxu0 %v7961
    %v7963 = vand.u32 %v3111, 4294901760
    %7964 = vmatprep.subr.mxu0 %v7963
    %v7965 = vand.u32 %v3110, 4294901760
    %7966 = vmatpush1.msra.mxu0 %v7965
    %v7967 = vand.u32 %v3115, 4294901760
    %7968 = vmatprep.subr.mxu0 %v7967
    %v7969 = vand.u32 %v3114, 4294901760
    %7970 = vmatpush1.msra.mxu0 %v7969
    %v7971 = vand.u32 %v3119, 4294901760
    %7972 = vmatprep.subr.mxu0 %v7971
    %v7973 = vand.u32 %v3118, 4294901760
    %7974 = vmatpush1.msra.mxu0 %v7973
    %v7975 = vand.u32 %v3123, 4294901760
    %7976 = vmatprep.subr.mxu0 %v7975
    %v7977 = vand.u32 %v3122, 4294901760
    %7978 = vmatpush1.msra.mxu0 %v7977
    %v7979 = vand.u32 %v3127, 4294901760
    %7980 = vmatprep.subr.mxu0 %v7979
    %v7981 = vand.u32 %v3126, 4294901760
    %7982 = vmatpush1.msra.mxu0 %v7981
    %v7983 = vand.u32 %v3131, 4294901760
    %7984 = vmatprep.subr.mxu0 %v7983
    %v7985 = vand.u32 %v3130, 4294901760
    %7986 = vmatpush1.msra.mxu0 %v7985
    %v7987 = vand.u32 %v3135, 4294901760
    %7988 = vmatprep.subr.mxu0 %v7987
    %v7989 = vand.u32 %v3134, 4294901760
    %7990 = vmatpush1.msra.mxu0 %v7989
    %v7991 = vand.u32 %v3139, 4294901760
    %7992 = vmatprep.subr.mxu0 %v7991
    %v7993 = vand.u32 %v3138, 4294901760
    %7994 = vmatpush1.msra.mxu0 %v7993
    %v7995 = vand.u32 %v3143, 4294901760
    %7996 = vmatprep.subr.mxu0 %v7995
    %v7997 = vand.u32 %v3142, 4294901760
    %7998 = vmatpush1.msra.mxu0 %v7997
    %v7999 = vand.u32 %v3147, 4294901760
    %8000 = vmatprep.subr.mxu0 %v7999
    %v8001 = vand.u32 %v3146, 4294901760
    %8002 = vmatpush1.msra.mxu0 %v8001
    %v8003 = vand.u32 %v3151, 4294901760
    %8004 = vmatprep.subr.mxu0 %v8003
    %v8005 = vand.u32 %v3150, 4294901760
    %8006 = vmatpush1.msra.mxu0 %v8005
    %v8007 = vand.u32 %v3155, 4294901760
    %8008 = vmatprep.subr.mxu0 %v8007
    %v8009 = vand.u32 %v3154, 4294901760
    %8010 = vmatpush1.msra.mxu0 %v8009
    %v8011 = vand.u32 %v3159, 4294901760
    %8012 = vmatprep.subr.mxu0 %v8011
    %v8013 = vand.u32 %v3158, 4294901760
    %8014 = vmatpush1.msra.mxu0 %v8013
    %v8015 = vand.u32 %v3163, 4294901760
    %8016 = vmatprep.subr.mxu0 %v8015
    %v8017 = vand.u32 %v3162, 4294901760
    %8018 = vmatpush1.msra.mxu0 %v8017
    %v8019 = vand.u32 %v3167, 4294901760
    %8020 = vmatprep.subr.mxu0 %v8019
    %v8021 = vand.u32 %v3166, 4294901760
    %8022 = vmatpush1.msra.mxu0 %v8021
    %v8023 = vand.u32 %v3171, 4294901760
    %8024 = vmatprep.subr.mxu0 %v8023
    %v8025 = vand.u32 %v3170, 4294901760
    %8026 = vmatpush1.msra.mxu0 %v8025
    %v8027 = vand.u32 %v3175, 4294901760
    %8028 = vmatprep.subr.mxu0 %v8027
    %v8029 = vand.u32 %v3174, 4294901760
    %8030 = vmatpush1.msra.mxu0 %v8029
    %v8031 = vand.u32 %v3179, 4294901760
    %8032 = vmatprep.subr.mxu0 %v8031
    %v8033 = vand.u32 %v3178, 4294901760
    %8034 = vmatpush1.msra.mxu0 %v8033
    %v8035 = vand.u32 %v3183, 4294901760
    %8036 = vmatprep.subr.mxu0 %v8035
    %v8037 = vand.u32 %v3182, 4294901760
    %8038 = vmatpush1.msra.mxu0 %v8037
    %v8039 = vand.u32 %v3187, 4294901760
    %8040 = vmatprep.subr.mxu0 %v8039
    %v8041 = vand.u32 %v3186, 4294901760
    %8042 = vmatpush1.msra.mxu0 %v8041
    %v8043 = vand.u32 %v3191, 4294901760
    %8044 = vmatprep.subr.mxu0 %v8043
    %v8045 = vand.u32 %v3190, 4294901760
    %8046 = vmatpush1.msra.mxu0 %v8045
    %v8047 = vand.u32 %v3195, 4294901760
    %8048 = vmatprep.subr.mxu0 %v8047
    %v8049 = vand.u32 %v3194, 4294901760
    %8050 = vmatpush1.msra.mxu0 %v8049
    %v8051 = vand.u32 %v3199, 4294901760
    %8052 = vmatprep.subr.mxu0 %v8051
    %v8053 = vand.u32 %v3198, 4294901760
    %8054 = vmatpush1.msra.mxu0 %v8053
    %v8055 = vand.u32 %v3203, 4294901760
    %8056 = vmatprep.subr.mxu0 %v8055
    %v8057 = vand.u32 %v3202, 4294901760
    %8058 = vmatpush1.msra.mxu0 %v8057
    %v8059 = vand.u32 %v3207, 4294901760
    %8060 = vmatprep.subr.mxu0 %v8059
    %v8061 = vand.u32 %v3206, 4294901760
    %8062 = vmatpush1.msra.mxu0 %v8061
    %v8063 = vand.u32 %v3211, 4294901760
    %8064 = vmatprep.subr.mxu0 %v8063
    %v8065 = vand.u32 %v3210, 4294901760
    %8066 = vmatpush1.msra.mxu0 %v8065
    %v8067 = vand.u32 %v3215, 4294901760
    %8068 = vmatprep.subr.mxu0 %v8067
    %v8069 = vand.u32 %v3214, 4294901760
    %8070 = vmatpush1.msra.mxu0 %v8069
    %v8071 = vand.u32 %v3219, 4294901760
    %8072 = vmatprep.subr.mxu0 %v8071
    %v8073 = vand.u32 %v3218, 4294901760
    %8074 = vmatpush1.msra.mxu0 %v8073
    %v8075 = vand.u32 %v3223, 4294901760
    %8076 = vmatprep.subr.mxu0 %v8075
    %v8077 = vand.u32 %v3222, 4294901760
    %8078 = vmatpush1.msra.mxu0 %v8077
    %v8079 = vand.u32 %v3227, 4294901760
    %8080 = vmatprep.subr.mxu0 %v8079
    %v8081 = vand.u32 %v3226, 4294901760
    %8082 = vmatpush1.msra.mxu0 %v8081
    %v8083 = vand.u32 %v3231, 4294901760
    %8084 = vmatprep.subr.mxu0 %v8083
    %v8085 = vand.u32 %v3230, 4294901760
    %8086 = vmatpush1.msra.mxu0 %v8085
    %v8087 = vand.u32 %v5932, 4294901760
    %v8088 = vsub.f32 %v5932, %v8087
    %v8089 = vand.u32 %v8088, 4294901760
    %8090 = vmatprep.mubr.f32.mxu0 %v8089
    %v8091 = vand.u32 %v3099, 4294901760
    %v8092 = vsub.f32 %v3099, %v8091
    %v8093 = vand.u32 %v8092, 4294901760
    %8094 = vmatmul.mubr.f32.gmra.mrb[0].mxu0 %v8093
    %v8095 = vpop.f32.mrb[0].mxu0
    %v8096 = vadd.f32 %v7955, %v8095
    %v8097 = vpop.f32.mrb[0].mxu0
    %v8098 = vadd.f32 %v7957, %v8097
    %8099 = vdwg.mxu0
    %v8100 = vand.u32 %v3107, 4294901760
    %v8101 = vsub.f32 %v3107, %v8100
    %v8102 = vand.u32 %v8101, 4294901760
    %8103 = vmatprep.subr.mxu0 %v8102
    %v8104 = vand.u32 %v3106, 4294901760
    %v8105 = vsub.f32 %v3106, %v8104
    %v8106 = vand.u32 %v8105, 4294901760
    %8107 = vmatpush1.msra.mxu0 %v8106
    %v8108 = vand.u32 %v3111, 4294901760
    %v8109 = vsub.f32 %v3111, %v8108
    %v8110 = vand.u32 %v8109, 4294901760
    %8111 = vmatprep.subr.mxu0 %v8110
    %v8112 = vand.u32 %v3110, 4294901760
    %v8113 = vsub.f32 %v3110, %v8112
    %v8114 = vand.u32 %v8113, 4294901760
    %8115 = vmatpush1.msra.mxu0 %v8114
    %v8116 = vand.u32 %v3115, 4294901760
    %v8117 = vsub.f32 %v3115, %v8116
    %v8118 = vand.u32 %v8117, 4294901760
    %8119 = vmatprep.subr.mxu0 %v8118
    %v8120 = vand.u32 %v3114, 4294901760
    %v8121 = vsub.f32 %v3114, %v8120
    %v8122 = vand.u32 %v8121, 4294901760
    %8123 = vmatpush1.msra.mxu0 %v8122
    %v8124 = vand.u32 %v3119, 4294901760
    %v8125 = vsub.f32 %v3119, %v8124
    %v8126 = vand.u32 %v8125, 4294901760
    %8127 = vmatprep.subr.mxu0 %v8126
    %v8128 = vand.u32 %v3118, 4294901760
    %v8129 = vsub.f32 %v3118, %v8128
    %v8130 = vand.u32 %v8129, 4294901760
    %8131 = vmatpush1.msra.mxu0 %v8130
    %v8132 = vand.u32 %v3123, 4294901760
    %v8133 = vsub.f32 %v3123, %v8132
    %v8134 = vand.u32 %v8133, 4294901760
    %8135 = vmatprep.subr.mxu0 %v8134
    %v8136 = vand.u32 %v3122, 4294901760
    %v8137 = vsub.f32 %v3122, %v8136
    %v8138 = vand.u32 %v8137, 4294901760
    %8139 = vmatpush1.msra.mxu0 %v8138
    %v8140 = vand.u32 %v3127, 4294901760
    %v8141 = vsub.f32 %v3127, %v8140
    %v8142 = vand.u32 %v8141, 4294901760
    %8143 = vmatprep.subr.mxu0 %v8142
    %v8144 = vand.u32 %v3126, 4294901760
    %v8145 = vsub.f32 %v3126, %v8144
    %v8146 = vand.u32 %v8145, 4294901760
    %8147 = vmatpush1.msra.mxu0 %v8146
    %v8148 = vand.u32 %v3131, 4294901760
    %v8149 = vsub.f32 %v3131, %v8148
    %v8150 = vand.u32 %v8149, 4294901760
    %8151 = vmatprep.subr.mxu0 %v8150
    %v8152 = vand.u32 %v3130, 4294901760
    %v8153 = vsub.f32 %v3130, %v8152
    %v8154 = vand.u32 %v8153, 4294901760
    %8155 = vmatpush1.msra.mxu0 %v8154
    %v8156 = vand.u32 %v3135, 4294901760
    %v8157 = vsub.f32 %v3135, %v8156
    %v8158 = vand.u32 %v8157, 4294901760
    %8159 = vmatprep.subr.mxu0 %v8158
    %v8160 = vand.u32 %v3134, 4294901760
    %v8161 = vsub.f32 %v3134, %v8160
    %v8162 = vand.u32 %v8161, 4294901760
    %8163 = vmatpush1.msra.mxu0 %v8162
    %v8164 = vand.u32 %v3139, 4294901760
    %v8165 = vsub.f32 %v3139, %v8164
    %v8166 = vand.u32 %v8165, 4294901760
    %8167 = vmatprep.subr.mxu0 %v8166
    %v8168 = vand.u32 %v3138, 4294901760
    %v8169 = vsub.f32 %v3138, %v8168
    %v8170 = vand.u32 %v8169, 4294901760
    %8171 = vmatpush1.msra.mxu0 %v8170
    %v8172 = vand.u32 %v3143, 4294901760
    %v8173 = vsub.f32 %v3143, %v8172
    %v8174 = vand.u32 %v8173, 4294901760
    %8175 = vmatprep.subr.mxu0 %v8174
    %v8176 = vand.u32 %v3142, 4294901760
    %v8177 = vsub.f32 %v3142, %v8176
    %v8178 = vand.u32 %v8177, 4294901760
    %8179 = vmatpush1.msra.mxu0 %v8178
    %v8180 = vand.u32 %v3147, 4294901760
    %v8181 = vsub.f32 %v3147, %v8180
    %v8182 = vand.u32 %v8181, 4294901760
    %8183 = vmatprep.subr.mxu0 %v8182
    %v8184 = vand.u32 %v3146, 4294901760
    %v8185 = vsub.f32 %v3146, %v8184
    %v8186 = vand.u32 %v8185, 4294901760
    %8187 = vmatpush1.msra.mxu0 %v8186
    %v8188 = vand.u32 %v3151, 4294901760
    %v8189 = vsub.f32 %v3151, %v8188
    %v8190 = vand.u32 %v8189, 4294901760
    %8191 = vmatprep.subr.mxu0 %v8190
    %v8192 = vand.u32 %v3150, 4294901760
    %v8193 = vsub.f32 %v3150, %v8192
    %v8194 = vand.u32 %v8193, 4294901760
    %8195 = vmatpush1.msra.mxu0 %v8194
    %v8196 = vand.u32 %v3155, 4294901760
    %v8197 = vsub.f32 %v3155, %v8196
    %v8198 = vand.u32 %v8197, 4294901760
    %8199 = vmatprep.subr.mxu0 %v8198
    %v8200 = vand.u32 %v3154, 4294901760
    %v8201 = vsub.f32 %v3154, %v8200
    %v8202 = vand.u32 %v8201, 4294901760
    %8203 = vmatpush1.msra.mxu0 %v8202
    %v8204 = vand.u32 %v3159, 4294901760
    %v8205 = vsub.f32 %v3159, %v8204
    %v8206 = vand.u32 %v8205, 4294901760
    %8207 = vmatprep.subr.mxu0 %v8206
    %v8208 = vand.u32 %v3158, 4294901760
    %v8209 = vsub.f32 %v3158, %v8208
    %v8210 = vand.u32 %v8209, 4294901760
    %8211 = vmatpush1.msra.mxu0 %v8210
    %v8212 = vand.u32 %v3163, 4294901760
    %v8213 = vsub.f32 %v3163, %v8212
    %v8214 = vand.u32 %v8213, 4294901760
    %8215 = vmatprep.subr.mxu0 %v8214
    %v8216 = vand.u32 %v3162, 4294901760
    %v8217 = vsub.f32 %v3162, %v8216
    %v8218 = vand.u32 %v8217, 4294901760
    %8219 = vmatpush1.msra.mxu0 %v8218
    %v8220 = vand.u32 %v3167, 4294901760
    %v8221 = vsub.f32 %v3167, %v8220
    %v8222 = vand.u32 %v8221, 4294901760
    %8223 = vmatprep.subr.mxu0 %v8222
    %v8224 = vand.u32 %v3166, 4294901760
    %v8225 = vsub.f32 %v3166, %v8224
    %v8226 = vand.u32 %v8225, 4294901760
    %8227 = vmatpush1.msra.mxu0 %v8226
    %v8228 = vand.u32 %v3171, 4294901760
    %v8229 = vsub.f32 %v3171, %v8228
    %v8230 = vand.u32 %v8229, 4294901760
    %8231 = vmatprep.subr.mxu0 %v8230
    %v8232 = vand.u32 %v3170, 4294901760
    %v8233 = vsub.f32 %v3170, %v8232
    %v8234 = vand.u32 %v8233, 4294901760
    %8235 = vmatpush1.msra.mxu0 %v8234
    %v8236 = vand.u32 %v3175, 4294901760
    %v8237 = vsub.f32 %v3175, %v8236
    %v8238 = vand.u32 %v8237, 4294901760
    %8239 = vmatprep.subr.mxu0 %v8238
    %v8240 = vand.u32 %v3174, 4294901760
    %v8241 = vsub.f32 %v3174, %v8240
    %v8242 = vand.u32 %v8241, 4294901760
    %8243 = vmatpush1.msra.mxu0 %v8242
    %v8244 = vand.u32 %v3179, 4294901760
    %v8245 = vsub.f32 %v3179, %v8244
    %v8246 = vand.u32 %v8245, 4294901760
    %8247 = vmatprep.subr.mxu0 %v8246
    %v8248 = vand.u32 %v3178, 4294901760
    %v8249 = vsub.f32 %v3178, %v8248
    %v8250 = vand.u32 %v8249, 4294901760
    %8251 = vmatpush1.msra.mxu0 %v8250
    %v8252 = vand.u32 %v3183, 4294901760
    %v8253 = vsub.f32 %v3183, %v8252
    %v8254 = vand.u32 %v8253, 4294901760
    %8255 = vmatprep.subr.mxu0 %v8254
    %v8256 = vand.u32 %v3182, 4294901760
    %v8257 = vsub.f32 %v3182, %v8256
    %v8258 = vand.u32 %v8257, 4294901760
    %8259 = vmatpush1.msra.mxu0 %v8258
    %v8260 = vand.u32 %v3187, 4294901760
    %v8261 = vsub.f32 %v3187, %v8260
    %v8262 = vand.u32 %v8261, 4294901760
    %8263 = vmatprep.subr.mxu0 %v8262
    %v8264 = vand.u32 %v3186, 4294901760
    %v8265 = vsub.f32 %v3186, %v8264
    %v8266 = vand.u32 %v8265, 4294901760
    %8267 = vmatpush1.msra.mxu0 %v8266
    %v8268 = vand.u32 %v3191, 4294901760
    %v8269 = vsub.f32 %v3191, %v8268
    %v8270 = vand.u32 %v8269, 4294901760
    %8271 = vmatprep.subr.mxu0 %v8270
    %v8272 = vand.u32 %v3190, 4294901760
    %v8273 = vsub.f32 %v3190, %v8272
    %v8274 = vand.u32 %v8273, 4294901760
    %8275 = vmatpush1.msra.mxu0 %v8274
    %v8276 = vand.u32 %v3195, 4294901760
    %v8277 = vsub.f32 %v3195, %v8276
    %v8278 = vand.u32 %v8277, 4294901760
    %8279 = vmatprep.subr.mxu0 %v8278
    %v8280 = vand.u32 %v3194, 4294901760
    %v8281 = vsub.f32 %v3194, %v8280
    %v8282 = vand.u32 %v8281, 4294901760
    %8283 = vmatpush1.msra.mxu0 %v8282
    %v8284 = vand.u32 %v3199, 4294901760
    %v8285 = vsub.f32 %v3199, %v8284
    %v8286 = vand.u32 %v8285, 4294901760
    %8287 = vmatprep.subr.mxu0 %v8286
    %v8288 = vand.u32 %v3198, 4294901760
    %v8289 = vsub.f32 %v3198, %v8288
    %v8290 = vand.u32 %v8289, 4294901760
    %8291 = vmatpush1.msra.mxu0 %v8290
    %v8292 = vand.u32 %v3203, 4294901760
    %v8293 = vsub.f32 %v3203, %v8292
    %v8294 = vand.u32 %v8293, 4294901760
    %8295 = vmatprep.subr.mxu0 %v8294
    %v8296 = vand.u32 %v3202, 4294901760
    %v8297 = vsub.f32 %v3202, %v8296
    %v8298 = vand.u32 %v8297, 4294901760
    %8299 = vmatpush1.msra.mxu0 %v8298
    %v8300 = vand.u32 %v3207, 4294901760
    %v8301 = vsub.f32 %v3207, %v8300
    %v8302 = vand.u32 %v8301, 4294901760
    %8303 = vmatprep.subr.mxu0 %v8302
    %v8304 = vand.u32 %v3206, 4294901760
    %v8305 = vsub.f32 %v3206, %v8304
    %v8306 = vand.u32 %v8305, 4294901760
    %8307 = vmatpush1.msra.mxu0 %v8306
    %v8308 = vand.u32 %v3211, 4294901760
    %v8309 = vsub.f32 %v3211, %v8308
    %v8310 = vand.u32 %v8309, 4294901760
    %8311 = vmatprep.subr.mxu0 %v8310
    %v8312 = vand.u32 %v3210, 4294901760
    %v8313 = vsub.f32 %v3210, %v8312
    %v8314 = vand.u32 %v8313, 4294901760
    %8315 = vmatpush1.msra.mxu0 %v8314
    %v8316 = vand.u32 %v3215, 4294901760
    %v8317 = vsub.f32 %v3215, %v8316
    %v8318 = vand.u32 %v8317, 4294901760
    %8319 = vmatprep.subr.mxu0 %v8318
    %v8320 = vand.u32 %v3214, 4294901760
    %v8321 = vsub.f32 %v3214, %v8320
    %v8322 = vand.u32 %v8321, 4294901760
    %8323 = vmatpush1.msra.mxu0 %v8322
    %v8324 = vand.u32 %v3219, 4294901760
    %v8325 = vsub.f32 %v3219, %v8324
    %v8326 = vand.u32 %v8325, 4294901760
    %8327 = vmatprep.subr.mxu0 %v8326
    %v8328 = vand.u32 %v3218, 4294901760
    %v8329 = vsub.f32 %v3218, %v8328
    %v8330 = vand.u32 %v8329, 4294901760
    %8331 = vmatpush1.msra.mxu0 %v8330
    %v8332 = vand.u32 %v3223, 4294901760
    %v8333 = vsub.f32 %v3223, %v8332
    %v8334 = vand.u32 %v8333, 4294901760
    %8335 = vmatprep.subr.mxu0 %v8334
    %v8336 = vand.u32 %v3222, 4294901760
    %v8337 = vsub.f32 %v3222, %v8336
    %v8338 = vand.u32 %v8337, 4294901760
    %8339 = vmatpush1.msra.mxu0 %v8338
    %v8340 = vand.u32 %v3227, 4294901760
    %v8341 = vsub.f32 %v3227, %v8340
    %v8342 = vand.u32 %v8341, 4294901760
    %8343 = vmatprep.subr.mxu0 %v8342
    %v8344 = vand.u32 %v3226, 4294901760
    %v8345 = vsub.f32 %v3226, %v8344
    %v8346 = vand.u32 %v8345, 4294901760
    %8347 = vmatpush1.msra.mxu0 %v8346
    %v8348 = vand.u32 %v3231, 4294901760
    %v8349 = vsub.f32 %v3231, %v8348
    %v8350 = vand.u32 %v8349, 4294901760
    %8351 = vmatprep.subr.mxu0 %v8350
    %v8352 = vand.u32 %v3230, 4294901760
    %v8353 = vsub.f32 %v3230, %v8352
    %v8354 = vand.u32 %v8353, 4294901760
    %8355 = vmatpush1.msra.mxu0 %v8354
    %v8356 = vand.u32 %v5932, 4294901760
    %8357 = vmatprep.mubr.f32.mxu0 %v8356
    %v8358 = vand.u32 %v3099, 4294901760
    %8359 = vmatmul.mubr.f32.gmra.mrb[0].mxu0 %v8358
    %v8360 = vpop.f32.mrb[0].mxu0
    %v8361 = vadd.f32 %v8096, %v8360
    %v8362 = vpop.f32.mrb[0].mxu0
    %v8363 = vadd.f32 %v8098, %v8362
    %8364 = vdwg.mxu0
    %v8365 = vand.u32 %v3107, 4294901760
    %8366 = vmatprep.subr.mxu0 %v8365
    %v8367 = vand.u32 %v3106, 4294901760
    %8368 = vmatpush1.msra.mxu0 %v8367
    %v8369 = vand.u32 %v3111, 4294901760
    %8370 = vmatprep.subr.mxu0 %v8369
    %v8371 = vand.u32 %v3110, 4294901760
    %8372 = vmatpush1.msra.mxu0 %v8371
    %v8373 = vand.u32 %v3115, 4294901760
    %8374 = vmatprep.subr.mxu0 %v8373
    %v8375 = vand.u32 %v3114, 4294901760
    %8376 = vmatpush1.msra.mxu0 %v8375
    %v8377 = vand.u32 %v3119, 4294901760
    %8378 = vmatprep.subr.mxu0 %v8377
    %v8379 = vand.u32 %v3118, 4294901760
    %8380 = vmatpush1.msra.mxu0 %v8379
    %v8381 = vand.u32 %v3123, 4294901760
    %8382 = vmatprep.subr.mxu0 %v8381
    %v8383 = vand.u32 %v3122, 4294901760
    %8384 = vmatpush1.msra.mxu0 %v8383
    %v8385 = vand.u32 %v3127, 4294901760
    %8386 = vmatprep.subr.mxu0 %v8385
    %v8387 = vand.u32 %v3126, 4294901760
    %8388 = vmatpush1.msra.mxu0 %v8387
    %v8389 = vand.u32 %v3131, 4294901760
    %8390 = vmatprep.subr.mxu0 %v8389
    %v8391 = vand.u32 %v3130, 4294901760
    %8392 = vmatpush1.msra.mxu0 %v8391
    %v8393 = vand.u32 %v3135, 4294901760
    %8394 = vmatprep.subr.mxu0 %v8393
    %v8395 = vand.u32 %v3134, 4294901760
    %8396 = vmatpush1.msra.mxu0 %v8395
    %v8397 = vand.u32 %v3139, 4294901760
    %8398 = vmatprep.subr.mxu0 %v8397
    %v8399 = vand.u32 %v3138, 4294901760
    %8400 = vmatpush1.msra.mxu0 %v8399
    %v8401 = vand.u32 %v3143, 4294901760
    %8402 = vmatprep.subr.mxu0 %v8401
    %v8403 = vand.u32 %v3142, 4294901760
    %8404 = vmatpush1.msra.mxu0 %v8403
    %v8405 = vand.u32 %v3147, 4294901760
    %8406 = vmatprep.subr.mxu0 %v8405
    %v8407 = vand.u32 %v3146, 4294901760
    %8408 = vmatpush1.msra.mxu0 %v8407
    %v8409 = vand.u32 %v3151, 4294901760
    %8410 = vmatprep.subr.mxu0 %v8409
    %v8411 = vand.u32 %v3150, 4294901760
    %8412 = vmatpush1.msra.mxu0 %v8411
    %v8413 = vand.u32 %v3155, 4294901760
    %8414 = vmatprep.subr.mxu0 %v8413
    %v8415 = vand.u32 %v3154, 4294901760
    %8416 = vmatpush1.msra.mxu0 %v8415
    %v8417 = vand.u32 %v3159, 4294901760
    %8418 = vmatprep.subr.mxu0 %v8417
    %v8419 = vand.u32 %v3158, 4294901760
    %8420 = vmatpush1.msra.mxu0 %v8419
    %v8421 = vand.u32 %v3163, 4294901760
    %8422 = vmatprep.subr.mxu0 %v8421
    %v8423 = vand.u32 %v3162, 4294901760
    %8424 = vmatpush1.msra.mxu0 %v8423
    %v8425 = vand.u32 %v3167, 4294901760
    %8426 = vmatprep.subr.mxu0 %v8425
    %v8427 = vand.u32 %v3166, 4294901760
    %8428 = vmatpush1.msra.mxu0 %v8427
    %v8429 = vand.u32 %v3171, 4294901760
    %8430 = vmatprep.subr.mxu0 %v8429
    %v8431 = vand.u32 %v3170, 4294901760
    %8432 = vmatpush1.msra.mxu0 %v8431
    %v8433 = vand.u32 %v3175, 4294901760
    %8434 = vmatprep.subr.mxu0 %v8433
    %v8435 = vand.u32 %v3174, 4294901760
    %8436 = vmatpush1.msra.mxu0 %v8435
    %v8437 = vand.u32 %v3179, 4294901760
    %8438 = vmatprep.subr.mxu0 %v8437
    %v8439 = vand.u32 %v3178, 4294901760
    %8440 = vmatpush1.msra.mxu0 %v8439
    %v8441 = vand.u32 %v3183, 4294901760
    %8442 = vmatprep.subr.mxu0 %v8441
    %v8443 = vand.u32 %v3182, 4294901760
    %8444 = vmatpush1.msra.mxu0 %v8443
    %v8445 = vand.u32 %v3187, 4294901760
    %8446 = vmatprep.subr.mxu0 %v8445
    %v8447 = vand.u32 %v3186, 4294901760
    %8448 = vmatpush1.msra.mxu0 %v8447
    %v8449 = vand.u32 %v3191, 4294901760
    %8450 = vmatprep.subr.mxu0 %v8449
    %v8451 = vand.u32 %v3190, 4294901760
    %8452 = vmatpush1.msra.mxu0 %v8451
    %v8453 = vand.u32 %v3195, 4294901760
    %8454 = vmatprep.subr.mxu0 %v8453
    %v8455 = vand.u32 %v3194, 4294901760
    %8456 = vmatpush1.msra.mxu0 %v8455
    %v8457 = vand.u32 %v3199, 4294901760
    %8458 = vmatprep.subr.mxu0 %v8457
    %v8459 = vand.u32 %v3198, 4294901760
    %8460 = vmatpush1.msra.mxu0 %v8459
    %v8461 = vand.u32 %v3203, 4294901760
    %8462 = vmatprep.subr.mxu0 %v8461
    %v8463 = vand.u32 %v3202, 4294901760
    %8464 = vmatpush1.msra.mxu0 %v8463
    %v8465 = vand.u32 %v3207, 4294901760
    %8466 = vmatprep.subr.mxu0 %v8465
    %v8467 = vand.u32 %v3206, 4294901760
    %8468 = vmatpush1.msra.mxu0 %v8467
    %v8469 = vand.u32 %v3211, 4294901760
    %8470 = vmatprep.subr.mxu0 %v8469
    %v8471 = vand.u32 %v3210, 4294901760
    %8472 = vmatpush1.msra.mxu0 %v8471
    %v8473 = vand.u32 %v3215, 4294901760
    %8474 = vmatprep.subr.mxu0 %v8473
    %v8475 = vand.u32 %v3214, 4294901760
    %8476 = vmatpush1.msra.mxu0 %v8475
    %v8477 = vand.u32 %v3219, 4294901760
    %8478 = vmatprep.subr.mxu0 %v8477
    %v8479 = vand.u32 %v3218, 4294901760
    %8480 = vmatpush1.msra.mxu0 %v8479
    %v8481 = vand.u32 %v3223, 4294901760
    %8482 = vmatprep.subr.mxu0 %v8481
    %v8483 = vand.u32 %v3222, 4294901760
    %8484 = vmatpush1.msra.mxu0 %v8483
    %v8485 = vand.u32 %v3227, 4294901760
    %8486 = vmatprep.subr.mxu0 %v8485
    %v8487 = vand.u32 %v3226, 4294901760
    %8488 = vmatpush1.msra.mxu0 %v8487
    %v8489 = vand.u32 %v3231, 4294901760
    %8490 = vmatprep.subr.mxu0 %v8489
    %v8491 = vand.u32 %v3230, 4294901760
    %8492 = vmatpush1.msra.mxu0 %v8491
    %v8493 = vand.u32 %v5932, 4294901760
    %8494 = vmatprep.mubr.f32.mxu0 %v8493
    %v8495 = vand.u32 %v3099, 4294901760
    %8496 = vmatmul.mubr.f32.gmra.mrb[0].mxu0 %v8495
    %v8497 = vpop.f32.mrb[0].mxu0
    %v8498 = vadd.f32 %v8361, %v8497
    %v8499 = vpop.f32.mrb[0].mxu0
    %v8500 = vadd.f32 %v8363, %v8499
    %8501 = vdwg.mxu0
    %v8502 = vmul.f32 %v7214, %v7214
    %v8503 = vmul.f32 %v7216, %v7216
    %v8504 = vmul.f32 %v8498, %v8498
    %v8505 = vmul.f32 %v8500, %v8500
    %v8506 = vadd.f32 %v8502, %v8504
    %v8507 = vadd.f32 %v8503, %v8505
    %v8508 = vmax.f32 %v8506, 1e-30
    %v8509 = vmax.f32 %v8507, 1e-30
    %v8510 = vld [vmem:[%s5] sm:$0xff]
    %v8511 = vld [vmem:[%s6] sm:$0xff]
    %v8512 = vmul.f32 %v8510, %v8511
    %v8513 = vrsqrt.pop %v8508
    %v8514 = vrsqrt.pop %v8509
    %v8517 = vcombine.low %v8513, %v8514
    %v8519 = vmul.f32 %v8512, %v8517
    %8520 = vst [vmem:[#allocation16] sm:$0xff] %v8519
    // Predicated region
    $region74: #{tpu_custom_call.1} parent=1 // pred_check
      _
    $region75: #{tpu_custom_call.1} parent=1 // pred_check_branch
      %8522 = sbr.rel (0) target = $region77
    $region76: #{tpu_custom_call.1} parent=1 // pred_region
      %s8524 = ssub.s32 128, 128
      %8525 = vsyncadd [#allocation4], %s8524
      %s8527 = sshll.u32 [#allocation16], 4
      %s8528 = int_to_ptr.vmem [resolvable:$true] %s8527
      %8530 = dma.vmem_to_hbm [thread:$0]  %s8528, 128, %s10, [#allocation4]
    $region77: #{tpu_custom_call.1} parent=1 // pred_fallthru
      _
    // Predicated region
    $region78: #{tpu_custom_call.1} parent=1 // pred_check
      _
    $region79: #{tpu_custom_call.1} parent=1 // pred_check_branch
      %8532 = sbr.rel (0) target = $region81
    $region80: #{tpu_custom_call.1} parent=1 // pred_region
      %8533 = dma.done [#allocation4], 128
    $region81: #{tpu_custom_call.1} parent=1 // pred_fallthru
      _
    %8534 = vsyncpa [#allocation3], 1
    %8535 = vsyncpa [#allocation6], 1
    %8536 = vsyncpa [#allocation9], 1
    %8537 = vsyncpa [#allocation12], 1
    %8538 = vsyncpa [#allocation15], 1
    %8539 = vsyncpa [#allocation4], 1

</llo_original>
